<compile_context>
chip_gen: v7x
topology: tpu7x:2x2x1
jax: 0.10.0
libtpu: 0.0.40
codegen_flags: <defaults>
</compile_context>

<pallas_src>
import functools
import math

import jax
import jax.numpy as jnp
from jax.experimental import pallas as pl
from jax.experimental.pallas import tpu as pltpu


# ----------------------------- config ----------------------------------------
class Config:
    n_embd = 32
    n_head = 4
    n_layer = 2
    block_size = 4            # per-modality sequence length T; attn window = 3*T
    max_timestep = 16
    n_state_layer = 3
    attn_type = "w_key"
    use_skip = True
    use_future_state = False
    KT = 0.1
    embd_pdrop = 0.1          # dropout -> identity (eval mode)
    resid_pdrop = 0.1
    attn_pdrop = 0.1


STATE_DIM = 8
ACTION_DIM = 6
KEY_DIM = 8
HIDDEN = 256                  # reference MLP(..., hidden_dims=[256])

_NEG_INF = -1e30              # finite "−inf" for masked_fill (avoids inf arith)


# ----------------------- fused forward Pallas kernel --------------------------
def _fused_gpt_kernel(*refs, n_head, n_layer):
    (states_ref, goal_ref, actions_ref, pos_ref,
     se_w0, se_b0, se_w1, se_b1,
     ge_w0, ge_b0, ge_w1, ge_b1,
     ae_w0, ae_b0, ae_w1, ae_b1,
     ln1_g, ln1_b,
     qh_w, qh_b, kh_w, kh_b, vh_w, vh_b,
     projh_w, proj_b,
     ln2_g, ln2_b,
     fc1_w, fc1_b, fc2_w, fc2_b,
     lnf_g, lnf_b,
     ap_w0, ap_b0, ap_w1, ap_b1, ap_w2, ap_b2,
     out_ref) = refs

    f32 = jnp.float32
    T = states_ref.shape[1]
    T3 = pos_ref.shape[1]
    C = pos_ref.shape[2]
    hd = C // n_head
    scale = 1.0 / math.sqrt(hd)

    def dot(a, b):
        return jnp.dot(a, b, preferred_element_type=f32)

    def mlp2(x, w0, b0, w1, b1):                     # Linear -> ReLU -> Linear
        h = jnp.maximum(dot(x, w0[...]) + b0[...], 0.0)
        return dot(h, w1[...]) + b1[...]

    def layernorm(v, gamma, beta):                   # torch LayerNorm, eps=1e-5
        mu = jnp.mean(v, axis=-1, keepdims=True)
        var = jnp.mean(jnp.square(v - mu), axis=-1, keepdims=True)
        return (v - mu) * jax.lax.rsqrt(var + 1e-5) * gamma + beta

    def gelu_exact(v):
        # exact (erf) GELU; erf via Abramowitz-Stegun 7.1.26 rational approx
        # (|abs err| < 1.5e-7, i.e. f32-accurate); exp goes to the EUP slot.
        z = v * 0.7071067811865476
        az = jnp.abs(z)
        t = 1.0 / (1.0 + 0.3275911 * az)
        poly = t * (0.254829592 + t * (-0.284496736 + t * (1.421413741
                    + t * (-1.453152027 + t * 1.061405429))))
        erf_abs = 1.0 - poly * jnp.exp(-az * az)
        erf = jnp.where(z >= 0.0, erf_abs, -erf_abs)
        return 0.5 * v * (1.0 + erf)

    # ---- token encoder MLPs (state / state-grad / action), fused in-kernel ---
    state_emb = mlp2(states_ref[0], se_w0, se_b0, se_w1, se_b1)      # (T, C)
    grad_emb = mlp2(goal_ref[0], ge_w0, ge_b0, ge_w1, ge_b1)         # (T, C)
    act_emb = mlp2(actions_ref[0], ae_w0, ae_b0, ae_w1, ae_b1)       # (T, C)
    # only the first T-1 action tokens enter the sequence (token 3T-1 stays 0)
    arow = jax.lax.broadcasted_iota(jnp.int32, (T, C), 0)
    act_emb = jnp.where(arow < T - 1, act_emb, 0.0)

    # ---- interleave [state, grad, action] tokens -> (3T, C) ------------------
    # one-hot scatter matmuls keep the activation lane-dense (no strided stores)
    irow = jax.lax.broadcasted_iota(jnp.int32, (T3, T), 0)
    icol = jax.lax.broadcasted_iota(jnp.int32, (T3, T), 1)
    x = (dot((irow == 3 * icol).astype(f32), state_emb)
         + dot((irow == 3 * icol + 1).astype(f32), grad_emb)
         + dot((irow == 3 * icol + 2).astype(f32), act_emb))
    x = x + pos_ref[0]                               # embd dropout = identity

    # ---- transformer blocks ---------------------------------------------------
    crow = jax.lax.broadcasted_iota(jnp.int32, (T3, T3), 0)
    ccol = jax.lax.broadcasted_iota(jnp.int32, (T3, T3), 1)
    causal = ccol <= crow

    for l in range(n_layer):
        h = layernorm(x, ln1_g[l], ln1_b[l])
        attn = jnp.zeros((T3, C), f32)
        for n in range(n_head):
            i = l * n_head + n
            q = dot(h, qh_w[i]) + qh_b[i]            # (3T, hd)
            k = dot(h, kh_w[i]) + kh_b[i]
            v = dot(h, vh_w[i]) + vh_b[i]
            att = jax.lax.dot_general(q, k, (((1,), (1,)), ((), ())),
                                      preferred_element_type=f32) * scale
            att = jnp.where(causal, att, _NEG_INF)   # causal masked_fill(-inf)
            att = att - jnp.max(att, axis=-1, keepdims=True)
            p = jnp.exp(att)
            p = p / jnp.sum(p, axis=-1, keepdims=True)   # softmax (attn drop = id)
            attn = attn + dot(dot(p, v), projh_w[i])     # head merge folded into proj
        x = x + attn + proj_b[l]                     # resid dropout = identity

        h2 = layernorm(x, ln2_g[l], ln2_b[l])
        h2 = dot(h2, fc1_w[l]) + fc1_b[l]            # (3T, 4C)
        h2 = gelu_exact(h2)                          # F.gelu (exact), fused in-kernel
        h2 = dot(h2, fc2_w[l]) + fc2_b[l]
        x = x + h2

    # ---- final LayerNorm + action predictor on grad-token rows (1::3) --------
    xf = layernorm(x, lnf_g[...], lnf_b[...])
    srow = jax.lax.broadcasted_iota(jnp.int32, (T, T3), 0)
    scol = jax.lax.broadcasted_iota(jnp.int32, (T, T3), 1)
    xa = dot((scol == 3 * srow + 1).astype(f32), xf)     # strided gather via matmul
    ha = jnp.maximum(dot(xa, ap_w0[...]) + ap_b0[...], 0.0)
    ha = jnp.maximum(dot(ha, ap_w1[...]) + ap_b1[...], 0.0)
    out_ref[0] = dot(ha, ap_w2[...]) + ap_b2[...]


_WEIGHT_NAMES = (
    "se_w0", "se_b0", "se_w1", "se_b1",
    "ge_w0", "ge_b0", "ge_w1", "ge_b1",
    "ae_w0", "ae_b0", "ae_w1", "ae_b1",
    "ln1_g", "ln1_b",
    "qh_w", "qh_b", "kh_w", "kh_b", "vh_w", "vh_b",
    "projh_w", "proj_b",
    "ln2_g", "ln2_b",
    "fc1_w", "fc1_b", "fc2_w", "fc2_b",
    "lnf_g", "lnf_b",
    "ap_w0", "ap_b0", "ap_w1", "ap_b1", "ap_w2", "ap_b2",
)


def _batched_spec(a):
    nd = a.ndim
    return pl.BlockSpec((1,) + a.shape[1:],
                        lambda b, nd=nd: (b,) + (0,) * (nd - 1))


def _resident_spec(a):
    nd = a.ndim
    return pl.BlockSpec(a.shape, lambda b, nd=nd: (0,) * nd)


def fused_gpt_forward(params, cfg, states, goal_vecs, actions, pos_emb):
    """One pallas_call: encoders + interleave + transformer trunk + predictor."""
    B, T, _ = states.shape
    A = actions.shape[-1]
    batched = [states, goal_vecs, actions, pos_emb]
    weights = [params[n] for n in _WEIGHT_NAMES]
    kernel = functools.partial(_fused_gpt_kernel,
                               n_head=cfg.n_head, n_layer=cfg.n_layer)
    return pl.pallas_call(
        kernel,
        grid=(B,),                                    # batch-parallel (2 TCs on v7x)
        in_specs=[_batched_spec(a) for a in batched]
                 + [_resident_spec(w) for w in weights],
        out_specs=pl.BlockSpec((1, T, A), lambda b: (b, 0, 0)),
        out_shape=jax.ShapeDtypeStruct((B, T, A), jnp.float32),
        compiler_params=pltpu.CompilerParams(dimension_semantics=("parallel",)),
    )(*batched, *weights)


# ----------------------------- parameter init --------------------------------
def init_params(key, cfg):
    C, L, H = cfg.n_embd, cfg.n_layer, HIDDEN
    S, A, K = STATE_DIM, ACTION_DIM, KEY_DIM
    NSL = cfg.n_state_layer
    nh, hd = cfg.n_head, cfg.n_embd // cfg.n_head
    gin = 2 * S if cfg.use_future_state else S

    ks = iter(jax.random.split(key, 32))
    nrm = lambda shape: 0.02 * jax.random.normal(next(ks), shape, jnp.float32)
    zeros = lambda shape: jnp.zeros(shape, jnp.float32)
    ones = lambda shape: jnp.ones(shape, jnp.float32)

    p = {}
    # hyper-network reward branch (plain JAX; differentiated w.r.t. states)
    p["se0_w"], p["se0_b"] = nrm((S, C)), zeros((C,))
    p["hn0_w"] = [nrm((K, NSL)) for _ in range(NSL - 1)]          # bias=False
    p["hn_hidden1_w"] = nrm((NSL, C * (C + 1)))                   # bias=False
    p["hn_out1_w"] = nrm((K, C))                                  # bias=False
    # positional embeddings (zeros, as in the reference init)
    p["local_pos_emb"] = zeros((1, cfg.block_size, C))
    p["global_pos_emb"] = zeros((1, cfg.max_timestep, C))
    # token encoders: MLP(in -> 256 -> C)
    # TODO(synk): MLP source not provided; assumed Linear -> ReLU -> Linear.
    for name, din in (("se", S), ("ge", gin), ("ae", A)):
        p[f"{name}_w0"], p[f"{name}_b0"] = nrm((din, H)), zeros((1, H))
        p[f"{name}_w1"], p[f"{name}_b1"] = nrm((H, C)), zeros((1, C))
    # transformer blocks (weights stacked over layers / heads, VMEM-resident)
    p["ln1_g"], p["ln1_b"] = ones((L, 1, C)), zeros((L, 1, C))
    p["ln2_g"], p["ln2_b"] = ones((L, 1, C)), zeros((L, 1, C))
    p["qh_w"], p["qh_b"] = nrm((L * nh, C, hd)), zeros((L * nh, 1, hd))
    p["kh_w"], p["kh_b"] = nrm((L * nh, C, hd)), zeros((L * nh, 1, hd))
    p["vh_w"], p["vh_b"] = nrm((L * nh, C, hd)), zeros((L * nh, 1, hd))
    p["projh_w"], p["proj_b"] = nrm((L * nh, hd, C)), zeros((L, 1, C))
    p["fc1_w"], p["fc1_b"] = nrm((L, C, 4 * C)), zeros((L, 1, 4 * C))
    p["fc2_w"], p["fc2_b"] = nrm((L, 4 * C, C)), zeros((L, 1, C))
    # final LayerNorm + action predictor MLP(C -> 256 -> 256 -> A)
    p["lnf_g"], p["lnf_b"] = ones((1, C)), zeros((1, C))
    p["ap_w0"], p["ap_b0"] = nrm((C, H)), zeros((1, H))
    p["ap_w1"], p["ap_b1"] = nrm((H, H)), zeros((1, H))
    p["ap_w2"], p["ap_b2"] = nrm((H, A)), zeros((1, A))
    return p


# --------------------- hyper-network reward branch (plain JAX) ----------------
def get_reward(params, cfg, states, keys_):
    # Kept in plain JAX so torch.autograd.grad w.r.t. `states` can be replicated
    # with jax.value_and_grad (Pallas kernels have no VJP rules).
    B, T, _ = states.shape
    C, Kd = cfg.n_embd, KEY_DIM
    x_states = states @ params["se0_w"] + params["se0_b"]
    x_hidden = x_states
    x_remain = x_states
    cnt_skip = 0
    for i in range(cfg.n_state_layer - 1):
        cnt_skip += int(cfg.use_skip)
        key_i = keys_[..., i * Kd:(i + 1) * Kd]
        whn_i = key_i @ params["hn0_w"][i]                        # (B,T,NSL)
        params_i = whn_i @ params["hn_hidden1_w"]                 # (B,T,C*(C+1))
        w_i = params_i[..., :-C].reshape(B, T, C, C)
        b_i = params_i[..., -C:]
        x_hidden = jnp.einsum("btc,btcd->btd", x_hidden, w_i) + b_i
        if cnt_skip == 2:
            x_hidden = x_hidden + x_remain
            if i != cfg.n_state_layer - 2:
                x_hidden = jnp.maximum(x_hidden, 0.0)
            x_remain = x_hidden
            cnt_skip = 0
        elif i != cfg.n_state_layer - 2:
            x_hidden = jnp.maximum(x_hidden, 0.0)
    v_r_norm = x_hidden / jnp.maximum(
        jnp.linalg.norm(x_hidden, axis=-1, keepdims=True), 1e-12)  # F.normalize
    key_last = keys_[..., -Kd:]
    mu_last = key_last @ params["hn_out1_w"]                       # (B,T,C)
    num = jnp.sum(mu_last * x_hidden, axis=-1)
    den = jnp.maximum(jnp.linalg.norm(mu_last, axis=-1)
                      * jnp.linalg.norm(x_hidden, axis=-1), 1e-8)  # cosine_similarity
    r = jax.nn.sigmoid((num / den) / cfg.KT)
    return r, v_r_norm


# ----------------------------- full forward -----------------------------------
def explicit_sahn_gpt_forward(params, cfg, states, timesteps,
                              actions=None, keys_=None, future_states=None):
    assert keys_ is not None
    # TODO(synk): the actions=None path of the reference (no action tokens) is
    # not implemented; the fused kernel always expects an actions tensor.
    assert actions is not None
    B, T = states.shape[0], states.shape[1]

    # reward + gradient w.r.t. states (torch.autograd.grad) in one autodiff pass
    def _r_sum(s):
        r, v = get_reward(params, cfg, s, keys_)
        return jnp.sum(r), (r, v)
    (_, (r, v_r_norm)), states_grad = jax.value_and_grad(_r_sum, has_aux=True)(states)

    if cfg.use_future_state:
        goal_vecs = jnp.concatenate([states_grad, future_states], axis=-1)
    else:
        goal_vecs = states_grad

    # positional embeddings (zeros at init; kept for exact semantics)
    gpe = params["global_pos_emb"][0]                              # (max_timestep, C)
    global_pos = gpe[timesteps[:, 0]][:, None, :]                  # torch.gather -> (B,1,C)
    local_pos = jnp.repeat(params["local_pos_emb"][:, :T, :], 3, axis=1)   # (1,3T,C)
    pos_emb = global_pos + local_pos                               # (B,3T,C)

    # single fused Pallas kernel: encoders + interleave + trunk + predictor
    action_preds = fused_gpt_forward(params, cfg, states, goal_vecs, actions, pos_emb)
    return action_preds, r, v_r_norm


# ----------------------------- main -------------------------------------------
if __name__ == "__main__":
    cfg = Config()
    key = jax.random.PRNGKey(0)
    pkey, skey, akey, kkey, tkey = jax.random.split(key, 5)

    params = init_params(pkey, cfg)

    B, T = 2, cfg.block_size
    states = jax.random.normal(skey, (B, T, STATE_DIM), jnp.float32)
    actions = jax.random.normal(akey, (B, T, ACTION_DIM), jnp.float32)
    keys_ = jax.random.normal(kkey, (B, T, cfg.n_state_layer * KEY_DIM), jnp.float32)
    timesteps = jax.random.randint(tkey, (B, 1), 0, cfg.max_timestep, dtype=jnp.int32)

    fwd = jax.jit(functools.partial(explicit_sahn_gpt_forward, params, cfg))
    action_preds, r, v_r_norm = fwd(states, timesteps, actions, keys_)
    jax.block_until_ready((action_preds, r, v_r_norm))

    assert action_preds.shape == (B, T, ACTION_DIM)
    assert r.shape == (B, T)
    assert v_r_norm.shape == (B, T, cfg.n_embd)
    assert bool(jnp.all(jnp.isfinite(action_preds)))
    assert bool(jnp.all(jnp.isfinite(r))) and bool(jnp.all(jnp.isfinite(v_r_norm)))
    print("KERNEL_OK")
</pallas_src>

<mosaic_0001>
module attributes {stable_mosaic.version = 11 : i64} {
  func.func @_fused_gpt_kernel(%arg0: i32, %arg1: memref<1x4x8xf32, #tpu.memory_space<vmem>>, %arg2: memref<1x4x8xf32, #tpu.memory_space<vmem>>, %arg3: memref<1x4x6xf32, #tpu.memory_space<vmem>>, %arg4: memref<1x12x32xf32, #tpu.memory_space<vmem>>, %arg5: memref<8x256xf32, #tpu.memory_space<vmem>>, %arg6: memref<1x256xf32, #tpu.memory_space<vmem>>, %arg7: memref<256x32xf32, #tpu.memory_space<vmem>>, %arg8: memref<1x32xf32, #tpu.memory_space<vmem>>, %arg9: memref<8x256xf32, #tpu.memory_space<vmem>>, %arg10: memref<1x256xf32, #tpu.memory_space<vmem>>, %arg11: memref<256x32xf32, #tpu.memory_space<vmem>>, %arg12: memref<1x32xf32, #tpu.memory_space<vmem>>, %arg13: memref<6x256xf32, #tpu.memory_space<vmem>>, %arg14: memref<1x256xf32, #tpu.memory_space<vmem>>, %arg15: memref<256x32xf32, #tpu.memory_space<vmem>>, %arg16: memref<1x32xf32, #tpu.memory_space<vmem>>, %arg17: memref<2x1x32xf32, #tpu.memory_space<vmem>>, %arg18: memref<2x1x32xf32, #tpu.memory_space<vmem>>, %arg19: memref<8x32x8xf32, #tpu.memory_space<vmem>>, %arg20: memref<8x1x8xf32, #tpu.memory_space<vmem>>, %arg21: memref<8x32x8xf32, #tpu.memory_space<vmem>>, %arg22: memref<8x1x8xf32, #tpu.memory_space<vmem>>, %arg23: memref<8x32x8xf32, #tpu.memory_space<vmem>>, %arg24: memref<8x1x8xf32, #tpu.memory_space<vmem>>, %arg25: memref<8x8x32xf32, #tpu.memory_space<vmem>>, %arg26: memref<2x1x32xf32, #tpu.memory_space<vmem>>, %arg27: memref<2x1x32xf32, #tpu.memory_space<vmem>>, %arg28: memref<2x1x32xf32, #tpu.memory_space<vmem>>, %arg29: memref<2x32x128xf32, #tpu.memory_space<vmem>>, %arg30: memref<2x1x128xf32, #tpu.memory_space<vmem>>, %arg31: memref<2x128x32xf32, #tpu.memory_space<vmem>>, %arg32: memref<2x1x32xf32, #tpu.memory_space<vmem>>, %arg33: memref<1x32xf32, #tpu.memory_space<vmem>>, %arg34: memref<1x32xf32, #tpu.memory_space<vmem>>, %arg35: memref<32x256xf32, #tpu.memory_space<vmem>>, %arg36: memref<1x256xf32, #tpu.memory_space<vmem>>, %arg37: memref<256x256xf32, #tpu.memory_space<vmem>>, %arg38: memref<1x256xf32, #tpu.memory_space<vmem>>, %arg39: memref<256x6xf32, #tpu.memory_space<vmem>>, %arg40: memref<1x6xf32, #tpu.memory_space<vmem>>, %arg41: memref<1x4x6xf32, #tpu.memory_space<vmem>>) attributes {dimension_semantics = [#tpu.dimension_semantics<parallel>], iteration_bounds = array<i64: 2>, scalar_prefetch = 0 : i64, scratch_operands = 0 : i64, tpu.core_type = #tpu.core_type<tc>, window_params = [{transform_indices = @transform_0, window_bounds = array<i64: 1, 4, 8>}, {transform_indices = @transform_1, window_bounds = array<i64: 1, 4, 8>}, {transform_indices = @transform_2, window_bounds = array<i64: 1, 4, 6>}, {transform_indices = @transform_3, window_bounds = array<i64: 1, 12, 32>}, {pipeline_mode = #tpu.pipeline_mode<synchronous>, transform_indices = @transform_4, window_bounds = array<i64: 8, 256>}, {pipeline_mode = #tpu.pipeline_mode<synchronous>, transform_indices = @transform_5, window_bounds = array<i64: 1, 256>}, {pipeline_mode = #tpu.pipeline_mode<synchronous>, transform_indices = @transform_6, window_bounds = array<i64: 256, 32>}, {pipeline_mode = #tpu.pipeline_mode<synchronous>, transform_indices = @transform_7, window_bounds = array<i64: 1, 32>}, {pipeline_mode = #tpu.pipeline_mode<synchronous>, transform_indices = @transform_8, window_bounds = array<i64: 8, 256>}, {pipeline_mode = #tpu.pipeline_mode<synchronous>, transform_indices = @transform_9, window_bounds = array<i64: 1, 256>}, {pipeline_mode = #tpu.pipeline_mode<synchronous>, transform_indices = @transform_10, window_bounds = array<i64: 256, 32>}, {pipeline_mode = #tpu.pipeline_mode<synchronous>, transform_indices = @transform_11, window_bounds = array<i64: 1, 32>}, {pipeline_mode = #tpu.pipeline_mode<synchronous>, transform_indices = @transform_12, window_bounds = array<i64: 6, 256>}, {pipeline_mode = #tpu.pipeline_mode<synchronous>, transform_indices = @transform_13, window_bounds = array<i64: 1, 256>}, {pipeline_mode = #tpu.pipeline_mode<synchronous>, transform_indices = @transform_14, window_bounds = array<i64: 256, 32>}, {pipeline_mode = #tpu.pipeline_mode<synchronous>, transform_indices = @transform_15, window_bounds = array<i64: 1, 32>}, {pipeline_mode = #tpu.pipeline_mode<synchronous>, transform_indices = @transform_16, window_bounds = array<i64: 2, 1, 32>}, {pipeline_mode = #tpu.pipeline_mode<synchronous>, transform_indices = @transform_17, window_bounds = array<i64: 2, 1, 32>}, {pipeline_mode = #tpu.pipeline_mode<synchronous>, transform_indices = @transform_18, window_bounds = array<i64: 8, 32, 8>}, {pipeline_mode = #tpu.pipeline_mode<synchronous>, transform_indices = @transform_19, window_bounds = array<i64: 8, 1, 8>}, {pipeline_mode = #tpu.pipeline_mode<synchronous>, transform_indices = @transform_20, window_bounds = array<i64: 8, 32, 8>}, {pipeline_mode = #tpu.pipeline_mode<synchronous>, transform_indices = @transform_21, window_bounds = array<i64: 8, 1, 8>}, {pipeline_mode = #tpu.pipeline_mode<synchronous>, transform_indices = @transform_22, window_bounds = array<i64: 8, 32, 8>}, {pipeline_mode = #tpu.pipeline_mode<synchronous>, transform_indices = @transform_23, window_bounds = array<i64: 8, 1, 8>}, {pipeline_mode = #tpu.pipeline_mode<synchronous>, transform_indices = @transform_24, window_bounds = array<i64: 8, 8, 32>}, {pipeline_mode = #tpu.pipeline_mode<synchronous>, transform_indices = @transform_25, window_bounds = array<i64: 2, 1, 32>}, {pipeline_mode = #tpu.pipeline_mode<synchronous>, transform_indices = @transform_26, window_bounds = array<i64: 2, 1, 32>}, {pipeline_mode = #tpu.pipeline_mode<synchronous>, transform_indices = @transform_27, window_bounds = array<i64: 2, 1, 32>}, {pipeline_mode = #tpu.pipeline_mode<synchronous>, transform_indices = @transform_28, window_bounds = array<i64: 2, 32, 128>}, {pipeline_mode = #tpu.pipeline_mode<synchronous>, transform_indices = @transform_29, window_bounds = array<i64: 2, 1, 128>}, {pipeline_mode = #tpu.pipeline_mode<synchronous>, transform_indices = @transform_30, window_bounds = array<i64: 2, 128, 32>}, {pipeline_mode = #tpu.pipeline_mode<synchronous>, transform_indices = @transform_31, window_bounds = array<i64: 2, 1, 32>}, {pipeline_mode = #tpu.pipeline_mode<synchronous>, transform_indices = @transform_32, window_bounds = array<i64: 1, 32>}, {pipeline_mode = #tpu.pipeline_mode<synchronous>, transform_indices = @transform_33, window_bounds = array<i64: 1, 32>}, {pipeline_mode = #tpu.pipeline_mode<synchronous>, transform_indices = @transform_34, window_bounds = array<i64: 32, 256>}, {pipeline_mode = #tpu.pipeline_mode<synchronous>, transform_indices = @transform_35, window_bounds = array<i64: 1, 256>}, {pipeline_mode = #tpu.pipeline_mode<synchronous>, transform_indices = @transform_36, window_bounds = array<i64: 256, 256>}, {pipeline_mode = #tpu.pipeline_mode<synchronous>, transform_indices = @transform_37, window_bounds = array<i64: 1, 256>}, {pipeline_mode = #tpu.pipeline_mode<synchronous>, transform_indices = @transform_38, window_bounds = array<i64: 256, 6>}, {pipeline_mode = #tpu.pipeline_mode<synchronous>, transform_indices = @transform_39, window_bounds = array<i64: 1, 6>}, {transform_indices = @transform_40, window_bounds = array<i64: 1, 4, 6>}]} {
    %c0 = arith.constant 0 : index
    %c0_0 = arith.constant 0 : index
    %c0_1 = arith.constant 0 : index
    %0 = vector.load %arg1[%c0, %c0_0, %c0_1] : memref<1x4x8xf32, #tpu.memory_space<vmem>>, vector<1x4x8xf32>
    %1 = vector.shape_cast %0 : vector<1x4x8xf32> to vector<4x8xf32>
    %c0_2 = arith.constant 0 : index
    %c0_3 = arith.constant 0 : index
    %2 = vector.load %arg5[%c0_2, %c0_3] : memref<8x256xf32, #tpu.memory_space<vmem>>, vector<8x256xf32>
    %cst = arith.constant dense<0.000000e+00> : vector<4x256xf32>
    %3 = tpu.matmul %1, %2, %cst {dimension_numbers = #tpu.dot_dimension_numbers<[1], [0], [0], [1], [0, 0, 1, 1], [], []>} : vector<4x8xf32>, vector<8x256xf32>, vector<4x256xf32> -> vector<4x256xf32>
    %c0_4 = arith.constant 0 : index
    %c0_5 = arith.constant 0 : index
    %4 = vector.load %arg6[%c0_4, %c0_5] : memref<1x256xf32, #tpu.memory_space<vmem>>, vector<1x256xf32>
    %5 = vector.broadcast %4 : vector<1x256xf32> to vector<4x256xf32>
    %6 = arith.addf %3, %5 : vector<4x256xf32>
    %cst_6 = arith.constant 0.000000e+00 : f32
    %7 = vector.broadcast %cst_6 : f32 to vector<4x256xf32>
    %8 = arith.maximumf %6, %7 : vector<4x256xf32>
    %c0_7 = arith.constant 0 : index
    %c0_8 = arith.constant 0 : index
    %9 = vector.load %arg7[%c0_7, %c0_8] : memref<256x32xf32, #tpu.memory_space<vmem>>, vector<256x32xf32>
    %cst_9 = arith.constant dense<0.000000e+00> : vector<4x32xf32>
    %10 = tpu.matmul %8, %9, %cst_9 {dimension_numbers = #tpu.dot_dimension_numbers<[1], [0], [0], [1], [0, 0, 1, 1], [], []>} : vector<4x256xf32>, vector<256x32xf32>, vector<4x32xf32> -> vector<4x32xf32>
    %c0_10 = arith.constant 0 : index
    %c0_11 = arith.constant 0 : index
    %11 = vector.load %arg8[%c0_10, %c0_11] : memref<1x32xf32, #tpu.memory_space<vmem>>, vector<1x32xf32>
    %12 = vector.broadcast %11 : vector<1x32xf32> to vector<4x32xf32>
    %13 = arith.addf %10, %12 : vector<4x32xf32>
    %c0_12 = arith.constant 0 : index
    %c0_13 = arith.constant 0 : index
    %c0_14 = arith.constant 0 : index
    %14 = vector.load %arg2[%c0_12, %c0_13, %c0_14] : memref<1x4x8xf32, #tpu.memory_space<vmem>>, vector<1x4x8xf32>
    %15 = vector.shape_cast %14 : vector<1x4x8xf32> to vector<4x8xf32>
    %c0_15 = arith.constant 0 : index
    %c0_16 = arith.constant 0 : index
    %16 = vector.load %arg9[%c0_15, %c0_16] : memref<8x256xf32, #tpu.memory_space<vmem>>, vector<8x256xf32>
    %cst_17 = arith.constant dense<0.000000e+00> : vector<4x256xf32>
    %17 = tpu.matmul %15, %16, %cst_17 {dimension_numbers = #tpu.dot_dimension_numbers<[1], [0], [0], [1], [0, 0, 1, 1], [], []>} : vector<4x8xf32>, vector<8x256xf32>, vector<4x256xf32> -> vector<4x256xf32>
    %c0_18 = arith.constant 0 : index
    %c0_19 = arith.constant 0 : index
    %18 = vector.load %arg10[%c0_18, %c0_19] : memref<1x256xf32, #tpu.memory_space<vmem>>, vector<1x256xf32>
    %19 = vector.broadcast %18 : vector<1x256xf32> to vector<4x256xf32>
    %20 = arith.addf %17, %19 : vector<4x256xf32>
    %cst_20 = arith.constant 0.000000e+00 : f32
    %21 = vector.broadcast %cst_20 : f32 to vector<4x256xf32>
    %22 = arith.maximumf %20, %21 : vector<4x256xf32>
    %c0_21 = arith.constant 0 : index
    %c0_22 = arith.constant 0 : index
    %23 = vector.load %arg11[%c0_21, %c0_22] : memref<256x32xf32, #tpu.memory_space<vmem>>, vector<256x32xf32>
    %cst_23 = arith.constant dense<0.000000e+00> : vector<4x32xf32>
    %24 = tpu.matmul %22, %23, %cst_23 {dimension_numbers = #tpu.dot_dimension_numbers<[1], [0], [0], [1], [0, 0, 1, 1], [], []>} : vector<4x256xf32>, vector<256x32xf32>, vector<4x32xf32> -> vector<4x32xf32>
    %c0_24 = arith.constant 0 : index
    %c0_25 = arith.constant 0 : index
    %25 = vector.load %arg12[%c0_24, %c0_25] : memref<1x32xf32, #tpu.memory_space<vmem>>, vector<1x32xf32>
    %26 = vector.broadcast %25 : vector<1x32xf32> to vector<4x32xf32>
    %27 = arith.addf %24, %26 : vector<4x32xf32>
    %c0_26 = arith.constant 0 : index
    %c0_27 = arith.constant 0 : index
    %c0_28 = arith.constant 0 : index
    %28 = vector.load %arg3[%c0_26, %c0_27, %c0_28] : memref<1x4x6xf32, #tpu.memory_space<vmem>>, vector<1x4x6xf32>
    %29 = vector.shape_cast %28 : vector<1x4x6xf32> to vector<4x6xf32>
    %c0_29 = arith.constant 0 : index
    %c0_30 = arith.constant 0 : index
    %30 = vector.load %arg13[%c0_29, %c0_30] : memref<6x256xf32, #tpu.memory_space<vmem>>, vector<6x256xf32>
    %cst_31 = arith.constant dense<0.000000e+00> : vector<4x256xf32>
    %31 = tpu.matmul %29, %30, %cst_31 {dimension_numbers = #tpu.dot_dimension_numbers<[1], [0], [0], [1], [0, 0, 1, 1], [], []>} : vector<4x6xf32>, vector<6x256xf32>, vector<4x256xf32> -> vector<4x256xf32>
    %c0_32 = arith.constant 0 : index
    %c0_33 = arith.constant 0 : index
    %32 = vector.load %arg14[%c0_32, %c0_33] : memref<1x256xf32, #tpu.memory_space<vmem>>, vector<1x256xf32>
    %33 = vector.broadcast %32 : vector<1x256xf32> to vector<4x256xf32>
    %34 = arith.addf %31, %33 : vector<4x256xf32>
    %cst_34 = arith.constant 0.000000e+00 : f32
    %35 = vector.broadcast %cst_34 : f32 to vector<4x256xf32>
    %36 = arith.maximumf %34, %35 : vector<4x256xf32>
    %c0_35 = arith.constant 0 : index
    %c0_36 = arith.constant 0 : index
    %37 = vector.load %arg15[%c0_35, %c0_36] : memref<256x32xf32, #tpu.memory_space<vmem>>, vector<256x32xf32>
    %cst_37 = arith.constant dense<0.000000e+00> : vector<4x32xf32>
    %38 = tpu.matmul %36, %37, %cst_37 {dimension_numbers = #tpu.dot_dimension_numbers<[1], [0], [0], [1], [0, 0, 1, 1], [], []>} : vector<4x256xf32>, vector<256x32xf32>, vector<4x32xf32> -> vector<4x32xf32>
    %c0_38 = arith.constant 0 : index
    %c0_39 = arith.constant 0 : index
    %39 = vector.load %arg16[%c0_38, %c0_39] : memref<1x32xf32, #tpu.memory_space<vmem>>, vector<1x32xf32>
    %40 = vector.broadcast %39 : vector<1x32xf32> to vector<4x32xf32>
    %41 = arith.addf %38, %40 : vector<4x32xf32>
    %42 = tpu.iota {dimensions = array<i32: 0>} : vector<4x32xi32>
    %c3_i32 = arith.constant 3 : i32
    %43 = vector.broadcast %c3_i32 : i32 to vector<4x32xi32>
    %44 = arith.cmpi slt, %42, %43 : vector<4x32xi32>
    %cst_40 = arith.constant 0.000000e+00 : f32
    %45 = vector.broadcast %cst_40 : f32 to vector<4x32xf32>
    %46 = arith.select %44, %41, %45 : vector<4x32xi1>, vector<4x32xf32>
    %47 = tpu.iota {dimensions = array<i32: 0>} : vector<12x4xi32>
    %48 = tpu.iota {dimensions = array<i32: 1>} : vector<12x4xi32>
    %c3_i32_41 = arith.constant 3 : i32
    %49 = vector.broadcast %c3_i32_41 : i32 to vector<12x4xi32>
    %50 = arith.muli %49, %48 : vector<12x4xi32>
    %51 = arith.cmpi eq, %47, %50 : vector<12x4xi32>
    %52 = arith.extui %51 : vector<12x4xi1> to vector<12x4xi32>
    %53 = arith.sitofp %52 : vector<12x4xi32> to vector<12x4xf32>
    %cst_42 = arith.constant dense<0.000000e+00> : vector<12x32xf32>
    %54 = tpu.matmul %53, %13, %cst_42 {dimension_numbers = #tpu.dot_dimension_numbers<[1], [0], [0], [1], [0, 0, 1, 1], [], []>} : vector<12x4xf32>, vector<4x32xf32>, vector<12x32xf32> -> vector<12x32xf32>
    %c3_i32_43 = arith.constant 3 : i32
    %55 = vector.broadcast %c3_i32_43 : i32 to vector<12x4xi32>
    %56 = arith.muli %55, %48 : vector<12x4xi32>
    %c1_i32 = arith.constant 1 : i32
    %57 = vector.broadcast %c1_i32 : i32 to vector<12x4xi32>
    %58 = arith.addi %56, %57 : vector<12x4xi32>
    %59 = arith.cmpi eq, %47, %58 : vector<12x4xi32>
    %60 = arith.extui %59 : vector<12x4xi1> to vector<12x4xi32>
    %61 = arith.sitofp %60 : vector<12x4xi32> to vector<12x4xf32>
    %cst_44 = arith.constant dense<0.000000e+00> : vector<12x32xf32>
    %62 = tpu.matmul %61, %27, %cst_44 {dimension_numbers = #tpu.dot_dimension_numbers<[1], [0], [0], [1], [0, 0, 1, 1], [], []>} : vector<12x4xf32>, vector<4x32xf32>, vector<12x32xf32> -> vector<12x32xf32>
    %63 = arith.addf %54, %62 : vector<12x32xf32>
    %c3_i32_45 = arith.constant 3 : i32
    %64 = vector.broadcast %c3_i32_45 : i32 to vector<12x4xi32>
    %65 = arith.muli %64, %48 : vector<12x4xi32>
    %c2_i32 = arith.constant 2 : i32
    %66 = vector.broadcast %c2_i32 : i32 to vector<12x4xi32>
    %67 = arith.addi %65, %66 : vector<12x4xi32>
    %68 = arith.cmpi eq, %47, %67 : vector<12x4xi32>
    %69 = arith.extui %68 : vector<12x4xi1> to vector<12x4xi32>
    %70 = arith.sitofp %69 : vector<12x4xi32> to vector<12x4xf32>
    %cst_46 = arith.constant dense<0.000000e+00> : vector<12x32xf32>
    %71 = tpu.matmul %70, %46, %cst_46 {dimension_numbers = #tpu.dot_dimension_numbers<[1], [0], [0], [1], [0, 0, 1, 1], [], []>} : vector<12x4xf32>, vector<4x32xf32>, vector<12x32xf32> -> vector<12x32xf32>
    %72 = arith.addf %63, %71 : vector<12x32xf32>
    %c0_47 = arith.constant 0 : index
    %c0_48 = arith.constant 0 : index
    %c0_49 = arith.constant 0 : index
    %73 = vector.load %arg4[%c0_47, %c0_48, %c0_49] : memref<1x12x32xf32, #tpu.memory_space<vmem>>, vector<1x12x32xf32>
    %74 = vector.shape_cast %73 : vector<1x12x32xf32> to vector<12x32xf32>
    %75 = arith.addf %72, %74 : vector<12x32xf32>
    %76 = tpu.iota {dimensions = array<i32: 0>} : vector<12x12xi32>
    %77 = tpu.iota {dimensions = array<i32: 1>} : vector<12x12xi32>
    %78 = arith.cmpi sle, %77, %76 : vector<12x12xi32>
    %c0_50 = arith.constant 0 : index
    %c0_51 = arith.constant 0 : index
    %c0_52 = arith.constant 0 : index
    %79 = vector.load %arg17[%c0_50, %c0_51, %c0_52] : memref<2x1x32xf32, #tpu.memory_space<vmem>>, vector<1x1x32xf32>
    %80 = vector.shape_cast %79 : vector<1x1x32xf32> to vector<1x32xf32>
    %c0_53 = arith.constant 0 : index
    %c0_54 = arith.constant 0 : index
    %c0_55 = arith.constant 0 : index
    %81 = vector.load %arg18[%c0_53, %c0_54, %c0_55] : memref<2x1x32xf32, #tpu.memory_space<vmem>>, vector<1x1x32xf32>
    %82 = vector.shape_cast %81 : vector<1x1x32xf32> to vector<1x32xf32>
    %cst_56 = arith.constant dense<0.000000e+00> : vector<12xf32>
    %83 = vector.multi_reduction <add>, %75, %cst_56 [1] : vector<12x32xf32> to vector<12xf32>
    %84 = vector.shape_cast %83 : vector<12xf32> to vector<12x1xf32>
    %cst_57 = arith.constant 3.200000e+01 : f32
    %85 = vector.broadcast %cst_57 : f32 to vector<12x1xf32>
    %86 = arith.divf %84, %85 : vector<12x1xf32>
    %87 = vector.broadcast %86 : vector<12x1xf32> to vector<12x32xf32>
    %88 = arith.subf %75, %87 : vector<12x32xf32>
    %89 = arith.mulf %88, %88 : vector<12x32xf32>
    %cst_58 = arith.constant dense<0.000000e+00> : vector<12xf32>
    %90 = vector.multi_reduction <add>, %89, %cst_58 [1] : vector<12x32xf32> to vector<12xf32>
    %91 = vector.shape_cast %90 : vector<12xf32> to vector<12x1xf32>
    %cst_59 = arith.constant 3.200000e+01 : f32
    %92 = vector.broadcast %cst_59 : f32 to vector<12x1xf32>
    %93 = arith.divf %91, %92 : vector<12x1xf32>
    %94 = vector.broadcast %86 : vector<12x1xf32> to vector<12x32xf32>
    %95 = arith.subf %75, %94 : vector<12x32xf32>
    %cst_60 = arith.constant 9.99999974E-6 : f32
    %96 = vector.broadcast %cst_60 : f32 to vector<12x1xf32>
    %97 = arith.addf %93, %96 : vector<12x1xf32>
    %98 = math.rsqrt %97 : vector<12x1xf32>
    %99 = vector.broadcast %98 : vector<12x1xf32> to vector<12x32xf32>
    %100 = arith.mulf %95, %99 : vector<12x32xf32>
    %101 = vector.broadcast %80 : vector<1x32xf32> to vector<12x32xf32>
    %102 = arith.mulf %100, %101 : vector<12x32xf32>
    %103 = vector.broadcast %82 : vector<1x32xf32> to vector<12x32xf32>
    %104 = arith.addf %102, %103 : vector<12x32xf32>
    %cst_61 = arith.constant 0.000000e+00 : f32
    %105 = vector.broadcast %cst_61 : f32 to vector<12x32xf32>
    %c0_62 = arith.constant 0 : index
    %c0_63 = arith.constant 0 : index
    %c0_64 = arith.constant 0 : index
    %106 = vector.load %arg19[%c0_62, %c0_63, %c0_64] : memref<8x32x8xf32, #tpu.memory_space<vmem>>, vector<1x32x8xf32>
    %107 = vector.shape_cast %106 : vector<1x32x8xf32> to vector<32x8xf32>
    %cst_65 = arith.constant dense<0.000000e+00> : vector<12x8xf32>
    %108 = tpu.matmul %104, %107, %cst_65 {dimension_numbers = #tpu.dot_dimension_numbers<[1], [0], [0], [1], [0, 0, 1, 1], [], []>} : vector<12x32xf32>, vector<32x8xf32>, vector<12x8xf32> -> vector<12x8xf32>
    %c0_66 = arith.constant 0 : index
    %c0_67 = arith.constant 0 : index
    %c0_68 = arith.constant 0 : index
    %109 = vector.load %arg20[%c0_66, %c0_67, %c0_68] : memref<8x1x8xf32, #tpu.memory_space<vmem>>, vector<1x1x8xf32>
    %110 = vector.shape_cast %109 : vector<1x1x8xf32> to vector<1x8xf32>
    %111 = vector.broadcast %110 : vector<1x8xf32> to vector<12x8xf32>
    %112 = arith.addf %108, %111 : vector<12x8xf32>
    %c0_69 = arith.constant 0 : index
    %c0_70 = arith.constant 0 : index
    %c0_71 = arith.constant 0 : index
    %113 = vector.load %arg21[%c0_69, %c0_70, %c0_71] : memref<8x32x8xf32, #tpu.memory_space<vmem>>, vector<1x32x8xf32>
    %114 = vector.shape_cast %113 : vector<1x32x8xf32> to vector<32x8xf32>
    %cst_72 = arith.constant dense<0.000000e+00> : vector<12x8xf32>
    %115 = tpu.matmul %104, %114, %cst_72 {dimension_numbers = #tpu.dot_dimension_numbers<[1], [0], [0], [1], [0, 0, 1, 1], [], []>} : vector<12x32xf32>, vector<32x8xf32>, vector<12x8xf32> -> vector<12x8xf32>
    %c0_73 = arith.constant 0 : index
    %c0_74 = arith.constant 0 : index
    %c0_75 = arith.constant 0 : index
    %116 = vector.load %arg22[%c0_73, %c0_74, %c0_75] : memref<8x1x8xf32, #tpu.memory_space<vmem>>, vector<1x1x8xf32>
    %117 = vector.shape_cast %116 : vector<1x1x8xf32> to vector<1x8xf32>
    %118 = vector.broadcast %117 : vector<1x8xf32> to vector<12x8xf32>
    %119 = arith.addf %115, %118 : vector<12x8xf32>
    %c0_76 = arith.constant 0 : index
    %c0_77 = arith.constant 0 : index
    %c0_78 = arith.constant 0 : index
    %120 = vector.load %arg23[%c0_76, %c0_77, %c0_78] : memref<8x32x8xf32, #tpu.memory_space<vmem>>, vector<1x32x8xf32>
    %121 = vector.shape_cast %120 : vector<1x32x8xf32> to vector<32x8xf32>
    %cst_79 = arith.constant dense<0.000000e+00> : vector<12x8xf32>
    %122 = tpu.matmul %104, %121, %cst_79 {dimension_numbers = #tpu.dot_dimension_numbers<[1], [0], [0], [1], [0, 0, 1, 1], [], []>} : vector<12x32xf32>, vector<32x8xf32>, vector<12x8xf32> -> vector<12x8xf32>
    %c0_80 = arith.constant 0 : index
    %c0_81 = arith.constant 0 : index
    %c0_82 = arith.constant 0 : index
    %123 = vector.load %arg24[%c0_80, %c0_81, %c0_82] : memref<8x1x8xf32, #tpu.memory_space<vmem>>, vector<1x1x8xf32>
    %124 = vector.shape_cast %123 : vector<1x1x8xf32> to vector<1x8xf32>
    %125 = vector.broadcast %124 : vector<1x8xf32> to vector<12x8xf32>
    %126 = arith.addf %122, %125 : vector<12x8xf32>
    %cst_83 = arith.constant dense<0.000000e+00> : vector<12x12xf32>
    %127 = tpu.matmul %112, %119, %cst_83 {dimension_numbers = #tpu.dot_dimension_numbers<[1], [1], [0], [0], [0, 0, 1, 0], [], []>} : vector<12x8xf32>, vector<12x8xf32>, vector<12x12xf32> -> vector<12x12xf32>
    %cst_84 = arith.constant 0.353553385 : f32
    %128 = vector.broadcast %cst_84 : f32 to vector<12x12xf32>
    %129 = arith.mulf %127, %128 : vector<12x12xf32>
    %cst_85 = arith.constant -1.000000e+30 : f32
    %130 = vector.broadcast %cst_85 : f32 to vector<12x12xf32>
    %131 = arith.select %78, %129, %130 : vector<12x12xi1>, vector<12x12xf32>
    %cst_86 = arith.constant dense<0xFF800000> : vector<12xf32>
    %132 = vector.multi_reduction <maximumf>, %131, %cst_86 [1] : vector<12x12xf32> to vector<12xf32>
    %133 = vector.shape_cast %132 : vector<12xf32> to vector<12x1xf32>
    %134 = vector.broadcast %133 : vector<12x1xf32> to vector<12x12xf32>
    %135 = arith.subf %131, %134 : vector<12x12xf32>
    %136 = math.exp %135 : vector<12x12xf32>
    %cst_87 = arith.constant dense<0.000000e+00> : vector<12xf32>
    %137 = vector.multi_reduction <add>, %136, %cst_87 [1] : vector<12x12xf32> to vector<12xf32>
    %138 = vector.shape_cast %137 : vector<12xf32> to vector<12x1xf32>
    %139 = vector.broadcast %138 : vector<12x1xf32> to vector<12x12xf32>
    %140 = arith.divf %136, %139 : vector<12x12xf32>
    %cst_88 = arith.constant dense<0.000000e+00> : vector<12x8xf32>
    %141 = tpu.matmul %140, %126, %cst_88 {dimension_numbers = #tpu.dot_dimension_numbers<[1], [0], [0], [1], [0, 0, 1, 1], [], []>} : vector<12x12xf32>, vector<12x8xf32>, vector<12x8xf32> -> vector<12x8xf32>
    %c0_89 = arith.constant 0 : index
    %c0_90 = arith.constant 0 : index
    %c0_91 = arith.constant 0 : index
    %142 = vector.load %arg25[%c0_89, %c0_90, %c0_91] : memref<8x8x32xf32, #tpu.memory_space<vmem>>, vector<1x8x32xf32>
    %143 = vector.shape_cast %142 : vector<1x8x32xf32> to vector<8x32xf32>
    %cst_92 = arith.constant dense<0.000000e+00> : vector<12x32xf32>
    %144 = tpu.matmul %141, %143, %cst_92 {dimension_numbers = #tpu.dot_dimension_numbers<[1], [0], [0], [1], [0, 0, 1, 1], [], []>} : vector<12x8xf32>, vector<8x32xf32>, vector<12x32xf32> -> vector<12x32xf32>
    %145 = arith.addf %105, %144 : vector<12x32xf32>
    %c1 = arith.constant 1 : index
    %c0_93 = arith.constant 0 : index
    %c0_94 = arith.constant 0 : index
    %146 = vector.load %arg19[%c1, %c0_93, %c0_94] : memref<8x32x8xf32, #tpu.memory_space<vmem>>, vector<1x32x8xf32>
    %147 = vector.shape_cast %146 : vector<1x32x8xf32> to vector<32x8xf32>
    %cst_95 = arith.constant dense<0.000000e+00> : vector<12x8xf32>
    %148 = tpu.matmul %104, %147, %cst_95 {dimension_numbers = #tpu.dot_dimension_numbers<[1], [0], [0], [1], [0, 0, 1, 1], [], []>} : vector<12x32xf32>, vector<32x8xf32>, vector<12x8xf32> -> vector<12x8xf32>
    %c1_96 = arith.constant 1 : index
    %c0_97 = arith.constant 0 : index
    %c0_98 = arith.constant 0 : index
    %149 = vector.load %arg20[%c1_96, %c0_97, %c0_98] : memref<8x1x8xf32, #tpu.memory_space<vmem>>, vector<1x1x8xf32>
    %150 = vector.shape_cast %149 : vector<1x1x8xf32> to vector<1x8xf32>
    %151 = vector.broadcast %150 : vector<1x8xf32> to vector<12x8xf32>
    %152 = arith.addf %148, %151 : vector<12x8xf32>
    %c1_99 = arith.constant 1 : index
    %c0_100 = arith.constant 0 : index
    %c0_101 = arith.constant 0 : index
    %153 = vector.load %arg21[%c1_99, %c0_100, %c0_101] : memref<8x32x8xf32, #tpu.memory_space<vmem>>, vector<1x32x8xf32>
    %154 = vector.shape_cast %153 : vector<1x32x8xf32> to vector<32x8xf32>
    %cst_102 = arith.constant dense<0.000000e+00> : vector<12x8xf32>
    %155 = tpu.matmul %104, %154, %cst_102 {dimension_numbers = #tpu.dot_dimension_numbers<[1], [0], [0], [1], [0, 0, 1, 1], [], []>} : vector<12x32xf32>, vector<32x8xf32>, vector<12x8xf32> -> vector<12x8xf32>
    %c1_103 = arith.constant 1 : index
    %c0_104 = arith.constant 0 : index
    %c0_105 = arith.constant 0 : index
    %156 = vector.load %arg22[%c1_103, %c0_104, %c0_105] : memref<8x1x8xf32, #tpu.memory_space<vmem>>, vector<1x1x8xf32>
    %157 = vector.shape_cast %156 : vector<1x1x8xf32> to vector<1x8xf32>
    %158 = vector.broadcast %157 : vector<1x8xf32> to vector<12x8xf32>
    %159 = arith.addf %155, %158 : vector<12x8xf32>
    %c1_106 = arith.constant 1 : index
    %c0_107 = arith.constant 0 : index
    %c0_108 = arith.constant 0 : index
    %160 = vector.load %arg23[%c1_106, %c0_107, %c0_108] : memref<8x32x8xf32, #tpu.memory_space<vmem>>, vector<1x32x8xf32>
    %161 = vector.shape_cast %160 : vector<1x32x8xf32> to vector<32x8xf32>
    %cst_109 = arith.constant dense<0.000000e+00> : vector<12x8xf32>
    %162 = tpu.matmul %104, %161, %cst_109 {dimension_numbers = #tpu.dot_dimension_numbers<[1], [0], [0], [1], [0, 0, 1, 1], [], []>} : vector<12x32xf32>, vector<32x8xf32>, vector<12x8xf32> -> vector<12x8xf32>
    %c1_110 = arith.constant 1 : index
    %c0_111 = arith.constant 0 : index
    %c0_112 = arith.constant 0 : index
    %163 = vector.load %arg24[%c1_110, %c0_111, %c0_112] : memref<8x1x8xf32, #tpu.memory_space<vmem>>, vector<1x1x8xf32>
    %164 = vector.shape_cast %163 : vector<1x1x8xf32> to vector<1x8xf32>
    %165 = vector.broadcast %164 : vector<1x8xf32> to vector<12x8xf32>
    %166 = arith.addf %162, %165 : vector<12x8xf32>
    %cst_113 = arith.constant dense<0.000000e+00> : vector<12x12xf32>
    %167 = tpu.matmul %152, %159, %cst_113 {dimension_numbers = #tpu.dot_dimension_numbers<[1], [1], [0], [0], [0, 0, 1, 0], [], []>} : vector<12x8xf32>, vector<12x8xf32>, vector<12x12xf32> -> vector<12x12xf32>
    %cst_114 = arith.constant 0.353553385 : f32
    %168 = vector.broadcast %cst_114 : f32 to vector<12x12xf32>
    %169 = arith.mulf %167, %168 : vector<12x12xf32>
    %cst_115 = arith.constant -1.000000e+30 : f32
    %170 = vector.broadcast %cst_115 : f32 to vector<12x12xf32>
    %171 = arith.select %78, %169, %170 : vector<12x12xi1>, vector<12x12xf32>
    %cst_116 = arith.constant dense<0xFF800000> : vector<12xf32>
    %172 = vector.multi_reduction <maximumf>, %171, %cst_116 [1] : vector<12x12xf32> to vector<12xf32>
    %173 = vector.shape_cast %172 : vector<12xf32> to vector<12x1xf32>
    %174 = vector.broadcast %173 : vector<12x1xf32> to vector<12x12xf32>
    %175 = arith.subf %171, %174 : vector<12x12xf32>
    %176 = math.exp %175 : vector<12x12xf32>
    %cst_117 = arith.constant dense<0.000000e+00> : vector<12xf32>
    %177 = vector.multi_reduction <add>, %176, %cst_117 [1] : vector<12x12xf32> to vector<12xf32>
    %178 = vector.shape_cast %177 : vector<12xf32> to vector<12x1xf32>
    %179 = vector.broadcast %178 : vector<12x1xf32> to vector<12x12xf32>
    %180 = arith.divf %176, %179 : vector<12x12xf32>
    %cst_118 = arith.constant dense<0.000000e+00> : vector<12x8xf32>
    %181 = tpu.matmul %180, %166, %cst_118 {dimension_numbers = #tpu.dot_dimension_numbers<[1], [0], [0], [1], [0, 0, 1, 1], [], []>} : vector<12x12xf32>, vector<12x8xf32>, vector<12x8xf32> -> vector<12x8xf32>
    %c1_119 = arith.constant 1 : index
    %c0_120 = arith.constant 0 : index
    %c0_121 = arith.constant 0 : index
    %182 = vector.load %arg25[%c1_119, %c0_120, %c0_121] : memref<8x8x32xf32, #tpu.memory_space<vmem>>, vector<1x8x32xf32>
    %183 = vector.shape_cast %182 : vector<1x8x32xf32> to vector<8x32xf32>
    %cst_122 = arith.constant dense<0.000000e+00> : vector<12x32xf32>
    %184 = tpu.matmul %181, %183, %cst_122 {dimension_numbers = #tpu.dot_dimension_numbers<[1], [0], [0], [1], [0, 0, 1, 1], [], []>} : vector<12x8xf32>, vector<8x32xf32>, vector<12x32xf32> -> vector<12x32xf32>
    %185 = arith.addf %145, %184 : vector<12x32xf32>
    %c2 = arith.constant 2 : index
    %c0_123 = arith.constant 0 : index
    %c0_124 = arith.constant 0 : index
    %186 = vector.load %arg19[%c2, %c0_123, %c0_124] : memref<8x32x8xf32, #tpu.memory_space<vmem>>, vector<1x32x8xf32>
    %187 = vector.shape_cast %186 : vector<1x32x8xf32> to vector<32x8xf32>
    %cst_125 = arith.constant dense<0.000000e+00> : vector<12x8xf32>
    %188 = tpu.matmul %104, %187, %cst_125 {dimension_numbers = #tpu.dot_dimension_numbers<[1], [0], [0], [1], [0, 0, 1, 1], [], []>} : vector<12x32xf32>, vector<32x8xf32>, vector<12x8xf32> -> vector<12x8xf32>
    %c2_126 = arith.constant 2 : index
    %c0_127 = arith.constant 0 : index
    %c0_128 = arith.constant 0 : index
    %189 = vector.load %arg20[%c2_126, %c0_127, %c0_128] : memref<8x1x8xf32, #tpu.memory_space<vmem>>, vector<1x1x8xf32>
    %190 = vector.shape_cast %189 : vector<1x1x8xf32> to vector<1x8xf32>
    %191 = vector.broadcast %190 : vector<1x8xf32> to vector<12x8xf32>
    %192 = arith.addf %188, %191 : vector<12x8xf32>
    %c2_129 = arith.constant 2 : index
    %c0_130 = arith.constant 0 : index
    %c0_131 = arith.constant 0 : index
    %193 = vector.load %arg21[%c2_129, %c0_130, %c0_131] : memref<8x32x8xf32, #tpu.memory_space<vmem>>, vector<1x32x8xf32>
    %194 = vector.shape_cast %193 : vector<1x32x8xf32> to vector<32x8xf32>
    %cst_132 = arith.constant dense<0.000000e+00> : vector<12x8xf32>
    %195 = tpu.matmul %104, %194, %cst_132 {dimension_numbers = #tpu.dot_dimension_numbers<[1], [0], [0], [1], [0, 0, 1, 1], [], []>} : vector<12x32xf32>, vector<32x8xf32>, vector<12x8xf32> -> vector<12x8xf32>
    %c2_133 = arith.constant 2 : index
    %c0_134 = arith.constant 0 : index
    %c0_135 = arith.constant 0 : index
    %196 = vector.load %arg22[%c2_133, %c0_134, %c0_135] : memref<8x1x8xf32, #tpu.memory_space<vmem>>, vector<1x1x8xf32>
    %197 = vector.shape_cast %196 : vector<1x1x8xf32> to vector<1x8xf32>
    %198 = vector.broadcast %197 : vector<1x8xf32> to vector<12x8xf32>
    %199 = arith.addf %195, %198 : vector<12x8xf32>
    %c2_136 = arith.constant 2 : index
    %c0_137 = arith.constant 0 : index
    %c0_138 = arith.constant 0 : index
    %200 = vector.load %arg23[%c2_136, %c0_137, %c0_138] : memref<8x32x8xf32, #tpu.memory_space<vmem>>, vector<1x32x8xf32>
    %201 = vector.shape_cast %200 : vector<1x32x8xf32> to vector<32x8xf32>
    %cst_139 = arith.constant dense<0.000000e+00> : vector<12x8xf32>
    %202 = tpu.matmul %104, %201, %cst_139 {dimension_numbers = #tpu.dot_dimension_numbers<[1], [0], [0], [1], [0, 0, 1, 1], [], []>} : vector<12x32xf32>, vector<32x8xf32>, vector<12x8xf32> -> vector<12x8xf32>
    %c2_140 = arith.constant 2 : index
    %c0_141 = arith.constant 0 : index
    %c0_142 = arith.constant 0 : index
    %203 = vector.load %arg24[%c2_140, %c0_141, %c0_142] : memref<8x1x8xf32, #tpu.memory_space<vmem>>, vector<1x1x8xf32>
    %204 = vector.shape_cast %203 : vector<1x1x8xf32> to vector<1x8xf32>
    %205 = vector.broadcast %204 : vector<1x8xf32> to vector<12x8xf32>
    %206 = arith.addf %202, %205 : vector<12x8xf32>
    %cst_143 = arith.constant dense<0.000000e+00> : vector<12x12xf32>
    %207 = tpu.matmul %192, %199, %cst_143 {dimension_numbers = #tpu.dot_dimension_numbers<[1], [1], [0], [0], [0, 0, 1, 0], [], []>} : vector<12x8xf32>, vector<12x8xf32>, vector<12x12xf32> -> vector<12x12xf32>
    %cst_144 = arith.constant 0.353553385 : f32
    %208 = vector.broadcast %cst_144 : f32 to vector<12x12xf32>
    %209 = arith.mulf %207, %208 : vector<12x12xf32>
    %cst_145 = arith.constant -1.000000e+30 : f32
    %210 = vector.broadcast %cst_145 : f32 to vector<12x12xf32>
    %211 = arith.select %78, %209, %210 : vector<12x12xi1>, vector<12x12xf32>
    %cst_146 = arith.constant dense<0xFF800000> : vector<12xf32>
    %212 = vector.multi_reduction <maximumf>, %211, %cst_146 [1] : vector<12x12xf32> to vector<12xf32>
    %213 = vector.shape_cast %212 : vector<12xf32> to vector<12x1xf32>
    %214 = vector.broadcast %213 : vector<12x1xf32> to vector<12x12xf32>
    %215 = arith.subf %211, %214 : vector<12x12xf32>
    %216 = math.exp %215 : vector<12x12xf32>
    %cst_147 = arith.constant dense<0.000000e+00> : vector<12xf32>
    %217 = vector.multi_reduction <add>, %216, %cst_147 [1] : vector<12x12xf32> to vector<12xf32>
    %218 = vector.shape_cast %217 : vector<12xf32> to vector<12x1xf32>
    %219 = vector.broadcast %218 : vector<12x1xf32> to vector<12x12xf32>
    %220 = arith.divf %216, %219 : vector<12x12xf32>
    %cst_148 = arith.constant dense<0.000000e+00> : vector<12x8xf32>
    %221 = tpu.matmul %220, %206, %cst_148 {dimension_numbers = #tpu.dot_dimension_numbers<[1], [0], [0], [1], [0, 0, 1, 1], [], []>} : vector<12x12xf32>, vector<12x8xf32>, vector<12x8xf32> -> vector<12x8xf32>
    %c2_149 = arith.constant 2 : index
    %c0_150 = arith.constant 0 : index
    %c0_151 = arith.constant 0 : index
    %222 = vector.load %arg25[%c2_149, %c0_150, %c0_151] : memref<8x8x32xf32, #tpu.memory_space<vmem>>, vector<1x8x32xf32>
    %223 = vector.shape_cast %222 : vector<1x8x32xf32> to vector<8x32xf32>
    %cst_152 = arith.constant dense<0.000000e+00> : vector<12x32xf32>
    %224 = tpu.matmul %221, %223, %cst_152 {dimension_numbers = #tpu.dot_dimension_numbers<[1], [0], [0], [1], [0, 0, 1, 1], [], []>} : vector<12x8xf32>, vector<8x32xf32>, vector<12x32xf32> -> vector<12x32xf32>
    %225 = arith.addf %185, %224 : vector<12x32xf32>
    %c3 = arith.constant 3 : index
    %c0_153 = arith.constant 0 : index
    %c0_154 = arith.constant 0 : index
    %226 = vector.load %arg19[%c3, %c0_153, %c0_154] : memref<8x32x8xf32, #tpu.memory_space<vmem>>, vector<1x32x8xf32>
    %227 = vector.shape_cast %226 : vector<1x32x8xf32> to vector<32x8xf32>
    %cst_155 = arith.constant dense<0.000000e+00> : vector<12x8xf32>
    %228 = tpu.matmul %104, %227, %cst_155 {dimension_numbers = #tpu.dot_dimension_numbers<[1], [0], [0], [1], [0, 0, 1, 1], [], []>} : vector<12x32xf32>, vector<32x8xf32>, vector<12x8xf32> -> vector<12x8xf32>
    %c3_156 = arith.constant 3 : index
    %c0_157 = arith.constant 0 : index
    %c0_158 = arith.constant 0 : index
    %229 = vector.load %arg20[%c3_156, %c0_157, %c0_158] : memref<8x1x8xf32, #tpu.memory_space<vmem>>, vector<1x1x8xf32>
    %230 = vector.shape_cast %229 : vector<1x1x8xf32> to vector<1x8xf32>
    %231 = vector.broadcast %230 : vector<1x8xf32> to vector<12x8xf32>
    %232 = arith.addf %228, %231 : vector<12x8xf32>
    %c3_159 = arith.constant 3 : index
    %c0_160 = arith.constant 0 : index
    %c0_161 = arith.constant 0 : index
    %233 = vector.load %arg21[%c3_159, %c0_160, %c0_161] : memref<8x32x8xf32, #tpu.memory_space<vmem>>, vector<1x32x8xf32>
    %234 = vector.shape_cast %233 : vector<1x32x8xf32> to vector<32x8xf32>
    %cst_162 = arith.constant dense<0.000000e+00> : vector<12x8xf32>
    %235 = tpu.matmul %104, %234, %cst_162 {dimension_numbers = #tpu.dot_dimension_numbers<[1], [0], [0], [1], [0, 0, 1, 1], [], []>} : vector<12x32xf32>, vector<32x8xf32>, vector<12x8xf32> -> vector<12x8xf32>
    %c3_163 = arith.constant 3 : index
    %c0_164 = arith.constant 0 : index
    %c0_165 = arith.constant 0 : index
    %236 = vector.load %arg22[%c3_163, %c0_164, %c0_165] : memref<8x1x8xf32, #tpu.memory_space<vmem>>, vector<1x1x8xf32>
    %237 = vector.shape_cast %236 : vector<1x1x8xf32> to vector<1x8xf32>
    %238 = vector.broadcast %237 : vector<1x8xf32> to vector<12x8xf32>
    %239 = arith.addf %235, %238 : vector<12x8xf32>
    %c3_166 = arith.constant 3 : index
    %c0_167 = arith.constant 0 : index
    %c0_168 = arith.constant 0 : index
    %240 = vector.load %arg23[%c3_166, %c0_167, %c0_168] : memref<8x32x8xf32, #tpu.memory_space<vmem>>, vector<1x32x8xf32>
    %241 = vector.shape_cast %240 : vector<1x32x8xf32> to vector<32x8xf32>
    %cst_169 = arith.constant dense<0.000000e+00> : vector<12x8xf32>
    %242 = tpu.matmul %104, %241, %cst_169 {dimension_numbers = #tpu.dot_dimension_numbers<[1], [0], [0], [1], [0, 0, 1, 1], [], []>} : vector<12x32xf32>, vector<32x8xf32>, vector<12x8xf32> -> vector<12x8xf32>
    %c3_170 = arith.constant 3 : index
    %c0_171 = arith.constant 0 : index
    %c0_172 = arith.constant 0 : index
    %243 = vector.load %arg24[%c3_170, %c0_171, %c0_172] : memref<8x1x8xf32, #tpu.memory_space<vmem>>, vector<1x1x8xf32>
    %244 = vector.shape_cast %243 : vector<1x1x8xf32> to vector<1x8xf32>
    %245 = vector.broadcast %244 : vector<1x8xf32> to vector<12x8xf32>
    %246 = arith.addf %242, %245 : vector<12x8xf32>
    %cst_173 = arith.constant dense<0.000000e+00> : vector<12x12xf32>
    %247 = tpu.matmul %232, %239, %cst_173 {dimension_numbers = #tpu.dot_dimension_numbers<[1], [1], [0], [0], [0, 0, 1, 0], [], []>} : vector<12x8xf32>, vector<12x8xf32>, vector<12x12xf32> -> vector<12x12xf32>
    %cst_174 = arith.constant 0.353553385 : f32
    %248 = vector.broadcast %cst_174 : f32 to vector<12x12xf32>
    %249 = arith.mulf %247, %248 : vector<12x12xf32>
    %cst_175 = arith.constant -1.000000e+30 : f32
    %250 = vector.broadcast %cst_175 : f32 to vector<12x12xf32>
    %251 = arith.select %78, %249, %250 : vector<12x12xi1>, vector<12x12xf32>
    %cst_176 = arith.constant dense<0xFF800000> : vector<12xf32>
    %252 = vector.multi_reduction <maximumf>, %251, %cst_176 [1] : vector<12x12xf32> to vector<12xf32>
    %253 = vector.shape_cast %252 : vector<12xf32> to vector<12x1xf32>
    %254 = vector.broadcast %253 : vector<12x1xf32> to vector<12x12xf32>
    %255 = arith.subf %251, %254 : vector<12x12xf32>
    %256 = math.exp %255 : vector<12x12xf32>
    %cst_177 = arith.constant dense<0.000000e+00> : vector<12xf32>
    %257 = vector.multi_reduction <add>, %256, %cst_177 [1] : vector<12x12xf32> to vector<12xf32>
    %258 = vector.shape_cast %257 : vector<12xf32> to vector<12x1xf32>
    %259 = vector.broadcast %258 : vector<12x1xf32> to vector<12x12xf32>
    %260 = arith.divf %256, %259 : vector<12x12xf32>
    %cst_178 = arith.constant dense<0.000000e+00> : vector<12x8xf32>
    %261 = tpu.matmul %260, %246, %cst_178 {dimension_numbers = #tpu.dot_dimension_numbers<[1], [0], [0], [1], [0, 0, 1, 1], [], []>} : vector<12x12xf32>, vector<12x8xf32>, vector<12x8xf32> -> vector<12x8xf32>
    %c3_179 = arith.constant 3 : index
    %c0_180 = arith.constant 0 : index
    %c0_181 = arith.constant 0 : index
    %262 = vector.load %arg25[%c3_179, %c0_180, %c0_181] : memref<8x8x32xf32, #tpu.memory_space<vmem>>, vector<1x8x32xf32>
    %263 = vector.shape_cast %262 : vector<1x8x32xf32> to vector<8x32xf32>
    %cst_182 = arith.constant dense<0.000000e+00> : vector<12x32xf32>
    %264 = tpu.matmul %261, %263, %cst_182 {dimension_numbers = #tpu.dot_dimension_numbers<[1], [0], [0], [1], [0, 0, 1, 1], [], []>} : vector<12x8xf32>, vector<8x32xf32>, vector<12x32xf32> -> vector<12x32xf32>
    %265 = arith.addf %225, %264 : vector<12x32xf32>
    %266 = arith.addf %75, %265 : vector<12x32xf32>
    %c0_183 = arith.constant 0 : index
    %c0_184 = arith.constant 0 : index
    %c0_185 = arith.constant 0 : index
    %267 = vector.load %arg26[%c0_183, %c0_184, %c0_185] : memref<2x1x32xf32, #tpu.memory_space<vmem>>, vector<1x1x32xf32>
    %268 = vector.shape_cast %267 : vector<1x1x32xf32> to vector<1x32xf32>
    %269 = vector.broadcast %268 : vector<1x32xf32> to vector<12x32xf32>
    %270 = arith.addf %266, %269 : vector<12x32xf32>
    %c0_186 = arith.constant 0 : index
    %c0_187 = arith.constant 0 : index
    %c0_188 = arith.constant 0 : index
    %271 = vector.load %arg27[%c0_186, %c0_187, %c0_188] : memref<2x1x32xf32, #tpu.memory_space<vmem>>, vector<1x1x32xf32>
    %272 = vector.shape_cast %271 : vector<1x1x32xf32> to vector<1x32xf32>
    %c0_189 = arith.constant 0 : index
    %c0_190 = arith.constant 0 : index
    %c0_191 = arith.constant 0 : index
    %273 = vector.load %arg28[%c0_189, %c0_190, %c0_191] : memref<2x1x32xf32, #tpu.memory_space<vmem>>, vector<1x1x32xf32>
    %274 = vector.shape_cast %273 : vector<1x1x32xf32> to vector<1x32xf32>
    %cst_192 = arith.constant dense<0.000000e+00> : vector<12xf32>
    %275 = vector.multi_reduction <add>, %270, %cst_192 [1] : vector<12x32xf32> to vector<12xf32>
    %276 = vector.shape_cast %275 : vector<12xf32> to vector<12x1xf32>
    %cst_193 = arith.constant 3.200000e+01 : f32
    %277 = vector.broadcast %cst_193 : f32 to vector<12x1xf32>
    %278 = arith.divf %276, %277 : vector<12x1xf32>
    %279 = vector.broadcast %278 : vector<12x1xf32> to vector<12x32xf32>
    %280 = arith.subf %270, %279 : vector<12x32xf32>
    %281 = arith.mulf %280, %280 : vector<12x32xf32>
    %cst_194 = arith.constant dense<0.000000e+00> : vector<12xf32>
    %282 = vector.multi_reduction <add>, %281, %cst_194 [1] : vector<12x32xf32> to vector<12xf32>
    %283 = vector.shape_cast %282 : vector<12xf32> to vector<12x1xf32>
    %cst_195 = arith.constant 3.200000e+01 : f32
    %284 = vector.broadcast %cst_195 : f32 to vector<12x1xf32>
    %285 = arith.divf %283, %284 : vector<12x1xf32>
    %286 = vector.broadcast %278 : vector<12x1xf32> to vector<12x32xf32>
    %287 = arith.subf %270, %286 : vector<12x32xf32>
    %cst_196 = arith.constant 9.99999974E-6 : f32
    %288 = vector.broadcast %cst_196 : f32 to vector<12x1xf32>
    %289 = arith.addf %285, %288 : vector<12x1xf32>
    %290 = math.rsqrt %289 : vector<12x1xf32>
    %291 = vector.broadcast %290 : vector<12x1xf32> to vector<12x32xf32>
    %292 = arith.mulf %287, %291 : vector<12x32xf32>
    %293 = vector.broadcast %272 : vector<1x32xf32> to vector<12x32xf32>
    %294 = arith.mulf %292, %293 : vector<12x32xf32>
    %295 = vector.broadcast %274 : vector<1x32xf32> to vector<12x32xf32>
    %296 = arith.addf %294, %295 : vector<12x32xf32>
    %c0_197 = arith.constant 0 : index
    %c0_198 = arith.constant 0 : index
    %c0_199 = arith.constant 0 : index
    %297 = vector.load %arg29[%c0_197, %c0_198, %c0_199] : memref<2x32x128xf32, #tpu.memory_space<vmem>>, vector<1x32x128xf32>
    %298 = vector.shape_cast %297 : vector<1x32x128xf32> to vector<32x128xf32>
    %cst_200 = arith.constant dense<0.000000e+00> : vector<12x128xf32>
    %299 = tpu.matmul %296, %298, %cst_200 {dimension_numbers = #tpu.dot_dimension_numbers<[1], [0], [0], [1], [0, 0, 1, 1], [], []>} : vector<12x32xf32>, vector<32x128xf32>, vector<12x128xf32> -> vector<12x128xf32>
    %c0_201 = arith.constant 0 : index
    %c0_202 = arith.constant 0 : index
    %c0_203 = arith.constant 0 : index
    %300 = vector.load %arg30[%c0_201, %c0_202, %c0_203] : memref<2x1x128xf32, #tpu.memory_space<vmem>>, vector<1x1x128xf32>
    %301 = vector.shape_cast %300 : vector<1x1x128xf32> to vector<1x128xf32>
    %302 = vector.broadcast %301 : vector<1x128xf32> to vector<12x128xf32>
    %303 = arith.addf %299, %302 : vector<12x128xf32>
    %cst_204 = arith.constant 0.707106769 : f32
    %304 = vector.broadcast %cst_204 : f32 to vector<12x128xf32>
    %305 = arith.mulf %303, %304 : vector<12x128xf32>
    %306 = math.absf %305 : vector<12x128xf32>
    %cst_205 = arith.constant 0.327591091 : f32
    %307 = vector.broadcast %cst_205 : f32 to vector<12x128xf32>
    %308 = arith.mulf %307, %306 : vector<12x128xf32>
    %cst_206 = arith.constant 1.000000e+00 : f32
    %309 = vector.broadcast %cst_206 : f32 to vector<12x128xf32>
    %310 = arith.addf %309, %308 : vector<12x128xf32>
    %cst_207 = arith.constant 1.000000e+00 : f32
    %311 = vector.broadcast %cst_207 : f32 to vector<12x128xf32>
    %312 = arith.divf %311, %310 : vector<12x128xf32>
    %cst_208 = arith.constant 1.06140542 : f32
    %313 = vector.broadcast %cst_208 : f32 to vector<12x128xf32>
    %314 = arith.mulf %312, %313 : vector<12x128xf32>
    %cst_209 = arith.constant -1.45315206 : f32
    %315 = vector.broadcast %cst_209 : f32 to vector<12x128xf32>
    %316 = arith.addf %315, %314 : vector<12x128xf32>
    %317 = arith.mulf %312, %316 : vector<12x128xf32>
    %cst_210 = arith.constant 1.42141378 : f32
    %318 = vector.broadcast %cst_210 : f32 to vector<12x128xf32>
    %319 = arith.addf %318, %317 : vector<12x128xf32>
    %320 = arith.mulf %312, %319 : vector<12x128xf32>
    %cst_211 = arith.constant -0.284496725 : f32
    %321 = vector.broadcast %cst_211 : f32 to vector<12x128xf32>
    %322 = arith.addf %321, %320 : vector<12x128xf32>
    %323 = arith.mulf %312, %322 : vector<12x128xf32>
    %cst_212 = arith.constant 0.254829586 : f32
    %324 = vector.broadcast %cst_212 : f32 to vector<12x128xf32>
    %325 = arith.addf %324, %323 : vector<12x128xf32>
    %326 = arith.mulf %312, %325 : vector<12x128xf32>
    %cst_213 = arith.constant 0.000000e+00 : f32
    %327 = vector.broadcast %cst_213 : f32 to vector<12x128xf32>
    %328 = arith.subf %327, %306 : vector<12x128xf32>
    %329 = arith.mulf %328, %306 : vector<12x128xf32>
    %330 = math.exp %329 : vector<12x128xf32>
    %331 = arith.mulf %326, %330 : vector<12x128xf32>
    %cst_214 = arith.constant 1.000000e+00 : f32
    %332 = vector.broadcast %cst_214 : f32 to vector<12x128xf32>
    %333 = arith.subf %332, %331 : vector<12x128xf32>
    %cst_215 = arith.constant 0.000000e+00 : f32
    %334 = vector.broadcast %cst_215 : f32 to vector<12x128xf32>
    %335 = arith.cmpf oge, %305, %334 : vector<12x128xf32>
    %cst_216 = arith.constant 0.000000e+00 : f32
    %336 = vector.broadcast %cst_216 : f32 to vector<12x128xf32>
    %337 = arith.subf %336, %333 : vector<12x128xf32>
    %338 = arith.select %335, %333, %337 : vector<12x128xi1>, vector<12x128xf32>
    %cst_217 = arith.constant 5.000000e-01 : f32
    %339 = vector.broadcast %cst_217 : f32 to vector<12x128xf32>
    %340 = arith.mulf %339, %303 : vector<12x128xf32>
    %cst_218 = arith.constant 1.000000e+00 : f32
    %341 = vector.broadcast %cst_218 : f32 to vector<12x128xf32>
    %342 = arith.addf %341, %338 : vector<12x128xf32>
    %343 = arith.mulf %340, %342 : vector<12x128xf32>
    %c0_219 = arith.constant 0 : index
    %c0_220 = arith.constant 0 : index
    %c0_221 = arith.constant 0 : index
    %344 = vector.load %arg31[%c0_219, %c0_220, %c0_221] : memref<2x128x32xf32, #tpu.memory_space<vmem>>, vector<1x128x32xf32>
    %345 = vector.shape_cast %344 : vector<1x128x32xf32> to vector<128x32xf32>
    %cst_222 = arith.constant dense<0.000000e+00> : vector<12x32xf32>
    %346 = tpu.matmul %343, %345, %cst_222 {dimension_numbers = #tpu.dot_dimension_numbers<[1], [0], [0], [1], [0, 0, 1, 1], [], []>} : vector<12x128xf32>, vector<128x32xf32>, vector<12x32xf32> -> vector<12x32xf32>
    %c0_223 = arith.constant 0 : index
    %c0_224 = arith.constant 0 : index
    %c0_225 = arith.constant 0 : index
    %347 = vector.load %arg32[%c0_223, %c0_224, %c0_225] : memref<2x1x32xf32, #tpu.memory_space<vmem>>, vector<1x1x32xf32>
    %348 = vector.shape_cast %347 : vector<1x1x32xf32> to vector<1x32xf32>
    %349 = vector.broadcast %348 : vector<1x32xf32> to vector<12x32xf32>
    %350 = arith.addf %346, %349 : vector<12x32xf32>
    %351 = arith.addf %270, %350 : vector<12x32xf32>
    %c1_226 = arith.constant 1 : index
    %c0_227 = arith.constant 0 : index
    %c0_228 = arith.constant 0 : index
    %352 = vector.load %arg17[%c1_226, %c0_227, %c0_228] : memref<2x1x32xf32, #tpu.memory_space<vmem>>, vector<1x1x32xf32>
    %353 = vector.shape_cast %352 : vector<1x1x32xf32> to vector<1x32xf32>
    %c1_229 = arith.constant 1 : index
    %c0_230 = arith.constant 0 : index
    %c0_231 = arith.constant 0 : index
    %354 = vector.load %arg18[%c1_229, %c0_230, %c0_231] : memref<2x1x32xf32, #tpu.memory_space<vmem>>, vector<1x1x32xf32>
    %355 = vector.shape_cast %354 : vector<1x1x32xf32> to vector<1x32xf32>
    %cst_232 = arith.constant dense<0.000000e+00> : vector<12xf32>
    %356 = vector.multi_reduction <add>, %351, %cst_232 [1] : vector<12x32xf32> to vector<12xf32>
    %357 = vector.shape_cast %356 : vector<12xf32> to vector<12x1xf32>
    %cst_233 = arith.constant 3.200000e+01 : f32
    %358 = vector.broadcast %cst_233 : f32 to vector<12x1xf32>
    %359 = arith.divf %357, %358 : vector<12x1xf32>
    %360 = vector.broadcast %359 : vector<12x1xf32> to vector<12x32xf32>
    %361 = arith.subf %351, %360 : vector<12x32xf32>
    %362 = arith.mulf %361, %361 : vector<12x32xf32>
    %cst_234 = arith.constant dense<0.000000e+00> : vector<12xf32>
    %363 = vector.multi_reduction <add>, %362, %cst_234 [1] : vector<12x32xf32> to vector<12xf32>
    %364 = vector.shape_cast %363 : vector<12xf32> to vector<12x1xf32>
    %cst_235 = arith.constant 3.200000e+01 : f32
    %365 = vector.broadcast %cst_235 : f32 to vector<12x1xf32>
    %366 = arith.divf %364, %365 : vector<12x1xf32>
    %367 = vector.broadcast %359 : vector<12x1xf32> to vector<12x32xf32>
    %368 = arith.subf %351, %367 : vector<12x32xf32>
    %cst_236 = arith.constant 9.99999974E-6 : f32
    %369 = vector.broadcast %cst_236 : f32 to vector<12x1xf32>
    %370 = arith.addf %366, %369 : vector<12x1xf32>
    %371 = math.rsqrt %370 : vector<12x1xf32>
    %372 = vector.broadcast %371 : vector<12x1xf32> to vector<12x32xf32>
    %373 = arith.mulf %368, %372 : vector<12x32xf32>
    %374 = vector.broadcast %353 : vector<1x32xf32> to vector<12x32xf32>
    %375 = arith.mulf %373, %374 : vector<12x32xf32>
    %376 = vector.broadcast %355 : vector<1x32xf32> to vector<12x32xf32>
    %377 = arith.addf %375, %376 : vector<12x32xf32>
    %cst_237 = arith.constant 0.000000e+00 : f32
    %378 = vector.broadcast %cst_237 : f32 to vector<12x32xf32>
    %c4 = arith.constant 4 : index
    %c0_238 = arith.constant 0 : index
    %c0_239 = arith.constant 0 : index
    %379 = vector.load %arg19[%c4, %c0_238, %c0_239] : memref<8x32x8xf32, #tpu.memory_space<vmem>>, vector<1x32x8xf32>
    %380 = vector.shape_cast %379 : vector<1x32x8xf32> to vector<32x8xf32>
    %cst_240 = arith.constant dense<0.000000e+00> : vector<12x8xf32>
    %381 = tpu.matmul %377, %380, %cst_240 {dimension_numbers = #tpu.dot_dimension_numbers<[1], [0], [0], [1], [0, 0, 1, 1], [], []>} : vector<12x32xf32>, vector<32x8xf32>, vector<12x8xf32> -> vector<12x8xf32>
    %c4_241 = arith.constant 4 : index
    %c0_242 = arith.constant 0 : index
    %c0_243 = arith.constant 0 : index
    %382 = vector.load %arg20[%c4_241, %c0_242, %c0_243] : memref<8x1x8xf32, #tpu.memory_space<vmem>>, vector<1x1x8xf32>
    %383 = vector.shape_cast %382 : vector<1x1x8xf32> to vector<1x8xf32>
    %384 = vector.broadcast %383 : vector<1x8xf32> to vector<12x8xf32>
    %385 = arith.addf %381, %384 : vector<12x8xf32>
    %c4_244 = arith.constant 4 : index
    %c0_245 = arith.constant 0 : index
    %c0_246 = arith.constant 0 : index
    %386 = vector.load %arg21[%c4_244, %c0_245, %c0_246] : memref<8x32x8xf32, #tpu.memory_space<vmem>>, vector<1x32x8xf32>
    %387 = vector.shape_cast %386 : vector<1x32x8xf32> to vector<32x8xf32>
    %cst_247 = arith.constant dense<0.000000e+00> : vector<12x8xf32>
    %388 = tpu.matmul %377, %387, %cst_247 {dimension_numbers = #tpu.dot_dimension_numbers<[1], [0], [0], [1], [0, 0, 1, 1], [], []>} : vector<12x32xf32>, vector<32x8xf32>, vector<12x8xf32> -> vector<12x8xf32>
    %c4_248 = arith.constant 4 : index
    %c0_249 = arith.constant 0 : index
    %c0_250 = arith.constant 0 : index
    %389 = vector.load %arg22[%c4_248, %c0_249, %c0_250] : memref<8x1x8xf32, #tpu.memory_space<vmem>>, vector<1x1x8xf32>
    %390 = vector.shape_cast %389 : vector<1x1x8xf32> to vector<1x8xf32>
    %391 = vector.broadcast %390 : vector<1x8xf32> to vector<12x8xf32>
    %392 = arith.addf %388, %391 : vector<12x8xf32>
    %c4_251 = arith.constant 4 : index
    %c0_252 = arith.constant 0 : index
    %c0_253 = arith.constant 0 : index
    %393 = vector.load %arg23[%c4_251, %c0_252, %c0_253] : memref<8x32x8xf32, #tpu.memory_space<vmem>>, vector<1x32x8xf32>
    %394 = vector.shape_cast %393 : vector<1x32x8xf32> to vector<32x8xf32>
    %cst_254 = arith.constant dense<0.000000e+00> : vector<12x8xf32>
    %395 = tpu.matmul %377, %394, %cst_254 {dimension_numbers = #tpu.dot_dimension_numbers<[1], [0], [0], [1], [0, 0, 1, 1], [], []>} : vector<12x32xf32>, vector<32x8xf32>, vector<12x8xf32> -> vector<12x8xf32>
    %c4_255 = arith.constant 4 : index
    %c0_256 = arith.constant 0 : index
    %c0_257 = arith.constant 0 : index
    %396 = vector.load %arg24[%c4_255, %c0_256, %c0_257] : memref<8x1x8xf32, #tpu.memory_space<vmem>>, vector<1x1x8xf32>
    %397 = vector.shape_cast %396 : vector<1x1x8xf32> to vector<1x8xf32>
    %398 = vector.broadcast %397 : vector<1x8xf32> to vector<12x8xf32>
    %399 = arith.addf %395, %398 : vector<12x8xf32>
    %cst_258 = arith.constant dense<0.000000e+00> : vector<12x12xf32>
    %400 = tpu.matmul %385, %392, %cst_258 {dimension_numbers = #tpu.dot_dimension_numbers<[1], [1], [0], [0], [0, 0, 1, 0], [], []>} : vector<12x8xf32>, vector<12x8xf32>, vector<12x12xf32> -> vector<12x12xf32>
    %cst_259 = arith.constant 0.353553385 : f32
    %401 = vector.broadcast %cst_259 : f32 to vector<12x12xf32>
    %402 = arith.mulf %400, %401 : vector<12x12xf32>
    %cst_260 = arith.constant -1.000000e+30 : f32
    %403 = vector.broadcast %cst_260 : f32 to vector<12x12xf32>
    %404 = arith.select %78, %402, %403 : vector<12x12xi1>, vector<12x12xf32>
    %cst_261 = arith.constant dense<0xFF800000> : vector<12xf32>
    %405 = vector.multi_reduction <maximumf>, %404, %cst_261 [1] : vector<12x12xf32> to vector<12xf32>
    %406 = vector.shape_cast %405 : vector<12xf32> to vector<12x1xf32>
    %407 = vector.broadcast %406 : vector<12x1xf32> to vector<12x12xf32>
    %408 = arith.subf %404, %407 : vector<12x12xf32>
    %409 = math.exp %408 : vector<12x12xf32>
    %cst_262 = arith.constant dense<0.000000e+00> : vector<12xf32>
    %410 = vector.multi_reduction <add>, %409, %cst_262 [1] : vector<12x12xf32> to vector<12xf32>
    %411 = vector.shape_cast %410 : vector<12xf32> to vector<12x1xf32>
    %412 = vector.broadcast %411 : vector<12x1xf32> to vector<12x12xf32>
    %413 = arith.divf %409, %412 : vector<12x12xf32>
    %cst_263 = arith.constant dense<0.000000e+00> : vector<12x8xf32>
    %414 = tpu.matmul %413, %399, %cst_263 {dimension_numbers = #tpu.dot_dimension_numbers<[1], [0], [0], [1], [0, 0, 1, 1], [], []>} : vector<12x12xf32>, vector<12x8xf32>, vector<12x8xf32> -> vector<12x8xf32>
    %c4_264 = arith.constant 4 : index
    %c0_265 = arith.constant 0 : index
    %c0_266 = arith.constant 0 : index
    %415 = vector.load %arg25[%c4_264, %c0_265, %c0_266] : memref<8x8x32xf32, #tpu.memory_space<vmem>>, vector<1x8x32xf32>
    %416 = vector.shape_cast %415 : vector<1x8x32xf32> to vector<8x32xf32>
    %cst_267 = arith.constant dense<0.000000e+00> : vector<12x32xf32>
    %417 = tpu.matmul %414, %416, %cst_267 {dimension_numbers = #tpu.dot_dimension_numbers<[1], [0], [0], [1], [0, 0, 1, 1], [], []>} : vector<12x8xf32>, vector<8x32xf32>, vector<12x32xf32> -> vector<12x32xf32>
    %418 = arith.addf %378, %417 : vector<12x32xf32>
    %c5 = arith.constant 5 : index
    %c0_268 = arith.constant 0 : index
    %c0_269 = arith.constant 0 : index
    %419 = vector.load %arg19[%c5, %c0_268, %c0_269] : memref<8x32x8xf32, #tpu.memory_space<vmem>>, vector<1x32x8xf32>
    %420 = vector.shape_cast %419 : vector<1x32x8xf32> to vector<32x8xf32>
    %cst_270 = arith.constant dense<0.000000e+00> : vector<12x8xf32>
    %421 = tpu.matmul %377, %420, %cst_270 {dimension_numbers = #tpu.dot_dimension_numbers<[1], [0], [0], [1], [0, 0, 1, 1], [], []>} : vector<12x32xf32>, vector<32x8xf32>, vector<12x8xf32> -> vector<12x8xf32>
    %c5_271 = arith.constant 5 : index
    %c0_272 = arith.constant 0 : index
    %c0_273 = arith.constant 0 : index
    %422 = vector.load %arg20[%c5_271, %c0_272, %c0_273] : memref<8x1x8xf32, #tpu.memory_space<vmem>>, vector<1x1x8xf32>
    %423 = vector.shape_cast %422 : vector<1x1x8xf32> to vector<1x8xf32>
    %424 = vector.broadcast %423 : vector<1x8xf32> to vector<12x8xf32>
    %425 = arith.addf %421, %424 : vector<12x8xf32>
    %c5_274 = arith.constant 5 : index
    %c0_275 = arith.constant 0 : index
    %c0_276 = arith.constant 0 : index
    %426 = vector.load %arg21[%c5_274, %c0_275, %c0_276] : memref<8x32x8xf32, #tpu.memory_space<vmem>>, vector<1x32x8xf32>
    %427 = vector.shape_cast %426 : vector<1x32x8xf32> to vector<32x8xf32>
    %cst_277 = arith.constant dense<0.000000e+00> : vector<12x8xf32>
    %428 = tpu.matmul %377, %427, %cst_277 {dimension_numbers = #tpu.dot_dimension_numbers<[1], [0], [0], [1], [0, 0, 1, 1], [], []>} : vector<12x32xf32>, vector<32x8xf32>, vector<12x8xf32> -> vector<12x8xf32>
    %c5_278 = arith.constant 5 : index
    %c0_279 = arith.constant 0 : index
    %c0_280 = arith.constant 0 : index
    %429 = vector.load %arg22[%c5_278, %c0_279, %c0_280] : memref<8x1x8xf32, #tpu.memory_space<vmem>>, vector<1x1x8xf32>
    %430 = vector.shape_cast %429 : vector<1x1x8xf32> to vector<1x8xf32>
    %431 = vector.broadcast %430 : vector<1x8xf32> to vector<12x8xf32>
    %432 = arith.addf %428, %431 : vector<12x8xf32>
    %c5_281 = arith.constant 5 : index
    %c0_282 = arith.constant 0 : index
    %c0_283 = arith.constant 0 : index
    %433 = vector.load %arg23[%c5_281, %c0_282, %c0_283] : memref<8x32x8xf32, #tpu.memory_space<vmem>>, vector<1x32x8xf32>
    %434 = vector.shape_cast %433 : vector<1x32x8xf32> to vector<32x8xf32>
    %cst_284 = arith.constant dense<0.000000e+00> : vector<12x8xf32>
    %435 = tpu.matmul %377, %434, %cst_284 {dimension_numbers = #tpu.dot_dimension_numbers<[1], [0], [0], [1], [0, 0, 1, 1], [], []>} : vector<12x32xf32>, vector<32x8xf32>, vector<12x8xf32> -> vector<12x8xf32>
    %c5_285 = arith.constant 5 : index
    %c0_286 = arith.constant 0 : index
    %c0_287 = arith.constant 0 : index
    %436 = vector.load %arg24[%c5_285, %c0_286, %c0_287] : memref<8x1x8xf32, #tpu.memory_space<vmem>>, vector<1x1x8xf32>
    %437 = vector.shape_cast %436 : vector<1x1x8xf32> to vector<1x8xf32>
    %438 = vector.broadcast %437 : vector<1x8xf32> to vector<12x8xf32>
    %439 = arith.addf %435, %438 : vector<12x8xf32>
    %cst_288 = arith.constant dense<0.000000e+00> : vector<12x12xf32>
    %440 = tpu.matmul %425, %432, %cst_288 {dimension_numbers = #tpu.dot_dimension_numbers<[1], [1], [0], [0], [0, 0, 1, 0], [], []>} : vector<12x8xf32>, vector<12x8xf32>, vector<12x12xf32> -> vector<12x12xf32>
    %cst_289 = arith.constant 0.353553385 : f32
    %441 = vector.broadcast %cst_289 : f32 to vector<12x12xf32>
    %442 = arith.mulf %440, %441 : vector<12x12xf32>
    %cst_290 = arith.constant -1.000000e+30 : f32
    %443 = vector.broadcast %cst_290 : f32 to vector<12x12xf32>
    %444 = arith.select %78, %442, %443 : vector<12x12xi1>, vector<12x12xf32>
    %cst_291 = arith.constant dense<0xFF800000> : vector<12xf32>
    %445 = vector.multi_reduction <maximumf>, %444, %cst_291 [1] : vector<12x12xf32> to vector<12xf32>
    %446 = vector.shape_cast %445 : vector<12xf32> to vector<12x1xf32>
    %447 = vector.broadcast %446 : vector<12x1xf32> to vector<12x12xf32>
    %448 = arith.subf %444, %447 : vector<12x12xf32>
    %449 = math.exp %448 : vector<12x12xf32>
    %cst_292 = arith.constant dense<0.000000e+00> : vector<12xf32>
    %450 = vector.multi_reduction <add>, %449, %cst_292 [1] : vector<12x12xf32> to vector<12xf32>
    %451 = vector.shape_cast %450 : vector<12xf32> to vector<12x1xf32>
    %452 = vector.broadcast %451 : vector<12x1xf32> to vector<12x12xf32>
    %453 = arith.divf %449, %452 : vector<12x12xf32>
    %cst_293 = arith.constant dense<0.000000e+00> : vector<12x8xf32>
    %454 = tpu.matmul %453, %439, %cst_293 {dimension_numbers = #tpu.dot_dimension_numbers<[1], [0], [0], [1], [0, 0, 1, 1], [], []>} : vector<12x12xf32>, vector<12x8xf32>, vector<12x8xf32> -> vector<12x8xf32>
    %c5_294 = arith.constant 5 : index
    %c0_295 = arith.constant 0 : index
    %c0_296 = arith.constant 0 : index
    %455 = vector.load %arg25[%c5_294, %c0_295, %c0_296] : memref<8x8x32xf32, #tpu.memory_space<vmem>>, vector<1x8x32xf32>
    %456 = vector.shape_cast %455 : vector<1x8x32xf32> to vector<8x32xf32>
    %cst_297 = arith.constant dense<0.000000e+00> : vector<12x32xf32>
    %457 = tpu.matmul %454, %456, %cst_297 {dimension_numbers = #tpu.dot_dimension_numbers<[1], [0], [0], [1], [0, 0, 1, 1], [], []>} : vector<12x8xf32>, vector<8x32xf32>, vector<12x32xf32> -> vector<12x32xf32>
    %458 = arith.addf %418, %457 : vector<12x32xf32>
    %c6 = arith.constant 6 : index
    %c0_298 = arith.constant 0 : index
    %c0_299 = arith.constant 0 : index
    %459 = vector.load %arg19[%c6, %c0_298, %c0_299] : memref<8x32x8xf32, #tpu.memory_space<vmem>>, vector<1x32x8xf32>
    %460 = vector.shape_cast %459 : vector<1x32x8xf32> to vector<32x8xf32>
    %cst_300 = arith.constant dense<0.000000e+00> : vector<12x8xf32>
    %461 = tpu.matmul %377, %460, %cst_300 {dimension_numbers = #tpu.dot_dimension_numbers<[1], [0], [0], [1], [0, 0, 1, 1], [], []>} : vector<12x32xf32>, vector<32x8xf32>, vector<12x8xf32> -> vector<12x8xf32>
    %c6_301 = arith.constant 6 : index
    %c0_302 = arith.constant 0 : index
    %c0_303 = arith.constant 0 : index
    %462 = vector.load %arg20[%c6_301, %c0_302, %c0_303] : memref<8x1x8xf32, #tpu.memory_space<vmem>>, vector<1x1x8xf32>
    %463 = vector.shape_cast %462 : vector<1x1x8xf32> to vector<1x8xf32>
    %464 = vector.broadcast %463 : vector<1x8xf32> to vector<12x8xf32>
    %465 = arith.addf %461, %464 : vector<12x8xf32>
    %c6_304 = arith.constant 6 : index
    %c0_305 = arith.constant 0 : index
    %c0_306 = arith.constant 0 : index
    %466 = vector.load %arg21[%c6_304, %c0_305, %c0_306] : memref<8x32x8xf32, #tpu.memory_space<vmem>>, vector<1x32x8xf32>
    %467 = vector.shape_cast %466 : vector<1x32x8xf32> to vector<32x8xf32>
    %cst_307 = arith.constant dense<0.000000e+00> : vector<12x8xf32>
    %468 = tpu.matmul %377, %467, %cst_307 {dimension_numbers = #tpu.dot_dimension_numbers<[1], [0], [0], [1], [0, 0, 1, 1], [], []>} : vector<12x32xf32>, vector<32x8xf32>, vector<12x8xf32> -> vector<12x8xf32>
    %c6_308 = arith.constant 6 : index
    %c0_309 = arith.constant 0 : index
    %c0_310 = arith.constant 0 : index
    %469 = vector.load %arg22[%c6_308, %c0_309, %c0_310] : memref<8x1x8xf32, #tpu.memory_space<vmem>>, vector<1x1x8xf32>
    %470 = vector.shape_cast %469 : vector<1x1x8xf32> to vector<1x8xf32>
    %471 = vector.broadcast %470 : vector<1x8xf32> to vector<12x8xf32>
    %472 = arith.addf %468, %471 : vector<12x8xf32>
    %c6_311 = arith.constant 6 : index
    %c0_312 = arith.constant 0 : index
    %c0_313 = arith.constant 0 : index
    %473 = vector.load %arg23[%c6_311, %c0_312, %c0_313] : memref<8x32x8xf32, #tpu.memory_space<vmem>>, vector<1x32x8xf32>
    %474 = vector.shape_cast %473 : vector<1x32x8xf32> to vector<32x8xf32>
    %cst_314 = arith.constant dense<0.000000e+00> : vector<12x8xf32>
    %475 = tpu.matmul %377, %474, %cst_314 {dimension_numbers = #tpu.dot_dimension_numbers<[1], [0], [0], [1], [0, 0, 1, 1], [], []>} : vector<12x32xf32>, vector<32x8xf32>, vector<12x8xf32> -> vector<12x8xf32>
    %c6_315 = arith.constant 6 : index
    %c0_316 = arith.constant 0 : index
    %c0_317 = arith.constant 0 : index
    %476 = vector.load %arg24[%c6_315, %c0_316, %c0_317] : memref<8x1x8xf32, #tpu.memory_space<vmem>>, vector<1x1x8xf32>
    %477 = vector.shape_cast %476 : vector<1x1x8xf32> to vector<1x8xf32>
    %478 = vector.broadcast %477 : vector<1x8xf32> to vector<12x8xf32>
    %479 = arith.addf %475, %478 : vector<12x8xf32>
    %cst_318 = arith.constant dense<0.000000e+00> : vector<12x12xf32>
    %480 = tpu.matmul %465, %472, %cst_318 {dimension_numbers = #tpu.dot_dimension_numbers<[1], [1], [0], [0], [0, 0, 1, 0], [], []>} : vector<12x8xf32>, vector<12x8xf32>, vector<12x12xf32> -> vector<12x12xf32>
    %cst_319 = arith.constant 0.353553385 : f32
    %481 = vector.broadcast %cst_319 : f32 to vector<12x12xf32>
    %482 = arith.mulf %480, %481 : vector<12x12xf32>
    %cst_320 = arith.constant -1.000000e+30 : f32
    %483 = vector.broadcast %cst_320 : f32 to vector<12x12xf32>
    %484 = arith.select %78, %482, %483 : vector<12x12xi1>, vector<12x12xf32>
    %cst_321 = arith.constant dense<0xFF800000> : vector<12xf32>
    %485 = vector.multi_reduction <maximumf>, %484, %cst_321 [1] : vector<12x12xf32> to vector<12xf32>
    %486 = vector.shape_cast %485 : vector<12xf32> to vector<12x1xf32>
    %487 = vector.broadcast %486 : vector<12x1xf32> to vector<12x12xf32>
    %488 = arith.subf %484, %487 : vector<12x12xf32>
    %489 = math.exp %488 : vector<12x12xf32>
    %cst_322 = arith.constant dense<0.000000e+00> : vector<12xf32>
    %490 = vector.multi_reduction <add>, %489, %cst_322 [1] : vector<12x12xf32> to vector<12xf32>
    %491 = vector.shape_cast %490 : vector<12xf32> to vector<12x1xf32>
    %492 = vector.broadcast %491 : vector<12x1xf32> to vector<12x12xf32>
    %493 = arith.divf %489, %492 : vector<12x12xf32>
    %cst_323 = arith.constant dense<0.000000e+00> : vector<12x8xf32>
    %494 = tpu.matmul %493, %479, %cst_323 {dimension_numbers = #tpu.dot_dimension_numbers<[1], [0], [0], [1], [0, 0, 1, 1], [], []>} : vector<12x12xf32>, vector<12x8xf32>, vector<12x8xf32> -> vector<12x8xf32>
    %c6_324 = arith.constant 6 : index
    %c0_325 = arith.constant 0 : index
    %c0_326 = arith.constant 0 : index
    %495 = vector.load %arg25[%c6_324, %c0_325, %c0_326] : memref<8x8x32xf32, #tpu.memory_space<vmem>>, vector<1x8x32xf32>
    %496 = vector.shape_cast %495 : vector<1x8x32xf32> to vector<8x32xf32>
    %cst_327 = arith.constant dense<0.000000e+00> : vector<12x32xf32>
    %497 = tpu.matmul %494, %496, %cst_327 {dimension_numbers = #tpu.dot_dimension_numbers<[1], [0], [0], [1], [0, 0, 1, 1], [], []>} : vector<12x8xf32>, vector<8x32xf32>, vector<12x32xf32> -> vector<12x32xf32>
    %498 = arith.addf %458, %497 : vector<12x32xf32>
    %c7 = arith.constant 7 : index
    %c0_328 = arith.constant 0 : index
    %c0_329 = arith.constant 0 : index
    %499 = vector.load %arg19[%c7, %c0_328, %c0_329] : memref<8x32x8xf32, #tpu.memory_space<vmem>>, vector<1x32x8xf32>
    %500 = vector.shape_cast %499 : vector<1x32x8xf32> to vector<32x8xf32>
    %cst_330 = arith.constant dense<0.000000e+00> : vector<12x8xf32>
    %501 = tpu.matmul %377, %500, %cst_330 {dimension_numbers = #tpu.dot_dimension_numbers<[1], [0], [0], [1], [0, 0, 1, 1], [], []>} : vector<12x32xf32>, vector<32x8xf32>, vector<12x8xf32> -> vector<12x8xf32>
    %c7_331 = arith.constant 7 : index
    %c0_332 = arith.constant 0 : index
    %c0_333 = arith.constant 0 : index
    %502 = vector.load %arg20[%c7_331, %c0_332, %c0_333] : memref<8x1x8xf32, #tpu.memory_space<vmem>>, vector<1x1x8xf32>
    %503 = vector.shape_cast %502 : vector<1x1x8xf32> to vector<1x8xf32>
    %504 = vector.broadcast %503 : vector<1x8xf32> to vector<12x8xf32>
    %505 = arith.addf %501, %504 : vector<12x8xf32>
    %c7_334 = arith.constant 7 : index
    %c0_335 = arith.constant 0 : index
    %c0_336 = arith.constant 0 : index
    %506 = vector.load %arg21[%c7_334, %c0_335, %c0_336] : memref<8x32x8xf32, #tpu.memory_space<vmem>>, vector<1x32x8xf32>
    %507 = vector.shape_cast %506 : vector<1x32x8xf32> to vector<32x8xf32>
    %cst_337 = arith.constant dense<0.000000e+00> : vector<12x8xf32>
    %508 = tpu.matmul %377, %507, %cst_337 {dimension_numbers = #tpu.dot_dimension_numbers<[1], [0], [0], [1], [0, 0, 1, 1], [], []>} : vector<12x32xf32>, vector<32x8xf32>, vector<12x8xf32> -> vector<12x8xf32>
    %c7_338 = arith.constant 7 : index
    %c0_339 = arith.constant 0 : index
    %c0_340 = arith.constant 0 : index
    %509 = vector.load %arg22[%c7_338, %c0_339, %c0_340] : memref<8x1x8xf32, #tpu.memory_space<vmem>>, vector<1x1x8xf32>
    %510 = vector.shape_cast %509 : vector<1x1x8xf32> to vector<1x8xf32>
    %511 = vector.broadcast %510 : vector<1x8xf32> to vector<12x8xf32>
    %512 = arith.addf %508, %511 : vector<12x8xf32>
    %c7_341 = arith.constant 7 : index
    %c0_342 = arith.constant 0 : index
    %c0_343 = arith.constant 0 : index
    %513 = vector.load %arg23[%c7_341, %c0_342, %c0_343] : memref<8x32x8xf32, #tpu.memory_space<vmem>>, vector<1x32x8xf32>
    %514 = vector.shape_cast %513 : vector<1x32x8xf32> to vector<32x8xf32>
    %cst_344 = arith.constant dense<0.000000e+00> : vector<12x8xf32>
    %515 = tpu.matmul %377, %514, %cst_344 {dimension_numbers = #tpu.dot_dimension_numbers<[1], [0], [0], [1], [0, 0, 1, 1], [], []>} : vector<12x32xf32>, vector<32x8xf32>, vector<12x8xf32> -> vector<12x8xf32>
    %c7_345 = arith.constant 7 : index
    %c0_346 = arith.constant 0 : index
    %c0_347 = arith.constant 0 : index
    %516 = vector.load %arg24[%c7_345, %c0_346, %c0_347] : memref<8x1x8xf32, #tpu.memory_space<vmem>>, vector<1x1x8xf32>
    %517 = vector.shape_cast %516 : vector<1x1x8xf32> to vector<1x8xf32>
    %518 = vector.broadcast %517 : vector<1x8xf32> to vector<12x8xf32>
    %519 = arith.addf %515, %518 : vector<12x8xf32>
    %cst_348 = arith.constant dense<0.000000e+00> : vector<12x12xf32>
    %520 = tpu.matmul %505, %512, %cst_348 {dimension_numbers = #tpu.dot_dimension_numbers<[1], [1], [0], [0], [0, 0, 1, 0], [], []>} : vector<12x8xf32>, vector<12x8xf32>, vector<12x12xf32> -> vector<12x12xf32>
    %cst_349 = arith.constant 0.353553385 : f32
    %521 = vector.broadcast %cst_349 : f32 to vector<12x12xf32>
    %522 = arith.mulf %520, %521 : vector<12x12xf32>
    %cst_350 = arith.constant -1.000000e+30 : f32
    %523 = vector.broadcast %cst_350 : f32 to vector<12x12xf32>
    %524 = arith.select %78, %522, %523 : vector<12x12xi1>, vector<12x12xf32>
    %cst_351 = arith.constant dense<0xFF800000> : vector<12xf32>
    %525 = vector.multi_reduction <maximumf>, %524, %cst_351 [1] : vector<12x12xf32> to vector<12xf32>
    %526 = vector.shape_cast %525 : vector<12xf32> to vector<12x1xf32>
    %527 = vector.broadcast %526 : vector<12x1xf32> to vector<12x12xf32>
    %528 = arith.subf %524, %527 : vector<12x12xf32>
    %529 = math.exp %528 : vector<12x12xf32>
    %cst_352 = arith.constant dense<0.000000e+00> : vector<12xf32>
    %530 = vector.multi_reduction <add>, %529, %cst_352 [1] : vector<12x12xf32> to vector<12xf32>
    %531 = vector.shape_cast %530 : vector<12xf32> to vector<12x1xf32>
    %532 = vector.broadcast %531 : vector<12x1xf32> to vector<12x12xf32>
    %533 = arith.divf %529, %532 : vector<12x12xf32>
    %cst_353 = arith.constant dense<0.000000e+00> : vector<12x8xf32>
    %534 = tpu.matmul %533, %519, %cst_353 {dimension_numbers = #tpu.dot_dimension_numbers<[1], [0], [0], [1], [0, 0, 1, 1], [], []>} : vector<12x12xf32>, vector<12x8xf32>, vector<12x8xf32> -> vector<12x8xf32>
    %c7_354 = arith.constant 7 : index
    %c0_355 = arith.constant 0 : index
    %c0_356 = arith.constant 0 : index
    %535 = vector.load %arg25[%c7_354, %c0_355, %c0_356] : memref<8x8x32xf32, #tpu.memory_space<vmem>>, vector<1x8x32xf32>
    %536 = vector.shape_cast %535 : vector<1x8x32xf32> to vector<8x32xf32>
    %cst_357 = arith.constant dense<0.000000e+00> : vector<12x32xf32>
    %537 = tpu.matmul %534, %536, %cst_357 {dimension_numbers = #tpu.dot_dimension_numbers<[1], [0], [0], [1], [0, 0, 1, 1], [], []>} : vector<12x8xf32>, vector<8x32xf32>, vector<12x32xf32> -> vector<12x32xf32>
    %538 = arith.addf %498, %537 : vector<12x32xf32>
    %539 = arith.addf %351, %538 : vector<12x32xf32>
    %c1_358 = arith.constant 1 : index
    %c0_359 = arith.constant 0 : index
    %c0_360 = arith.constant 0 : index
    %540 = vector.load %arg26[%c1_358, %c0_359, %c0_360] : memref<2x1x32xf32, #tpu.memory_space<vmem>>, vector<1x1x32xf32>
    %541 = vector.shape_cast %540 : vector<1x1x32xf32> to vector<1x32xf32>
    %542 = vector.broadcast %541 : vector<1x32xf32> to vector<12x32xf32>
    %543 = arith.addf %539, %542 : vector<12x32xf32>
    %c1_361 = arith.constant 1 : index
    %c0_362 = arith.constant 0 : index
    %c0_363 = arith.constant 0 : index
    %544 = vector.load %arg27[%c1_361, %c0_362, %c0_363] : memref<2x1x32xf32, #tpu.memory_space<vmem>>, vector<1x1x32xf32>
    %545 = vector.shape_cast %544 : vector<1x1x32xf32> to vector<1x32xf32>
    %c1_364 = arith.constant 1 : index
    %c0_365 = arith.constant 0 : index
    %c0_366 = arith.constant 0 : index
    %546 = vector.load %arg28[%c1_364, %c0_365, %c0_366] : memref<2x1x32xf32, #tpu.memory_space<vmem>>, vector<1x1x32xf32>
    %547 = vector.shape_cast %546 : vector<1x1x32xf32> to vector<1x32xf32>
    %cst_367 = arith.constant dense<0.000000e+00> : vector<12xf32>
    %548 = vector.multi_reduction <add>, %543, %cst_367 [1] : vector<12x32xf32> to vector<12xf32>
    %549 = vector.shape_cast %548 : vector<12xf32> to vector<12x1xf32>
    %cst_368 = arith.constant 3.200000e+01 : f32
    %550 = vector.broadcast %cst_368 : f32 to vector<12x1xf32>
    %551 = arith.divf %549, %550 : vector<12x1xf32>
    %552 = vector.broadcast %551 : vector<12x1xf32> to vector<12x32xf32>
    %553 = arith.subf %543, %552 : vector<12x32xf32>
    %554 = arith.mulf %553, %553 : vector<12x32xf32>
    %cst_369 = arith.constant dense<0.000000e+00> : vector<12xf32>
    %555 = vector.multi_reduction <add>, %554, %cst_369 [1] : vector<12x32xf32> to vector<12xf32>
    %556 = vector.shape_cast %555 : vector<12xf32> to vector<12x1xf32>
    %cst_370 = arith.constant 3.200000e+01 : f32
    %557 = vector.broadcast %cst_370 : f32 to vector<12x1xf32>
    %558 = arith.divf %556, %557 : vector<12x1xf32>
    %559 = vector.broadcast %551 : vector<12x1xf32> to vector<12x32xf32>
    %560 = arith.subf %543, %559 : vector<12x32xf32>
    %cst_371 = arith.constant 9.99999974E-6 : f32
    %561 = vector.broadcast %cst_371 : f32 to vector<12x1xf32>
    %562 = arith.addf %558, %561 : vector<12x1xf32>
    %563 = math.rsqrt %562 : vector<12x1xf32>
    %564 = vector.broadcast %563 : vector<12x1xf32> to vector<12x32xf32>
    %565 = arith.mulf %560, %564 : vector<12x32xf32>
    %566 = vector.broadcast %545 : vector<1x32xf32> to vector<12x32xf32>
    %567 = arith.mulf %565, %566 : vector<12x32xf32>
    %568 = vector.broadcast %547 : vector<1x32xf32> to vector<12x32xf32>
    %569 = arith.addf %567, %568 : vector<12x32xf32>
    %c1_372 = arith.constant 1 : index
    %c0_373 = arith.constant 0 : index
    %c0_374 = arith.constant 0 : index
    %570 = vector.load %arg29[%c1_372, %c0_373, %c0_374] : memref<2x32x128xf32, #tpu.memory_space<vmem>>, vector<1x32x128xf32>
    %571 = vector.shape_cast %570 : vector<1x32x128xf32> to vector<32x128xf32>
    %cst_375 = arith.constant dense<0.000000e+00> : vector<12x128xf32>
    %572 = tpu.matmul %569, %571, %cst_375 {dimension_numbers = #tpu.dot_dimension_numbers<[1], [0], [0], [1], [0, 0, 1, 1], [], []>} : vector<12x32xf32>, vector<32x128xf32>, vector<12x128xf32> -> vector<12x128xf32>
    %c1_376 = arith.constant 1 : index
    %c0_377 = arith.constant 0 : index
    %c0_378 = arith.constant 0 : index
    %573 = vector.load %arg30[%c1_376, %c0_377, %c0_378] : memref<2x1x128xf32, #tpu.memory_space<vmem>>, vector<1x1x128xf32>
    %574 = vector.shape_cast %573 : vector<1x1x128xf32> to vector<1x128xf32>
    %575 = vector.broadcast %574 : vector<1x128xf32> to vector<12x128xf32>
    %576 = arith.addf %572, %575 : vector<12x128xf32>
    %cst_379 = arith.constant 0.707106769 : f32
    %577 = vector.broadcast %cst_379 : f32 to vector<12x128xf32>
    %578 = arith.mulf %576, %577 : vector<12x128xf32>
    %579 = math.absf %578 : vector<12x128xf32>
    %cst_380 = arith.constant 0.327591091 : f32
    %580 = vector.broadcast %cst_380 : f32 to vector<12x128xf32>
    %581 = arith.mulf %580, %579 : vector<12x128xf32>
    %cst_381 = arith.constant 1.000000e+00 : f32
    %582 = vector.broadcast %cst_381 : f32 to vector<12x128xf32>
    %583 = arith.addf %582, %581 : vector<12x128xf32>
    %cst_382 = arith.constant 1.000000e+00 : f32
    %584 = vector.broadcast %cst_382 : f32 to vector<12x128xf32>
    %585 = arith.divf %584, %583 : vector<12x128xf32>
    %cst_383 = arith.constant 1.06140542 : f32
    %586 = vector.broadcast %cst_383 : f32 to vector<12x128xf32>
    %587 = arith.mulf %585, %586 : vector<12x128xf32>
    %cst_384 = arith.constant -1.45315206 : f32
    %588 = vector.broadcast %cst_384 : f32 to vector<12x128xf32>
    %589 = arith.addf %588, %587 : vector<12x128xf32>
    %590 = arith.mulf %585, %589 : vector<12x128xf32>
    %cst_385 = arith.constant 1.42141378 : f32
    %591 = vector.broadcast %cst_385 : f32 to vector<12x128xf32>
    %592 = arith.addf %591, %590 : vector<12x128xf32>
    %593 = arith.mulf %585, %592 : vector<12x128xf32>
    %cst_386 = arith.constant -0.284496725 : f32
    %594 = vector.broadcast %cst_386 : f32 to vector<12x128xf32>
    %595 = arith.addf %594, %593 : vector<12x128xf32>
    %596 = arith.mulf %585, %595 : vector<12x128xf32>
    %cst_387 = arith.constant 0.254829586 : f32
    %597 = vector.broadcast %cst_387 : f32 to vector<12x128xf32>
    %598 = arith.addf %597, %596 : vector<12x128xf32>
    %599 = arith.mulf %585, %598 : vector<12x128xf32>
    %cst_388 = arith.constant 0.000000e+00 : f32
    %600 = vector.broadcast %cst_388 : f32 to vector<12x128xf32>
    %601 = arith.subf %600, %579 : vector<12x128xf32>
    %602 = arith.mulf %601, %579 : vector<12x128xf32>
    %603 = math.exp %602 : vector<12x128xf32>
    %604 = arith.mulf %599, %603 : vector<12x128xf32>
    %cst_389 = arith.constant 1.000000e+00 : f32
    %605 = vector.broadcast %cst_389 : f32 to vector<12x128xf32>
    %606 = arith.subf %605, %604 : vector<12x128xf32>
    %cst_390 = arith.constant 0.000000e+00 : f32
    %607 = vector.broadcast %cst_390 : f32 to vector<12x128xf32>
    %608 = arith.cmpf oge, %578, %607 : vector<12x128xf32>
    %cst_391 = arith.constant 0.000000e+00 : f32
    %609 = vector.broadcast %cst_391 : f32 to vector<12x128xf32>
    %610 = arith.subf %609, %606 : vector<12x128xf32>
    %611 = arith.select %608, %606, %610 : vector<12x128xi1>, vector<12x128xf32>
    %cst_392 = arith.constant 5.000000e-01 : f32
    %612 = vector.broadcast %cst_392 : f32 to vector<12x128xf32>
    %613 = arith.mulf %612, %576 : vector<12x128xf32>
    %cst_393 = arith.constant 1.000000e+00 : f32
    %614 = vector.broadcast %cst_393 : f32 to vector<12x128xf32>
    %615 = arith.addf %614, %611 : vector<12x128xf32>
    %616 = arith.mulf %613, %615 : vector<12x128xf32>
    %c1_394 = arith.constant 1 : index
    %c0_395 = arith.constant 0 : index
    %c0_396 = arith.constant 0 : index
    %617 = vector.load %arg31[%c1_394, %c0_395, %c0_396] : memref<2x128x32xf32, #tpu.memory_space<vmem>>, vector<1x128x32xf32>
    %618 = vector.shape_cast %617 : vector<1x128x32xf32> to vector<128x32xf32>
    %cst_397 = arith.constant dense<0.000000e+00> : vector<12x32xf32>
    %619 = tpu.matmul %616, %618, %cst_397 {dimension_numbers = #tpu.dot_dimension_numbers<[1], [0], [0], [1], [0, 0, 1, 1], [], []>} : vector<12x128xf32>, vector<128x32xf32>, vector<12x32xf32> -> vector<12x32xf32>
    %c1_398 = arith.constant 1 : index
    %c0_399 = arith.constant 0 : index
    %c0_400 = arith.constant 0 : index
    %620 = vector.load %arg32[%c1_398, %c0_399, %c0_400] : memref<2x1x32xf32, #tpu.memory_space<vmem>>, vector<1x1x32xf32>
    %621 = vector.shape_cast %620 : vector<1x1x32xf32> to vector<1x32xf32>
    %622 = vector.broadcast %621 : vector<1x32xf32> to vector<12x32xf32>
    %623 = arith.addf %619, %622 : vector<12x32xf32>
    %624 = arith.addf %543, %623 : vector<12x32xf32>
    %c0_401 = arith.constant 0 : index
    %c0_402 = arith.constant 0 : index
    %625 = vector.load %arg33[%c0_401, %c0_402] : memref<1x32xf32, #tpu.memory_space<vmem>>, vector<1x32xf32>
    %c0_403 = arith.constant 0 : index
    %c0_404 = arith.constant 0 : index
    %626 = vector.load %arg34[%c0_403, %c0_404] : memref<1x32xf32, #tpu.memory_space<vmem>>, vector<1x32xf32>
    %cst_405 = arith.constant dense<0.000000e+00> : vector<12xf32>
    %627 = vector.multi_reduction <add>, %624, %cst_405 [1] : vector<12x32xf32> to vector<12xf32>
    %628 = vector.shape_cast %627 : vector<12xf32> to vector<12x1xf32>
    %cst_406 = arith.constant 3.200000e+01 : f32
    %629 = vector.broadcast %cst_406 : f32 to vector<12x1xf32>
    %630 = arith.divf %628, %629 : vector<12x1xf32>
    %631 = vector.broadcast %630 : vector<12x1xf32> to vector<12x32xf32>
    %632 = arith.subf %624, %631 : vector<12x32xf32>
    %633 = arith.mulf %632, %632 : vector<12x32xf32>
    %cst_407 = arith.constant dense<0.000000e+00> : vector<12xf32>
    %634 = vector.multi_reduction <add>, %633, %cst_407 [1] : vector<12x32xf32> to vector<12xf32>
    %635 = vector.shape_cast %634 : vector<12xf32> to vector<12x1xf32>
    %cst_408 = arith.constant 3.200000e+01 : f32
    %636 = vector.broadcast %cst_408 : f32 to vector<12x1xf32>
    %637 = arith.divf %635, %636 : vector<12x1xf32>
    %638 = vector.broadcast %630 : vector<12x1xf32> to vector<12x32xf32>
    %639 = arith.subf %624, %638 : vector<12x32xf32>
    %cst_409 = arith.constant 9.99999974E-6 : f32
    %640 = vector.broadcast %cst_409 : f32 to vector<12x1xf32>
    %641 = arith.addf %637, %640 : vector<12x1xf32>
    %642 = math.rsqrt %641 : vector<12x1xf32>
    %643 = vector.broadcast %642 : vector<12x1xf32> to vector<12x32xf32>
    %644 = arith.mulf %639, %643 : vector<12x32xf32>
    %645 = vector.broadcast %625 : vector<1x32xf32> to vector<12x32xf32>
    %646 = arith.mulf %644, %645 : vector<12x32xf32>
    %647 = vector.broadcast %626 : vector<1x32xf32> to vector<12x32xf32>
    %648 = arith.addf %646, %647 : vector<12x32xf32>
    %649 = tpu.iota {dimensions = array<i32: 0>} : vector<4x12xi32>
    %650 = tpu.iota {dimensions = array<i32: 1>} : vector<4x12xi32>
    %c3_i32_410 = arith.constant 3 : i32
    %651 = vector.broadcast %c3_i32_410 : i32 to vector<4x12xi32>
    %652 = arith.muli %651, %649 : vector<4x12xi32>
    %c1_i32_411 = arith.constant 1 : i32
    %653 = vector.broadcast %c1_i32_411 : i32 to vector<4x12xi32>
    %654 = arith.addi %652, %653 : vector<4x12xi32>
    %655 = arith.cmpi eq, %650, %654 : vector<4x12xi32>
    %656 = arith.extui %655 : vector<4x12xi1> to vector<4x12xi32>
    %657 = arith.sitofp %656 : vector<4x12xi32> to vector<4x12xf32>
    %cst_412 = arith.constant dense<0.000000e+00> : vector<4x32xf32>
    %658 = tpu.matmul %657, %648, %cst_412 {dimension_numbers = #tpu.dot_dimension_numbers<[1], [0], [0], [1], [0, 0, 1, 1], [], []>} : vector<4x12xf32>, vector<12x32xf32>, vector<4x32xf32> -> vector<4x32xf32>
    %c0_413 = arith.constant 0 : index
    %c0_414 = arith.constant 0 : index
    %659 = vector.load %arg35[%c0_413, %c0_414] : memref<32x256xf32, #tpu.memory_space<vmem>>, vector<32x256xf32>
    %cst_415 = arith.constant dense<0.000000e+00> : vector<4x256xf32>
    %660 = tpu.matmul %658, %659, %cst_415 {dimension_numbers = #tpu.dot_dimension_numbers<[1], [0], [0], [1], [0, 0, 1, 1], [], []>} : vector<4x32xf32>, vector<32x256xf32>, vector<4x256xf32> -> vector<4x256xf32>
    %c0_416 = arith.constant 0 : index
    %c0_417 = arith.constant 0 : index
    %661 = vector.load %arg36[%c0_416, %c0_417] : memref<1x256xf32, #tpu.memory_space<vmem>>, vector<1x256xf32>
    %662 = vector.broadcast %661 : vector<1x256xf32> to vector<4x256xf32>
    %663 = arith.addf %660, %662 : vector<4x256xf32>
    %cst_418 = arith.constant 0.000000e+00 : f32
    %664 = vector.broadcast %cst_418 : f32 to vector<4x256xf32>
    %665 = arith.maximumf %663, %664 : vector<4x256xf32>
    %c0_419 = arith.constant 0 : index
    %c0_420 = arith.constant 0 : index
    %666 = vector.load %arg37[%c0_419, %c0_420] : memref<256x256xf32, #tpu.memory_space<vmem>>, vector<256x256xf32>
    %cst_421 = arith.constant dense<0.000000e+00> : vector<4x256xf32>
    %667 = tpu.matmul %665, %666, %cst_421 {dimension_numbers = #tpu.dot_dimension_numbers<[1], [0], [0], [1], [0, 0, 1, 1], [], []>} : vector<4x256xf32>, vector<256x256xf32>, vector<4x256xf32> -> vector<4x256xf32>
    %c0_422 = arith.constant 0 : index
    %c0_423 = arith.constant 0 : index
    %668 = vector.load %arg38[%c0_422, %c0_423] : memref<1x256xf32, #tpu.memory_space<vmem>>, vector<1x256xf32>
    %669 = vector.broadcast %668 : vector<1x256xf32> to vector<4x256xf32>
    %670 = arith.addf %667, %669 : vector<4x256xf32>
    %cst_424 = arith.constant 0.000000e+00 : f32
    %671 = vector.broadcast %cst_424 : f32 to vector<4x256xf32>
    %672 = arith.maximumf %670, %671 : vector<4x256xf32>
    %c0_425 = arith.constant 0 : index
    %c0_426 = arith.constant 0 : index
    %673 = vector.load %arg39[%c0_425, %c0_426] : memref<256x6xf32, #tpu.memory_space<vmem>>, vector<256x6xf32>
    %cst_427 = arith.constant dense<0.000000e+00> : vector<4x6xf32>
    %674 = tpu.matmul %672, %673, %cst_427 {dimension_numbers = #tpu.dot_dimension_numbers<[1], [0], [0], [1], [0, 0, 1, 1], [], []>} : vector<4x256xf32>, vector<256x6xf32>, vector<4x6xf32> -> vector<4x6xf32>
    %c0_428 = arith.constant 0 : index
    %c0_429 = arith.constant 0 : index
    %675 = vector.load %arg40[%c0_428, %c0_429] : memref<1x6xf32, #tpu.memory_space<vmem>>, vector<1x6xf32>
    %676 = vector.broadcast %675 : vector<1x6xf32> to vector<4x6xf32>
    %677 = arith.addf %674, %676 : vector<4x6xf32>
    %c0_430 = arith.constant 0 : index
    %c0_431 = arith.constant 0 : index
    %c0_432 = arith.constant 0 : index
    %678 = vector.load %arg41[%c0_430, %c0_431, %c0_432] : memref<1x4x6xf32, #tpu.memory_space<vmem>>, vector<1x4x6xf32>
    %679 = vector.shape_cast %678 : vector<1x4x6xf32> to vector<4x6xf32>
    %680 = vector.shape_cast %677 : vector<4x6xf32> to vector<1x4x6xf32>
    tpu.vector_store %arg41[%c0_430, %c0_431, %c0_432], %680 {strides = array<i32>} : memref<1x4x6xf32, #tpu.memory_space<vmem>>, vector<1x4x6xf32>,
    return
  }
  func.func @transform_0(%arg0: i32) -> (i32, i32, i32) {
    %c0_i32 = arith.constant 0 : i32
    %c0_i32_0 = arith.constant 0 : i32
    %c0_i32_1 = arith.constant 0 : i32
    return %arg0, %c0_i32, %c0_i32_0 : i32, i32, i32
  }
  func.func @transform_1(%arg0: i32) -> (i32, i32, i32) {
    %c0_i32 = arith.constant 0 : i32
    %c0_i32_0 = arith.constant 0 : i32
    %c0_i32_1 = arith.constant 0 : i32
    return %arg0, %c0_i32, %c0_i32_0 : i32, i32, i32
  }
  func.func @transform_2(%arg0: i32) -> (i32, i32, i32) {
    %c0_i32 = arith.constant 0 : i32
    %c0_i32_0 = arith.constant 0 : i32
    %c0_i32_1 = arith.constant 0 : i32
    return %arg0, %c0_i32, %c0_i32_0 : i32, i32, i32
  }
  func.func @transform_3(%arg0: i32) -> (i32, i32, i32) {
    %c0_i32 = arith.constant 0 : i32
    %c0_i32_0 = arith.constant 0 : i32
    %c0_i32_1 = arith.constant 0 : i32
    return %arg0, %c0_i32, %c0_i32_0 : i32, i32, i32
  }
  func.func @transform_4(%arg0: i32) -> (i32, i32) {
    %c0_i32 = arith.constant 0 : i32
    %c0_i32_0 = arith.constant 0 : i32
    %c0_i32_1 = arith.constant 0 : i32
    return %c0_i32, %c0_i32_0 : i32, i32
  }
  func.func @transform_5(%arg0: i32) -> (i32, i32) {
    %c0_i32 = arith.constant 0 : i32
    %c0_i32_0 = arith.constant 0 : i32
    %c0_i32_1 = arith.constant 0 : i32
    return %c0_i32, %c0_i32_0 : i32, i32
  }
  func.func @transform_6(%arg0: i32) -> (i32, i32) {
    %c0_i32 = arith.constant 0 : i32
    %c0_i32_0 = arith.constant 0 : i32
    %c0_i32_1 = arith.constant 0 : i32
    return %c0_i32, %c0_i32_0 : i32, i32
  }
  func.func @transform_7(%arg0: i32) -> (i32, i32) {
    %c0_i32 = arith.constant 0 : i32
    %c0_i32_0 = arith.constant 0 : i32
    %c0_i32_1 = arith.constant 0 : i32
    return %c0_i32, %c0_i32_0 : i32, i32
  }
  func.func @transform_8(%arg0: i32) -> (i32, i32) {
    %c0_i32 = arith.constant 0 : i32
    %c0_i32_0 = arith.constant 0 : i32
    %c0_i32_1 = arith.constant 0 : i32
    return %c0_i32, %c0_i32_0 : i32, i32
  }
  func.func @transform_9(%arg0: i32) -> (i32, i32) {
    %c0_i32 = arith.constant 0 : i32
    %c0_i32_0 = arith.constant 0 : i32
    %c0_i32_1 = arith.constant 0 : i32
    return %c0_i32, %c0_i32_0 : i32, i32
  }
  func.func @transform_10(%arg0: i32) -> (i32, i32) {
    %c0_i32 = arith.constant 0 : i32
    %c0_i32_0 = arith.constant 0 : i32
    %c0_i32_1 = arith.constant 0 : i32
    return %c0_i32, %c0_i32_0 : i32, i32
  }
  func.func @transform_11(%arg0: i32) -> (i32, i32) {
    %c0_i32 = arith.constant 0 : i32
    %c0_i32_0 = arith.constant 0 : i32
    %c0_i32_1 = arith.constant 0 : i32
    return %c0_i32, %c0_i32_0 : i32, i32
  }
  func.func @transform_12(%arg0: i32) -> (i32, i32) {
    %c0_i32 = arith.constant 0 : i32
    %c0_i32_0 = arith.constant 0 : i32
    %c0_i32_1 = arith.constant 0 : i32
    return %c0_i32, %c0_i32_0 : i32, i32
  }
  func.func @transform_13(%arg0: i32) -> (i32, i32) {
    %c0_i32 = arith.constant 0 : i32
    %c0_i32_0 = arith.constant 0 : i32
    %c0_i32_1 = arith.constant 0 : i32
    return %c0_i32, %c0_i32_0 : i32, i32
  }
  func.func @transform_14(%arg0: i32) -> (i32, i32) {
    %c0_i32 = arith.constant 0 : i32
    %c0_i32_0 = arith.constant 0 : i32
    %c0_i32_1 = arith.constant 0 : i32
    return %c0_i32, %c0_i32_0 : i32, i32
  }
  func.func @transform_15(%arg0: i32) -> (i32, i32) {
    %c0_i32 = arith.constant 0 : i32
    %c0_i32_0 = arith.constant 0 : i32
    %c0_i32_1 = arith.constant 0 : i32
    return %c0_i32, %c0_i32_0 : i32, i32
  }
  func.func @transform_16(%arg0: i32) -> (i32, i32, i32) {
    %c0_i32 = arith.constant 0 : i32
    %c0_i32_0 = arith.constant 0 : i32
    %c0_i32_1 = arith.constant 0 : i32
    %c0_i32_2 = arith.constant 0 : i32
    return %c0_i32, %c0_i32_0, %c0_i32_1 : i32, i32, i32
  }
  func.func @transform_17(%arg0: i32) -> (i32, i32, i32) {
    %c0_i32 = arith.constant 0 : i32
    %c0_i32_0 = arith.constant 0 : i32
    %c0_i32_1 = arith.constant 0 : i32
    %c0_i32_2 = arith.constant 0 : i32
    return %c0_i32, %c0_i32_0, %c0_i32_1 : i32, i32, i32
  }
  func.func @transform_18(%arg0: i32) -> (i32, i32, i32) {
    %c0_i32 = arith.constant 0 : i32
    %c0_i32_0 = arith.constant 0 : i32
    %c0_i32_1 = arith.constant 0 : i32
    %c0_i32_2 = arith.constant 0 : i32
    return %c0_i32, %c0_i32_0, %c0_i32_1 : i32, i32, i32
  }
  func.func @transform_19(%arg0: i32) -> (i32, i32, i32) {
    %c0_i32 = arith.constant 0 : i32
    %c0_i32_0 = arith.constant 0 : i32
    %c0_i32_1 = arith.constant 0 : i32
    %c0_i32_2 = arith.constant 0 : i32
    return %c0_i32, %c0_i32_0, %c0_i32_1 : i32, i32, i32
  }
  func.func @transform_20(%arg0: i32) -> (i32, i32, i32) {
    %c0_i32 = arith.constant 0 : i32
    %c0_i32_0 = arith.constant 0 : i32
    %c0_i32_1 = arith.constant 0 : i32
    %c0_i32_2 = arith.constant 0 : i32
    return %c0_i32, %c0_i32_0, %c0_i32_1 : i32, i32, i32
  }
  func.func @transform_21(%arg0: i32) -> (i32, i32, i32) {
    %c0_i32 = arith.constant 0 : i32
    %c0_i32_0 = arith.constant 0 : i32
    %c0_i32_1 = arith.constant 0 : i32
    %c0_i32_2 = arith.constant 0 : i32
    return %c0_i32, %c0_i32_0, %c0_i32_1 : i32, i32, i32
  }
  func.func @transform_22(%arg0: i32) -> (i32, i32, i32) {
    %c0_i32 = arith.constant 0 : i32
    %c0_i32_0 = arith.constant 0 : i32
    %c0_i32_1 = arith.constant 0 : i32
    %c0_i32_2 = arith.constant 0 : i32
    return %c0_i32, %c0_i32_0, %c0_i32_1 : i32, i32, i32
  }
  func.func @transform_23(%arg0: i32) -> (i32, i32, i32) {
    %c0_i32 = arith.constant 0 : i32
    %c0_i32_0 = arith.constant 0 : i32
    %c0_i32_1 = arith.constant 0 : i32
    %c0_i32_2 = arith.constant 0 : i32
    return %c0_i32, %c0_i32_0, %c0_i32_1 : i32, i32, i32
  }
  func.func @transform_24(%arg0: i32) -> (i32, i32, i32) {
    %c0_i32 = arith.constant 0 : i32
    %c0_i32_0 = arith.constant 0 : i32
    %c0_i32_1 = arith.constant 0 : i32
    %c0_i32_2 = arith.constant 0 : i32
    return %c0_i32, %c0_i32_0, %c0_i32_1 : i32, i32, i32
  }
  func.func @transform_25(%arg0: i32) -> (i32, i32, i32) {
    %c0_i32 = arith.constant 0 : i32
    %c0_i32_0 = arith.constant 0 : i32
    %c0_i32_1 = arith.constant 0 : i32
    %c0_i32_2 = arith.constant 0 : i32
    return %c0_i32, %c0_i32_0, %c0_i32_1 : i32, i32, i32
  }
  func.func @transform_26(%arg0: i32) -> (i32, i32, i32) {
    %c0_i32 = arith.constant 0 : i32
    %c0_i32_0 = arith.constant 0 : i32
    %c0_i32_1 = arith.constant 0 : i32
    %c0_i32_2 = arith.constant 0 : i32
    return %c0_i32, %c0_i32_0, %c0_i32_1 : i32, i32, i32
  }
  func.func @transform_27(%arg0: i32) -> (i32, i32, i32) {
    %c0_i32 = arith.constant 0 : i32
    %c0_i32_0 = arith.constant 0 : i32
    %c0_i32_1 = arith.constant 0 : i32
    %c0_i32_2 = arith.constant 0 : i32
    return %c0_i32, %c0_i32_0, %c0_i32_1 : i32, i32, i32
  }
  func.func @transform_28(%arg0: i32) -> (i32, i32, i32) {
    %c0_i32 = arith.constant 0 : i32
    %c0_i32_0 = arith.constant 0 : i32
    %c0_i32_1 = arith.constant 0 : i32
    %c0_i32_2 = arith.constant 0 : i32
    return %c0_i32, %c0_i32_0, %c0_i32_1 : i32, i32, i32
  }
  func.func @transform_29(%arg0: i32) -> (i32, i32, i32) {
    %c0_i32 = arith.constant 0 : i32
    %c0_i32_0 = arith.constant 0 : i32
    %c0_i32_1 = arith.constant 0 : i32
    %c0_i32_2 = arith.constant 0 : i32
    return %c0_i32, %c0_i32_0, %c0_i32_1 : i32, i32, i32
  }
  func.func @transform_30(%arg0: i32) -> (i32, i32, i32) {
    %c0_i32 = arith.constant 0 : i32
    %c0_i32_0 = arith.constant 0 : i32
    %c0_i32_1 = arith.constant 0 : i32
    %c0_i32_2 = arith.constant 0 : i32
    return %c0_i32, %c0_i32_0, %c0_i32_1 : i32, i32, i32
  }
  func.func @transform_31(%arg0: i32) -> (i32, i32, i32) {
    %c0_i32 = arith.constant 0 : i32
    %c0_i32_0 = arith.constant 0 : i32
    %c0_i32_1 = arith.constant 0 : i32
    %c0_i32_2 = arith.constant 0 : i32
    return %c0_i32, %c0_i32_0, %c0_i32_1 : i32, i32, i32
  }
  func.func @transform_32(%arg0: i32) -> (i32, i32) {
    %c0_i32 = arith.constant 0 : i32
    %c0_i32_0 = arith.constant 0 : i32
    %c0_i32_1 = arith.constant 0 : i32
    return %c0_i32, %c0_i32_0 : i32, i32
  }
  func.func @transform_33(%arg0: i32) -> (i32, i32) {
    %c0_i32 = arith.constant 0 : i32
    %c0_i32_0 = arith.constant 0 : i32
    %c0_i32_1 = arith.constant 0 : i32
    return %c0_i32, %c0_i32_0 : i32, i32
  }
  func.func @transform_34(%arg0: i32) -> (i32, i32) {
    %c0_i32 = arith.constant 0 : i32
    %c0_i32_0 = arith.constant 0 : i32
    %c0_i32_1 = arith.constant 0 : i32
    return %c0_i32, %c0_i32_0 : i32, i32
  }
  func.func @transform_35(%arg0: i32) -> (i32, i32) {
    %c0_i32 = arith.constant 0 : i32
    %c0_i32_0 = arith.constant 0 : i32
    %c0_i32_1 = arith.constant 0 : i32
    return %c0_i32, %c0_i32_0 : i32, i32
  }
  func.func @transform_36(%arg0: i32) -> (i32, i32) {
    %c0_i32 = arith.constant 0 : i32
    %c0_i32_0 = arith.constant 0 : i32
    %c0_i32_1 = arith.constant 0 : i32
    return %c0_i32, %c0_i32_0 : i32, i32
  }
  func.func @transform_37(%arg0: i32) -> (i32, i32) {
    %c0_i32 = arith.constant 0 : i32
    %c0_i32_0 = arith.constant 0 : i32
    %c0_i32_1 = arith.constant 0 : i32
    return %c0_i32, %c0_i32_0 : i32, i32
  }
  func.func @transform_38(%arg0: i32) -> (i32, i32) {
    %c0_i32 = arith.constant 0 : i32
    %c0_i32_0 = arith.constant 0 : i32
    %c0_i32_1 = arith.constant 0 : i32
    return %c0_i32, %c0_i32_0 : i32, i32
  }
  func.func @transform_39(%arg0: i32) -> (i32, i32) {
    %c0_i32 = arith.constant 0 : i32
    %c0_i32_0 = arith.constant 0 : i32
    %c0_i32_1 = arith.constant 0 : i32
    return %c0_i32, %c0_i32_0 : i32, i32
  }
  func.func @transform_40(%arg0: i32) -> (i32, i32, i32) {
    %c0_i32 = arith.constant 0 : i32
    %c0_i32_0 = arith.constant 0 : i32
    %c0_i32_1 = arith.constant 0 : i32
    return %arg0, %c0_i32, %c0_i32_0 : i32, i32, i32
  }
}

</mosaic_0001>

<llo_original>
// kernel: squeeze.2
$region0: #{squeeze.2}
  #allocation0 [shape = 's32[1]{0}', space=sflag, size = 0x4, scoped, tag = 'scoped memory for squeeze.2']
  %s0 = inlined_call_operand.<no memory space> [shape: f32[], index: 0, kind: input, shape index: {}]
  %s1 = inlined_call_operand.vmem [shape: f32[16,32], index: 1, kind: output, shape index: {}]
  %v2 = vstv %s0
  %3 = vst [vmem:[%s1] sm:$0xff] %v2
  %s4 = scalar_lea.vmem %s1, 8
  %5 = vst [vmem:[%s4] sm:$0xff] %v2

// kernel: explicit_sahn_gpt_forward.1
$region0: #{explicit_sahn_gpt_forward.1}
  #allocation0 [shape = 'u32[]', space=smem, size = 0x4, offset = 0x4, fixed_abs, tag = 'smem constant byte address 0x4 - core index']
  #allocation1 [shape = 'u32[144,128]{1,0:T(1,128)}', space=vmem, size = 0x12000, scoped, tag = 'internal scratch']
  %s0 = inlined_call_operand.smem [shape: u32[41], index: -1, kind: input, shape index: {}]
  %s1 = sld [smem:[%s0]]
  %s2 = scalar_lea.smem %s0, 1
  %s3 = sld [smem:[%s2]]
  %s4 = scalar_lea.smem %s0, 2
  %s5 = sld [smem:[%s4]]
  %s6 = scalar_lea.smem %s0, 3
  %s7 = sld [smem:[%s6]]
  %s8 = scalar_lea.smem %s0, 4
  %s9 = sld [smem:[%s8]]
  %s10 = scalar_lea.smem %s0, 5
  %s11 = sld [smem:[%s10]]
  %s12 = scalar_lea.smem %s0, 6
  %s13 = sld [smem:[%s12]]
  %s14 = scalar_lea.smem %s0, 7
  %s15 = sld [smem:[%s14]]
  %s16 = scalar_lea.smem %s0, 8
  %s17 = sld [smem:[%s16]]
  %s18 = scalar_lea.smem %s0, 9
  %s19 = sld [smem:[%s18]]
  %s20 = scalar_lea.smem %s0, 10
  %s21 = sld [smem:[%s20]]
  %s22 = scalar_lea.smem %s0, 11
  %s23 = sld [smem:[%s22]]
  %s24 = scalar_lea.smem %s0, 12
  %s25 = sld [smem:[%s24]]
  %s26 = scalar_lea.smem %s0, 13
  %s27 = sld [smem:[%s26]]
  %s28 = scalar_lea.smem %s0, 14
  %s29 = sld [smem:[%s28]]
  %s30 = scalar_lea.smem %s0, 15
  %s31 = sld [smem:[%s30]]
  %s32 = scalar_lea.smem %s0, 16
  %s33 = sld [smem:[%s32]]
  %s34 = scalar_lea.smem %s0, 17
  %s35 = sld [smem:[%s34]]
  %s36 = scalar_lea.smem %s0, 18
  %s37 = sld [smem:[%s36]]
  %s38 = scalar_lea.smem %s0, 19
  %s39 = sld [smem:[%s38]]
  %s40 = scalar_lea.smem %s0, 20
  %s41 = sld [smem:[%s40]]
  %s42 = scalar_lea.smem %s0, 21
  %s43 = sld [smem:[%s42]]
  %s44 = scalar_lea.smem %s0, 22
  %s45 = sld [smem:[%s44]]
  %s46 = scalar_lea.smem %s0, 23
  %s47 = sld [smem:[%s46]]
  %s48 = scalar_lea.smem %s0, 24
  %s49 = sld [smem:[%s48]]
  %s50 = scalar_lea.smem %s0, 25
  %s51 = sld [smem:[%s50]]
  %s52 = scalar_lea.smem %s0, 26
  %s53 = sld [smem:[%s52]]
  %s54 = scalar_lea.smem %s0, 27
  %s55 = sld [smem:[%s54]]
  %s56 = scalar_lea.smem %s0, 28
  %s57 = sld [smem:[%s56]]
  %s58 = scalar_lea.smem %s0, 29
  %s59 = sld [smem:[%s58]]
  %s60 = scalar_lea.smem %s0, 30
  %s61 = sld [smem:[%s60]]
  %s62 = scalar_lea.smem %s0, 31
  %s63 = sld [smem:[%s62]]
  %s64 = scalar_lea.smem %s0, 32
  %s65 = sld [smem:[%s64]]
  %s66 = scalar_lea.smem %s0, 33
  %s67 = sld [smem:[%s66]]
  %s68 = scalar_lea.smem %s0, 34
  %s69 = sld [smem:[%s68]]
  %s70 = scalar_lea.smem %s0, 35
  %s71 = sld [smem:[%s70]]
  %s72 = scalar_lea.smem %s0, 36
  %s73 = sld [smem:[%s72]]
  %s74 = scalar_lea.smem %s0, 37
  %s75 = sld [smem:[%s74]]
  %s76 = scalar_lea.smem %s0, 38
  %s77 = sld [smem:[%s76]]
  %s78 = scalar_lea.smem %s0, 39
  %s79 = sld [smem:[%s78]]
  %s80 = scalar_lea.smem %s0, 40
  %s81 = sld [smem:[%s80]]
  %s82 = sld [smem:[#allocation0]]
  $region217: #{explicit_sahn_gpt_forward.1} parent=0
    _
  %s84 = ssub.s32 1, %s82
  %s85 = scalar_select 0, %s84, %s82
  $region1: #{explicit_sahn_gpt_forward.1} parent=0
    #allocation2 [shape = 'u8[4096]{0}', space=vmem, size = 0x1000, scoped, tag = 'input window, operand 0']
    #allocation3 [shape = 's32[2]{0}', space=sflag, size = 0x8, scoped, tag = 'scoped memory for explicit_sahn_gpt_forward.1']
    #allocation4 [shape = 's32[2]{0}', space=sflag, size = 0x8, scoped, tag = 'scoped memory for explicit_sahn_gpt_forward.1']
    #allocation5 [shape = 'u8[4096]{0}', space=vmem, size = 0x1000, scoped, tag = 'input window, operand 2']
    #allocation6 [shape = 's32[2]{0}', space=sflag, size = 0x8, scoped, tag = 'scoped memory for explicit_sahn_gpt_forward.1']
    #allocation7 [shape = 'u8[8192]{0}', space=vmem, size = 0x2000, scoped, tag = 'input window, operand 12, single buffered']
    #allocation8 [shape = 'u8[32768]{0}', space=vmem, size = 0x8000, scoped, tag = 'input window, operand 24, single buffered']
    #allocation9 [shape = 's32[1]{0}', space=sflag, size = 0x4, scoped, tag = 'scoped memory for explicit_sahn_gpt_forward.1']
    #allocation10 [shape = 'u8[32768]{0}', space=vmem, size = 0x8000, scoped, tag = 'input window, operand 28, single buffered']
    #allocation11 [shape = 'u8[32768]{0}', space=vmem, size = 0x8000, scoped, tag = 'input window, operand 34, single buffered']
    #allocation12 [shape = 's32[1]{0}', space=sflag, size = 0x4, scoped, tag = 'scoped memory for explicit_sahn_gpt_forward.1']
    #allocation13 [shape = 'u8[4096]{0}', space=vmem, size = 0x1000, scoped, tag = 'output window, operand 0']
    %86 = vsyncpa [#allocation3], 0
    %s87 = scalar_lea.sflag [#allocation3], 1
    %88 = vsyncpa %s87, 0
    %89 = vsyncpa [#allocation6], 0
    %s90 = scalar_lea.sflag [#allocation6], 1
    %91 = vsyncpa %s90, 0
    %92 = vsyncpa [#allocation9], 0
    %93 = vsyncpa [#allocation12], 0
    %94 = vsyncpa [#allocation4], 0
    %s95 = scalar_lea.sflag [#allocation4], 1
    %96 = vsyncpa %s95, 0
    loop: start=0, step=1, limit=4
    $region2: #{explicit_sahn_gpt_forward.1} parent=1 // loop_pre_header
      _
    $region3: #{explicit_sahn_gpt_forward.1} parent=1 // loop_header
      %s98 = sphi 0, %s102
      %p99 = scmp.ge.s32.totalorder %s98, 4
      %s108 = sphi 0, %s110
      %s111 = sphi 0, %s108
      %s112 = sphi 0, %s111
      %s128 = sphi 0, %s112
      %s134 = sphi 0, %s136
      %s137 = sphi 0, %s134
      %s138 = sphi 0, %s137
      %s154 = sphi 0, %s138
      %s160 = sphi 0, %s162
      %s163 = sphi 0, %s160
      %s164 = sphi 0, %s163
      %s180 = sphi 0, %s164
      %s186 = sphi 0, %s188
      %s189 = sphi 0, %s186
      %s190 = sphi 0, %s189
      %s206 = sphi 0, %s190
      %s210 = sphi 0, %s210
      %s212 = sphi 0, %s210
      %s213 = sphi 0, %s212
      %s227 = sphi 0, %s213
      %s231 = sphi 0, %s231
      %s233 = sphi 0, %s231
      %s234 = sphi 0, %s233
      %s248 = sphi 0, %s234
      %s252 = sphi 0, %s252
      %s254 = sphi 0, %s252
      %s255 = sphi 0, %s254
      %s269 = sphi 0, %s255
      %s273 = sphi 0, %s273
      %s275 = sphi 0, %s273
      %s276 = sphi 0, %s275
      %s290 = sphi 0, %s276
      %s294 = sphi 0, %s294
      %s296 = sphi 0, %s294
      %s297 = sphi 0, %s296
      %s311 = sphi 0, %s297
      %s315 = sphi 0, %s315
      %s317 = sphi 0, %s315
      %s318 = sphi 0, %s317
      %s332 = sphi 0, %s318
      %s336 = sphi 0, %s336
      %s338 = sphi 0, %s336
      %s339 = sphi 0, %s338
      %s353 = sphi 0, %s339
      %s357 = sphi 0, %s357
      %s359 = sphi 0, %s357
      %s360 = sphi 0, %s359
      %s374 = sphi 0, %s360
      %s378 = sphi 0, %s378
      %s380 = sphi 0, %s378
      %s381 = sphi 0, %s380
      %s395 = sphi 0, %s381
      %s399 = sphi 0, %s399
      %s401 = sphi 0, %s399
      %s402 = sphi 0, %s401
      %s416 = sphi 0, %s402
      %s420 = sphi 0, %s420
      %s422 = sphi 0, %s420
      %s423 = sphi 0, %s422
      %s437 = sphi 0, %s423
      %s441 = sphi 0, %s441
      %s443 = sphi 0, %s441
      %s444 = sphi 0, %s443
      %s458 = sphi 0, %s444
      %s462 = sphi 0, %s462
      %s464 = sphi 0, %s462
      %s465 = sphi 0, %s464
      %s479 = sphi 0, %s465
      %s483 = sphi 0, %s483
      %s485 = sphi 0, %s483
      %s486 = sphi 0, %s485
      %s500 = sphi 0, %s486
      %s504 = sphi 0, %s504
      %s506 = sphi 0, %s504
      %s507 = sphi 0, %s506
      %s521 = sphi 0, %s507
      %s525 = sphi 0, %s525
      %s527 = sphi 0, %s525
      %s528 = sphi 0, %s527
      %s542 = sphi 0, %s528
      %s546 = sphi 0, %s546
      %s548 = sphi 0, %s546
      %s549 = sphi 0, %s548
      %s563 = sphi 0, %s549
      %s567 = sphi 0, %s567
      %s569 = sphi 0, %s567
      %s570 = sphi 0, %s569
      %s584 = sphi 0, %s570
      %s588 = sphi 0, %s588
      %s590 = sphi 0, %s588
      %s591 = sphi 0, %s590
      %s605 = sphi 0, %s591
      %s609 = sphi 0, %s609
      %s611 = sphi 0, %s609
      %s612 = sphi 0, %s611
      %s626 = sphi 0, %s612
      %s630 = sphi 0, %s630
      %s632 = sphi 0, %s630
      %s633 = sphi 0, %s632
      %s647 = sphi 0, %s633
      %s651 = sphi 0, %s651
      %s653 = sphi 0, %s651
      %s654 = sphi 0, %s653
      %s668 = sphi 0, %s654
      %s672 = sphi 0, %s672
      %s674 = sphi 0, %s672
      %s675 = sphi 0, %s674
      %s689 = sphi 0, %s675
      %s693 = sphi 0, %s693
      %s695 = sphi 0, %s693
      %s696 = sphi 0, %s695
      %s710 = sphi 0, %s696
      %s714 = sphi 0, %s714
      %s716 = sphi 0, %s714
      %s717 = sphi 0, %s716
      %s731 = sphi 0, %s717
      %s735 = sphi 0, %s735
      %s737 = sphi 0, %s735
      %s738 = sphi 0, %s737
      %s752 = sphi 0, %s738
      %s756 = sphi 0, %s756
      %s758 = sphi 0, %s756
      %s759 = sphi 0, %s758
      %s773 = sphi 0, %s759
      %s777 = sphi 0, %s777
      %s779 = sphi 0, %s777
      %s780 = sphi 0, %s779
      %s794 = sphi 0, %s780
      %s798 = sphi 0, %s798
      %s800 = sphi 0, %s798
      %s801 = sphi 0, %s800
      %s815 = sphi 0, %s801
      %s819 = sphi 0, %s819
      %s821 = sphi 0, %s819
      %s822 = sphi 0, %s821
      %s836 = sphi 0, %s822
      %s840 = sphi 0, %s840
      %s842 = sphi 0, %s840
      %s843 = sphi 0, %s842
      %s857 = sphi 0, %s843
      %s861 = sphi 0, %s861
      %s863 = sphi 0, %s861
      %s864 = sphi 0, %s863
      %s878 = sphi 0, %s864
      %s882 = sphi 0, %s882
      %s884 = sphi 0, %s882
      %s885 = sphi 0, %s884
      %s899 = sphi 0, %s885
      %s903 = sphi 0, %s903
      %s905 = sphi 0, %s903
      %s906 = sphi 0, %s905
      %s920 = sphi 0, %s906
      %s924 = sphi 0, %s924
      %s926 = sphi 0, %s924
      %s927 = sphi 0, %s926
      %s941 = sphi 0, %s927
      %s945 = sphi 0, %s945
      %s947 = sphi 0, %s945
      %s948 = sphi 0, %s947
      %s962 = sphi 0, %s948
      %s968 = sphi 0, %s970
      %s971 = sphi 0, %s968
      %s972 = sphi 0, %s971
      %s988 = sphi 0, %s972
    $region4: #{explicit_sahn_gpt_forward.1} parent=1 // loop_header_branch
      %101 = sbr.rel (%p99) target = $region8
    $region5: #{explicit_sahn_gpt_forward.1} parent=1 // loop_body
      %s103 = ssub.s32 %s98, 1
      %s104 = ssub.s32 %s98, 2
      %s105 = sadd.s32 %s98, 1
      %s106 = ssub.s32 %s98, %s105
      %p107 = scmp.eq.s32.totalorder %s106, 0
      %s109 = sadd.s32 %s108, 1
      %s110 = scalar_select %p107, %s108, %s109
      %p113 = pneg %p107
      %p114 = scmp.eq.s32.totalorder %s98, 1
      %p115 = por %p113, %p114
      %p116 = scmp.ne.s32.totalorder %s108, %s111
      %p117 = scmp.eq.s32.totalorder %s98, 0
      %p118 = por %p116, %p117
      %p119 = scmp.ne.s32.totalorder %s108, %s111
      %p120 = scmp.eq.s32.totalorder %s103, 1
      %p121 = por %p119, %p120
      %p122 = scmp.ne.s32.totalorder %s111, %s112
      %p123 = scmp.eq.s32.totalorder %s103, 0
      %p124 = por %p122, %p123
      %p125 = scmp.ne.s32.totalorder %s111, %s112
      %p126 = scmp.eq.s32.totalorder %s104, 1
      %p127 = por %p125, %p126
      %p129 = scmp.ne.s32.totalorder %s112, %s128
      %p130 = scmp.eq.s32.totalorder %s104, 0
      %p131 = por %p129, %p130
      %s132 = ssub.s32 %s98, %s105
      %p133 = scmp.eq.s32.totalorder %s132, 0
      %s135 = sadd.s32 %s134, 1
      %s136 = scalar_select %p133, %s134, %s135
      %p139 = pneg %p133
      %p140 = scmp.eq.s32.totalorder %s98, 1
      %p141 = por %p139, %p140
      %p142 = scmp.ne.s32.totalorder %s134, %s137
      %p143 = scmp.eq.s32.totalorder %s98, 0
      %p144 = por %p142, %p143
      %p145 = scmp.ne.s32.totalorder %s134, %s137
      %p146 = scmp.eq.s32.totalorder %s103, 1
      %p147 = por %p145, %p146
      %p148 = scmp.ne.s32.totalorder %s137, %s138
      %p149 = scmp.eq.s32.totalorder %s103, 0
      %p150 = por %p148, %p149
      %p151 = scmp.ne.s32.totalorder %s137, %s138
      %p152 = scmp.eq.s32.totalorder %s104, 1
      %p153 = por %p151, %p152
      %p155 = scmp.ne.s32.totalorder %s138, %s154
      %p156 = scmp.eq.s32.totalorder %s104, 0
      %p157 = por %p155, %p156
      %s158 = ssub.s32 %s98, %s105
      %p159 = scmp.eq.s32.totalorder %s158, 0
      %s161 = sadd.s32 %s160, 1
      %s162 = scalar_select %p159, %s160, %s161
      %p165 = pneg %p159
      %p166 = scmp.eq.s32.totalorder %s98, 1
      %p167 = por %p165, %p166
      %p168 = scmp.ne.s32.totalorder %s160, %s163
      %p169 = scmp.eq.s32.totalorder %s98, 0
      %p170 = por %p168, %p169
      %p171 = scmp.ne.s32.totalorder %s160, %s163
      %p172 = scmp.eq.s32.totalorder %s103, 1
      %p173 = por %p171, %p172
      %p174 = scmp.ne.s32.totalorder %s163, %s164
      %p175 = scmp.eq.s32.totalorder %s103, 0
      %p176 = por %p174, %p175
      %p177 = scmp.ne.s32.totalorder %s163, %s164
      %p178 = scmp.eq.s32.totalorder %s104, 1
      %p179 = por %p177, %p178
      %p181 = scmp.ne.s32.totalorder %s164, %s180
      %p182 = scmp.eq.s32.totalorder %s104, 0
      %p183 = por %p181, %p182
      %s184 = ssub.s32 %s98, %s105
      %p185 = scmp.eq.s32.totalorder %s184, 0
      %s187 = sadd.s32 %s186, 1
      %s188 = scalar_select %p185, %s186, %s187
      %p191 = pneg %p185
      %p192 = scmp.eq.s32.totalorder %s98, 1
      %p193 = por %p191, %p192
      %p194 = scmp.ne.s32.totalorder %s186, %s189
      %p195 = scmp.eq.s32.totalorder %s98, 0
      %p196 = por %p194, %p195
      %p197 = scmp.ne.s32.totalorder %s186, %s189
      %p198 = scmp.eq.s32.totalorder %s103, 1
      %p199 = por %p197, %p198
      %p200 = scmp.ne.s32.totalorder %s189, %s190
      %p201 = scmp.eq.s32.totalorder %s103, 0
      %p202 = por %p200, %p201
      %p203 = scmp.ne.s32.totalorder %s189, %s190
      %p204 = scmp.eq.s32.totalorder %s104, 1
      %p205 = por %p203, %p204
      %p207 = scmp.ne.s32.totalorder %s190, %s206
      %p208 = scmp.eq.s32.totalorder %s104, 0
      %p209 = por %p207, %p208
      %s211 = sadd.s32 %s210, 1
      %p214 = scmp.eq.s32.totalorder %s98, 1
      %p215 = scmp.ne.s32.totalorder %s210, %s212
      %p216 = scmp.eq.s32.totalorder %s98, 0
      %p217 = por %p215, %p216
      %p218 = scmp.ne.s32.totalorder %s210, %s212
      %p219 = scmp.eq.s32.totalorder %s103, 1
      %p220 = por %p218, %p219
      %p221 = scmp.ne.s32.totalorder %s212, %s213
      %p222 = scmp.eq.s32.totalorder %s103, 0
      %p223 = por %p221, %p222
      %p224 = scmp.ne.s32.totalorder %s212, %s213
      %p225 = scmp.eq.s32.totalorder %s104, 1
      %p226 = por %p224, %p225
      %p228 = scmp.ne.s32.totalorder %s213, %s227
      %p229 = scmp.eq.s32.totalorder %s104, 0
      %p230 = por %p228, %p229
      %s232 = sadd.s32 %s231, 1
      %p235 = scmp.eq.s32.totalorder %s98, 1
      %p236 = scmp.ne.s32.totalorder %s231, %s233
      %p237 = scmp.eq.s32.totalorder %s98, 0
      %p238 = por %p236, %p237
      %p239 = scmp.ne.s32.totalorder %s231, %s233
      %p240 = scmp.eq.s32.totalorder %s103, 1
      %p241 = por %p239, %p240
      %p242 = scmp.ne.s32.totalorder %s233, %s234
      %p243 = scmp.eq.s32.totalorder %s103, 0
      %p244 = por %p242, %p243
      %p245 = scmp.ne.s32.totalorder %s233, %s234
      %p246 = scmp.eq.s32.totalorder %s104, 1
      %p247 = por %p245, %p246
      %p249 = scmp.ne.s32.totalorder %s234, %s248
      %p250 = scmp.eq.s32.totalorder %s104, 0
      %p251 = por %p249, %p250
      %s253 = sadd.s32 %s252, 1
      %p256 = scmp.eq.s32.totalorder %s98, 1
      %p257 = scmp.ne.s32.totalorder %s252, %s254
      %p258 = scmp.eq.s32.totalorder %s98, 0
      %p259 = por %p257, %p258
      %p260 = scmp.ne.s32.totalorder %s252, %s254
      %p261 = scmp.eq.s32.totalorder %s103, 1
      %p262 = por %p260, %p261
      %p263 = scmp.ne.s32.totalorder %s254, %s255
      %p264 = scmp.eq.s32.totalorder %s103, 0
      %p265 = por %p263, %p264
      %p266 = scmp.ne.s32.totalorder %s254, %s255
      %p267 = scmp.eq.s32.totalorder %s104, 1
      %p268 = por %p266, %p267
      %p270 = scmp.ne.s32.totalorder %s255, %s269
      %p271 = scmp.eq.s32.totalorder %s104, 0
      %p272 = por %p270, %p271
      %s274 = sadd.s32 %s273, 1
      %p277 = scmp.eq.s32.totalorder %s98, 1
      %p278 = scmp.ne.s32.totalorder %s273, %s275
      %p279 = scmp.eq.s32.totalorder %s98, 0
      %p280 = por %p278, %p279
      %p281 = scmp.ne.s32.totalorder %s273, %s275
      %p282 = scmp.eq.s32.totalorder %s103, 1
      %p283 = por %p281, %p282
      %p284 = scmp.ne.s32.totalorder %s275, %s276
      %p285 = scmp.eq.s32.totalorder %s103, 0
      %p286 = por %p284, %p285
      %p287 = scmp.ne.s32.totalorder %s275, %s276
      %p288 = scmp.eq.s32.totalorder %s104, 1
      %p289 = por %p287, %p288
      %p291 = scmp.ne.s32.totalorder %s276, %s290
      %p292 = scmp.eq.s32.totalorder %s104, 0
      %p293 = por %p291, %p292
      %s295 = sadd.s32 %s294, 1
      %p298 = scmp.eq.s32.totalorder %s98, 1
      %p299 = scmp.ne.s32.totalorder %s294, %s296
      %p300 = scmp.eq.s32.totalorder %s98, 0
      %p301 = por %p299, %p300
      %p302 = scmp.ne.s32.totalorder %s294, %s296
      %p303 = scmp.eq.s32.totalorder %s103, 1
      %p304 = por %p302, %p303
      %p305 = scmp.ne.s32.totalorder %s296, %s297
      %p306 = scmp.eq.s32.totalorder %s103, 0
      %p307 = por %p305, %p306
      %p308 = scmp.ne.s32.totalorder %s296, %s297
      %p309 = scmp.eq.s32.totalorder %s104, 1
      %p310 = por %p308, %p309
      %p312 = scmp.ne.s32.totalorder %s297, %s311
      %p313 = scmp.eq.s32.totalorder %s104, 0
      %p314 = por %p312, %p313
      %s316 = sadd.s32 %s315, 1
      %p319 = scmp.eq.s32.totalorder %s98, 1
      %p320 = scmp.ne.s32.totalorder %s315, %s317
      %p321 = scmp.eq.s32.totalorder %s98, 0
      %p322 = por %p320, %p321
      %p323 = scmp.ne.s32.totalorder %s315, %s317
      %p324 = scmp.eq.s32.totalorder %s103, 1
      %p325 = por %p323, %p324
      %p326 = scmp.ne.s32.totalorder %s317, %s318
      %p327 = scmp.eq.s32.totalorder %s103, 0
      %p328 = por %p326, %p327
      %p329 = scmp.ne.s32.totalorder %s317, %s318
      %p330 = scmp.eq.s32.totalorder %s104, 1
      %p331 = por %p329, %p330
      %p333 = scmp.ne.s32.totalorder %s318, %s332
      %p334 = scmp.eq.s32.totalorder %s104, 0
      %p335 = por %p333, %p334
      %s337 = sadd.s32 %s336, 1
      %p340 = scmp.eq.s32.totalorder %s98, 1
      %p341 = scmp.ne.s32.totalorder %s336, %s338
      %p342 = scmp.eq.s32.totalorder %s98, 0
      %p343 = por %p341, %p342
      %p344 = scmp.ne.s32.totalorder %s336, %s338
      %p345 = scmp.eq.s32.totalorder %s103, 1
      %p346 = por %p344, %p345
      %p347 = scmp.ne.s32.totalorder %s338, %s339
      %p348 = scmp.eq.s32.totalorder %s103, 0
      %p349 = por %p347, %p348
      %p350 = scmp.ne.s32.totalorder %s338, %s339
      %p351 = scmp.eq.s32.totalorder %s104, 1
      %p352 = por %p350, %p351
      %p354 = scmp.ne.s32.totalorder %s339, %s353
      %p355 = scmp.eq.s32.totalorder %s104, 0
      %p356 = por %p354, %p355
      %s358 = sadd.s32 %s357, 1
      %p361 = scmp.eq.s32.totalorder %s98, 1
      %p362 = scmp.ne.s32.totalorder %s357, %s359
      %p363 = scmp.eq.s32.totalorder %s98, 0
      %p364 = por %p362, %p363
      %p365 = scmp.ne.s32.totalorder %s357, %s359
      %p366 = scmp.eq.s32.totalorder %s103, 1
      %p367 = por %p365, %p366
      %p368 = scmp.ne.s32.totalorder %s359, %s360
      %p369 = scmp.eq.s32.totalorder %s103, 0
      %p370 = por %p368, %p369
      %p371 = scmp.ne.s32.totalorder %s359, %s360
      %p372 = scmp.eq.s32.totalorder %s104, 1
      %p373 = por %p371, %p372
      %p375 = scmp.ne.s32.totalorder %s360, %s374
      %p376 = scmp.eq.s32.totalorder %s104, 0
      %p377 = por %p375, %p376
      %s379 = sadd.s32 %s378, 1
      %p382 = scmp.eq.s32.totalorder %s98, 1
      %p383 = scmp.ne.s32.totalorder %s378, %s380
      %p384 = scmp.eq.s32.totalorder %s98, 0
      %p385 = por %p383, %p384
      %p386 = scmp.ne.s32.totalorder %s378, %s380
      %p387 = scmp.eq.s32.totalorder %s103, 1
      %p388 = por %p386, %p387
      %p389 = scmp.ne.s32.totalorder %s380, %s381
      %p390 = scmp.eq.s32.totalorder %s103, 0
      %p391 = por %p389, %p390
      %p392 = scmp.ne.s32.totalorder %s380, %s381
      %p393 = scmp.eq.s32.totalorder %s104, 1
      %p394 = por %p392, %p393
      %p396 = scmp.ne.s32.totalorder %s381, %s395
      %p397 = scmp.eq.s32.totalorder %s104, 0
      %p398 = por %p396, %p397
      %s400 = sadd.s32 %s399, 1
      %p403 = scmp.eq.s32.totalorder %s98, 1
      %p404 = scmp.ne.s32.totalorder %s399, %s401
      %p405 = scmp.eq.s32.totalorder %s98, 0
      %p406 = por %p404, %p405
      %p407 = scmp.ne.s32.totalorder %s399, %s401
      %p408 = scmp.eq.s32.totalorder %s103, 1
      %p409 = por %p407, %p408
      %p410 = scmp.ne.s32.totalorder %s401, %s402
      %p411 = scmp.eq.s32.totalorder %s103, 0
      %p412 = por %p410, %p411
      %p413 = scmp.ne.s32.totalorder %s401, %s402
      %p414 = scmp.eq.s32.totalorder %s104, 1
      %p415 = por %p413, %p414
      %p417 = scmp.ne.s32.totalorder %s402, %s416
      %p418 = scmp.eq.s32.totalorder %s104, 0
      %p419 = por %p417, %p418
      %s421 = sadd.s32 %s420, 1
      %p424 = scmp.eq.s32.totalorder %s98, 1
      %p425 = scmp.ne.s32.totalorder %s420, %s422
      %p426 = scmp.eq.s32.totalorder %s98, 0
      %p427 = por %p425, %p426
      %p428 = scmp.ne.s32.totalorder %s420, %s422
      %p429 = scmp.eq.s32.totalorder %s103, 1
      %p430 = por %p428, %p429
      %p431 = scmp.ne.s32.totalorder %s422, %s423
      %p432 = scmp.eq.s32.totalorder %s103, 0
      %p433 = por %p431, %p432
      %p434 = scmp.ne.s32.totalorder %s422, %s423
      %p435 = scmp.eq.s32.totalorder %s104, 1
      %p436 = por %p434, %p435
      %p438 = scmp.ne.s32.totalorder %s423, %s437
      %p439 = scmp.eq.s32.totalorder %s104, 0
      %p440 = por %p438, %p439
      %s442 = sadd.s32 %s441, 1
      %p445 = scmp.eq.s32.totalorder %s98, 1
      %p446 = scmp.ne.s32.totalorder %s441, %s443
      %p447 = scmp.eq.s32.totalorder %s98, 0
      %p448 = por %p446, %p447
      %p449 = scmp.ne.s32.totalorder %s441, %s443
      %p450 = scmp.eq.s32.totalorder %s103, 1
      %p451 = por %p449, %p450
      %p452 = scmp.ne.s32.totalorder %s443, %s444
      %p453 = scmp.eq.s32.totalorder %s103, 0
      %p454 = por %p452, %p453
      %p455 = scmp.ne.s32.totalorder %s443, %s444
      %p456 = scmp.eq.s32.totalorder %s104, 1
      %p457 = por %p455, %p456
      %p459 = scmp.ne.s32.totalorder %s444, %s458
      %p460 = scmp.eq.s32.totalorder %s104, 0
      %p461 = por %p459, %p460
      %s463 = sadd.s32 %s462, 1
      %p466 = scmp.eq.s32.totalorder %s98, 1
      %p467 = scmp.ne.s32.totalorder %s462, %s464
      %p468 = scmp.eq.s32.totalorder %s98, 0
      %p469 = por %p467, %p468
      %p470 = scmp.ne.s32.totalorder %s462, %s464
      %p471 = scmp.eq.s32.totalorder %s103, 1
      %p472 = por %p470, %p471
      %p473 = scmp.ne.s32.totalorder %s464, %s465
      %p474 = scmp.eq.s32.totalorder %s103, 0
      %p475 = por %p473, %p474
      %p476 = scmp.ne.s32.totalorder %s464, %s465
      %p477 = scmp.eq.s32.totalorder %s104, 1
      %p478 = por %p476, %p477
      %p480 = scmp.ne.s32.totalorder %s465, %s479
      %p481 = scmp.eq.s32.totalorder %s104, 0
      %p482 = por %p480, %p481
      %s484 = sadd.s32 %s483, 1
      %p487 = scmp.eq.s32.totalorder %s98, 1
      %p488 = scmp.ne.s32.totalorder %s483, %s485
      %p489 = scmp.eq.s32.totalorder %s98, 0
      %p490 = por %p488, %p489
      %p491 = scmp.ne.s32.totalorder %s483, %s485
      %p492 = scmp.eq.s32.totalorder %s103, 1
      %p493 = por %p491, %p492
      %p494 = scmp.ne.s32.totalorder %s485, %s486
      %p495 = scmp.eq.s32.totalorder %s103, 0
      %p496 = por %p494, %p495
      %p497 = scmp.ne.s32.totalorder %s485, %s486
      %p498 = scmp.eq.s32.totalorder %s104, 1
      %p499 = por %p497, %p498
      %p501 = scmp.ne.s32.totalorder %s486, %s500
      %p502 = scmp.eq.s32.totalorder %s104, 0
      %p503 = por %p501, %p502
      %s505 = sadd.s32 %s504, 1
      %p508 = scmp.eq.s32.totalorder %s98, 1
      %p509 = scmp.ne.s32.totalorder %s504, %s506
      %p510 = scmp.eq.s32.totalorder %s98, 0
      %p511 = por %p509, %p510
      %p512 = scmp.ne.s32.totalorder %s504, %s506
      %p513 = scmp.eq.s32.totalorder %s103, 1
      %p514 = por %p512, %p513
      %p515 = scmp.ne.s32.totalorder %s506, %s507
      %p516 = scmp.eq.s32.totalorder %s103, 0
      %p517 = por %p515, %p516
      %p518 = scmp.ne.s32.totalorder %s506, %s507
      %p519 = scmp.eq.s32.totalorder %s104, 1
      %p520 = por %p518, %p519
      %p522 = scmp.ne.s32.totalorder %s507, %s521
      %p523 = scmp.eq.s32.totalorder %s104, 0
      %p524 = por %p522, %p523
      %s526 = sadd.s32 %s525, 1
      %p529 = scmp.eq.s32.totalorder %s98, 1
      %p530 = scmp.ne.s32.totalorder %s525, %s527
      %p531 = scmp.eq.s32.totalorder %s98, 0
      %p532 = por %p530, %p531
      %p533 = scmp.ne.s32.totalorder %s525, %s527
      %p534 = scmp.eq.s32.totalorder %s103, 1
      %p535 = por %p533, %p534
      %p536 = scmp.ne.s32.totalorder %s527, %s528
      %p537 = scmp.eq.s32.totalorder %s103, 0
      %p538 = por %p536, %p537
      %p539 = scmp.ne.s32.totalorder %s527, %s528
      %p540 = scmp.eq.s32.totalorder %s104, 1
      %p541 = por %p539, %p540
      %p543 = scmp.ne.s32.totalorder %s528, %s542
      %p544 = scmp.eq.s32.totalorder %s104, 0
      %p545 = por %p543, %p544
      %s547 = sadd.s32 %s546, 1
      %p550 = scmp.eq.s32.totalorder %s98, 1
      %p551 = scmp.ne.s32.totalorder %s546, %s548
      %p552 = scmp.eq.s32.totalorder %s98, 0
      %p553 = por %p551, %p552
      %p554 = scmp.ne.s32.totalorder %s546, %s548
      %p555 = scmp.eq.s32.totalorder %s103, 1
      %p556 = por %p554, %p555
      %p557 = scmp.ne.s32.totalorder %s548, %s549
      %p558 = scmp.eq.s32.totalorder %s103, 0
      %p559 = por %p557, %p558
      %p560 = scmp.ne.s32.totalorder %s548, %s549
      %p561 = scmp.eq.s32.totalorder %s104, 1
      %p562 = por %p560, %p561
      %p564 = scmp.ne.s32.totalorder %s549, %s563
      %p565 = scmp.eq.s32.totalorder %s104, 0
      %p566 = por %p564, %p565
      %s568 = sadd.s32 %s567, 1
      %p571 = scmp.eq.s32.totalorder %s98, 1
      %p572 = scmp.ne.s32.totalorder %s567, %s569
      %p573 = scmp.eq.s32.totalorder %s98, 0
      %p574 = por %p572, %p573
      %p575 = scmp.ne.s32.totalorder %s567, %s569
      %p576 = scmp.eq.s32.totalorder %s103, 1
      %p577 = por %p575, %p576
      %p578 = scmp.ne.s32.totalorder %s569, %s570
      %p579 = scmp.eq.s32.totalorder %s103, 0
      %p580 = por %p578, %p579
      %p581 = scmp.ne.s32.totalorder %s569, %s570
      %p582 = scmp.eq.s32.totalorder %s104, 1
      %p583 = por %p581, %p582
      %p585 = scmp.ne.s32.totalorder %s570, %s584
      %p586 = scmp.eq.s32.totalorder %s104, 0
      %p587 = por %p585, %p586
      %s589 = sadd.s32 %s588, 1
      %p592 = scmp.eq.s32.totalorder %s98, 1
      %p593 = scmp.ne.s32.totalorder %s588, %s590
      %p594 = scmp.eq.s32.totalorder %s98, 0
      %p595 = por %p593, %p594
      %p596 = scmp.ne.s32.totalorder %s588, %s590
      %p597 = scmp.eq.s32.totalorder %s103, 1
      %p598 = por %p596, %p597
      %p599 = scmp.ne.s32.totalorder %s590, %s591
      %p600 = scmp.eq.s32.totalorder %s103, 0
      %p601 = por %p599, %p600
      %p602 = scmp.ne.s32.totalorder %s590, %s591
      %p603 = scmp.eq.s32.totalorder %s104, 1
      %p604 = por %p602, %p603
      %p606 = scmp.ne.s32.totalorder %s591, %s605
      %p607 = scmp.eq.s32.totalorder %s104, 0
      %p608 = por %p606, %p607
      %s610 = sadd.s32 %s609, 1
      %p613 = scmp.eq.s32.totalorder %s98, 1
      %p614 = scmp.ne.s32.totalorder %s609, %s611
      %p615 = scmp.eq.s32.totalorder %s98, 0
      %p616 = por %p614, %p615
      %p617 = scmp.ne.s32.totalorder %s609, %s611
      %p618 = scmp.eq.s32.totalorder %s103, 1
      %p619 = por %p617, %p618
      %p620 = scmp.ne.s32.totalorder %s611, %s612
      %p621 = scmp.eq.s32.totalorder %s103, 0
      %p622 = por %p620, %p621
      %p623 = scmp.ne.s32.totalorder %s611, %s612
      %p624 = scmp.eq.s32.totalorder %s104, 1
      %p625 = por %p623, %p624
      %p627 = scmp.ne.s32.totalorder %s612, %s626
      %p628 = scmp.eq.s32.totalorder %s104, 0
      %p629 = por %p627, %p628
      %s631 = sadd.s32 %s630, 1
      %p634 = scmp.eq.s32.totalorder %s98, 1
      %p635 = scmp.ne.s32.totalorder %s630, %s632
      %p636 = scmp.eq.s32.totalorder %s98, 0
      %p637 = por %p635, %p636
      %p638 = scmp.ne.s32.totalorder %s630, %s632
      %p639 = scmp.eq.s32.totalorder %s103, 1
      %p640 = por %p638, %p639
      %p641 = scmp.ne.s32.totalorder %s632, %s633
      %p642 = scmp.eq.s32.totalorder %s103, 0
      %p643 = por %p641, %p642
      %p644 = scmp.ne.s32.totalorder %s632, %s633
      %p645 = scmp.eq.s32.totalorder %s104, 1
      %p646 = por %p644, %p645
      %p648 = scmp.ne.s32.totalorder %s633, %s647
      %p649 = scmp.eq.s32.totalorder %s104, 0
      %p650 = por %p648, %p649
      %s652 = sadd.s32 %s651, 1
      %p655 = scmp.eq.s32.totalorder %s98, 1
      %p656 = scmp.ne.s32.totalorder %s651, %s653
      %p657 = scmp.eq.s32.totalorder %s98, 0
      %p658 = por %p656, %p657
      %p659 = scmp.ne.s32.totalorder %s651, %s653
      %p660 = scmp.eq.s32.totalorder %s103, 1
      %p661 = por %p659, %p660
      %p662 = scmp.ne.s32.totalorder %s653, %s654
      %p663 = scmp.eq.s32.totalorder %s103, 0
      %p664 = por %p662, %p663
      %p665 = scmp.ne.s32.totalorder %s653, %s654
      %p666 = scmp.eq.s32.totalorder %s104, 1
      %p667 = por %p665, %p666
      %p669 = scmp.ne.s32.totalorder %s654, %s668
      %p670 = scmp.eq.s32.totalorder %s104, 0
      %p671 = por %p669, %p670
      %s673 = sadd.s32 %s672, 1
      %p676 = scmp.eq.s32.totalorder %s98, 1
      %p677 = scmp.ne.s32.totalorder %s672, %s674
      %p678 = scmp.eq.s32.totalorder %s98, 0
      %p679 = por %p677, %p678
      %p680 = scmp.ne.s32.totalorder %s672, %s674
      %p681 = scmp.eq.s32.totalorder %s103, 1
      %p682 = por %p680, %p681
      %p683 = scmp.ne.s32.totalorder %s674, %s675
      %p684 = scmp.eq.s32.totalorder %s103, 0
      %p685 = por %p683, %p684
      %p686 = scmp.ne.s32.totalorder %s674, %s675
      %p687 = scmp.eq.s32.totalorder %s104, 1
      %p688 = por %p686, %p687
      %p690 = scmp.ne.s32.totalorder %s675, %s689
      %p691 = scmp.eq.s32.totalorder %s104, 0
      %p692 = por %p690, %p691
      %s694 = sadd.s32 %s693, 1
      %p697 = scmp.eq.s32.totalorder %s98, 1
      %p698 = scmp.ne.s32.totalorder %s693, %s695
      %p699 = scmp.eq.s32.totalorder %s98, 0
      %p700 = por %p698, %p699
      %p701 = scmp.ne.s32.totalorder %s693, %s695
      %p702 = scmp.eq.s32.totalorder %s103, 1
      %p703 = por %p701, %p702
      %p704 = scmp.ne.s32.totalorder %s695, %s696
      %p705 = scmp.eq.s32.totalorder %s103, 0
      %p706 = por %p704, %p705
      %p707 = scmp.ne.s32.totalorder %s695, %s696
      %p708 = scmp.eq.s32.totalorder %s104, 1
      %p709 = por %p707, %p708
      %p711 = scmp.ne.s32.totalorder %s696, %s710
      %p712 = scmp.eq.s32.totalorder %s104, 0
      %p713 = por %p711, %p712
      %s715 = sadd.s32 %s714, 1
      %p718 = scmp.eq.s32.totalorder %s98, 1
      %p719 = scmp.ne.s32.totalorder %s714, %s716
      %p720 = scmp.eq.s32.totalorder %s98, 0
      %p721 = por %p719, %p720
      %p722 = scmp.ne.s32.totalorder %s714, %s716
      %p723 = scmp.eq.s32.totalorder %s103, 1
      %p724 = por %p722, %p723
      %p725 = scmp.ne.s32.totalorder %s716, %s717
      %p726 = scmp.eq.s32.totalorder %s103, 0
      %p727 = por %p725, %p726
      %p728 = scmp.ne.s32.totalorder %s716, %s717
      %p729 = scmp.eq.s32.totalorder %s104, 1
      %p730 = por %p728, %p729
      %p732 = scmp.ne.s32.totalorder %s717, %s731
      %p733 = scmp.eq.s32.totalorder %s104, 0
      %p734 = por %p732, %p733
      %s736 = sadd.s32 %s735, 1
      %p739 = scmp.eq.s32.totalorder %s98, 1
      %p740 = scmp.ne.s32.totalorder %s735, %s737
      %p741 = scmp.eq.s32.totalorder %s98, 0
      %p742 = por %p740, %p741
      %p743 = scmp.ne.s32.totalorder %s735, %s737
      %p744 = scmp.eq.s32.totalorder %s103, 1
      %p745 = por %p743, %p744
      %p746 = scmp.ne.s32.totalorder %s737, %s738
      %p747 = scmp.eq.s32.totalorder %s103, 0
      %p748 = por %p746, %p747
      %p749 = scmp.ne.s32.totalorder %s737, %s738
      %p750 = scmp.eq.s32.totalorder %s104, 1
      %p751 = por %p749, %p750
      %p753 = scmp.ne.s32.totalorder %s738, %s752
      %p754 = scmp.eq.s32.totalorder %s104, 0
      %p755 = por %p753, %p754
      %s757 = sadd.s32 %s756, 1
      %p760 = scmp.eq.s32.totalorder %s98, 1
      %p761 = scmp.ne.s32.totalorder %s756, %s758
      %p762 = scmp.eq.s32.totalorder %s98, 0
      %p763 = por %p761, %p762
      %p764 = scmp.ne.s32.totalorder %s756, %s758
      %p765 = scmp.eq.s32.totalorder %s103, 1
      %p766 = por %p764, %p765
      %p767 = scmp.ne.s32.totalorder %s758, %s759
      %p768 = scmp.eq.s32.totalorder %s103, 0
      %p769 = por %p767, %p768
      %p770 = scmp.ne.s32.totalorder %s758, %s759
      %p771 = scmp.eq.s32.totalorder %s104, 1
      %p772 = por %p770, %p771
      %p774 = scmp.ne.s32.totalorder %s759, %s773
      %p775 = scmp.eq.s32.totalorder %s104, 0
      %p776 = por %p774, %p775
      %s778 = sadd.s32 %s777, 1
      %p781 = scmp.eq.s32.totalorder %s98, 1
      %p782 = scmp.ne.s32.totalorder %s777, %s779
      %p783 = scmp.eq.s32.totalorder %s98, 0
      %p784 = por %p782, %p783
      %p785 = scmp.ne.s32.totalorder %s777, %s779
      %p786 = scmp.eq.s32.totalorder %s103, 1
      %p787 = por %p785, %p786
      %p788 = scmp.ne.s32.totalorder %s779, %s780
      %p789 = scmp.eq.s32.totalorder %s103, 0
      %p790 = por %p788, %p789
      %p791 = scmp.ne.s32.totalorder %s779, %s780
      %p792 = scmp.eq.s32.totalorder %s104, 1
      %p793 = por %p791, %p792
      %p795 = scmp.ne.s32.totalorder %s780, %s794
      %p796 = scmp.eq.s32.totalorder %s104, 0
      %p797 = por %p795, %p796
      %s799 = sadd.s32 %s798, 1
      %p802 = scmp.eq.s32.totalorder %s98, 1
      %p803 = scmp.ne.s32.totalorder %s798, %s800
      %p804 = scmp.eq.s32.totalorder %s98, 0
      %p805 = por %p803, %p804
      %p806 = scmp.ne.s32.totalorder %s798, %s800
      %p807 = scmp.eq.s32.totalorder %s103, 1
      %p808 = por %p806, %p807
      %p809 = scmp.ne.s32.totalorder %s800, %s801
      %p810 = scmp.eq.s32.totalorder %s103, 0
      %p811 = por %p809, %p810
      %p812 = scmp.ne.s32.totalorder %s800, %s801
      %p813 = scmp.eq.s32.totalorder %s104, 1
      %p814 = por %p812, %p813
      %p816 = scmp.ne.s32.totalorder %s801, %s815
      %p817 = scmp.eq.s32.totalorder %s104, 0
      %p818 = por %p816, %p817
      %s820 = sadd.s32 %s819, 1
      %p823 = scmp.eq.s32.totalorder %s98, 1
      %p824 = scmp.ne.s32.totalorder %s819, %s821
      %p825 = scmp.eq.s32.totalorder %s98, 0
      %p826 = por %p824, %p825
      %p827 = scmp.ne.s32.totalorder %s819, %s821
      %p828 = scmp.eq.s32.totalorder %s103, 1
      %p829 = por %p827, %p828
      %p830 = scmp.ne.s32.totalorder %s821, %s822
      %p831 = scmp.eq.s32.totalorder %s103, 0
      %p832 = por %p830, %p831
      %p833 = scmp.ne.s32.totalorder %s821, %s822
      %p834 = scmp.eq.s32.totalorder %s104, 1
      %p835 = por %p833, %p834
      %p837 = scmp.ne.s32.totalorder %s822, %s836
      %p838 = scmp.eq.s32.totalorder %s104, 0
      %p839 = por %p837, %p838
      %s841 = sadd.s32 %s840, 1
      %p844 = scmp.eq.s32.totalorder %s98, 1
      %p845 = scmp.ne.s32.totalorder %s840, %s842
      %p846 = scmp.eq.s32.totalorder %s98, 0
      %p847 = por %p845, %p846
      %p848 = scmp.ne.s32.totalorder %s840, %s842
      %p849 = scmp.eq.s32.totalorder %s103, 1
      %p850 = por %p848, %p849
      %p851 = scmp.ne.s32.totalorder %s842, %s843
      %p852 = scmp.eq.s32.totalorder %s103, 0
      %p853 = por %p851, %p852
      %p854 = scmp.ne.s32.totalorder %s842, %s843
      %p855 = scmp.eq.s32.totalorder %s104, 1
      %p856 = por %p854, %p855
      %p858 = scmp.ne.s32.totalorder %s843, %s857
      %p859 = scmp.eq.s32.totalorder %s104, 0
      %p860 = por %p858, %p859
      %s862 = sadd.s32 %s861, 1
      %p865 = scmp.eq.s32.totalorder %s98, 1
      %p866 = scmp.ne.s32.totalorder %s861, %s863
      %p867 = scmp.eq.s32.totalorder %s98, 0
      %p868 = por %p866, %p867
      %p869 = scmp.ne.s32.totalorder %s861, %s863
      %p870 = scmp.eq.s32.totalorder %s103, 1
      %p871 = por %p869, %p870
      %p872 = scmp.ne.s32.totalorder %s863, %s864
      %p873 = scmp.eq.s32.totalorder %s103, 0
      %p874 = por %p872, %p873
      %p875 = scmp.ne.s32.totalorder %s863, %s864
      %p876 = scmp.eq.s32.totalorder %s104, 1
      %p877 = por %p875, %p876
      %p879 = scmp.ne.s32.totalorder %s864, %s878
      %p880 = scmp.eq.s32.totalorder %s104, 0
      %p881 = por %p879, %p880
      %s883 = sadd.s32 %s882, 1
      %p886 = scmp.eq.s32.totalorder %s98, 1
      %p887 = scmp.ne.s32.totalorder %s882, %s884
      %p888 = scmp.eq.s32.totalorder %s98, 0
      %p889 = por %p887, %p888
      %p890 = scmp.ne.s32.totalorder %s882, %s884
      %p891 = scmp.eq.s32.totalorder %s103, 1
      %p892 = por %p890, %p891
      %p893 = scmp.ne.s32.totalorder %s884, %s885
      %p894 = scmp.eq.s32.totalorder %s103, 0
      %p895 = por %p893, %p894
      %p896 = scmp.ne.s32.totalorder %s884, %s885
      %p897 = scmp.eq.s32.totalorder %s104, 1
      %p898 = por %p896, %p897
      %p900 = scmp.ne.s32.totalorder %s885, %s899
      %p901 = scmp.eq.s32.totalorder %s104, 0
      %p902 = por %p900, %p901
      %s904 = sadd.s32 %s903, 1
      %p907 = scmp.eq.s32.totalorder %s98, 1
      %p908 = scmp.ne.s32.totalorder %s903, %s905
      %p909 = scmp.eq.s32.totalorder %s98, 0
      %p910 = por %p908, %p909
      %p911 = scmp.ne.s32.totalorder %s903, %s905
      %p912 = scmp.eq.s32.totalorder %s103, 1
      %p913 = por %p911, %p912
      %p914 = scmp.ne.s32.totalorder %s905, %s906
      %p915 = scmp.eq.s32.totalorder %s103, 0
      %p916 = por %p914, %p915
      %p917 = scmp.ne.s32.totalorder %s905, %s906
      %p918 = scmp.eq.s32.totalorder %s104, 1
      %p919 = por %p917, %p918
      %p921 = scmp.ne.s32.totalorder %s906, %s920
      %p922 = scmp.eq.s32.totalorder %s104, 0
      %p923 = por %p921, %p922
      %s925 = sadd.s32 %s924, 1
      %p928 = scmp.eq.s32.totalorder %s98, 1
      %p929 = scmp.ne.s32.totalorder %s924, %s926
      %p930 = scmp.eq.s32.totalorder %s98, 0
      %p931 = por %p929, %p930
      %p932 = scmp.ne.s32.totalorder %s924, %s926
      %p933 = scmp.eq.s32.totalorder %s103, 1
      %p934 = por %p932, %p933
      %p935 = scmp.ne.s32.totalorder %s926, %s927
      %p936 = scmp.eq.s32.totalorder %s103, 0
      %p937 = por %p935, %p936
      %p938 = scmp.ne.s32.totalorder %s926, %s927
      %p939 = scmp.eq.s32.totalorder %s104, 1
      %p940 = por %p938, %p939
      %p942 = scmp.ne.s32.totalorder %s927, %s941
      %p943 = scmp.eq.s32.totalorder %s104, 0
      %p944 = por %p942, %p943
      %s946 = sadd.s32 %s945, 1
      %p949 = scmp.eq.s32.totalorder %s98, 1
      %p950 = scmp.ne.s32.totalorder %s945, %s947
      %p951 = scmp.eq.s32.totalorder %s98, 0
      %p952 = por %p950, %p951
      %p953 = scmp.ne.s32.totalorder %s945, %s947
      %p954 = scmp.eq.s32.totalorder %s103, 1
      %p955 = por %p953, %p954
      %p956 = scmp.ne.s32.totalorder %s947, %s948
      %p957 = scmp.eq.s32.totalorder %s103, 0
      %p958 = por %p956, %p957
      %p959 = scmp.ne.s32.totalorder %s947, %s948
      %p960 = scmp.eq.s32.totalorder %s104, 1
      %p961 = por %p959, %p960
      %p963 = scmp.ne.s32.totalorder %s948, %s962
      %p964 = scmp.eq.s32.totalorder %s104, 0
      %p965 = por %p963, %p964
      %s966 = ssub.s32 %s98, %s105
      %p967 = scmp.eq.s32.totalorder %s966, 0
      %s969 = sadd.s32 %s968, 1
      %s970 = scalar_select %p967, %s968, %s969
      %p973 = pneg %p967
      %p974 = scmp.eq.s32.totalorder %s98, 1
      %p975 = por %p973, %p974
      %p976 = scmp.ne.s32.totalorder %s968, %s971
      %p977 = scmp.eq.s32.totalorder %s98, 0
      %p978 = por %p976, %p977
      %p979 = scmp.ne.s32.totalorder %s968, %s971
      %p980 = scmp.eq.s32.totalorder %s103, 1
      %p981 = por %p979, %p980
      %p982 = scmp.ne.s32.totalorder %s971, %s972
      %p983 = scmp.eq.s32.totalorder %s103, 0
      %p984 = por %p982, %p983
      %p985 = scmp.ne.s32.totalorder %s971, %s972
      %p986 = scmp.eq.s32.totalorder %s104, 1
      %p987 = por %p985, %p986
      %p989 = scmp.ne.s32.totalorder %s972, %s988
      %p990 = scmp.eq.s32.totalorder %s104, 0
      %p991 = por %p989, %p990
      %p992 = scmp.le.s32.totalorder 1, %s98
      %p993 = scmp.lt.s32.totalorder %s98, 3
      %p994 = pnand %p992, %p993
      %p995 = pneg %p994
      // Predicated region
      $region9: #{explicit_sahn_gpt_forward.1} parent=5 // pred_check
        _
      $region10: #{explicit_sahn_gpt_forward.1} parent=5 // pred_check_branch
        %997 = sbr.rel (%p994) target = $region12
      $region11: #{explicit_sahn_gpt_forward.1} parent=5 // pred_region
        %s998 = ssub.s32 %s98, 1
        // Predicated region
        $region13: #{explicit_sahn_gpt_forward.1} parent=11 // pred_check
          %p999 = pneg %p223
        $region14: #{explicit_sahn_gpt_forward.1} parent=11 // pred_check_branch
          %1001 = sbr.rel (%p999) target = $region16
        $region15: #{explicit_sahn_gpt_forward.1} parent=11 // pred_region
          _
        $region16: #{explicit_sahn_gpt_forward.1} parent=11 // pred_fallthru
          _
        // Predicated region
        $region17: #{explicit_sahn_gpt_forward.1} parent=11 // pred_check
          %p1002 = pneg %p244
        $region18: #{explicit_sahn_gpt_forward.1} parent=11 // pred_check_branch
          %1004 = sbr.rel (%p1002) target = $region20
        $region19: #{explicit_sahn_gpt_forward.1} parent=11 // pred_region
          _
        $region20: #{explicit_sahn_gpt_forward.1} parent=11 // pred_fallthru
          _
        // Predicated region
        $region21: #{explicit_sahn_gpt_forward.1} parent=11 // pred_check
          %p1005 = pneg %p265
        $region22: #{explicit_sahn_gpt_forward.1} parent=11 // pred_check_branch
          %1007 = sbr.rel (%p1005) target = $region24
        $region23: #{explicit_sahn_gpt_forward.1} parent=11 // pred_region
          _
        $region24: #{explicit_sahn_gpt_forward.1} parent=11 // pred_fallthru
          _
        // Predicated region
        $region25: #{explicit_sahn_gpt_forward.1} parent=11 // pred_check
          %p1008 = pneg %p286
        $region26: #{explicit_sahn_gpt_forward.1} parent=11 // pred_check_branch
          %1010 = sbr.rel (%p1008) target = $region28
        $region27: #{explicit_sahn_gpt_forward.1} parent=11 // pred_region
          _
        $region28: #{explicit_sahn_gpt_forward.1} parent=11 // pred_fallthru
          _
        // Predicated region
        $region29: #{explicit_sahn_gpt_forward.1} parent=11 // pred_check
          %p1011 = pneg %p307
        $region30: #{explicit_sahn_gpt_forward.1} parent=11 // pred_check_branch
          %1013 = sbr.rel (%p1011) target = $region32
        $region31: #{explicit_sahn_gpt_forward.1} parent=11 // pred_region
          _
        $region32: #{explicit_sahn_gpt_forward.1} parent=11 // pred_fallthru
          _
        // Predicated region
        $region33: #{explicit_sahn_gpt_forward.1} parent=11 // pred_check
          %p1014 = pneg %p328
        $region34: #{explicit_sahn_gpt_forward.1} parent=11 // pred_check_branch
          %1016 = sbr.rel (%p1014) target = $region36
        $region35: #{explicit_sahn_gpt_forward.1} parent=11 // pred_region
          _
        $region36: #{explicit_sahn_gpt_forward.1} parent=11 // pred_fallthru
          _
        // Predicated region
        $region37: #{explicit_sahn_gpt_forward.1} parent=11 // pred_check
          %p1017 = pneg %p349
        $region38: #{explicit_sahn_gpt_forward.1} parent=11 // pred_check_branch
          %1019 = sbr.rel (%p1017) target = $region40
        $region39: #{explicit_sahn_gpt_forward.1} parent=11 // pred_region
          _
        $region40: #{explicit_sahn_gpt_forward.1} parent=11 // pred_fallthru
          _
        // Predicated region
        $region41: #{explicit_sahn_gpt_forward.1} parent=11 // pred_check
          %p1020 = pneg %p370
        $region42: #{explicit_sahn_gpt_forward.1} parent=11 // pred_check_branch
          %1022 = sbr.rel (%p1020) target = $region44
        $region43: #{explicit_sahn_gpt_forward.1} parent=11 // pred_region
          _
        $region44: #{explicit_sahn_gpt_forward.1} parent=11 // pred_fallthru
          _
        // Predicated region
        $region45: #{explicit_sahn_gpt_forward.1} parent=11 // pred_check
          %p1023 = pneg %p391
        $region46: #{explicit_sahn_gpt_forward.1} parent=11 // pred_check_branch
          %1025 = sbr.rel (%p1023) target = $region48
        $region47: #{explicit_sahn_gpt_forward.1} parent=11 // pred_region
          %s1027 = ssub.s32 256, 256
          %1028 = vsyncadd [#allocation6], %s1027
          %s1030 = sshll.u32 [#allocation7], 4
          %s1031 = int_to_ptr.vmem [resolvable:$true] %s1030
          %1033 = dma.hbm_to_vmem [thread:$0]  %s25, 256, %s1031, [#allocation6]
        $region48: #{explicit_sahn_gpt_forward.1} parent=11 // pred_fallthru
          _
        // Predicated region
        $region49: #{explicit_sahn_gpt_forward.1} parent=11 // pred_check
          %p1034 = pneg %p412
        $region50: #{explicit_sahn_gpt_forward.1} parent=11 // pred_check_branch
          %1036 = sbr.rel (%p1034) target = $region52
        $region51: #{explicit_sahn_gpt_forward.1} parent=11 // pred_region
          _
        $region52: #{explicit_sahn_gpt_forward.1} parent=11 // pred_fallthru
          _
        // Predicated region
        $region53: #{explicit_sahn_gpt_forward.1} parent=11 // pred_check
          %p1037 = pneg %p433
        $region54: #{explicit_sahn_gpt_forward.1} parent=11 // pred_check_branch
          %1039 = sbr.rel (%p1037) target = $region56
        $region55: #{explicit_sahn_gpt_forward.1} parent=11 // pred_region
          _
        $region56: #{explicit_sahn_gpt_forward.1} parent=11 // pred_fallthru
          _
        // Predicated region
        $region57: #{explicit_sahn_gpt_forward.1} parent=11 // pred_check
          %p1040 = pneg %p454
        $region58: #{explicit_sahn_gpt_forward.1} parent=11 // pred_check_branch
          %1042 = sbr.rel (%p1040) target = $region60
        $region59: #{explicit_sahn_gpt_forward.1} parent=11 // pred_region
          _
        $region60: #{explicit_sahn_gpt_forward.1} parent=11 // pred_fallthru
          _
        // Predicated region
        $region61: #{explicit_sahn_gpt_forward.1} parent=11 // pred_check
          %p1043 = pneg %p475
        $region62: #{explicit_sahn_gpt_forward.1} parent=11 // pred_check_branch
          %1045 = sbr.rel (%p1043) target = $region64
        $region63: #{explicit_sahn_gpt_forward.1} parent=11 // pred_region
          _
        $region64: #{explicit_sahn_gpt_forward.1} parent=11 // pred_fallthru
          _
        // Predicated region
        $region65: #{explicit_sahn_gpt_forward.1} parent=11 // pred_check
          %p1046 = pneg %p496
        $region66: #{explicit_sahn_gpt_forward.1} parent=11 // pred_check_branch
          %1048 = sbr.rel (%p1046) target = $region68
        $region67: #{explicit_sahn_gpt_forward.1} parent=11 // pred_region
          _
        $region68: #{explicit_sahn_gpt_forward.1} parent=11 // pred_fallthru
          _
        // Predicated region
        $region69: #{explicit_sahn_gpt_forward.1} parent=11 // pred_check
          %p1049 = pneg %p517
        $region70: #{explicit_sahn_gpt_forward.1} parent=11 // pred_check_branch
          %1051 = sbr.rel (%p1049) target = $region72
        $region71: #{explicit_sahn_gpt_forward.1} parent=11 // pred_region
          _
        $region72: #{explicit_sahn_gpt_forward.1} parent=11 // pred_fallthru
          _
        // Predicated region
        $region73: #{explicit_sahn_gpt_forward.1} parent=11 // pred_check
          %p1052 = pneg %p538
        $region74: #{explicit_sahn_gpt_forward.1} parent=11 // pred_check_branch
          %1054 = sbr.rel (%p1052) target = $region76
        $region75: #{explicit_sahn_gpt_forward.1} parent=11 // pred_region
          _
        $region76: #{explicit_sahn_gpt_forward.1} parent=11 // pred_fallthru
          _
        // Predicated region
        $region77: #{explicit_sahn_gpt_forward.1} parent=11 // pred_check
          %p1055 = pneg %p559
        $region78: #{explicit_sahn_gpt_forward.1} parent=11 // pred_check_branch
          %1057 = sbr.rel (%p1055) target = $region80
        $region79: #{explicit_sahn_gpt_forward.1} parent=11 // pred_region
          _
        $region80: #{explicit_sahn_gpt_forward.1} parent=11 // pred_fallthru
          _
        // Predicated region
        $region81: #{explicit_sahn_gpt_forward.1} parent=11 // pred_check
          %p1058 = pneg %p580
        $region82: #{explicit_sahn_gpt_forward.1} parent=11 // pred_check_branch
          %1060 = sbr.rel (%p1058) target = $region84
        $region83: #{explicit_sahn_gpt_forward.1} parent=11 // pred_region
          _
        $region84: #{explicit_sahn_gpt_forward.1} parent=11 // pred_fallthru
          _
        // Predicated region
        $region85: #{explicit_sahn_gpt_forward.1} parent=11 // pred_check
          %p1061 = pneg %p601
        $region86: #{explicit_sahn_gpt_forward.1} parent=11 // pred_check_branch
          %1063 = sbr.rel (%p1061) target = $region88
        $region87: #{explicit_sahn_gpt_forward.1} parent=11 // pred_region
          _
        $region88: #{explicit_sahn_gpt_forward.1} parent=11 // pred_fallthru
          _
        // Predicated region
        $region89: #{explicit_sahn_gpt_forward.1} parent=11 // pred_check
          %p1064 = pneg %p622
        $region90: #{explicit_sahn_gpt_forward.1} parent=11 // pred_check_branch
          %1066 = sbr.rel (%p1064) target = $region92
        $region91: #{explicit_sahn_gpt_forward.1} parent=11 // pred_region
          _
        $region92: #{explicit_sahn_gpt_forward.1} parent=11 // pred_fallthru
          _
        // Predicated region
        $region93: #{explicit_sahn_gpt_forward.1} parent=11 // pred_check
          %p1067 = pneg %p643
        $region94: #{explicit_sahn_gpt_forward.1} parent=11 // pred_check_branch
          %1069 = sbr.rel (%p1067) target = $region96
        $region95: #{explicit_sahn_gpt_forward.1} parent=11 // pred_region
          %s1071 = ssub.s32 1024, 1024
          %1072 = vsyncadd [#allocation9], %s1071
          %s1073 = sshll.u32 [#allocation8], 4
          %s1074 = int_to_ptr.vmem [resolvable:$true] %s1073
          %1079 = dma.hbm_to_vmem [thread:$0]  %s49, 1024, %s1074, [#allocation9], 128, 128, 8
        $region96: #{explicit_sahn_gpt_forward.1} parent=11 // pred_fallthru
          _
        // Predicated region
        $region97: #{explicit_sahn_gpt_forward.1} parent=11 // pred_check
          %p1080 = pneg %p664
        $region98: #{explicit_sahn_gpt_forward.1} parent=11 // pred_check_branch
          %1082 = sbr.rel (%p1080) target = $region100
        $region99: #{explicit_sahn_gpt_forward.1} parent=11 // pred_region
          _
        $region100: #{explicit_sahn_gpt_forward.1} parent=11 // pred_fallthru
          _
        // Predicated region
        $region101: #{explicit_sahn_gpt_forward.1} parent=11 // pred_check
          %p1083 = pneg %p685
        $region102: #{explicit_sahn_gpt_forward.1} parent=11 // pred_check_branch
          %1085 = sbr.rel (%p1083) target = $region104
        $region103: #{explicit_sahn_gpt_forward.1} parent=11 // pred_region
          _
        $region104: #{explicit_sahn_gpt_forward.1} parent=11 // pred_fallthru
          _
        // Predicated region
        $region105: #{explicit_sahn_gpt_forward.1} parent=11 // pred_check
          %p1086 = pneg %p706
        $region106: #{explicit_sahn_gpt_forward.1} parent=11 // pred_check_branch
          %1088 = sbr.rel (%p1086) target = $region108
        $region107: #{explicit_sahn_gpt_forward.1} parent=11 // pred_region
          _
        $region108: #{explicit_sahn_gpt_forward.1} parent=11 // pred_fallthru
          _
        // Predicated region
        $region109: #{explicit_sahn_gpt_forward.1} parent=11 // pred_check
          %p1089 = pneg %p727
        $region110: #{explicit_sahn_gpt_forward.1} parent=11 // pred_check_branch
          %1091 = sbr.rel (%p1089) target = $region112
        $region111: #{explicit_sahn_gpt_forward.1} parent=11 // pred_region
          %s1093 = ssub.s32 1024, 1024
          %1094 = vsyncadd [#allocation9], %s1093
          %s1095 = sshll.u32 [#allocation10], 4
          %s1096 = int_to_ptr.vmem [resolvable:$true] %s1095
          %1101 = dma.hbm_to_vmem [thread:$0]  %s57, 1024, %s1096, [#allocation9], 128, 128, 8
        $region112: #{explicit_sahn_gpt_forward.1} parent=11 // pred_fallthru
          _
        // Predicated region
        $region113: #{explicit_sahn_gpt_forward.1} parent=11 // pred_check
          %p1102 = pneg %p748
        $region114: #{explicit_sahn_gpt_forward.1} parent=11 // pred_check_branch
          %1104 = sbr.rel (%p1102) target = $region116
        $region115: #{explicit_sahn_gpt_forward.1} parent=11 // pred_region
          _
        $region116: #{explicit_sahn_gpt_forward.1} parent=11 // pred_fallthru
          _
        // Predicated region
        $region117: #{explicit_sahn_gpt_forward.1} parent=11 // pred_check
          %p1105 = pneg %p769
        $region118: #{explicit_sahn_gpt_forward.1} parent=11 // pred_check_branch
          %1107 = sbr.rel (%p1105) target = $region120
        $region119: #{explicit_sahn_gpt_forward.1} parent=11 // pred_region
          _
        $region120: #{explicit_sahn_gpt_forward.1} parent=11 // pred_fallthru
          _
        // Predicated region
        $region121: #{explicit_sahn_gpt_forward.1} parent=11 // pred_check
          %p1108 = pneg %p790
        $region122: #{explicit_sahn_gpt_forward.1} parent=11 // pred_check_branch
          %1110 = sbr.rel (%p1108) target = $region124
        $region123: #{explicit_sahn_gpt_forward.1} parent=11 // pred_region
          _
        $region124: #{explicit_sahn_gpt_forward.1} parent=11 // pred_fallthru
          _
        // Predicated region
        $region125: #{explicit_sahn_gpt_forward.1} parent=11 // pred_check
          %p1111 = pneg %p811
        $region126: #{explicit_sahn_gpt_forward.1} parent=11 // pred_check_branch
          %1113 = sbr.rel (%p1111) target = $region128
        $region127: #{explicit_sahn_gpt_forward.1} parent=11 // pred_region
          _
        $region128: #{explicit_sahn_gpt_forward.1} parent=11 // pred_fallthru
          _
        // Predicated region
        $region129: #{explicit_sahn_gpt_forward.1} parent=11 // pred_check
          %p1114 = pneg %p832
        $region130: #{explicit_sahn_gpt_forward.1} parent=11 // pred_check_branch
          %1116 = sbr.rel (%p1114) target = $region132
        $region131: #{explicit_sahn_gpt_forward.1} parent=11 // pred_region
          _
        $region132: #{explicit_sahn_gpt_forward.1} parent=11 // pred_fallthru
          _
        // Predicated region
        $region133: #{explicit_sahn_gpt_forward.1} parent=11 // pred_check
          %p1117 = pneg %p853
        $region134: #{explicit_sahn_gpt_forward.1} parent=11 // pred_check_branch
          %1119 = sbr.rel (%p1117) target = $region136
        $region135: #{explicit_sahn_gpt_forward.1} parent=11 // pred_region
          %s1121 = ssub.s32 1024, 1024
          %1122 = vsyncadd [#allocation12], %s1121
          %s1123 = sshll.u32 [#allocation11], 4
          %s1124 = int_to_ptr.vmem [resolvable:$true] %s1123
          %1129 = dma.hbm_to_vmem [thread:$0]  %s69, 1024, %s1124, [#allocation12], 256, 256, 16
        $region136: #{explicit_sahn_gpt_forward.1} parent=11 // pred_fallthru
          _
        // Predicated region
        $region137: #{explicit_sahn_gpt_forward.1} parent=11 // pred_check
          %p1130 = pneg %p874
        $region138: #{explicit_sahn_gpt_forward.1} parent=11 // pred_check_branch
          %1132 = sbr.rel (%p1130) target = $region140
        $region139: #{explicit_sahn_gpt_forward.1} parent=11 // pred_region
          _
        $region140: #{explicit_sahn_gpt_forward.1} parent=11 // pred_fallthru
          _
        // Predicated region
        $region141: #{explicit_sahn_gpt_forward.1} parent=11 // pred_check
          %p1133 = pneg %p895
        $region142: #{explicit_sahn_gpt_forward.1} parent=11 // pred_check_branch
          %1135 = sbr.rel (%p1133) target = $region144
        $region143: #{explicit_sahn_gpt_forward.1} parent=11 // pred_region
          _
        $region144: #{explicit_sahn_gpt_forward.1} parent=11 // pred_fallthru
          _
        // Predicated region
        $region145: #{explicit_sahn_gpt_forward.1} parent=11 // pred_check
          %p1136 = pneg %p916
        $region146: #{explicit_sahn_gpt_forward.1} parent=11 // pred_check_branch
          %1138 = sbr.rel (%p1136) target = $region148
        $region147: #{explicit_sahn_gpt_forward.1} parent=11 // pred_region
          _
        $region148: #{explicit_sahn_gpt_forward.1} parent=11 // pred_fallthru
          _
        // Predicated region
        $region149: #{explicit_sahn_gpt_forward.1} parent=11 // pred_check
          %p1139 = pneg %p937
        $region150: #{explicit_sahn_gpt_forward.1} parent=11 // pred_check_branch
          %1141 = sbr.rel (%p1139) target = $region152
        $region151: #{explicit_sahn_gpt_forward.1} parent=11 // pred_region
          _
        $region152: #{explicit_sahn_gpt_forward.1} parent=11 // pred_fallthru
          _
        // Predicated region
        $region153: #{explicit_sahn_gpt_forward.1} parent=11 // pred_check
          %p1142 = pneg %p958
        $region154: #{explicit_sahn_gpt_forward.1} parent=11 // pred_check_branch
          %1144 = sbr.rel (%p1142) target = $region156
        $region155: #{explicit_sahn_gpt_forward.1} parent=11 // pred_region
          _
        $region156: #{explicit_sahn_gpt_forward.1} parent=11 // pred_fallthru
          _
      $region12: #{explicit_sahn_gpt_forward.1} parent=5 // pred_fallthru
        _
      %p1145 = scmp.lt.s32.totalorder %s98, 2
      // Predicated region
      $region157: #{explicit_sahn_gpt_forward.1} parent=5 // pred_check
        %p1146 = pneg %p1145
      $region158: #{explicit_sahn_gpt_forward.1} parent=5 // pred_check_branch
        %1148 = sbr.rel (%p1146) target = $region160
      $region159: #{explicit_sahn_gpt_forward.1} parent=5 // pred_region
        // Predicated region
        $region161: #{explicit_sahn_gpt_forward.1} parent=159 // pred_check
          %p1149 = pneg %p118
        $region162: #{explicit_sahn_gpt_forward.1} parent=159 // pred_check_branch
          %1151 = sbr.rel (%p1149) target = $region164
        $region163: #{explicit_sahn_gpt_forward.1} parent=159 // pred_region
          %s1152 = sand.u32 %s108, 1
          %s1153 = scalar_lea.sflag [#allocation3], %s1152
          %s1154 = sand.u32 %s108, 1
          %s1155 = smul.addr %s1154, 4
          %s1156 = scalar_lea.vmem [#allocation2], %s1155
          %s1158 = ssub.s32 64, 64
          %1159 = vsyncadd %s1153, %s1158
          %s1160 = smul.addr %s98, 64
          %s1161 = scalar_lea.hbm %s1, %s1160
          %s1163 = sshll.u32 %s1156, 4
          %s1164 = int_to_ptr.vmem [resolvable:$true] %s1163
          %1166 = dma.hbm_to_vmem [thread:$0]  %s1161, 64, %s1164, %s1153
        $region164: #{explicit_sahn_gpt_forward.1} parent=159 // pred_fallthru
          _
        // Predicated region
        $region165: #{explicit_sahn_gpt_forward.1} parent=159 // pred_check
          %p1167 = pneg %p144
        $region166: #{explicit_sahn_gpt_forward.1} parent=159 // pred_check_branch
          %1169 = sbr.rel (%p1167) target = $region168
        $region167: #{explicit_sahn_gpt_forward.1} parent=159 // pred_region
          %p1170 = scmp.lt.s32.totalorder %s98, 1
          %s1171 = scalar_select %p1170, %s98, 1
          %s1172 = smul.addr %s1171, 4
          %s1173 = scalar_lea.vmem %s3, %s1172
        $region168: #{explicit_sahn_gpt_forward.1} parent=159 // pred_fallthru
          _
        // Predicated region
        $region169: #{explicit_sahn_gpt_forward.1} parent=159 // pred_check
          %p1174 = pneg %p170
        $region170: #{explicit_sahn_gpt_forward.1} parent=159 // pred_check_branch
          %1176 = sbr.rel (%p1174) target = $region172
        $region171: #{explicit_sahn_gpt_forward.1} parent=159 // pred_region
          %s1177 = sand.u32 %s98, 1
          %s1178 = scalar_lea.sflag [#allocation6], %s1177
          %s1179 = sand.u32 %s160, 1
          %s1180 = smul.addr %s1179, 4
          %s1181 = scalar_lea.vmem [#allocation5], %s1180
          %s1183 = ssub.s32 64, 64
          %1184 = vsyncadd %s1178, %s1183
          %s1185 = smul.addr %s98, 64
          %s1186 = scalar_lea.hbm %s5, %s1185
          %s1188 = sshll.u32 %s1181, 4
          %s1189 = int_to_ptr.vmem [resolvable:$true] %s1188
          %1191 = dma.hbm_to_vmem [thread:$0]  %s1186, 64, %s1189, %s1178
        $region172: #{explicit_sahn_gpt_forward.1} parent=159 // pred_fallthru
          _
        // Predicated region
        $region173: #{explicit_sahn_gpt_forward.1} parent=159 // pred_check
          %p1192 = pneg %p196
        $region174: #{explicit_sahn_gpt_forward.1} parent=159 // pred_check_branch
          %1194 = sbr.rel (%p1192) target = $region176
        $region175: #{explicit_sahn_gpt_forward.1} parent=159 // pred_region
          %p1195 = scmp.lt.s32.totalorder %s98, 1
          %s1196 = scalar_select %p1195, %s98, 1
          %s1197 = smul.addr %s1196, 2
          %s1198 = smul.addr %s1197, 8
          %s1199 = scalar_lea.vmem %s7, %s1198
        $region176: #{explicit_sahn_gpt_forward.1} parent=159 // pred_fallthru
          _
      $region160: #{explicit_sahn_gpt_forward.1} parent=5 // pred_fallthru
        _
      %p1200 = scmp.le.s32.totalorder 1, %s98
      %p1201 = scmp.lt.s32.totalorder %s98, 3
      %p1202 = pnand %p1200, %p1201
      %p1203 = pneg %p1202
      // Predicated region
      $region177: #{explicit_sahn_gpt_forward.1} parent=5 // pred_check
        _
      $region178: #{explicit_sahn_gpt_forward.1} parent=5 // pred_check_branch
        %1205 = sbr.rel (%p1202) target = $region180
      $region179: #{explicit_sahn_gpt_forward.1} parent=5 // pred_region
        %s1206 = ssub.s32 %s98, 1
        %s1207 = sand.u32 %s111, 1
        %s1208 = scalar_lea.sflag [#allocation3], %s1207
        %s1209 = sand.u32 %s111, 1
        %s1210 = smul.addr %s1209, 4
        %s1211 = scalar_lea.vmem [#allocation2], %s1210
        // Predicated region
        $region181: #{explicit_sahn_gpt_forward.1} parent=179 // pred_check
          %p1212 = pneg %p124
        $region182: #{explicit_sahn_gpt_forward.1} parent=179 // pred_check_branch
          %1214 = sbr.rel (%p1212) target = $region184
        $region183: #{explicit_sahn_gpt_forward.1} parent=179 // pred_region
          %1215 = dma.done %s1208, 64
        $region184: #{explicit_sahn_gpt_forward.1} parent=179 // pred_fallthru
          _
        %s1216 = sand.u32 %s103, 1
        %s1217 = scalar_lea.sflag [#allocation6], %s1216
        %s1218 = sand.u32 %s163, 1
        %s1219 = smul.addr %s1218, 4
        %s1220 = scalar_lea.vmem [#allocation5], %s1219
        // Predicated region
        $region185: #{explicit_sahn_gpt_forward.1} parent=179 // pred_check
          %p1221 = pneg %p176
        $region186: #{explicit_sahn_gpt_forward.1} parent=179 // pred_check_branch
          %1223 = sbr.rel (%p1221) target = $region188
        $region187: #{explicit_sahn_gpt_forward.1} parent=179 // pred_region
          %1224 = dma.done %s1217, 64
        $region188: #{explicit_sahn_gpt_forward.1} parent=179 // pred_fallthru
          _
        // Predicated region
        $region189: #{explicit_sahn_gpt_forward.1} parent=179 // pred_check
          %p1225 = pneg %p391
        $region190: #{explicit_sahn_gpt_forward.1} parent=179 // pred_check_branch
          %1227 = sbr.rel (%p1225) target = $region192
        $region191: #{explicit_sahn_gpt_forward.1} parent=179 // pred_region
          %1228 = dma.done [#allocation6], 256
        $region192: #{explicit_sahn_gpt_forward.1} parent=179 // pred_fallthru
          _
        // Predicated region
        $region193: #{explicit_sahn_gpt_forward.1} parent=179 // pred_check
          %p1229 = pneg %p643
        $region194: #{explicit_sahn_gpt_forward.1} parent=179 // pred_check_branch
          %1231 = sbr.rel (%p1229) target = $region196
        $region195: #{explicit_sahn_gpt_forward.1} parent=179 // pred_region
          %1232 = dma.done [#allocation9], 1024
        $region196: #{explicit_sahn_gpt_forward.1} parent=179 // pred_fallthru
          _
        // Predicated region
        $region197: #{explicit_sahn_gpt_forward.1} parent=179 // pred_check
          %p1233 = pneg %p727
        $region198: #{explicit_sahn_gpt_forward.1} parent=179 // pred_check_branch
          %1235 = sbr.rel (%p1233) target = $region200
        $region199: #{explicit_sahn_gpt_forward.1} parent=179 // pred_region
          %1236 = dma.done [#allocation9], 1024
        $region200: #{explicit_sahn_gpt_forward.1} parent=179 // pred_fallthru
          _
        // Predicated region
        $region201: #{explicit_sahn_gpt_forward.1} parent=179 // pred_check
          %p1237 = pneg %p853
        $region202: #{explicit_sahn_gpt_forward.1} parent=179 // pred_check_branch
          %1239 = sbr.rel (%p1237) target = $region204
        $region203: #{explicit_sahn_gpt_forward.1} parent=179 // pred_region
          %1240 = dma.done [#allocation12], 1024
        $region204: #{explicit_sahn_gpt_forward.1} parent=179 // pred_fallthru
          _
        %s1241 = sand.u32 %s111, 1
        %s1242 = scalar_lea.sflag [#allocation3], %s1241
        %s1243 = sand.u32 %s111, 1
        %s1244 = smul.addr %s1243, 4
        %s1245 = scalar_lea.vmem [#allocation2], %s1244
        %p1246 = pneg %p124
        %p1247 = pneg %p121
        %p1248 = scmp.lt.s32.totalorder %s103, 1
        %s1249 = scalar_select %p1248, %s103, 1
        %s1250 = smul.addr %s1249, 4
        %s1251 = scalar_lea.vmem %s3, %s1250
        %p1252 = pneg %p150
        %p1253 = pneg %p147
        %s1254 = sand.u32 %s103, 1
        %s1255 = scalar_lea.sflag [#allocation6], %s1254
        %s1256 = sand.u32 %s163, 1
        %s1257 = smul.addr %s1256, 4
        %s1258 = scalar_lea.vmem [#allocation5], %s1257
        %p1259 = pneg %p176
        %p1260 = pneg %p173
        %p1261 = scmp.lt.s32.totalorder %s103, 1
        %s1262 = scalar_select %p1261, %s103, 1
        %s1263 = smul.addr %s1262, 2
        %s1264 = smul.addr %s1263, 8
        %s1265 = scalar_lea.vmem %s7, %s1264
        %p1266 = pneg %p202
        %p1267 = pneg %p199
        %p1268 = pneg %p223
        %p1269 = pneg %p220
        %p1270 = pneg %p244
        %p1271 = pneg %p241
        %p1272 = pneg %p265
        %p1273 = pneg %p262
        %p1274 = pneg %p286
        %p1275 = pneg %p283
        %p1276 = pneg %p307
        %p1277 = pneg %p304
        %p1278 = pneg %p328
        %p1279 = pneg %p325
        %p1280 = pneg %p349
        %p1281 = pneg %p346
        %p1282 = pneg %p370
        %p1283 = pneg %p367
        %p1284 = pneg %p391
        %p1285 = pneg %p388
        %p1286 = pneg %p412
        %p1287 = pneg %p409
        %p1288 = pneg %p433
        %p1289 = pneg %p430
        %p1290 = pneg %p454
        %p1291 = pneg %p451
        %p1292 = pneg %p475
        %p1293 = pneg %p472
        %p1294 = pneg %p496
        %p1295 = pneg %p493
        %p1296 = pneg %p517
        %p1297 = pneg %p514
        %p1298 = pneg %p538
        %p1299 = pneg %p535
        %p1300 = pneg %p559
        %p1301 = pneg %p556
        %p1302 = pneg %p580
        %p1303 = pneg %p577
        %p1304 = pneg %p601
        %p1305 = pneg %p598
        %p1306 = pneg %p622
        %p1307 = pneg %p619
        %p1308 = pneg %p643
        %p1309 = pneg %p640
        %p1310 = pneg %p664
        %p1311 = pneg %p661
        %p1312 = pneg %p685
        %p1313 = pneg %p682
        %p1314 = pneg %p706
        %p1315 = pneg %p703
        %p1316 = pneg %p727
        %p1317 = pneg %p724
        %p1318 = pneg %p748
        %p1319 = pneg %p745
        %p1320 = pneg %p769
        %p1321 = pneg %p766
        %p1322 = pneg %p790
        %p1323 = pneg %p787
        %p1324 = pneg %p811
        %p1325 = pneg %p808
        %p1326 = pneg %p832
        %p1327 = pneg %p829
        %p1328 = pneg %p853
        %p1329 = pneg %p850
        %p1330 = pneg %p874
        %p1331 = pneg %p871
        %p1332 = pneg %p895
        %p1333 = pneg %p892
        %p1334 = pneg %p916
        %p1335 = pneg %p913
        %p1336 = pneg %p937
        %p1337 = pneg %p934
        %p1338 = pneg %p958
        %p1339 = pneg %p955
        %p1340 = pneg %p984
        %p1341 = pneg %p981
        %s1342 = sand.u32 %s971, 1
        %s1343 = scalar_lea.sflag [#allocation4], %s1342
        %s1344 = sand.u32 %s971, 1
        %s1345 = smul.addr %s1344, 4
        %s1346 = scalar_lea.vmem [#allocation13], %s1345
        %p1347 = scmp.lt.s32.totalorder %s103, 1
        %s1348 = scalar_select %p1347, %s103, 1
        %s1349 = smul.addr %s1348, 4
        %s1350 = scalar_lea.vmem %s3, %s1349
        %p1351 = scmp.lt.s32.totalorder %s103, 1
        %s1352 = scalar_select %p1351, %s103, 1
        %s1353 = smul.addr %s1352, 2
        %s1354 = smul.addr %s1353, 8
        %s1355 = scalar_lea.vmem %s7, %s1354
        %v1356 = vld [vmem:[%s1211] sm:$0xf]
        %v1357 = vld [vmem:[%s9] sm:$0xff]
        %v1358 = vld [vmem:[%s9 + $0x8] sm:$0xff]
        %v1359 = vld [vmem:[%s11] sm:$0x3]
        %v1361 = vlaneseq
        %v1362 = vshrl.u32 %v1361, 7
        %v1363 = vsub.s32 0, %v1362
        %v1364 = vrot.slane %v1359, %v1363
        %v1365 = vlaneseq
        %v1366 = vshrl.u32 %v1365, 7
        %v1367 = vsub.s32 1, %v1366
        %v1368 = vrot.slane %v1359, %v1367
        %vm1371 = vcmask 64512
        %v1373 = vsel %vm1371, %v1356, 0
        %1375 = vmatprep.subr.mxu0 %v1358
        %1376 = vmatpush1.msra.mxu0 %v1357
        %1377 = vmatprep.subr.mxu0 0.0
        %1378 = vmatpush1.msra.mxu0 0.0
        %1379 = vmatprep.subr.mxu0 0.0
        %1380 = vmatpush1.msra.mxu0 0.0
        %1381 = vmatprep.subr.mxu0 0.0
        %1382 = vmatpush1.msra.mxu0 0.0
        %1383 = vmatprep.subr.mxu0 0.0
        %1384 = vmatpush1.msra.mxu0 0.0
        %1385 = vmatprep.subr.mxu0 0.0
        %1386 = vmatpush1.msra.mxu0 0.0
        %1387 = vmatprep.subr.mxu0 0.0
        %1388 = vmatpush1.msra.mxu0 0.0
        %1389 = vmatprep.subr.mxu0 0.0
        %1390 = vmatpush1.msra.mxu0 0.0
        %1391 = vmatprep.subr.mxu0 0.0
        %1392 = vmatpush1.msra.mxu0 0.0
        %1393 = vmatprep.subr.mxu0 0.0
        %1394 = vmatpush1.msra.mxu0 0.0
        %1395 = vmatprep.subr.mxu0 0.0
        %1396 = vmatpush1.msra.mxu0 0.0
        %1397 = vmatprep.subr.mxu0 0.0
        %1398 = vmatpush1.msra.mxu0 0.0
        %1399 = vmatprep.subr.mxu0 0.0
        %1400 = vmatpush1.msra.mxu0 0.0
        %1401 = vmatprep.subr.mxu0 0.0
        %1402 = vmatpush1.msra.mxu0 0.0
        %1403 = vmatprep.subr.mxu0 0.0
        %1404 = vmatpush1.msra.mxu0 0.0
        %1405 = vmatprep.subr.mxu0 0.0
        %1406 = vmatpush1.msra.mxu0 0.0
        %1407 = vmatprep.subr.mxu0 0.0
        %1408 = vmatpush1.msra.mxu0 0.0
        %1409 = vmatprep.subr.mxu0 0.0
        %1410 = vmatpush1.msra.mxu0 0.0
        %1411 = vmatprep.subr.mxu0 0.0
        %1412 = vmatpush1.msra.mxu0 0.0
        %1413 = vmatprep.subr.mxu0 0.0
        %1414 = vmatpush1.msra.mxu0 0.0
        %1415 = vmatprep.subr.mxu0 0.0
        %1416 = vmatpush1.msra.mxu0 0.0
        %1417 = vmatprep.subr.mxu0 0.0
        %1418 = vmatpush1.msra.mxu0 0.0
        %1419 = vmatprep.subr.mxu0 0.0
        %1420 = vmatpush1.msra.mxu0 0.0
        %1421 = vmatprep.subr.mxu0 0.0
        %1422 = vmatpush1.msra.mxu0 0.0
        %1423 = vmatprep.subr.mxu0 0.0
        %1424 = vmatpush1.msra.mxu0 0.0
        %1425 = vmatprep.subr.mxu0 0.0
        %1426 = vmatpush1.msra.mxu0 0.0
        %1427 = vmatprep.subr.mxu0 0.0
        %1428 = vmatpush1.msra.mxu0 0.0
        %1429 = vmatprep.subr.mxu0 0.0
        %1430 = vmatpush1.msra.mxu0 0.0
        %1431 = vmatprep.subr.mxu0 0.0
        %1432 = vmatpush1.msra.mxu0 0.0
        %1433 = vmatprep.subr.mxu0 0.0
        %1434 = vmatpush1.msra.mxu0 0.0
        %1435 = vmatprep.subr.mxu0 0.0
        %1436 = vmatpush1.msra.mxu0 0.0
        %1437 = vmatprep.subr.mxu0 0.0
        %1438 = vmatpush1.msra.mxu0 0.0
        %1439 = vmatprep.mubr.f32.mxu0 0.0
        %1440 = vmatmul.mubr.f32.gmra.mrb[0].mxu0 %v1373
        %v1441 = vpop.f32.mrb[0].mxu0
        %v1442 = vadd.f32 %v1364, %v1441
        %v1443 = vpop.f32.mrb[0].mxu0
        %v1444 = vadd.f32 %v1368, %v1443
        %1445 = vdwg.mxu0
        %v1446 = vmax.f32 %v1442, 0.0
        %v1447 = vmax.f32 %v1444, 0.0
        %v1448 = vld [vmem:[%s13] sm:$0xff]
        %v1449 = vld [vmem:[%s13 + $0x8] sm:$0xff]
        %v1450 = vld [vmem:[%s13 + $0x10] sm:$0xff]
        %v1451 = vld [vmem:[%s13 + $0x18] sm:$0xff]
        %v1452 = vld [vmem:[%s13 + $0x20] sm:$0xff]
        %v1453 = vld [vmem:[%s13 + $0x28] sm:$0xff]
        %v1454 = vld [vmem:[%s13 + $0x30] sm:$0xff]
        %v1455 = vld [vmem:[%s13 + $0x38] sm:$0xff]
        %v1456 = vld [vmem:[%s13 + $0x40] sm:$0xff]
        %v1457 = vld [vmem:[%s13 + $0x48] sm:$0xff]
        %v1458 = vld [vmem:[%s13 + $0x50] sm:$0xff]
        %v1459 = vld [vmem:[%s13 + $0x58] sm:$0xff]
        %v1460 = vld [vmem:[%s13 + $0x60] sm:$0xff]
        %v1461 = vld [vmem:[%s13 + $0x68] sm:$0xff]
        %v1462 = vld [vmem:[%s13 + $0x70] sm:$0xff]
        %v1463 = vld [vmem:[%s13 + $0x78] sm:$0xff]
        %v1464 = vld [vmem:[%s13 + $0x80] sm:$0xff]
        %v1465 = vld [vmem:[%s13 + $0x88] sm:$0xff]
        %v1466 = vld [vmem:[%s13 + $0x90] sm:$0xff]
        %v1467 = vld [vmem:[%s13 + $0x98] sm:$0xff]
        %v1468 = vld [vmem:[%s13 + $0xa0] sm:$0xff]
        %v1469 = vld [vmem:[%s13 + $0xa8] sm:$0xff]
        %v1470 = vld [vmem:[%s13 + $0xb0] sm:$0xff]
        %v1471 = vld [vmem:[%s13 + $0xb8] sm:$0xff]
        %v1472 = vld [vmem:[%s13 + $0xc0] sm:$0xff]
        %v1473 = vld [vmem:[%s13 + $0xc8] sm:$0xff]
        %v1474 = vld [vmem:[%s13 + $0xd0] sm:$0xff]
        %v1475 = vld [vmem:[%s13 + $0xd8] sm:$0xff]
        %v1476 = vld [vmem:[%s13 + $0xe0] sm:$0xff]
        %v1477 = vld [vmem:[%s13 + $0xe8] sm:$0xff]
        %v1478 = vld [vmem:[%s13 + $0xf0] sm:$0xff]
        %v1479 = vld [vmem:[%s13 + $0xf8] sm:$0xff]
        %v1480 = vld [vmem:[%s15] sm:$0x1]
        %v1482 = vlaneseq
        %v1483 = vshrl.u32 %v1482, 7
        %v1484 = vsub.s32 0, %v1483
        %v1485 = vrot.slane %v1480, %v1484
        %1487 = vmatprep.subr.mxu0 0.0
        %1488 = vmatpush1.msra.mxu0 %v1448
        %1489 = vmatprep.subr.mxu0 0.0
        %1490 = vmatpush1.msra.mxu0 %v1449
        %1491 = vmatprep.subr.mxu0 0.0
        %1492 = vmatpush1.msra.mxu0 %v1450
        %1493 = vmatprep.subr.mxu0 0.0
        %1494 = vmatpush1.msra.mxu0 %v1451
        %1495 = vmatprep.subr.mxu0 0.0
        %1496 = vmatpush1.msra.mxu0 %v1452
        %1497 = vmatprep.subr.mxu0 0.0
        %1498 = vmatpush1.msra.mxu0 %v1453
        %1499 = vmatprep.subr.mxu0 0.0
        %1500 = vmatpush1.msra.mxu0 %v1454
        %1501 = vmatprep.subr.mxu0 0.0
        %1502 = vmatpush1.msra.mxu0 %v1455
        %1503 = vmatprep.subr.mxu0 0.0
        %1504 = vmatpush1.msra.mxu0 %v1456
        %1505 = vmatprep.subr.mxu0 0.0
        %1506 = vmatpush1.msra.mxu0 %v1457
        %1507 = vmatprep.subr.mxu0 0.0
        %1508 = vmatpush1.msra.mxu0 %v1458
        %1509 = vmatprep.subr.mxu0 0.0
        %1510 = vmatpush1.msra.mxu0 %v1459
        %1511 = vmatprep.subr.mxu0 0.0
        %1512 = vmatpush1.msra.mxu0 %v1460
        %1513 = vmatprep.subr.mxu0 0.0
        %1514 = vmatpush1.msra.mxu0 %v1461
        %1515 = vmatprep.subr.mxu0 0.0
        %1516 = vmatpush1.msra.mxu0 %v1462
        %1517 = vmatprep.subr.mxu0 0.0
        %1518 = vmatpush1.msra.mxu0 %v1463
        %1519 = vmatprep.subr.mxu0 0.0
        %1520 = vmatpush1.msra.mxu0 %v1464
        %1521 = vmatprep.subr.mxu0 0.0
        %1522 = vmatpush1.msra.mxu0 %v1465
        %1523 = vmatprep.subr.mxu0 0.0
        %1524 = vmatpush1.msra.mxu0 %v1466
        %1525 = vmatprep.subr.mxu0 0.0
        %1526 = vmatpush1.msra.mxu0 %v1467
        %1527 = vmatprep.subr.mxu0 0.0
        %1528 = vmatpush1.msra.mxu0 %v1468
        %1529 = vmatprep.subr.mxu0 0.0
        %1530 = vmatpush1.msra.mxu0 %v1469
        %1531 = vmatprep.subr.mxu0 0.0
        %1532 = vmatpush1.msra.mxu0 %v1470
        %1533 = vmatprep.subr.mxu0 0.0
        %1534 = vmatpush1.msra.mxu0 %v1471
        %1535 = vmatprep.subr.mxu0 0.0
        %1536 = vmatpush1.msra.mxu0 %v1472
        %1537 = vmatprep.subr.mxu0 0.0
        %1538 = vmatpush1.msra.mxu0 %v1473
        %1539 = vmatprep.subr.mxu0 0.0
        %1540 = vmatpush1.msra.mxu0 %v1474
        %1541 = vmatprep.subr.mxu0 0.0
        %1542 = vmatpush1.msra.mxu0 %v1475
        %1543 = vmatprep.subr.mxu0 0.0
        %1544 = vmatpush1.msra.mxu0 %v1476
        %1545 = vmatprep.subr.mxu0 0.0
        %1546 = vmatpush1.msra.mxu0 %v1477
        %1547 = vmatprep.subr.mxu0 0.0
        %1548 = vmatpush1.msra.mxu0 %v1478
        %1549 = vmatprep.subr.mxu0 0.0
        %1550 = vmatpush1.msra.mxu0 %v1479
        %1551 = vmatprep.mubr.f32.mxu0 %v1447
        %1552 = vmatmul.mubr.f32.gmra.mrb[0].mxu0 %v1446
        %v1553 = vpop.f32.mrb[0].mxu0
        %v1554 = vadd.f32 %v1485, %v1553
        %v1555 = vpop.f32.mrb[0].mxu0
        %1556 = vdwg.mxu0
        %v1557 = vld [vmem:[%s1350] sm:$0xf]
        %v1558 = vld [vmem:[%s17] sm:$0xff]
        %v1559 = vld [vmem:[%s17 + $0x8] sm:$0xff]
        %v1560 = vld [vmem:[%s19] sm:$0x3]
        %v1562 = vlaneseq
        %v1563 = vshrl.u32 %v1562, 7
        %v1564 = vsub.s32 0, %v1563
        %v1565 = vrot.slane %v1560, %v1564
        %v1566 = vlaneseq
        %v1567 = vshrl.u32 %v1566, 7
        %v1568 = vsub.s32 1, %v1567
        %v1569 = vrot.slane %v1560, %v1568
        %v1573 = vsel %vm1371, %v1557, 0
        %1575 = vmatprep.subr.mxu0 %v1559
        %1576 = vmatpush1.msra.mxu0 %v1558
        %1577 = vmatprep.subr.mxu0 0.0
        %1578 = vmatpush1.msra.mxu0 0.0
        %1579 = vmatprep.subr.mxu0 0.0
        %1580 = vmatpush1.msra.mxu0 0.0
        %1581 = vmatprep.subr.mxu0 0.0
        %1582 = vmatpush1.msra.mxu0 0.0
        %1583 = vmatprep.subr.mxu0 0.0
        %1584 = vmatpush1.msra.mxu0 0.0
        %1585 = vmatprep.subr.mxu0 0.0
        %1586 = vmatpush1.msra.mxu0 0.0
        %1587 = vmatprep.subr.mxu0 0.0
        %1588 = vmatpush1.msra.mxu0 0.0
        %1589 = vmatprep.subr.mxu0 0.0
        %1590 = vmatpush1.msra.mxu0 0.0
        %1591 = vmatprep.subr.mxu0 0.0
        %1592 = vmatpush1.msra.mxu0 0.0
        %1593 = vmatprep.subr.mxu0 0.0
        %1594 = vmatpush1.msra.mxu0 0.0
        %1595 = vmatprep.subr.mxu0 0.0
        %1596 = vmatpush1.msra.mxu0 0.0
        %1597 = vmatprep.subr.mxu0 0.0
        %1598 = vmatpush1.msra.mxu0 0.0
        %1599 = vmatprep.subr.mxu0 0.0
        %1600 = vmatpush1.msra.mxu0 0.0
        %1601 = vmatprep.subr.mxu0 0.0
        %1602 = vmatpush1.msra.mxu0 0.0
        %1603 = vmatprep.subr.mxu0 0.0
        %1604 = vmatpush1.msra.mxu0 0.0
        %1605 = vmatprep.subr.mxu0 0.0
        %1606 = vmatpush1.msra.mxu0 0.0
        %1607 = vmatprep.subr.mxu0 0.0
        %1608 = vmatpush1.msra.mxu0 0.0
        %1609 = vmatprep.subr.mxu0 0.0
        %1610 = vmatpush1.msra.mxu0 0.0
        %1611 = vmatprep.subr.mxu0 0.0
        %1612 = vmatpush1.msra.mxu0 0.0
        %1613 = vmatprep.subr.mxu0 0.0
        %1614 = vmatpush1.msra.mxu0 0.0
        %1615 = vmatprep.subr.mxu0 0.0
        %1616 = vmatpush1.msra.mxu0 0.0
        %1617 = vmatprep.subr.mxu0 0.0
        %1618 = vmatpush1.msra.mxu0 0.0
        %1619 = vmatprep.subr.mxu0 0.0
        %1620 = vmatpush1.msra.mxu0 0.0
        %1621 = vmatprep.subr.mxu0 0.0
        %1622 = vmatpush1.msra.mxu0 0.0
        %1623 = vmatprep.subr.mxu0 0.0
        %1624 = vmatpush1.msra.mxu0 0.0
        %1625 = vmatprep.subr.mxu0 0.0
        %1626 = vmatpush1.msra.mxu0 0.0
        %1627 = vmatprep.subr.mxu0 0.0
        %1628 = vmatpush1.msra.mxu0 0.0
        %1629 = vmatprep.subr.mxu0 0.0
        %1630 = vmatpush1.msra.mxu0 0.0
        %1631 = vmatprep.subr.mxu0 0.0
        %1632 = vmatpush1.msra.mxu0 0.0
        %1633 = vmatprep.subr.mxu0 0.0
        %1634 = vmatpush1.msra.mxu0 0.0
        %1635 = vmatprep.subr.mxu0 0.0
        %1636 = vmatpush1.msra.mxu0 0.0
        %1637 = vmatprep.subr.mxu0 0.0
        %1638 = vmatpush1.msra.mxu0 0.0
        %1639 = vmatprep.mubr.f32.mxu0 0.0
        %1640 = vmatmul.mubr.f32.gmra.mrb[0].mxu0 %v1573
        %v1641 = vpop.f32.mrb[0].mxu0
        %v1642 = vadd.f32 %v1565, %v1641
        %v1643 = vpop.f32.mrb[0].mxu0
        %v1644 = vadd.f32 %v1569, %v1643
        %1645 = vdwg.mxu0
        %v1646 = vmax.f32 %v1642, 0.0
        %v1647 = vmax.f32 %v1644, 0.0
        %v1648 = vld [vmem:[%s21] sm:$0xff]
        %v1649 = vld [vmem:[%s21 + $0x8] sm:$0xff]
        %v1650 = vld [vmem:[%s21 + $0x10] sm:$0xff]
        %v1651 = vld [vmem:[%s21 + $0x18] sm:$0xff]
        %v1652 = vld [vmem:[%s21 + $0x20] sm:$0xff]
        %v1653 = vld [vmem:[%s21 + $0x28] sm:$0xff]
        %v1654 = vld [vmem:[%s21 + $0x30] sm:$0xff]
        %v1655 = vld [vmem:[%s21 + $0x38] sm:$0xff]
        %v1656 = vld [vmem:[%s21 + $0x40] sm:$0xff]
        %v1657 = vld [vmem:[%s21 + $0x48] sm:$0xff]
        %v1658 = vld [vmem:[%s21 + $0x50] sm:$0xff]
        %v1659 = vld [vmem:[%s21 + $0x58] sm:$0xff]
        %v1660 = vld [vmem:[%s21 + $0x60] sm:$0xff]
        %v1661 = vld [vmem:[%s21 + $0x68] sm:$0xff]
        %v1662 = vld [vmem:[%s21 + $0x70] sm:$0xff]
        %v1663 = vld [vmem:[%s21 + $0x78] sm:$0xff]
        %v1664 = vld [vmem:[%s21 + $0x80] sm:$0xff]
        %v1665 = vld [vmem:[%s21 + $0x88] sm:$0xff]
        %v1666 = vld [vmem:[%s21 + $0x90] sm:$0xff]
        %v1667 = vld [vmem:[%s21 + $0x98] sm:$0xff]
        %v1668 = vld [vmem:[%s21 + $0xa0] sm:$0xff]
        %v1669 = vld [vmem:[%s21 + $0xa8] sm:$0xff]
        %v1670 = vld [vmem:[%s21 + $0xb0] sm:$0xff]
        %v1671 = vld [vmem:[%s21 + $0xb8] sm:$0xff]
        %v1672 = vld [vmem:[%s21 + $0xc0] sm:$0xff]
        %v1673 = vld [vmem:[%s21 + $0xc8] sm:$0xff]
        %v1674 = vld [vmem:[%s21 + $0xd0] sm:$0xff]
        %v1675 = vld [vmem:[%s21 + $0xd8] sm:$0xff]
        %v1676 = vld [vmem:[%s21 + $0xe0] sm:$0xff]
        %v1677 = vld [vmem:[%s21 + $0xe8] sm:$0xff]
        %v1678 = vld [vmem:[%s21 + $0xf0] sm:$0xff]
        %v1679 = vld [vmem:[%s21 + $0xf8] sm:$0xff]
        %v1680 = vld [vmem:[%s23] sm:$0x1]
        %v1682 = vlaneseq
        %v1683 = vshrl.u32 %v1682, 7
        %v1684 = vsub.s32 0, %v1683
        %v1685 = vrot.slane %v1680, %v1684
        %1687 = vmatprep.subr.mxu0 0.0
        %1688 = vmatpush1.msra.mxu0 %v1648
        %1689 = vmatprep.subr.mxu0 0.0
        %1690 = vmatpush1.msra.mxu0 %v1649
        %1691 = vmatprep.subr.mxu0 0.0
        %1692 = vmatpush1.msra.mxu0 %v1650
        %1693 = vmatprep.subr.mxu0 0.0
        %1694 = vmatpush1.msra.mxu0 %v1651
        %1695 = vmatprep.subr.mxu0 0.0
        %1696 = vmatpush1.msra.mxu0 %v1652
        %1697 = vmatprep.subr.mxu0 0.0
        %1698 = vmatpush1.msra.mxu0 %v1653
        %1699 = vmatprep.subr.mxu0 0.0
        %1700 = vmatpush1.msra.mxu0 %v1654
        %1701 = vmatprep.subr.mxu0 0.0
        %1702 = vmatpush1.msra.mxu0 %v1655
        %1703 = vmatprep.subr.mxu0 0.0
        %1704 = vmatpush1.msra.mxu0 %v1656
        %1705 = vmatprep.subr.mxu0 0.0
        %1706 = vmatpush1.msra.mxu0 %v1657
        %1707 = vmatprep.subr.mxu0 0.0
        %1708 = vmatpush1.msra.mxu0 %v1658
        %1709 = vmatprep.subr.mxu0 0.0
        %1710 = vmatpush1.msra.mxu0 %v1659
        %1711 = vmatprep.subr.mxu0 0.0
        %1712 = vmatpush1.msra.mxu0 %v1660
        %1713 = vmatprep.subr.mxu0 0.0
        %1714 = vmatpush1.msra.mxu0 %v1661
        %1715 = vmatprep.subr.mxu0 0.0
        %1716 = vmatpush1.msra.mxu0 %v1662
        %1717 = vmatprep.subr.mxu0 0.0
        %1718 = vmatpush1.msra.mxu0 %v1663
        %1719 = vmatprep.subr.mxu0 0.0
        %1720 = vmatpush1.msra.mxu0 %v1664
        %1721 = vmatprep.subr.mxu0 0.0
        %1722 = vmatpush1.msra.mxu0 %v1665
        %1723 = vmatprep.subr.mxu0 0.0
        %1724 = vmatpush1.msra.mxu0 %v1666
        %1725 = vmatprep.subr.mxu0 0.0
        %1726 = vmatpush1.msra.mxu0 %v1667
        %1727 = vmatprep.subr.mxu0 0.0
        %1728 = vmatpush1.msra.mxu0 %v1668
        %1729 = vmatprep.subr.mxu0 0.0
        %1730 = vmatpush1.msra.mxu0 %v1669
        %1731 = vmatprep.subr.mxu0 0.0
        %1732 = vmatpush1.msra.mxu0 %v1670
        %1733 = vmatprep.subr.mxu0 0.0
        %1734 = vmatpush1.msra.mxu0 %v1671
        %1735 = vmatprep.subr.mxu0 0.0
        %1736 = vmatpush1.msra.mxu0 %v1672
        %1737 = vmatprep.subr.mxu0 0.0
        %1738 = vmatpush1.msra.mxu0 %v1673
        %1739 = vmatprep.subr.mxu0 0.0
        %1740 = vmatpush1.msra.mxu0 %v1674
        %1741 = vmatprep.subr.mxu0 0.0
        %1742 = vmatpush1.msra.mxu0 %v1675
        %1743 = vmatprep.subr.mxu0 0.0
        %1744 = vmatpush1.msra.mxu0 %v1676
        %1745 = vmatprep.subr.mxu0 0.0
        %1746 = vmatpush1.msra.mxu0 %v1677
        %1747 = vmatprep.subr.mxu0 0.0
        %1748 = vmatpush1.msra.mxu0 %v1678
        %1749 = vmatprep.subr.mxu0 0.0
        %1750 = vmatpush1.msra.mxu0 %v1679
        %1751 = vmatprep.mubr.f32.mxu0 %v1647
        %1752 = vmatmul.mubr.f32.gmra.mrb[0].mxu0 %v1646
        %v1753 = vpop.f32.mrb[0].mxu0
        %v1754 = vadd.f32 %v1685, %v1753
        %v1755 = vpop.f32.mrb[0].mxu0
        %1756 = vdwg.mxu0
        %v1757 = vld [vmem:[%s1220] sm:$0xf]
        %v1758 = vld [vmem:[#allocation7] sm:$0x3f]
        %v1759 = vld [vmem:[#allocation7 + $0x8] sm:$0x3f]
        %v1760 = vld [vmem:[%s27] sm:$0x3]
        %v1762 = vlaneseq
        %v1763 = vshrl.u32 %v1762, 7
        %v1764 = vsub.s32 0, %v1763
        %v1765 = vrot.slane %v1760, %v1764
        %v1766 = vlaneseq
        %v1767 = vshrl.u32 %v1766, 7
        %v1768 = vsub.s32 1, %v1767
        %v1769 = vrot.slane %v1760, %v1768
        %vm1772 = vcmask 48128
        %v1774 = vsel %vm1772, %v1757, 0
        %vm1776 = vcmask 1045504
        %v1778 = vsel %vm1776, %v1758, 0
        %v1781 = vsel %vm1776, %v1759, 0
        %1783 = vmatprep.subr.mxu0 %v1781
        %1784 = vmatpush1.msra.mxu0 %v1778
        %1785 = vmatprep.subr.mxu0 0.0
        %1786 = vmatpush1.msra.mxu0 0.0
        %1787 = vmatprep.subr.mxu0 0.0
        %1788 = vmatpush1.msra.mxu0 0.0
        %1789 = vmatprep.subr.mxu0 0.0
        %1790 = vmatpush1.msra.mxu0 0.0
        %1791 = vmatprep.subr.mxu0 0.0
        %1792 = vmatpush1.msra.mxu0 0.0
        %1793 = vmatprep.subr.mxu0 0.0
        %1794 = vmatpush1.msra.mxu0 0.0
        %1795 = vmatprep.subr.mxu0 0.0
        %1796 = vmatpush1.msra.mxu0 0.0
        %1797 = vmatprep.subr.mxu0 0.0
        %1798 = vmatpush1.msra.mxu0 0.0
        %1799 = vmatprep.subr.mxu0 0.0
        %1800 = vmatpush1.msra.mxu0 0.0
        %1801 = vmatprep.subr.mxu0 0.0
        %1802 = vmatpush1.msra.mxu0 0.0
        %1803 = vmatprep.subr.mxu0 0.0
        %1804 = vmatpush1.msra.mxu0 0.0
        %1805 = vmatprep.subr.mxu0 0.0
        %1806 = vmatpush1.msra.mxu0 0.0
        %1807 = vmatprep.subr.mxu0 0.0
        %1808 = vmatpush1.msra.mxu0 0.0
        %1809 = vmatprep.subr.mxu0 0.0
        %1810 = vmatpush1.msra.mxu0 0.0
        %1811 = vmatprep.subr.mxu0 0.0
        %1812 = vmatpush1.msra.mxu0 0.0
        %1813 = vmatprep.subr.mxu0 0.0
        %1814 = vmatpush1.msra.mxu0 0.0
        %1815 = vmatprep.subr.mxu0 0.0
        %1816 = vmatpush1.msra.mxu0 0.0
        %1817 = vmatprep.subr.mxu0 0.0
        %1818 = vmatpush1.msra.mxu0 0.0
        %1819 = vmatprep.subr.mxu0 0.0
        %1820 = vmatpush1.msra.mxu0 0.0
        %1821 = vmatprep.subr.mxu0 0.0
        %1822 = vmatpush1.msra.mxu0 0.0
        %1823 = vmatprep.subr.mxu0 0.0
        %1824 = vmatpush1.msra.mxu0 0.0
        %1825 = vmatprep.subr.mxu0 0.0
        %1826 = vmatpush1.msra.mxu0 0.0
        %1827 = vmatprep.subr.mxu0 0.0
        %1828 = vmatpush1.msra.mxu0 0.0
        %1829 = vmatprep.subr.mxu0 0.0
        %1830 = vmatpush1.msra.mxu0 0.0
        %1831 = vmatprep.subr.mxu0 0.0
        %1832 = vmatpush1.msra.mxu0 0.0
        %1833 = vmatprep.subr.mxu0 0.0
        %1834 = vmatpush1.msra.mxu0 0.0
        %1835 = vmatprep.subr.mxu0 0.0
        %1836 = vmatpush1.msra.mxu0 0.0
        %1837 = vmatprep.subr.mxu0 0.0
        %1838 = vmatpush1.msra.mxu0 0.0
        %1839 = vmatprep.subr.mxu0 0.0
        %1840 = vmatpush1.msra.mxu0 0.0
        %1841 = vmatprep.subr.mxu0 0.0
        %1842 = vmatpush1.msra.mxu0 0.0
        %1843 = vmatprep.subr.mxu0 0.0
        %1844 = vmatpush1.msra.mxu0 0.0
        %1845 = vmatprep.subr.mxu0 0.0
        %1846 = vmatpush1.msra.mxu0 0.0
        %1847 = vmatprep.mubr.f32.mxu0 0.0
        %1848 = vmatmul.mubr.f32.gmra.mrb[0].mxu0 %v1774
        %v1849 = vpop.f32.mrb[0].mxu0
        %v1850 = vadd.f32 %v1765, %v1849
        %v1851 = vpop.f32.mrb[0].mxu0
        %v1852 = vadd.f32 %v1769, %v1851
        %1853 = vdwg.mxu0
        %v1854 = vmax.f32 %v1850, 0.0
        %v1855 = vmax.f32 %v1852, 0.0
        %v1856 = vld [vmem:[%s29] sm:$0xff]
        %v1857 = vld [vmem:[%s29 + $0x8] sm:$0xff]
        %v1858 = vld [vmem:[%s29 + $0x10] sm:$0xff]
        %v1859 = vld [vmem:[%s29 + $0x18] sm:$0xff]
        %v1860 = vld [vmem:[%s29 + $0x20] sm:$0xff]
        %v1861 = vld [vmem:[%s29 + $0x28] sm:$0xff]
        %v1862 = vld [vmem:[%s29 + $0x30] sm:$0xff]
        %v1863 = vld [vmem:[%s29 + $0x38] sm:$0xff]
        %v1864 = vld [vmem:[%s29 + $0x40] sm:$0xff]
        %v1865 = vld [vmem:[%s29 + $0x48] sm:$0xff]
        %v1866 = vld [vmem:[%s29 + $0x50] sm:$0xff]
        %v1867 = vld [vmem:[%s29 + $0x58] sm:$0xff]
        %v1868 = vld [vmem:[%s29 + $0x60] sm:$0xff]
        %v1869 = vld [vmem:[%s29 + $0x68] sm:$0xff]
        %v1870 = vld [vmem:[%s29 + $0x70] sm:$0xff]
        %v1871 = vld [vmem:[%s29 + $0x78] sm:$0xff]
        %v1872 = vld [vmem:[%s29 + $0x80] sm:$0xff]
        %v1873 = vld [vmem:[%s29 + $0x88] sm:$0xff]
        %v1874 = vld [vmem:[%s29 + $0x90] sm:$0xff]
        %v1875 = vld [vmem:[%s29 + $0x98] sm:$0xff]
        %v1876 = vld [vmem:[%s29 + $0xa0] sm:$0xff]
        %v1877 = vld [vmem:[%s29 + $0xa8] sm:$0xff]
        %v1878 = vld [vmem:[%s29 + $0xb0] sm:$0xff]
        %v1879 = vld [vmem:[%s29 + $0xb8] sm:$0xff]
        %v1880 = vld [vmem:[%s29 + $0xc0] sm:$0xff]
        %v1881 = vld [vmem:[%s29 + $0xc8] sm:$0xff]
        %v1882 = vld [vmem:[%s29 + $0xd0] sm:$0xff]
        %v1883 = vld [vmem:[%s29 + $0xd8] sm:$0xff]
        %v1884 = vld [vmem:[%s29 + $0xe0] sm:$0xff]
        %v1885 = vld [vmem:[%s29 + $0xe8] sm:$0xff]
        %v1886 = vld [vmem:[%s29 + $0xf0] sm:$0xff]
        %v1887 = vld [vmem:[%s29 + $0xf8] sm:$0xff]
        %v1888 = vld [vmem:[%s31] sm:$0x1]
        %v1890 = vlaneseq
        %v1891 = vshrl.u32 %v1890, 7
        %v1892 = vsub.s32 0, %v1891
        %v1893 = vrot.slane %v1888, %v1892
        %1895 = vmatprep.subr.mxu0 0.0
        %1896 = vmatpush1.msra.mxu0 %v1856
        %1897 = vmatprep.subr.mxu0 0.0
        %1898 = vmatpush1.msra.mxu0 %v1857
        %1899 = vmatprep.subr.mxu0 0.0
        %1900 = vmatpush1.msra.mxu0 %v1858
        %1901 = vmatprep.subr.mxu0 0.0
        %1902 = vmatpush1.msra.mxu0 %v1859
        %1903 = vmatprep.subr.mxu0 0.0
        %1904 = vmatpush1.msra.mxu0 %v1860
        %1905 = vmatprep.subr.mxu0 0.0
        %1906 = vmatpush1.msra.mxu0 %v1861
        %1907 = vmatprep.subr.mxu0 0.0
        %1908 = vmatpush1.msra.mxu0 %v1862
        %1909 = vmatprep.subr.mxu0 0.0
        %1910 = vmatpush1.msra.mxu0 %v1863
        %1911 = vmatprep.subr.mxu0 0.0
        %1912 = vmatpush1.msra.mxu0 %v1864
        %1913 = vmatprep.subr.mxu0 0.0
        %1914 = vmatpush1.msra.mxu0 %v1865
        %1915 = vmatprep.subr.mxu0 0.0
        %1916 = vmatpush1.msra.mxu0 %v1866
        %1917 = vmatprep.subr.mxu0 0.0
        %1918 = vmatpush1.msra.mxu0 %v1867
        %1919 = vmatprep.subr.mxu0 0.0
        %1920 = vmatpush1.msra.mxu0 %v1868
        %1921 = vmatprep.subr.mxu0 0.0
        %1922 = vmatpush1.msra.mxu0 %v1869
        %1923 = vmatprep.subr.mxu0 0.0
        %1924 = vmatpush1.msra.mxu0 %v1870
        %1925 = vmatprep.subr.mxu0 0.0
        %1926 = vmatpush1.msra.mxu0 %v1871
        %1927 = vmatprep.subr.mxu0 0.0
        %1928 = vmatpush1.msra.mxu0 %v1872
        %1929 = vmatprep.subr.mxu0 0.0
        %1930 = vmatpush1.msra.mxu0 %v1873
        %1931 = vmatprep.subr.mxu0 0.0
        %1932 = vmatpush1.msra.mxu0 %v1874
        %1933 = vmatprep.subr.mxu0 0.0
        %1934 = vmatpush1.msra.mxu0 %v1875
        %1935 = vmatprep.subr.mxu0 0.0
        %1936 = vmatpush1.msra.mxu0 %v1876
        %1937 = vmatprep.subr.mxu0 0.0
        %1938 = vmatpush1.msra.mxu0 %v1877
        %1939 = vmatprep.subr.mxu0 0.0
        %1940 = vmatpush1.msra.mxu0 %v1878
        %1941 = vmatprep.subr.mxu0 0.0
        %1942 = vmatpush1.msra.mxu0 %v1879
        %1943 = vmatprep.subr.mxu0 0.0
        %1944 = vmatpush1.msra.mxu0 %v1880
        %1945 = vmatprep.subr.mxu0 0.0
        %1946 = vmatpush1.msra.mxu0 %v1881
        %1947 = vmatprep.subr.mxu0 0.0
        %1948 = vmatpush1.msra.mxu0 %v1882
        %1949 = vmatprep.subr.mxu0 0.0
        %1950 = vmatpush1.msra.mxu0 %v1883
        %1951 = vmatprep.subr.mxu0 0.0
        %1952 = vmatpush1.msra.mxu0 %v1884
        %1953 = vmatprep.subr.mxu0 0.0
        %1954 = vmatpush1.msra.mxu0 %v1885
        %1955 = vmatprep.subr.mxu0 0.0
        %1956 = vmatpush1.msra.mxu0 %v1886
        %1957 = vmatprep.subr.mxu0 0.0
        %1958 = vmatpush1.msra.mxu0 %v1887
        %1959 = vmatprep.mubr.f32.mxu0 %v1855
        %1960 = vmatmul.mubr.f32.gmra.mrb[0].mxu0 %v1854
        %v1961 = vpop.f32.mrb[0].mxu0
        %v1962 = vadd.f32 %v1893, %v1961
        %v1963 = vpop.f32.mrb[0].mxu0
        %1964 = vdwg.mxu0
        %v1965 = vlaneseq
        %v1966 = vshrl.u32 %v1965, 7
        %vm1967 = vcmp.lt.s32.totalorder %v1966, 3
        %v1968 = vsel %vm1967, %v1962, 0.0
        %v1969 = vadd.s32 %v1966, 8
        %v1970 = vlaneseq
        %v1971 = vand.u32 %v1970, 127
        %v1972 = vmul.u32 %v1971, 3
        %vm1973 = vcmp.eq.s32.totalorder %v1966, %v1972
        %vm1974 = vcmp.eq.s32.totalorder %v1969, %v1972
        %v1975 = vsel %vm1973, 1, 0
        %v1976 = vsel %vm1974, 1, 0
        %v1977 = vcvt.s32.f32 %v1975
        %v1978 = vcvt.s32.f32 %v1976
        %v1979 = vadd.s32 %v1972, 1
        %vm1980 = vcmp.eq.s32.totalorder %v1966, %v1979
        %vm1981 = vcmp.eq.s32.totalorder %v1969, %v1979
        %v1982 = vsel %vm1980, 1, 0
        %v1983 = vsel %vm1981, 1, 0
        %v1984 = vcvt.s32.f32 %v1982
        %v1985 = vcvt.s32.f32 %v1983
        %vm1986 = vcmask 31744
        %v1988 = vsel %vm1986, %v1984, 0
        %v1991 = vsel %vm1986, %v1985, 0
        %vm1993 = vcmask 1043456
        %v1995 = vsel %vm1993, %v1754, 0
        %1997 = vmatprep.subr.mxu0 0.0
        %1998 = vmatpush1.msra.mxu0 %v1995
        %1999 = vmatprep.subr.mxu0 0.0
        %2000 = vmatpush1.msra.mxu0 0.0
        %2001 = vmatprep.subr.mxu0 0.0
        %2002 = vmatpush1.msra.mxu0 0.0
        %2003 = vmatprep.subr.mxu0 0.0
        %2004 = vmatpush1.msra.mxu0 0.0
        %2005 = vmatprep.subr.mxu0 0.0
        %2006 = vmatpush1.msra.mxu0 0.0
        %2007 = vmatprep.subr.mxu0 0.0
        %2008 = vmatpush1.msra.mxu0 0.0
        %2009 = vmatprep.subr.mxu0 0.0
        %2010 = vmatpush1.msra.mxu0 0.0
        %2011 = vmatprep.subr.mxu0 0.0
        %2012 = vmatpush1.msra.mxu0 0.0
        %2013 = vmatprep.subr.mxu0 0.0
        %2014 = vmatpush1.msra.mxu0 0.0
        %2015 = vmatprep.subr.mxu0 0.0
        %2016 = vmatpush1.msra.mxu0 0.0
        %2017 = vmatprep.subr.mxu0 0.0
        %2018 = vmatpush1.msra.mxu0 0.0
        %2019 = vmatprep.subr.mxu0 0.0
        %2020 = vmatpush1.msra.mxu0 0.0
        %2021 = vmatprep.subr.mxu0 0.0
        %2022 = vmatpush1.msra.mxu0 0.0
        %2023 = vmatprep.subr.mxu0 0.0
        %2024 = vmatpush1.msra.mxu0 0.0
        %2025 = vmatprep.subr.mxu0 0.0
        %2026 = vmatpush1.msra.mxu0 0.0
        %2027 = vmatprep.subr.mxu0 0.0
        %2028 = vmatpush1.msra.mxu0 0.0
        %2029 = vmatprep.subr.mxu0 0.0
        %2030 = vmatpush1.msra.mxu0 0.0
        %2031 = vmatprep.subr.mxu0 0.0
        %2032 = vmatpush1.msra.mxu0 0.0
        %2033 = vmatprep.subr.mxu0 0.0
        %2034 = vmatpush1.msra.mxu0 0.0
        %2035 = vmatprep.subr.mxu0 0.0
        %2036 = vmatpush1.msra.mxu0 0.0
        %2037 = vmatprep.subr.mxu0 0.0
        %2038 = vmatpush1.msra.mxu0 0.0
        %2039 = vmatprep.subr.mxu0 0.0
        %2040 = vmatpush1.msra.mxu0 0.0
        %2041 = vmatprep.subr.mxu0 0.0
        %2042 = vmatpush1.msra.mxu0 0.0
        %2043 = vmatprep.subr.mxu0 0.0
        %2044 = vmatpush1.msra.mxu0 0.0
        %2045 = vmatprep.subr.mxu0 0.0
        %2046 = vmatpush1.msra.mxu0 0.0
        %2047 = vmatprep.subr.mxu0 0.0
        %2048 = vmatpush1.msra.mxu0 0.0
        %2049 = vmatprep.subr.mxu0 0.0
        %2050 = vmatpush1.msra.mxu0 0.0
        %2051 = vmatprep.subr.mxu0 0.0
        %2052 = vmatpush1.msra.mxu0 0.0
        %2053 = vmatprep.subr.mxu0 0.0
        %2054 = vmatpush1.msra.mxu0 0.0
        %2055 = vmatprep.subr.mxu0 0.0
        %2056 = vmatpush1.msra.mxu0 0.0
        %2057 = vmatprep.subr.mxu0 0.0
        %2058 = vmatpush1.msra.mxu0 0.0
        %2059 = vmatprep.subr.mxu0 0.0
        %2060 = vmatpush1.msra.mxu0 0.0
        %2061 = vmatprep.mubr.f32.mxu0 0.0
        %2062 = vmatmul.mubr.f32.gmra.mrb[0].mxu0 %v1988
        %v2063 = vpop.f32.mrb[0].mxu0
        %v2064 = vadd.f32 0.0, %v2063
        %v2065 = vpop.f32.mrb[0].mxu0
        %2066 = vmatprep.mubr.f32.mxu0 0.0
        %2067 = vmatmul.mubr.f32.gmra.mrb[0].mxu0 %v1991
        %v2068 = vpop.f32.mrb[0].mxu0
        %v2069 = vadd.f32 0.0, %v2068
        %v2070 = vpop.f32.mrb[0].mxu0
        %2071 = vdwg.mxu0
        %v2073 = vsel %vm1986, %v1977, 0
        %v2076 = vsel %vm1986, %v1978, 0
        %v2079 = vsel %vm1993, %v1554, 0
        %2081 = vmatprep.subr.mxu0 0.0
        %2082 = vmatpush1.msra.mxu0 %v2079
        %2083 = vmatprep.subr.mxu0 0.0
        %2084 = vmatpush1.msra.mxu0 0.0
        %2085 = vmatprep.subr.mxu0 0.0
        %2086 = vmatpush1.msra.mxu0 0.0
        %2087 = vmatprep.subr.mxu0 0.0
        %2088 = vmatpush1.msra.mxu0 0.0
        %2089 = vmatprep.subr.mxu0 0.0
        %2090 = vmatpush1.msra.mxu0 0.0
        %2091 = vmatprep.subr.mxu0 0.0
        %2092 = vmatpush1.msra.mxu0 0.0
        %2093 = vmatprep.subr.mxu0 0.0
        %2094 = vmatpush1.msra.mxu0 0.0
        %2095 = vmatprep.subr.mxu0 0.0
        %2096 = vmatpush1.msra.mxu0 0.0
        %2097 = vmatprep.subr.mxu0 0.0
        %2098 = vmatpush1.msra.mxu0 0.0
        %2099 = vmatprep.subr.mxu0 0.0
        %2100 = vmatpush1.msra.mxu0 0.0
        %2101 = vmatprep.subr.mxu0 0.0
        %2102 = vmatpush1.msra.mxu0 0.0
        %2103 = vmatprep.subr.mxu0 0.0
        %2104 = vmatpush1.msra.mxu0 0.0
        %2105 = vmatprep.subr.mxu0 0.0
        %2106 = vmatpush1.msra.mxu0 0.0
        %2107 = vmatprep.subr.mxu0 0.0
        %2108 = vmatpush1.msra.mxu0 0.0
        %2109 = vmatprep.subr.mxu0 0.0
        %2110 = vmatpush1.msra.mxu0 0.0
        %2111 = vmatprep.subr.mxu0 0.0
        %2112 = vmatpush1.msra.mxu0 0.0
        %2113 = vmatprep.subr.mxu0 0.0
        %2114 = vmatpush1.msra.mxu0 0.0
        %2115 = vmatprep.subr.mxu0 0.0
        %2116 = vmatpush1.msra.mxu0 0.0
        %2117 = vmatprep.subr.mxu0 0.0
        %2118 = vmatpush1.msra.mxu0 0.0
        %2119 = vmatprep.subr.mxu0 0.0
        %2120 = vmatpush1.msra.mxu0 0.0
        %2121 = vmatprep.subr.mxu0 0.0
        %2122 = vmatpush1.msra.mxu0 0.0
        %2123 = vmatprep.subr.mxu0 0.0
        %2124 = vmatpush1.msra.mxu0 0.0
        %2125 = vmatprep.subr.mxu0 0.0
        %2126 = vmatpush1.msra.mxu0 0.0
        %2127 = vmatprep.subr.mxu0 0.0
        %2128 = vmatpush1.msra.mxu0 0.0
        %2129 = vmatprep.subr.mxu0 0.0
        %2130 = vmatpush1.msra.mxu0 0.0
        %2131 = vmatprep.subr.mxu0 0.0
        %2132 = vmatpush1.msra.mxu0 0.0
        %2133 = vmatprep.subr.mxu0 0.0
        %2134 = vmatpush1.msra.mxu0 0.0
        %2135 = vmatprep.subr.mxu0 0.0
        %2136 = vmatpush1.msra.mxu0 0.0
        %2137 = vmatprep.subr.mxu0 0.0
        %2138 = vmatpush1.msra.mxu0 0.0
        %2139 = vmatprep.subr.mxu0 0.0
        %2140 = vmatpush1.msra.mxu0 0.0
        %2141 = vmatprep.subr.mxu0 0.0
        %2142 = vmatpush1.msra.mxu0 0.0
        %2143 = vmatprep.subr.mxu0 0.0
        %2144 = vmatpush1.msra.mxu0 0.0
        %2145 = vmatprep.mubr.f32.mxu0 0.0
        %2146 = vmatmul.mubr.f32.gmra.mrb[0].mxu0 %v2073
        %v2147 = vpop.f32.mrb[0].mxu0
        %v2148 = vadd.f32 %v2064, %v2147
        %v2149 = vpop.f32.mrb[0].mxu0
        %2150 = vmatprep.mubr.f32.mxu0 0.0
        %2151 = vmatmul.mubr.f32.gmra.mrb[0].mxu0 %v2076
        %v2152 = vpop.f32.mrb[0].mxu0
        %v2153 = vadd.f32 %v2069, %v2152
        %v2154 = vpop.f32.mrb[0].mxu0
        %2155 = vdwg.mxu0
        %v2156 = vadd.s32 %v1972, 2
        %vm2157 = vcmp.eq.s32.totalorder %v1966, %v2156
        %vm2158 = vcmp.eq.s32.totalorder %v1969, %v2156
        %v2159 = vsel %vm2157, 1, 0
        %v2160 = vsel %vm2158, 1, 0
        %v2161 = vcvt.s32.f32 %v2159
        %v2162 = vcvt.s32.f32 %v2160
        %v2164 = vsel %vm1986, %v2161, 0
        %v2167 = vsel %vm1986, %v2162, 0
        %v2170 = vsel %vm1993, %v1968, 0
        %2172 = vmatprep.subr.mxu0 0.0
        %2173 = vmatpush1.msra.mxu0 %v2170
        %2174 = vmatprep.subr.mxu0 0.0
        %2175 = vmatpush1.msra.mxu0 0.0
        %2176 = vmatprep.subr.mxu0 0.0
        %2177 = vmatpush1.msra.mxu0 0.0
        %2178 = vmatprep.subr.mxu0 0.0
        %2179 = vmatpush1.msra.mxu0 0.0
        %2180 = vmatprep.subr.mxu0 0.0
        %2181 = vmatpush1.msra.mxu0 0.0
        %2182 = vmatprep.subr.mxu0 0.0
        %2183 = vmatpush1.msra.mxu0 0.0
        %2184 = vmatprep.subr.mxu0 0.0
        %2185 = vmatpush1.msra.mxu0 0.0
        %2186 = vmatprep.subr.mxu0 0.0
        %2187 = vmatpush1.msra.mxu0 0.0
        %2188 = vmatprep.subr.mxu0 0.0
        %2189 = vmatpush1.msra.mxu0 0.0
        %2190 = vmatprep.subr.mxu0 0.0
        %2191 = vmatpush1.msra.mxu0 0.0
        %2192 = vmatprep.subr.mxu0 0.0
        %2193 = vmatpush1.msra.mxu0 0.0
        %2194 = vmatprep.subr.mxu0 0.0
        %2195 = vmatpush1.msra.mxu0 0.0
        %2196 = vmatprep.subr.mxu0 0.0
        %2197 = vmatpush1.msra.mxu0 0.0
        %2198 = vmatprep.subr.mxu0 0.0
        %2199 = vmatpush1.msra.mxu0 0.0
        %2200 = vmatprep.subr.mxu0 0.0
        %2201 = vmatpush1.msra.mxu0 0.0
        %2202 = vmatprep.subr.mxu0 0.0
        %2203 = vmatpush1.msra.mxu0 0.0
        %2204 = vmatprep.subr.mxu0 0.0
        %2205 = vmatpush1.msra.mxu0 0.0
        %2206 = vmatprep.subr.mxu0 0.0
        %2207 = vmatpush1.msra.mxu0 0.0
        %2208 = vmatprep.subr.mxu0 0.0
        %2209 = vmatpush1.msra.mxu0 0.0
        %2210 = vmatprep.subr.mxu0 0.0
        %2211 = vmatpush1.msra.mxu0 0.0
        %2212 = vmatprep.subr.mxu0 0.0
        %2213 = vmatpush1.msra.mxu0 0.0
        %2214 = vmatprep.subr.mxu0 0.0
        %2215 = vmatpush1.msra.mxu0 0.0
        %2216 = vmatprep.subr.mxu0 0.0
        %2217 = vmatpush1.msra.mxu0 0.0
        %2218 = vmatprep.subr.mxu0 0.0
        %2219 = vmatpush1.msra.mxu0 0.0
        %2220 = vmatprep.subr.mxu0 0.0
        %2221 = vmatpush1.msra.mxu0 0.0
        %2222 = vmatprep.subr.mxu0 0.0
        %2223 = vmatpush1.msra.mxu0 0.0
        %2224 = vmatprep.subr.mxu0 0.0
        %2225 = vmatpush1.msra.mxu0 0.0
        %2226 = vmatprep.subr.mxu0 0.0
        %2227 = vmatpush1.msra.mxu0 0.0
        %2228 = vmatprep.subr.mxu0 0.0
        %2229 = vmatpush1.msra.mxu0 0.0
        %2230 = vmatprep.subr.mxu0 0.0
        %2231 = vmatpush1.msra.mxu0 0.0
        %2232 = vmatprep.subr.mxu0 0.0
        %2233 = vmatpush1.msra.mxu0 0.0
        %2234 = vmatprep.subr.mxu0 0.0
        %2235 = vmatpush1.msra.mxu0 0.0
        %2236 = vmatprep.mubr.f32.mxu0 0.0
        %2237 = vmatmul.mubr.f32.gmra.mrb[0].mxu0 %v2164
        %v2238 = vpop.f32.mrb[0].mxu0
        %v2239 = vadd.f32 0.0, %v2238
        %v2240 = vpop.f32.mrb[0].mxu0
        %2241 = vmatprep.mubr.f32.mxu0 0.0
        %2242 = vmatmul.mubr.f32.gmra.mrb[0].mxu0 %v2167
        %v2243 = vpop.f32.mrb[0].mxu0
        %v2244 = vadd.f32 0.0, %v2243
        %v2245 = vpop.f32.mrb[0].mxu0
        %2246 = vdwg.mxu0
        %v2247 = vadd.f32 %v2148, %v2239
        %v2248 = vadd.f32 %v2153, %v2244
        %v2249 = vld [vmem:[%s1355] sm:$0xff]
        %v2250 = vld [vmem:[%s1355 + $0x8] sm:$0xf]
        %v2251 = vadd.f32 %v2247, %v2249
        %v2252 = vadd.f32 %v2248, %v2250
        %vm2253 = vcmp.le.s32.totalorder %v1971, %v1966
        %vm2254 = vcmp.le.s32.totalorder %v1971, %v1969
        %v2255 = vld [vmem:[%s33] sm:$0x1]
        %v2256 = vld [vmem:[%s35] sm:$0x1]
        %vm2257 = vcmask 261120
        %v2258 = vsel %vm2257, %v2251, 0.0
        %2259 = vadd.xlane.f32.xlu0 %v2258
        %v2260 = vpop.xlane.xlu0 %2259
        %vm2261 = vcmask 257024
        %v2262 = vsel %vm2261, %v2252, 0.0
        %2263 = vadd.xlane.f32.xlu0 %v2262
        %v2264 = vpop.xlane.xlu0 %2263
        %v2265 = vrcp.pop 32.0
        %v2266 = vmul.f32 %v2260, %v2265
        %v2267 = vmul.f32 %v2264, %v2265
        %v2268 = vsub.f32 %v2251, %v2266
        %v2269 = vsub.f32 %v2252, %v2267
        %v2270 = vmul.f32 %v2268, %v2268
        %v2271 = vmul.f32 %v2269, %v2269
        %v2272 = vsel %vm2257, %v2270, 0.0
        %2273 = vadd.xlane.f32.xlu0 %v2272
        %v2274 = vpop.xlane.xlu0 %2273
        %v2275 = vsel %vm2261, %v2271, 0.0
        %2276 = vadd.xlane.f32.xlu0 %v2275
        %v2277 = vpop.xlane.xlu0 %2276
        %v2278 = vmul.f32 %v2274, %v2265
        %v2279 = vmul.f32 %v2277, %v2265
        %v2280 = vadd.f32 %v2278, 1e-05
        %v2281 = vadd.f32 %v2279, 1e-05
        %v2282 = vrsqrt.pop %v2280
        %v2283 = vrsqrt.pop %v2281
        %v2284 = vmul.f32 %v2268, %v2282
        %v2285 = vmul.f32 %v2269, %v2283
        %v2287 = vlaneseq
        %v2288 = vshrl.u32 %v2287, 7
        %v2289 = vsub.s32 0, %v2288
        %v2290 = vrot.slane %v2255, %v2289
        %v2292 = vmul.f32 %v2284, %v2290
        %v2293 = vmul.f32 %v2285, %v2290
        %v2295 = vlaneseq
        %v2296 = vshrl.u32 %v2295, 7
        %v2297 = vsub.s32 0, %v2296
        %v2298 = vrot.slane %v2256, %v2297
        %v2300 = vadd.f32 %v2292, %v2298
        %v2301 = vadd.f32 %v2293, %v2298
        %v2302 = vld [vmem:[%s37] sm:$0xff]
        %v2303 = vld [vmem:[%s37 + $0x8] sm:$0xff]
        %v2304 = vld [vmem:[%s37 + $0x10] sm:$0xff]
        %v2305 = vld [vmem:[%s37 + $0x18] sm:$0xff]
        %v2306 = vld [vmem:[%s39] sm:$0x1]
        %v2308 = vlaneseq
        %v2309 = vshrl.u32 %v2308, 7
        %v2310 = vsub.s32 0, %v2309
        %v2311 = vrot.slane %v2306, %v2310
        %v2314 = vsel %vm2257, %v2300, 0
        %v2317 = vsel %vm2257, %v2301, 0
        %2319 = vmatprep.subr.mxu0 0.0
        %2320 = vmatpush1.msra.mxu0 %v2302
        %2321 = vmatprep.subr.mxu0 0.0
        %2322 = vmatpush1.msra.mxu0 %v2303
        %2323 = vmatprep.subr.mxu0 0.0
        %2324 = vmatpush1.msra.mxu0 %v2304
        %2325 = vmatprep.subr.mxu0 0.0
        %2326 = vmatpush1.msra.mxu0 %v2305
        %2327 = vmatprep.subr.mxu0 0.0
        %2328 = vmatpush1.msra.mxu0 0.0
        %2329 = vmatprep.subr.mxu0 0.0
        %2330 = vmatpush1.msra.mxu0 0.0
        %2331 = vmatprep.subr.mxu0 0.0
        %2332 = vmatpush1.msra.mxu0 0.0
        %2333 = vmatprep.subr.mxu0 0.0
        %2334 = vmatpush1.msra.mxu0 0.0
        %2335 = vmatprep.subr.mxu0 0.0
        %2336 = vmatpush1.msra.mxu0 0.0
        %2337 = vmatprep.subr.mxu0 0.0
        %2338 = vmatpush1.msra.mxu0 0.0
        %2339 = vmatprep.subr.mxu0 0.0
        %2340 = vmatpush1.msra.mxu0 0.0
        %2341 = vmatprep.subr.mxu0 0.0
        %2342 = vmatpush1.msra.mxu0 0.0
        %2343 = vmatprep.subr.mxu0 0.0
        %2344 = vmatpush1.msra.mxu0 0.0
        %2345 = vmatprep.subr.mxu0 0.0
        %2346 = vmatpush1.msra.mxu0 0.0
        %2347 = vmatprep.subr.mxu0 0.0
        %2348 = vmatpush1.msra.mxu0 0.0
        %2349 = vmatprep.subr.mxu0 0.0
        %2350 = vmatpush1.msra.mxu0 0.0
        %2351 = vmatprep.subr.mxu0 0.0
        %2352 = vmatpush1.msra.mxu0 0.0
        %2353 = vmatprep.subr.mxu0 0.0
        %2354 = vmatpush1.msra.mxu0 0.0
        %2355 = vmatprep.subr.mxu0 0.0
        %2356 = vmatpush1.msra.mxu0 0.0
        %2357 = vmatprep.subr.mxu0 0.0
        %2358 = vmatpush1.msra.mxu0 0.0
        %2359 = vmatprep.subr.mxu0 0.0
        %2360 = vmatpush1.msra.mxu0 0.0
        %2361 = vmatprep.subr.mxu0 0.0
        %2362 = vmatpush1.msra.mxu0 0.0
        %2363 = vmatprep.subr.mxu0 0.0
        %2364 = vmatpush1.msra.mxu0 0.0
        %2365 = vmatprep.subr.mxu0 0.0
        %2366 = vmatpush1.msra.mxu0 0.0
        %2367 = vmatprep.subr.mxu0 0.0
        %2368 = vmatpush1.msra.mxu0 0.0
        %2369 = vmatprep.subr.mxu0 0.0
        %2370 = vmatpush1.msra.mxu0 0.0
        %2371 = vmatprep.subr.mxu0 0.0
        %2372 = vmatpush1.msra.mxu0 0.0
        %2373 = vmatprep.subr.mxu0 0.0
        %2374 = vmatpush1.msra.mxu0 0.0
        %2375 = vmatprep.subr.mxu0 0.0
        %2376 = vmatpush1.msra.mxu0 0.0
        %2377 = vmatprep.subr.mxu0 0.0
        %2378 = vmatpush1.msra.mxu0 0.0
        %2379 = vmatprep.subr.mxu0 0.0
        %2380 = vmatpush1.msra.mxu0 0.0
        %2381 = vmatprep.subr.mxu0 0.0
        %2382 = vmatpush1.msra.mxu0 0.0
        %2383 = vmatprep.mubr.f32.mxu0 0.0
        %2384 = vmatmul.mubr.f32.gmra.mrb[0].mxu0 %v2314
        %v2385 = vpop.f32.mrb[0].mxu0
        %v2386 = vadd.f32 %v2311, %v2385
        %v2387 = vpop.f32.mrb[0].mxu0
        %2388 = vmatprep.mubr.f32.mxu0 0.0
        %2389 = vmatmul.mubr.f32.gmra.mrb[0].mxu0 %v2317
        %v2390 = vpop.f32.mrb[0].mxu0
        %v2391 = vadd.f32 %v2311, %v2390
        %v2392 = vpop.f32.mrb[0].mxu0
        %2393 = vdwg.mxu0
        %v2394 = vld [vmem:[%s41] sm:$0xff]
        %v2395 = vld [vmem:[%s41 + $0x8] sm:$0xff]
        %v2396 = vld [vmem:[%s41 + $0x10] sm:$0xff]
        %v2397 = vld [vmem:[%s41 + $0x18] sm:$0xff]
        %v2398 = vld [vmem:[%s43] sm:$0x1]
        %v2400 = vlaneseq
        %v2401 = vshrl.u32 %v2400, 7
        %v2402 = vsub.s32 0, %v2401
        %v2403 = vrot.slane %v2398, %v2402
        %2405 = vmatprep.subr.mxu0 0.0
        %2406 = vmatpush1.msra.mxu0 %v2394
        %2407 = vmatprep.subr.mxu0 0.0
        %2408 = vmatpush1.msra.mxu0 %v2395
        %2409 = vmatprep.subr.mxu0 0.0
        %2410 = vmatpush1.msra.mxu0 %v2396
        %2411 = vmatprep.subr.mxu0 0.0
        %2412 = vmatpush1.msra.mxu0 %v2397
        %2413 = vmatprep.subr.mxu0 0.0
        %2414 = vmatpush1.msra.mxu0 0.0
        %2415 = vmatprep.subr.mxu0 0.0
        %2416 = vmatpush1.msra.mxu0 0.0
        %2417 = vmatprep.subr.mxu0 0.0
        %2418 = vmatpush1.msra.mxu0 0.0
        %2419 = vmatprep.subr.mxu0 0.0
        %2420 = vmatpush1.msra.mxu0 0.0
        %2421 = vmatprep.subr.mxu0 0.0
        %2422 = vmatpush1.msra.mxu0 0.0
        %2423 = vmatprep.subr.mxu0 0.0
        %2424 = vmatpush1.msra.mxu0 0.0
        %2425 = vmatprep.subr.mxu0 0.0
        %2426 = vmatpush1.msra.mxu0 0.0
        %2427 = vmatprep.subr.mxu0 0.0
        %2428 = vmatpush1.msra.mxu0 0.0
        %2429 = vmatprep.subr.mxu0 0.0
        %2430 = vmatpush1.msra.mxu0 0.0
        %2431 = vmatprep.subr.mxu0 0.0
        %2432 = vmatpush1.msra.mxu0 0.0
        %2433 = vmatprep.subr.mxu0 0.0
        %2434 = vmatpush1.msra.mxu0 0.0
        %2435 = vmatprep.subr.mxu0 0.0
        %2436 = vmatpush1.msra.mxu0 0.0
        %2437 = vmatprep.subr.mxu0 0.0
        %2438 = vmatpush1.msra.mxu0 0.0
        %2439 = vmatprep.subr.mxu0 0.0
        %2440 = vmatpush1.msra.mxu0 0.0
        %2441 = vmatprep.subr.mxu0 0.0
        %2442 = vmatpush1.msra.mxu0 0.0
        %2443 = vmatprep.subr.mxu0 0.0
        %2444 = vmatpush1.msra.mxu0 0.0
        %2445 = vmatprep.subr.mxu0 0.0
        %2446 = vmatpush1.msra.mxu0 0.0
        %2447 = vmatprep.subr.mxu0 0.0
        %2448 = vmatpush1.msra.mxu0 0.0
        %2449 = vmatprep.subr.mxu0 0.0
        %2450 = vmatpush1.msra.mxu0 0.0
        %2451 = vmatprep.subr.mxu0 0.0
        %2452 = vmatpush1.msra.mxu0 0.0
        %2453 = vmatprep.subr.mxu0 0.0
        %2454 = vmatpush1.msra.mxu0 0.0
        %2455 = vmatprep.subr.mxu0 0.0
        %2456 = vmatpush1.msra.mxu0 0.0
        %2457 = vmatprep.subr.mxu0 0.0
        %2458 = vmatpush1.msra.mxu0 0.0
        %2459 = vmatprep.subr.mxu0 0.0
        %2460 = vmatpush1.msra.mxu0 0.0
        %2461 = vmatprep.subr.mxu0 0.0
        %2462 = vmatpush1.msra.mxu0 0.0
        %2463 = vmatprep.subr.mxu0 0.0
        %2464 = vmatpush1.msra.mxu0 0.0
        %2465 = vmatprep.subr.mxu0 0.0
        %2466 = vmatpush1.msra.mxu0 0.0
        %2467 = vmatprep.subr.mxu0 0.0
        %2468 = vmatpush1.msra.mxu0 0.0
        %2469 = vmatprep.mubr.f32.mxu0 0.0
        %2470 = vmatmul.mubr.f32.gmra.mrb[0].mxu0 %v2314
        %v2471 = vpop.f32.mrb[0].mxu0
        %v2472 = vadd.f32 %v2403, %v2471
        %v2473 = vpop.f32.mrb[0].mxu0
        %2474 = vmatprep.mubr.f32.mxu0 0.0
        %2475 = vmatmul.mubr.f32.gmra.mrb[0].mxu0 %v2317
        %v2476 = vpop.f32.mrb[0].mxu0
        %v2477 = vadd.f32 %v2403, %v2476
        %v2478 = vpop.f32.mrb[0].mxu0
        %2479 = vdwg.mxu0
        %v2480 = vld [vmem:[%s45] sm:$0xff]
        %v2481 = vld [vmem:[%s45 + $0x8] sm:$0xff]
        %v2482 = vld [vmem:[%s45 + $0x10] sm:$0xff]
        %v2483 = vld [vmem:[%s45 + $0x18] sm:$0xff]
        %v2484 = vld [vmem:[%s47] sm:$0x1]
        %v2486 = vlaneseq
        %v2487 = vshrl.u32 %v2486, 7
        %v2488 = vsub.s32 0, %v2487
        %v2489 = vrot.slane %v2484, %v2488
        %2491 = vmatprep.subr.mxu0 0.0
        %2492 = vmatpush1.msra.mxu0 %v2480
        %2493 = vmatprep.subr.mxu0 0.0
        %2494 = vmatpush1.msra.mxu0 %v2481
        %2495 = vmatprep.subr.mxu0 0.0
        %2496 = vmatpush1.msra.mxu0 %v2482
        %2497 = vmatprep.subr.mxu0 0.0
        %2498 = vmatpush1.msra.mxu0 %v2483
        %2499 = vmatprep.subr.mxu0 0.0
        %2500 = vmatpush1.msra.mxu0 0.0
        %2501 = vmatprep.subr.mxu0 0.0
        %2502 = vmatpush1.msra.mxu0 0.0
        %2503 = vmatprep.subr.mxu0 0.0
        %2504 = vmatpush1.msra.mxu0 0.0
        %2505 = vmatprep.subr.mxu0 0.0
        %2506 = vmatpush1.msra.mxu0 0.0
        %2507 = vmatprep.subr.mxu0 0.0
        %2508 = vmatpush1.msra.mxu0 0.0
        %2509 = vmatprep.subr.mxu0 0.0
        %2510 = vmatpush1.msra.mxu0 0.0
        %2511 = vmatprep.subr.mxu0 0.0
        %2512 = vmatpush1.msra.mxu0 0.0
        %2513 = vmatprep.subr.mxu0 0.0
        %2514 = vmatpush1.msra.mxu0 0.0
        %2515 = vmatprep.subr.mxu0 0.0
        %2516 = vmatpush1.msra.mxu0 0.0
        %2517 = vmatprep.subr.mxu0 0.0
        %2518 = vmatpush1.msra.mxu0 0.0
        %2519 = vmatprep.subr.mxu0 0.0
        %2520 = vmatpush1.msra.mxu0 0.0
        %2521 = vmatprep.subr.mxu0 0.0
        %2522 = vmatpush1.msra.mxu0 0.0
        %2523 = vmatprep.subr.mxu0 0.0
        %2524 = vmatpush1.msra.mxu0 0.0
        %2525 = vmatprep.subr.mxu0 0.0
        %2526 = vmatpush1.msra.mxu0 0.0
        %2527 = vmatprep.subr.mxu0 0.0
        %2528 = vmatpush1.msra.mxu0 0.0
        %2529 = vmatprep.subr.mxu0 0.0
        %2530 = vmatpush1.msra.mxu0 0.0
        %2531 = vmatprep.subr.mxu0 0.0
        %2532 = vmatpush1.msra.mxu0 0.0
        %2533 = vmatprep.subr.mxu0 0.0
        %2534 = vmatpush1.msra.mxu0 0.0
        %2535 = vmatprep.subr.mxu0 0.0
        %2536 = vmatpush1.msra.mxu0 0.0
        %2537 = vmatprep.subr.mxu0 0.0
        %2538 = vmatpush1.msra.mxu0 0.0
        %2539 = vmatprep.subr.mxu0 0.0
        %2540 = vmatpush1.msra.mxu0 0.0
        %2541 = vmatprep.subr.mxu0 0.0
        %2542 = vmatpush1.msra.mxu0 0.0
        %2543 = vmatprep.subr.mxu0 0.0
        %2544 = vmatpush1.msra.mxu0 0.0
        %2545 = vmatprep.subr.mxu0 0.0
        %2546 = vmatpush1.msra.mxu0 0.0
        %2547 = vmatprep.subr.mxu0 0.0
        %2548 = vmatpush1.msra.mxu0 0.0
        %2549 = vmatprep.subr.mxu0 0.0
        %2550 = vmatpush1.msra.mxu0 0.0
        %2551 = vmatprep.subr.mxu0 0.0
        %2552 = vmatpush1.msra.mxu0 0.0
        %2553 = vmatprep.subr.mxu0 0.0
        %2554 = vmatpush1.msra.mxu0 0.0
        %2555 = vmatprep.mubr.f32.mxu0 0.0
        %2556 = vmatmul.mubr.f32.gmra.mrb[0].mxu0 %v2314
        %v2557 = vpop.f32.mrb[0].mxu0
        %v2558 = vadd.f32 %v2489, %v2557
        %v2559 = vpop.f32.mrb[0].mxu0
        %2560 = vmatprep.mubr.f32.mxu0 0.0
        %2561 = vmatmul.mubr.f32.gmra.mrb[0].mxu0 %v2317
        %v2562 = vpop.f32.mrb[0].mxu0
        %v2563 = vadd.f32 %v2489, %v2562
        %v2564 = vpop.f32.mrb[0].mxu0
        %2565 = vdwg.mxu0
        %v2567 = vsel %vm1371, %v2386, 0
        %v2570 = vsel %vm1371, %v2391, 0
        %v2573 = vsel %vm1371, %v2472, 0
        %v2576 = vsel %vm1371, %v2477, 0
        %2578 = vmatprep.subr.mxu0 0.0
        %2579 = vmatpush1.xpose.msra.mxu0 %v2573
        %2580 = vmatprep.subr.mxu0 0.0
        %2581 = vmatpush1.xpose.msra.mxu0 %v2576
        %2582 = vmatprep.subr.mxu0 0.0
        %2583 = vmatpush1.xpose.msra.mxu0 0.0
        %2584 = vmatprep.subr.mxu0 0.0
        %2585 = vmatpush1.xpose.msra.mxu0 0.0
        %2586 = vmatprep.subr.mxu0 0.0
        %2587 = vmatpush1.xpose.msra.mxu0 0.0
        %2588 = vmatprep.subr.mxu0 0.0
        %2589 = vmatpush1.xpose.msra.mxu0 0.0
        %2590 = vmatprep.subr.mxu0 0.0
        %2591 = vmatpush1.xpose.msra.mxu0 0.0
        %2592 = vmatprep.subr.mxu0 0.0
        %2593 = vmatpush1.xpose.msra.mxu0 0.0
        %2594 = vmatprep.subr.mxu0 0.0
        %2595 = vmatpush1.xpose.msra.mxu0 0.0
        %2596 = vmatprep.subr.mxu0 0.0
        %2597 = vmatpush1.xpose.msra.mxu0 0.0
        %2598 = vmatprep.subr.mxu0 0.0
        %2599 = vmatpush1.xpose.msra.mxu0 0.0
        %2600 = vmatprep.subr.mxu0 0.0
        %2601 = vmatpush1.xpose.msra.mxu0 0.0
        %2602 = vmatprep.subr.mxu0 0.0
        %2603 = vmatpush1.xpose.msra.mxu0 0.0
        %2604 = vmatprep.subr.mxu0 0.0
        %2605 = vmatpush1.xpose.msra.mxu0 0.0
        %2606 = vmatprep.subr.mxu0 0.0
        %2607 = vmatpush1.xpose.msra.mxu0 0.0
        %2608 = vmatprep.subr.mxu0 0.0
        %2609 = vmatpush1.xpose.msra.mxu0 0.0
        %2610 = vmatprep.subr.mxu0 0.0
        %2611 = vmatpush1.xpose.msra.mxu0 0.0
        %2612 = vmatprep.subr.mxu0 0.0
        %2613 = vmatpush1.xpose.msra.mxu0 0.0
        %2614 = vmatprep.subr.mxu0 0.0
        %2615 = vmatpush1.xpose.msra.mxu0 0.0
        %2616 = vmatprep.subr.mxu0 0.0
        %2617 = vmatpush1.xpose.msra.mxu0 0.0
        %2618 = vmatprep.subr.mxu0 0.0
        %2619 = vmatpush1.xpose.msra.mxu0 0.0
        %2620 = vmatprep.subr.mxu0 0.0
        %2621 = vmatpush1.xpose.msra.mxu0 0.0
        %2622 = vmatprep.subr.mxu0 0.0
        %2623 = vmatpush1.xpose.msra.mxu0 0.0
        %2624 = vmatprep.subr.mxu0 0.0
        %2625 = vmatpush1.xpose.msra.mxu0 0.0
        %2626 = vmatprep.subr.mxu0 0.0
        %2627 = vmatpush1.xpose.msra.mxu0 0.0
        %2628 = vmatprep.subr.mxu0 0.0
        %2629 = vmatpush1.xpose.msra.mxu0 0.0
        %2630 = vmatprep.subr.mxu0 0.0
        %2631 = vmatpush1.xpose.msra.mxu0 0.0
        %2632 = vmatprep.subr.mxu0 0.0
        %2633 = vmatpush1.xpose.msra.mxu0 0.0
        %2634 = vmatprep.subr.mxu0 0.0
        %2635 = vmatpush1.xpose.msra.mxu0 0.0
        %2636 = vmatprep.subr.mxu0 0.0
        %2637 = vmatpush1.xpose.msra.mxu0 0.0
        %2638 = vmatprep.subr.mxu0 0.0
        %2639 = vmatpush1.xpose.msra.mxu0 0.0
        %2640 = vmatprep.subr.mxu0 0.0
        %2641 = vmatpush1.xpose.msra.mxu0 0.0
        %2642 = vmatprep.mubr.f32.mxu0 0.0
        %2643 = vmatmul.mubr.f32.gmra.mrb[0].mxu0 %v2567
        %v2644 = vpop.f32.mrb[0].mxu0
        %v2645 = vadd.f32 0.0, %v2644
        %v2646 = vpop.f32.mrb[0].mxu0
        %2647 = vmatprep.mubr.f32.mxu0 0.0
        %2648 = vmatmul.mubr.f32.gmra.mrb[0].mxu0 %v2570
        %v2649 = vpop.f32.mrb[0].mxu0
        %v2650 = vadd.f32 0.0, %v2649
        %v2651 = vpop.f32.mrb[0].mxu0
        %2652 = vdwg.mxu0
        %v2653 = vmul.f32 %v2645, 0.35355338
        %v2654 = vmul.f32 %v2650, 0.35355338
        %v2655 = vsel %vm2253, %v2653, -1e+30
        %v2656 = vsel %vm2254, %v2654, -1e+30
        %vm2657 = vcmask 97280
        %v2658 = vsel %vm2657, %v2655, -inf
        %2659 = vmax.xlane.f32.xlu0 %v2658
        %v2660 = vpop.xlane.xlu0 %2659
        %vm2661 = vcmask 93184
        %v2662 = vsel %vm2661, %v2656, -inf
        %2663 = vmax.xlane.f32.xlu0 %v2662
        %v2664 = vpop.xlane.xlu0 %2663
        %v2665 = vsub.f32 %v2655, %v2660
        %v2666 = vsub.f32 %v2656, %v2664
        %v2667 = vmul.f32 %v2665, 1.442695
        %v2668 = vpow.pop %v2667
        %v2669 = vmul.f32 %v2666, 1.442695
        %v2670 = vpow.pop %v2669
        %v2671 = vsel %vm2657, %v2668, 0.0
        %2672 = vadd.xlane.f32.xlu0 %v2671
        %v2673 = vpop.xlane.xlu0 %2672
        %v2674 = vsel %vm2661, %v2670, 0.0
        %2675 = vadd.xlane.f32.xlu0 %v2674
        %v2676 = vpop.xlane.xlu0 %2675
        %v2677 = vrcp.pop %v2673
        %v2678 = vmul.f32 %v2668, %v2677
        %v2679 = vrcp.pop %v2676
        %v2680 = vmul.f32 %v2670, %v2679
        %v2682 = vsel %vm2657, %v2678, 0
        %v2685 = vsel %vm2657, %v2680, 0
        %v2688 = vsel %vm1993, %v2563, 0
        %2690 = vmatprep.subr.mxu0 0.0
        %2691 = vmatpush1.msra.mxu0 %v2558
        %2692 = vmatprep.subr.mxu0 0.0
        %2693 = vmatpush1.msra.mxu0 %v2688
        %2694 = vmatprep.subr.mxu0 0.0
        %2695 = vmatpush1.msra.mxu0 0.0
        %2696 = vmatprep.subr.mxu0 0.0
        %2697 = vmatpush1.msra.mxu0 0.0
        %2698 = vmatprep.subr.mxu0 0.0
        %2699 = vmatpush1.msra.mxu0 0.0
        %2700 = vmatprep.subr.mxu0 0.0
        %2701 = vmatpush1.msra.mxu0 0.0
        %2702 = vmatprep.subr.mxu0 0.0
        %2703 = vmatpush1.msra.mxu0 0.0
        %2704 = vmatprep.subr.mxu0 0.0
        %2705 = vmatpush1.msra.mxu0 0.0
        %2706 = vmatprep.subr.mxu0 0.0
        %2707 = vmatpush1.msra.mxu0 0.0
        %2708 = vmatprep.subr.mxu0 0.0
        %2709 = vmatpush1.msra.mxu0 0.0
        %2710 = vmatprep.subr.mxu0 0.0
        %2711 = vmatpush1.msra.mxu0 0.0
        %2712 = vmatprep.subr.mxu0 0.0
        %2713 = vmatpush1.msra.mxu0 0.0
        %2714 = vmatprep.subr.mxu0 0.0
        %2715 = vmatpush1.msra.mxu0 0.0
        %2716 = vmatprep.subr.mxu0 0.0
        %2717 = vmatpush1.msra.mxu0 0.0
        %2718 = vmatprep.subr.mxu0 0.0
        %2719 = vmatpush1.msra.mxu0 0.0
        %2720 = vmatprep.subr.mxu0 0.0
        %2721 = vmatpush1.msra.mxu0 0.0
        %2722 = vmatprep.subr.mxu0 0.0
        %2723 = vmatpush1.msra.mxu0 0.0
        %2724 = vmatprep.subr.mxu0 0.0
        %2725 = vmatpush1.msra.mxu0 0.0
        %2726 = vmatprep.subr.mxu0 0.0
        %2727 = vmatpush1.msra.mxu0 0.0
        %2728 = vmatprep.subr.mxu0 0.0
        %2729 = vmatpush1.msra.mxu0 0.0
        %2730 = vmatprep.subr.mxu0 0.0
        %2731 = vmatpush1.msra.mxu0 0.0
        %2732 = vmatprep.subr.mxu0 0.0
        %2733 = vmatpush1.msra.mxu0 0.0
        %2734 = vmatprep.subr.mxu0 0.0
        %2735 = vmatpush1.msra.mxu0 0.0
        %2736 = vmatprep.subr.mxu0 0.0
        %2737 = vmatpush1.msra.mxu0 0.0
        %2738 = vmatprep.subr.mxu0 0.0
        %2739 = vmatpush1.msra.mxu0 0.0
        %2740 = vmatprep.subr.mxu0 0.0
        %2741 = vmatpush1.msra.mxu0 0.0
        %2742 = vmatprep.subr.mxu0 0.0
        %2743 = vmatpush1.msra.mxu0 0.0
        %2744 = vmatprep.subr.mxu0 0.0
        %2745 = vmatpush1.msra.mxu0 0.0
        %2746 = vmatprep.subr.mxu0 0.0
        %2747 = vmatpush1.msra.mxu0 0.0
        %2748 = vmatprep.subr.mxu0 0.0
        %2749 = vmatpush1.msra.mxu0 0.0
        %2750 = vmatprep.subr.mxu0 0.0
        %2751 = vmatpush1.msra.mxu0 0.0
        %2752 = vmatprep.subr.mxu0 0.0
        %2753 = vmatpush1.msra.mxu0 0.0
        %2754 = vmatprep.mubr.f32.mxu0 0.0
        %2755 = vmatmul.mubr.f32.gmra.mrb[0].mxu0 %v2682
        %v2756 = vpop.f32.mrb[0].mxu0
        %v2757 = vadd.f32 0.0, %v2756
        %v2758 = vpop.f32.mrb[0].mxu0
        %2759 = vmatprep.mubr.f32.mxu0 0.0
        %2760 = vmatmul.mubr.f32.gmra.mrb[0].mxu0 %v2685
        %v2761 = vpop.f32.mrb[0].mxu0
        %v2762 = vadd.f32 0.0, %v2761
        %v2763 = vpop.f32.mrb[0].mxu0
        %2764 = vdwg.mxu0
        %v2765 = vld [vmem:[#allocation8] sm:$0xff]
        %s2766 = scalar_lea.vmem %s37, 32
        %v2767 = vld [vmem:[%s2766] sm:$0xff]
        %v2768 = vld [vmem:[%s2766 + $0x8] sm:$0xff]
        %v2769 = vld [vmem:[%s2766 + $0x10] sm:$0xff]
        %v2770 = vld [vmem:[%s2766 + $0x18] sm:$0xff]
        %s2771 = scalar_lea.vmem %s39, 1
        %v2772 = vld [vmem:[%s2771] sm:$0x1]
        %v2774 = vlaneseq
        %v2775 = vshrl.u32 %v2774, 7
        %v2776 = vsub.s32 0, %v2775
        %v2777 = vrot.slane %v2772, %v2776
        %2779 = vmatprep.subr.mxu0 0.0
        %2780 = vmatpush1.msra.mxu0 %v2767
        %2781 = vmatprep.subr.mxu0 0.0
        %2782 = vmatpush1.msra.mxu0 %v2768
        %2783 = vmatprep.subr.mxu0 0.0
        %2784 = vmatpush1.msra.mxu0 %v2769
        %2785 = vmatprep.subr.mxu0 0.0
        %2786 = vmatpush1.msra.mxu0 %v2770
        %2787 = vmatprep.subr.mxu0 0.0
        %2788 = vmatpush1.msra.mxu0 0.0
        %2789 = vmatprep.subr.mxu0 0.0
        %2790 = vmatpush1.msra.mxu0 0.0
        %2791 = vmatprep.subr.mxu0 0.0
        %2792 = vmatpush1.msra.mxu0 0.0
        %2793 = vmatprep.subr.mxu0 0.0
        %2794 = vmatpush1.msra.mxu0 0.0
        %2795 = vmatprep.subr.mxu0 0.0
        %2796 = vmatpush1.msra.mxu0 0.0
        %2797 = vmatprep.subr.mxu0 0.0
        %2798 = vmatpush1.msra.mxu0 0.0
        %2799 = vmatprep.subr.mxu0 0.0
        %2800 = vmatpush1.msra.mxu0 0.0
        %2801 = vmatprep.subr.mxu0 0.0
        %2802 = vmatpush1.msra.mxu0 0.0
        %2803 = vmatprep.subr.mxu0 0.0
        %2804 = vmatpush1.msra.mxu0 0.0
        %2805 = vmatprep.subr.mxu0 0.0
        %2806 = vmatpush1.msra.mxu0 0.0
        %2807 = vmatprep.subr.mxu0 0.0
        %2808 = vmatpush1.msra.mxu0 0.0
        %2809 = vmatprep.subr.mxu0 0.0
        %2810 = vmatpush1.msra.mxu0 0.0
        %2811 = vmatprep.subr.mxu0 0.0
        %2812 = vmatpush1.msra.mxu0 0.0
        %2813 = vmatprep.subr.mxu0 0.0
        %2814 = vmatpush1.msra.mxu0 0.0
        %2815 = vmatprep.subr.mxu0 0.0
        %2816 = vmatpush1.msra.mxu0 0.0
        %2817 = vmatprep.subr.mxu0 0.0
        %2818 = vmatpush1.msra.mxu0 0.0
        %2819 = vmatprep.subr.mxu0 0.0
        %2820 = vmatpush1.msra.mxu0 0.0
        %2821 = vmatprep.subr.mxu0 0.0
        %2822 = vmatpush1.msra.mxu0 0.0
        %2823 = vmatprep.subr.mxu0 0.0
        %2824 = vmatpush1.msra.mxu0 0.0
        %2825 = vmatprep.subr.mxu0 0.0
        %2826 = vmatpush1.msra.mxu0 0.0
        %2827 = vmatprep.subr.mxu0 0.0
        %2828 = vmatpush1.msra.mxu0 0.0
        %2829 = vmatprep.subr.mxu0 0.0
        %2830 = vmatpush1.msra.mxu0 0.0
        %2831 = vmatprep.subr.mxu0 0.0
        %2832 = vmatpush1.msra.mxu0 0.0
        %2833 = vmatprep.subr.mxu0 0.0
        %2834 = vmatpush1.msra.mxu0 0.0
        %2835 = vmatprep.subr.mxu0 0.0
        %2836 = vmatpush1.msra.mxu0 0.0
        %2837 = vmatprep.subr.mxu0 0.0
        %2838 = vmatpush1.msra.mxu0 0.0
        %2839 = vmatprep.subr.mxu0 0.0
        %2840 = vmatpush1.msra.mxu0 0.0
        %2841 = vmatprep.subr.mxu0 0.0
        %2842 = vmatpush1.msra.mxu0 0.0
        %2843 = vmatprep.mubr.f32.mxu0 0.0
        %2844 = vmatmul.mubr.f32.gmra.mrb[0].mxu0 %v2314
        %v2845 = vpop.f32.mrb[0].mxu0
        %v2846 = vadd.f32 %v2777, %v2845
        %v2847 = vpop.f32.mrb[0].mxu0
        %2848 = vmatprep.mubr.f32.mxu0 0.0
        %2849 = vmatmul.mubr.f32.gmra.mrb[0].mxu0 %v2317
        %v2850 = vpop.f32.mrb[0].mxu0
        %v2851 = vadd.f32 %v2777, %v2850
        %v2852 = vpop.f32.mrb[0].mxu0
        %2853 = vdwg.mxu0
        %s2854 = scalar_lea.vmem %s41, 32
        %v2855 = vld [vmem:[%s2854] sm:$0xff]
        %v2856 = vld [vmem:[%s2854 + $0x8] sm:$0xff]
        %v2857 = vld [vmem:[%s2854 + $0x10] sm:$0xff]
        %v2858 = vld [vmem:[%s2854 + $0x18] sm:$0xff]
        %s2859 = scalar_lea.vmem %s43, 1
        %v2860 = vld [vmem:[%s2859] sm:$0x1]
        %v2862 = vlaneseq
        %v2863 = vshrl.u32 %v2862, 7
        %v2864 = vsub.s32 0, %v2863
        %v2865 = vrot.slane %v2860, %v2864
        %2867 = vmatprep.subr.mxu0 0.0
        %2868 = vmatpush1.msra.mxu0 %v2855
        %2869 = vmatprep.subr.mxu0 0.0
        %2870 = vmatpush1.msra.mxu0 %v2856
        %2871 = vmatprep.subr.mxu0 0.0
        %2872 = vmatpush1.msra.mxu0 %v2857
        %2873 = vmatprep.subr.mxu0 0.0
        %2874 = vmatpush1.msra.mxu0 %v2858
        %2875 = vmatprep.subr.mxu0 0.0
        %2876 = vmatpush1.msra.mxu0 0.0
        %2877 = vmatprep.subr.mxu0 0.0
        %2878 = vmatpush1.msra.mxu0 0.0
        %2879 = vmatprep.subr.mxu0 0.0
        %2880 = vmatpush1.msra.mxu0 0.0
        %2881 = vmatprep.subr.mxu0 0.0
        %2882 = vmatpush1.msra.mxu0 0.0
        %2883 = vmatprep.subr.mxu0 0.0
        %2884 = vmatpush1.msra.mxu0 0.0
        %2885 = vmatprep.subr.mxu0 0.0
        %2886 = vmatpush1.msra.mxu0 0.0
        %2887 = vmatprep.subr.mxu0 0.0
        %2888 = vmatpush1.msra.mxu0 0.0
        %2889 = vmatprep.subr.mxu0 0.0
        %2890 = vmatpush1.msra.mxu0 0.0
        %2891 = vmatprep.subr.mxu0 0.0
        %2892 = vmatpush1.msra.mxu0 0.0
        %2893 = vmatprep.subr.mxu0 0.0
        %2894 = vmatpush1.msra.mxu0 0.0
        %2895 = vmatprep.subr.mxu0 0.0
        %2896 = vmatpush1.msra.mxu0 0.0
        %2897 = vmatprep.subr.mxu0 0.0
        %2898 = vmatpush1.msra.mxu0 0.0
        %2899 = vmatprep.subr.mxu0 0.0
        %2900 = vmatpush1.msra.mxu0 0.0
        %2901 = vmatprep.subr.mxu0 0.0
        %2902 = vmatpush1.msra.mxu0 0.0
        %2903 = vmatprep.subr.mxu0 0.0
        %2904 = vmatpush1.msra.mxu0 0.0
        %2905 = vmatprep.subr.mxu0 0.0
        %2906 = vmatpush1.msra.mxu0 0.0
        %2907 = vmatprep.subr.mxu0 0.0
        %2908 = vmatpush1.msra.mxu0 0.0
        %2909 = vmatprep.subr.mxu0 0.0
        %2910 = vmatpush1.msra.mxu0 0.0
        %2911 = vmatprep.subr.mxu0 0.0
        %2912 = vmatpush1.msra.mxu0 0.0
        %2913 = vmatprep.subr.mxu0 0.0
        %2914 = vmatpush1.msra.mxu0 0.0
        %2915 = vmatprep.subr.mxu0 0.0
        %2916 = vmatpush1.msra.mxu0 0.0
        %2917 = vmatprep.subr.mxu0 0.0
        %2918 = vmatpush1.msra.mxu0 0.0
        %2919 = vmatprep.subr.mxu0 0.0
        %2920 = vmatpush1.msra.mxu0 0.0
        %2921 = vmatprep.subr.mxu0 0.0
        %2922 = vmatpush1.msra.mxu0 0.0
        %2923 = vmatprep.subr.mxu0 0.0
        %2924 = vmatpush1.msra.mxu0 0.0
        %2925 = vmatprep.subr.mxu0 0.0
        %2926 = vmatpush1.msra.mxu0 0.0
        %2927 = vmatprep.subr.mxu0 0.0
        %2928 = vmatpush1.msra.mxu0 0.0
        %2929 = vmatprep.subr.mxu0 0.0
        %2930 = vmatpush1.msra.mxu0 0.0
        %2931 = vmatprep.mubr.f32.mxu0 0.0
        %2932 = vmatmul.mubr.f32.gmra.mrb[0].mxu0 %v2314
        %v2933 = vpop.f32.mrb[0].mxu0
        %v2934 = vadd.f32 %v2865, %v2933
        %v2935 = vpop.f32.mrb[0].mxu0
        %2936 = vmatprep.mubr.f32.mxu0 0.0
        %2937 = vmatmul.mubr.f32.gmra.mrb[0].mxu0 %v2317
        %v2938 = vpop.f32.mrb[0].mxu0
        %v2939 = vadd.f32 %v2865, %v2938
        %v2940 = vpop.f32.mrb[0].mxu0
        %2941 = vdwg.mxu0
        %s2942 = scalar_lea.vmem %s45, 32
        %v2943 = vld [vmem:[%s2942] sm:$0xff]
        %v2944 = vld [vmem:[%s2942 + $0x8] sm:$0xff]
        %v2945 = vld [vmem:[%s2942 + $0x10] sm:$0xff]
        %v2946 = vld [vmem:[%s2942 + $0x18] sm:$0xff]
        %s2947 = scalar_lea.vmem %s47, 1
        %v2948 = vld [vmem:[%s2947] sm:$0x1]
        %v2950 = vlaneseq
        %v2951 = vshrl.u32 %v2950, 7
        %v2952 = vsub.s32 0, %v2951
        %v2953 = vrot.slane %v2948, %v2952
        %2955 = vmatprep.subr.mxu0 0.0
        %2956 = vmatpush1.msra.mxu0 %v2943
        %2957 = vmatprep.subr.mxu0 0.0
        %2958 = vmatpush1.msra.mxu0 %v2944
        %2959 = vmatprep.subr.mxu0 0.0
        %2960 = vmatpush1.msra.mxu0 %v2945
        %2961 = vmatprep.subr.mxu0 0.0
        %2962 = vmatpush1.msra.mxu0 %v2946
        %2963 = vmatprep.subr.mxu0 0.0
        %2964 = vmatpush1.msra.mxu0 0.0
        %2965 = vmatprep.subr.mxu0 0.0
        %2966 = vmatpush1.msra.mxu0 0.0
        %2967 = vmatprep.subr.mxu0 0.0
        %2968 = vmatpush1.msra.mxu0 0.0
        %2969 = vmatprep.subr.mxu0 0.0
        %2970 = vmatpush1.msra.mxu0 0.0
        %2971 = vmatprep.subr.mxu0 0.0
        %2972 = vmatpush1.msra.mxu0 0.0
        %2973 = vmatprep.subr.mxu0 0.0
        %2974 = vmatpush1.msra.mxu0 0.0
        %2975 = vmatprep.subr.mxu0 0.0
        %2976 = vmatpush1.msra.mxu0 0.0
        %2977 = vmatprep.subr.mxu0 0.0
        %2978 = vmatpush1.msra.mxu0 0.0
        %2979 = vmatprep.subr.mxu0 0.0
        %2980 = vmatpush1.msra.mxu0 0.0
        %2981 = vmatprep.subr.mxu0 0.0
        %2982 = vmatpush1.msra.mxu0 0.0
        %2983 = vmatprep.subr.mxu0 0.0
        %2984 = vmatpush1.msra.mxu0 0.0
        %2985 = vmatprep.subr.mxu0 0.0
        %2986 = vmatpush1.msra.mxu0 0.0
        %2987 = vmatprep.subr.mxu0 0.0
        %2988 = vmatpush1.msra.mxu0 0.0
        %2989 = vmatprep.subr.mxu0 0.0
        %2990 = vmatpush1.msra.mxu0 0.0
        %2991 = vmatprep.subr.mxu0 0.0
        %2992 = vmatpush1.msra.mxu0 0.0
        %2993 = vmatprep.subr.mxu0 0.0
        %2994 = vmatpush1.msra.mxu0 0.0
        %2995 = vmatprep.subr.mxu0 0.0
        %2996 = vmatpush1.msra.mxu0 0.0
        %2997 = vmatprep.subr.mxu0 0.0
        %2998 = vmatpush1.msra.mxu0 0.0
        %2999 = vmatprep.subr.mxu0 0.0
        %3000 = vmatpush1.msra.mxu0 0.0
        %3001 = vmatprep.subr.mxu0 0.0
        %3002 = vmatpush1.msra.mxu0 0.0
        %3003 = vmatprep.subr.mxu0 0.0
        %3004 = vmatpush1.msra.mxu0 0.0
        %3005 = vmatprep.subr.mxu0 0.0
        %3006 = vmatpush1.msra.mxu0 0.0
        %3007 = vmatprep.subr.mxu0 0.0
        %3008 = vmatpush1.msra.mxu0 0.0
        %3009 = vmatprep.subr.mxu0 0.0
        %3010 = vmatpush1.msra.mxu0 0.0
        %3011 = vmatprep.subr.mxu0 0.0
        %3012 = vmatpush1.msra.mxu0 0.0
        %3013 = vmatprep.subr.mxu0 0.0
        %3014 = vmatpush1.msra.mxu0 0.0
        %3015 = vmatprep.subr.mxu0 0.0
        %3016 = vmatpush1.msra.mxu0 0.0
        %3017 = vmatprep.subr.mxu0 0.0
        %3018 = vmatpush1.msra.mxu0 0.0
        %3019 = vmatprep.mubr.f32.mxu0 0.0
        %3020 = vmatmul.mubr.f32.gmra.mrb[0].mxu0 %v2314
        %v3021 = vpop.f32.mrb[0].mxu0
        %v3022 = vadd.f32 %v2953, %v3021
        %v3023 = vpop.f32.mrb[0].mxu0
        %3024 = vmatprep.mubr.f32.mxu0 0.0
        %3025 = vmatmul.mubr.f32.gmra.mrb[0].mxu0 %v2317
        %v3026 = vpop.f32.mrb[0].mxu0
        %v3027 = vadd.f32 %v2953, %v3026
        %v3028 = vpop.f32.mrb[0].mxu0
        %3029 = vdwg.mxu0
        %v3031 = vsel %vm1371, %v2846, 0
        %v3034 = vsel %vm1371, %v2851, 0
        %v3037 = vsel %vm1371, %v2934, 0
        %v3040 = vsel %vm1371, %v2939, 0
        %3042 = vmatprep.subr.mxu0 0.0
        %3043 = vmatpush1.xpose.msra.mxu0 %v3037
        %3044 = vmatprep.subr.mxu0 0.0
        %3045 = vmatpush1.xpose.msra.mxu0 %v3040
        %3046 = vmatprep.subr.mxu0 0.0
        %3047 = vmatpush1.xpose.msra.mxu0 0.0
        %3048 = vmatprep.subr.mxu0 0.0
        %3049 = vmatpush1.xpose.msra.mxu0 0.0
        %3050 = vmatprep.subr.mxu0 0.0
        %3051 = vmatpush1.xpose.msra.mxu0 0.0
        %3052 = vmatprep.subr.mxu0 0.0
        %3053 = vmatpush1.xpose.msra.mxu0 0.0
        %3054 = vmatprep.subr.mxu0 0.0
        %3055 = vmatpush1.xpose.msra.mxu0 0.0
        %3056 = vmatprep.subr.mxu0 0.0
        %3057 = vmatpush1.xpose.msra.mxu0 0.0
        %3058 = vmatprep.subr.mxu0 0.0
        %3059 = vmatpush1.xpose.msra.mxu0 0.0
        %3060 = vmatprep.subr.mxu0 0.0
        %3061 = vmatpush1.xpose.msra.mxu0 0.0
        %3062 = vmatprep.subr.mxu0 0.0
        %3063 = vmatpush1.xpose.msra.mxu0 0.0
        %3064 = vmatprep.subr.mxu0 0.0
        %3065 = vmatpush1.xpose.msra.mxu0 0.0
        %3066 = vmatprep.subr.mxu0 0.0
        %3067 = vmatpush1.xpose.msra.mxu0 0.0
        %3068 = vmatprep.subr.mxu0 0.0
        %3069 = vmatpush1.xpose.msra.mxu0 0.0
        %3070 = vmatprep.subr.mxu0 0.0
        %3071 = vmatpush1.xpose.msra.mxu0 0.0
        %3072 = vmatprep.subr.mxu0 0.0
        %3073 = vmatpush1.xpose.msra.mxu0 0.0
        %3074 = vmatprep.subr.mxu0 0.0
        %3075 = vmatpush1.xpose.msra.mxu0 0.0
        %3076 = vmatprep.subr.mxu0 0.0
        %3077 = vmatpush1.xpose.msra.mxu0 0.0
        %3078 = vmatprep.subr.mxu0 0.0
        %3079 = vmatpush1.xpose.msra.mxu0 0.0
        %3080 = vmatprep.subr.mxu0 0.0
        %3081 = vmatpush1.xpose.msra.mxu0 0.0
        %3082 = vmatprep.subr.mxu0 0.0
        %3083 = vmatpush1.xpose.msra.mxu0 0.0
        %3084 = vmatprep.subr.mxu0 0.0
        %3085 = vmatpush1.xpose.msra.mxu0 0.0
        %3086 = vmatprep.subr.mxu0 0.0
        %3087 = vmatpush1.xpose.msra.mxu0 0.0
        %3088 = vmatprep.subr.mxu0 0.0
        %3089 = vmatpush1.xpose.msra.mxu0 0.0
        %3090 = vmatprep.subr.mxu0 0.0
        %3091 = vmatpush1.xpose.msra.mxu0 0.0
        %3092 = vmatprep.subr.mxu0 0.0
        %3093 = vmatpush1.xpose.msra.mxu0 0.0
        %3094 = vmatprep.subr.mxu0 0.0
        %3095 = vmatpush1.xpose.msra.mxu0 0.0
        %3096 = vmatprep.subr.mxu0 0.0
        %3097 = vmatpush1.xpose.msra.mxu0 0.0
        %3098 = vmatprep.subr.mxu0 0.0
        %3099 = vmatpush1.xpose.msra.mxu0 0.0
        %3100 = vmatprep.subr.mxu0 0.0
        %3101 = vmatpush1.xpose.msra.mxu0 0.0
        %3102 = vmatprep.subr.mxu0 0.0
        %3103 = vmatpush1.xpose.msra.mxu0 0.0
        %3104 = vmatprep.subr.mxu0 0.0
        %3105 = vmatpush1.xpose.msra.mxu0 0.0
        %3106 = vmatprep.mubr.f32.mxu0 0.0
        %3107 = vmatmul.mubr.f32.gmra.mrb[0].mxu0 %v3031
        %v3108 = vpop.f32.mrb[0].mxu0
        %v3109 = vadd.f32 0.0, %v3108
        %v3110 = vpop.f32.mrb[0].mxu0
        %3111 = vmatprep.mubr.f32.mxu0 0.0
        %3112 = vmatmul.mubr.f32.gmra.mrb[0].mxu0 %v3034
        %v3113 = vpop.f32.mrb[0].mxu0
        %v3114 = vadd.f32 0.0, %v3113
        %v3115 = vpop.f32.mrb[0].mxu0
        %3116 = vdwg.mxu0
        %v3117 = vmul.f32 %v3109, 0.35355338
        %v3118 = vmul.f32 %v3114, 0.35355338
        %v3119 = vsel %vm2253, %v3117, -1e+30
        %v3120 = vsel %vm2254, %v3118, -1e+30
        %v3121 = vsel %vm2657, %v3119, -inf
        %3122 = vmax.xlane.f32.xlu0 %v3121
        %v3123 = vpop.xlane.xlu0 %3122
        %v3124 = vsel %vm2661, %v3120, -inf
        %3125 = vmax.xlane.f32.xlu0 %v3124
        %v3126 = vpop.xlane.xlu0 %3125
        %v3127 = vsub.f32 %v3119, %v3123
        %v3128 = vsub.f32 %v3120, %v3126
        %v3129 = vmul.f32 %v3127, 1.442695
        %v3130 = vpow.pop %v3129
        %v3131 = vmul.f32 %v3128, 1.442695
        %v3132 = vpow.pop %v3131
        %v3133 = vsel %vm2657, %v3130, 0.0
        %3134 = vadd.xlane.f32.xlu0 %v3133
        %v3135 = vpop.xlane.xlu0 %3134
        %v3136 = vsel %vm2661, %v3132, 0.0
        %3137 = vadd.xlane.f32.xlu0 %v3136
        %v3138 = vpop.xlane.xlu0 %3137
        %v3139 = vrcp.pop %v3135
        %v3140 = vmul.f32 %v3130, %v3139
        %v3141 = vrcp.pop %v3138
        %v3142 = vmul.f32 %v3132, %v3141
        %v3144 = vsel %vm2657, %v3140, 0
        %v3147 = vsel %vm2657, %v3142, 0
        %v3150 = vsel %vm1993, %v3027, 0
        %3152 = vmatprep.subr.mxu0 0.0
        %3153 = vmatpush1.msra.mxu0 %v3022
        %3154 = vmatprep.subr.mxu0 0.0
        %3155 = vmatpush1.msra.mxu0 %v3150
        %3156 = vmatprep.subr.mxu0 0.0
        %3157 = vmatpush1.msra.mxu0 0.0
        %3158 = vmatprep.subr.mxu0 0.0
        %3159 = vmatpush1.msra.mxu0 0.0
        %3160 = vmatprep.subr.mxu0 0.0
        %3161 = vmatpush1.msra.mxu0 0.0
        %3162 = vmatprep.subr.mxu0 0.0
        %3163 = vmatpush1.msra.mxu0 0.0
        %3164 = vmatprep.subr.mxu0 0.0
        %3165 = vmatpush1.msra.mxu0 0.0
        %3166 = vmatprep.subr.mxu0 0.0
        %3167 = vmatpush1.msra.mxu0 0.0
        %3168 = vmatprep.subr.mxu0 0.0
        %3169 = vmatpush1.msra.mxu0 0.0
        %3170 = vmatprep.subr.mxu0 0.0
        %3171 = vmatpush1.msra.mxu0 0.0
        %3172 = vmatprep.subr.mxu0 0.0
        %3173 = vmatpush1.msra.mxu0 0.0
        %3174 = vmatprep.subr.mxu0 0.0
        %3175 = vmatpush1.msra.mxu0 0.0
        %3176 = vmatprep.subr.mxu0 0.0
        %3177 = vmatpush1.msra.mxu0 0.0
        %3178 = vmatprep.subr.mxu0 0.0
        %3179 = vmatpush1.msra.mxu0 0.0
        %3180 = vmatprep.subr.mxu0 0.0
        %3181 = vmatpush1.msra.mxu0 0.0
        %3182 = vmatprep.subr.mxu0 0.0
        %3183 = vmatpush1.msra.mxu0 0.0
        %3184 = vmatprep.subr.mxu0 0.0
        %3185 = vmatpush1.msra.mxu0 0.0
        %3186 = vmatprep.subr.mxu0 0.0
        %3187 = vmatpush1.msra.mxu0 0.0
        %3188 = vmatprep.subr.mxu0 0.0
        %3189 = vmatpush1.msra.mxu0 0.0
        %3190 = vmatprep.subr.mxu0 0.0
        %3191 = vmatpush1.msra.mxu0 0.0
        %3192 = vmatprep.subr.mxu0 0.0
        %3193 = vmatpush1.msra.mxu0 0.0
        %3194 = vmatprep.subr.mxu0 0.0
        %3195 = vmatpush1.msra.mxu0 0.0
        %3196 = vmatprep.subr.mxu0 0.0
        %3197 = vmatpush1.msra.mxu0 0.0
        %3198 = vmatprep.subr.mxu0 0.0
        %3199 = vmatpush1.msra.mxu0 0.0
        %3200 = vmatprep.subr.mxu0 0.0
        %3201 = vmatpush1.msra.mxu0 0.0
        %3202 = vmatprep.subr.mxu0 0.0
        %3203 = vmatpush1.msra.mxu0 0.0
        %3204 = vmatprep.subr.mxu0 0.0
        %3205 = vmatpush1.msra.mxu0 0.0
        %3206 = vmatprep.subr.mxu0 0.0
        %3207 = vmatpush1.msra.mxu0 0.0
        %3208 = vmatprep.subr.mxu0 0.0
        %3209 = vmatpush1.msra.mxu0 0.0
        %3210 = vmatprep.subr.mxu0 0.0
        %3211 = vmatpush1.msra.mxu0 0.0
        %3212 = vmatprep.subr.mxu0 0.0
        %3213 = vmatpush1.msra.mxu0 0.0
        %3214 = vmatprep.subr.mxu0 0.0
        %3215 = vmatpush1.msra.mxu0 0.0
        %3216 = vmatprep.mubr.f32.mxu0 0.0
        %3217 = vmatmul.mubr.f32.gmra.mrb[0].mxu0 %v3144
        %v3218 = vpop.f32.mrb[0].mxu0
        %v3219 = vadd.f32 0.0, %v3218
        %v3220 = vpop.f32.mrb[0].mxu0
        %3221 = vmatprep.mubr.f32.mxu0 0.0
        %3222 = vmatmul.mubr.f32.gmra.mrb[0].mxu0 %v3147
        %v3223 = vpop.f32.mrb[0].mxu0
        %v3224 = vadd.f32 0.0, %v3223
        %v3225 = vpop.f32.mrb[0].mxu0
        %3226 = vdwg.mxu0
        %s3227 = scalar_lea.vmem [#allocation8], 8
        %v3228 = vld [vmem:[%s3227] sm:$0xff]
        %v3230 = vsel %vm1371, %v3219, 0
        %v3233 = vsel %vm1371, %v3224, 0
        %3235 = vmatprep.subr.mxu0 0.0
        %3236 = vmatpush1.msra.mxu0 %v3228
        %3237 = vmatprep.subr.mxu0 0.0
        %3238 = vmatpush1.msra.mxu0 0.0
        %3239 = vmatprep.subr.mxu0 0.0
        %3240 = vmatpush1.msra.mxu0 0.0
        %3241 = vmatprep.subr.mxu0 0.0
        %3242 = vmatpush1.msra.mxu0 0.0
        %3243 = vmatprep.subr.mxu0 0.0
        %3244 = vmatpush1.msra.mxu0 0.0
        %3245 = vmatprep.subr.mxu0 0.0
        %3246 = vmatpush1.msra.mxu0 0.0
        %3247 = vmatprep.subr.mxu0 0.0
        %3248 = vmatpush1.msra.mxu0 0.0
        %3249 = vmatprep.subr.mxu0 0.0
        %3250 = vmatpush1.msra.mxu0 0.0
        %3251 = vmatprep.subr.mxu0 0.0
        %3252 = vmatpush1.msra.mxu0 0.0
        %3253 = vmatprep.subr.mxu0 0.0
        %3254 = vmatpush1.msra.mxu0 0.0
        %3255 = vmatprep.subr.mxu0 0.0
        %3256 = vmatpush1.msra.mxu0 0.0
        %3257 = vmatprep.subr.mxu0 0.0
        %3258 = vmatpush1.msra.mxu0 0.0
        %3259 = vmatprep.subr.mxu0 0.0
        %3260 = vmatpush1.msra.mxu0 0.0
        %3261 = vmatprep.subr.mxu0 0.0
        %3262 = vmatpush1.msra.mxu0 0.0
        %3263 = vmatprep.subr.mxu0 0.0
        %3264 = vmatpush1.msra.mxu0 0.0
        %3265 = vmatprep.subr.mxu0 0.0
        %3266 = vmatpush1.msra.mxu0 0.0
        %3267 = vmatprep.subr.mxu0 0.0
        %3268 = vmatpush1.msra.mxu0 0.0
        %3269 = vmatprep.subr.mxu0 0.0
        %3270 = vmatpush1.msra.mxu0 0.0
        %3271 = vmatprep.subr.mxu0 0.0
        %3272 = vmatpush1.msra.mxu0 0.0
        %3273 = vmatprep.subr.mxu0 0.0
        %3274 = vmatpush1.msra.mxu0 0.0
        %3275 = vmatprep.subr.mxu0 0.0
        %3276 = vmatpush1.msra.mxu0 0.0
        %3277 = vmatprep.subr.mxu0 0.0
        %3278 = vmatpush1.msra.mxu0 0.0
        %3279 = vmatprep.subr.mxu0 0.0
        %3280 = vmatpush1.msra.mxu0 0.0
        %3281 = vmatprep.subr.mxu0 0.0
        %3282 = vmatpush1.msra.mxu0 0.0
        %3283 = vmatprep.subr.mxu0 0.0
        %3284 = vmatpush1.msra.mxu0 0.0
        %3285 = vmatprep.subr.mxu0 0.0
        %3286 = vmatpush1.msra.mxu0 0.0
        %3287 = vmatprep.subr.mxu0 0.0
        %3288 = vmatpush1.msra.mxu0 0.0
        %3289 = vmatprep.subr.mxu0 0.0
        %3290 = vmatpush1.msra.mxu0 0.0
        %3291 = vmatprep.subr.mxu0 0.0
        %3292 = vmatpush1.msra.mxu0 0.0
        %3293 = vmatprep.subr.mxu0 0.0
        %3294 = vmatpush1.msra.mxu0 0.0
        %3295 = vmatprep.subr.mxu0 0.0
        %3296 = vmatpush1.msra.mxu0 0.0
        %3297 = vmatprep.subr.mxu0 0.0
        %3298 = vmatpush1.msra.mxu0 0.0
        %3299 = vmatprep.mubr.f32.mxu0 0.0
        %3300 = vmatmul.mubr.f32.gmra.mrb[0].mxu0 %v3230
        %v3301 = vpop.f32.mrb[0].mxu0
        %v3302 = vadd.f32 0.0, %v3301
        %v3303 = vpop.f32.mrb[0].mxu0
        %3304 = vmatprep.mubr.f32.mxu0 0.0
        %3305 = vmatmul.mubr.f32.gmra.mrb[0].mxu0 %v3233
        %v3306 = vpop.f32.mrb[0].mxu0
        %v3307 = vadd.f32 0.0, %v3306
        %v3308 = vpop.f32.mrb[0].mxu0
        %3309 = vdwg.mxu0
        %v3311 = vsel %vm1371, %v2757, 0
        %v3314 = vsel %vm1371, %v2762, 0
        %3316 = vmatprep.subr.mxu0 0.0
        %3317 = vmatpush1.msra.mxu0 %v2765
        %3318 = vmatprep.subr.mxu0 0.0
        %3319 = vmatpush1.msra.mxu0 0.0
        %3320 = vmatprep.subr.mxu0 0.0
        %3321 = vmatpush1.msra.mxu0 0.0
        %3322 = vmatprep.subr.mxu0 0.0
        %3323 = vmatpush1.msra.mxu0 0.0
        %3324 = vmatprep.subr.mxu0 0.0
        %3325 = vmatpush1.msra.mxu0 0.0
        %3326 = vmatprep.subr.mxu0 0.0
        %3327 = vmatpush1.msra.mxu0 0.0
        %3328 = vmatprep.subr.mxu0 0.0
        %3329 = vmatpush1.msra.mxu0 0.0
        %3330 = vmatprep.subr.mxu0 0.0
        %3331 = vmatpush1.msra.mxu0 0.0
        %3332 = vmatprep.subr.mxu0 0.0
        %3333 = vmatpush1.msra.mxu0 0.0
        %3334 = vmatprep.subr.mxu0 0.0
        %3335 = vmatpush1.msra.mxu0 0.0
        %3336 = vmatprep.subr.mxu0 0.0
        %3337 = vmatpush1.msra.mxu0 0.0
        %3338 = vmatprep.subr.mxu0 0.0
        %3339 = vmatpush1.msra.mxu0 0.0
        %3340 = vmatprep.subr.mxu0 0.0
        %3341 = vmatpush1.msra.mxu0 0.0
        %3342 = vmatprep.subr.mxu0 0.0
        %3343 = vmatpush1.msra.mxu0 0.0
        %3344 = vmatprep.subr.mxu0 0.0
        %3345 = vmatpush1.msra.mxu0 0.0
        %3346 = vmatprep.subr.mxu0 0.0
        %3347 = vmatpush1.msra.mxu0 0.0
        %3348 = vmatprep.subr.mxu0 0.0
        %3349 = vmatpush1.msra.mxu0 0.0
        %3350 = vmatprep.subr.mxu0 0.0
        %3351 = vmatpush1.msra.mxu0 0.0
        %3352 = vmatprep.subr.mxu0 0.0
        %3353 = vmatpush1.msra.mxu0 0.0
        %3354 = vmatprep.subr.mxu0 0.0
        %3355 = vmatpush1.msra.mxu0 0.0
        %3356 = vmatprep.subr.mxu0 0.0
        %3357 = vmatpush1.msra.mxu0 0.0
        %3358 = vmatprep.subr.mxu0 0.0
        %3359 = vmatpush1.msra.mxu0 0.0
        %3360 = vmatprep.subr.mxu0 0.0
        %3361 = vmatpush1.msra.mxu0 0.0
        %3362 = vmatprep.subr.mxu0 0.0
        %3363 = vmatpush1.msra.mxu0 0.0
        %3364 = vmatprep.subr.mxu0 0.0
        %3365 = vmatpush1.msra.mxu0 0.0
        %3366 = vmatprep.subr.mxu0 0.0
        %3367 = vmatpush1.msra.mxu0 0.0
        %3368 = vmatprep.subr.mxu0 0.0
        %3369 = vmatpush1.msra.mxu0 0.0
        %3370 = vmatprep.subr.mxu0 0.0
        %3371 = vmatpush1.msra.mxu0 0.0
        %3372 = vmatprep.subr.mxu0 0.0
        %3373 = vmatpush1.msra.mxu0 0.0
        %3374 = vmatprep.subr.mxu0 0.0
        %3375 = vmatpush1.msra.mxu0 0.0
        %3376 = vmatprep.subr.mxu0 0.0
        %3377 = vmatpush1.msra.mxu0 0.0
        %3378 = vmatprep.subr.mxu0 0.0
        %3379 = vmatpush1.msra.mxu0 0.0
        %3380 = vmatprep.mubr.f32.mxu0 0.0
        %3381 = vmatmul.mubr.f32.gmra.mrb[0].mxu0 %v3311
        %v3382 = vpop.f32.mrb[0].mxu0
        %v3383 = vadd.f32 %v3302, %v3382
        %v3384 = vpop.f32.mrb[0].mxu0
        %3385 = vmatprep.mubr.f32.mxu0 0.0
        %3386 = vmatmul.mubr.f32.gmra.mrb[0].mxu0 %v3314
        %v3387 = vpop.f32.mrb[0].mxu0
        %v3388 = vadd.f32 %v3307, %v3387
        %v3389 = vpop.f32.mrb[0].mxu0
        %3390 = vdwg.mxu0
        %s3391 = scalar_lea.vmem %s37, 64
        %v3392 = vld [vmem:[%s3391] sm:$0xff]
        %v3393 = vld [vmem:[%s3391 + $0x8] sm:$0xff]
        %v3394 = vld [vmem:[%s3391 + $0x10] sm:$0xff]
        %v3395 = vld [vmem:[%s3391 + $0x18] sm:$0xff]
        %s3396 = scalar_lea.vmem %s39, 2
        %v3397 = vld [vmem:[%s3396] sm:$0x1]
        %v3399 = vlaneseq
        %v3400 = vshrl.u32 %v3399, 7
        %v3401 = vsub.s32 0, %v3400
        %v3402 = vrot.slane %v3397, %v3401
        %3404 = vmatprep.subr.mxu0 0.0
        %3405 = vmatpush1.msra.mxu0 %v3392
        %3406 = vmatprep.subr.mxu0 0.0
        %3407 = vmatpush1.msra.mxu0 %v3393
        %3408 = vmatprep.subr.mxu0 0.0
        %3409 = vmatpush1.msra.mxu0 %v3394
        %3410 = vmatprep.subr.mxu0 0.0
        %3411 = vmatpush1.msra.mxu0 %v3395
        %3412 = vmatprep.subr.mxu0 0.0
        %3413 = vmatpush1.msra.mxu0 0.0
        %3414 = vmatprep.subr.mxu0 0.0
        %3415 = vmatpush1.msra.mxu0 0.0
        %3416 = vmatprep.subr.mxu0 0.0
        %3417 = vmatpush1.msra.mxu0 0.0
        %3418 = vmatprep.subr.mxu0 0.0
        %3419 = vmatpush1.msra.mxu0 0.0
        %3420 = vmatprep.subr.mxu0 0.0
        %3421 = vmatpush1.msra.mxu0 0.0
        %3422 = vmatprep.subr.mxu0 0.0
        %3423 = vmatpush1.msra.mxu0 0.0
        %3424 = vmatprep.subr.mxu0 0.0
        %3425 = vmatpush1.msra.mxu0 0.0
        %3426 = vmatprep.subr.mxu0 0.0
        %3427 = vmatpush1.msra.mxu0 0.0
        %3428 = vmatprep.subr.mxu0 0.0
        %3429 = vmatpush1.msra.mxu0 0.0
        %3430 = vmatprep.subr.mxu0 0.0
        %3431 = vmatpush1.msra.mxu0 0.0
        %3432 = vmatprep.subr.mxu0 0.0
        %3433 = vmatpush1.msra.mxu0 0.0
        %3434 = vmatprep.subr.mxu0 0.0
        %3435 = vmatpush1.msra.mxu0 0.0
        %3436 = vmatprep.subr.mxu0 0.0
        %3437 = vmatpush1.msra.mxu0 0.0
        %3438 = vmatprep.subr.mxu0 0.0
        %3439 = vmatpush1.msra.mxu0 0.0
        %3440 = vmatprep.subr.mxu0 0.0
        %3441 = vmatpush1.msra.mxu0 0.0
        %3442 = vmatprep.subr.mxu0 0.0
        %3443 = vmatpush1.msra.mxu0 0.0
        %3444 = vmatprep.subr.mxu0 0.0
        %3445 = vmatpush1.msra.mxu0 0.0
        %3446 = vmatprep.subr.mxu0 0.0
        %3447 = vmatpush1.msra.mxu0 0.0
        %3448 = vmatprep.subr.mxu0 0.0
        %3449 = vmatpush1.msra.mxu0 0.0
        %3450 = vmatprep.subr.mxu0 0.0
        %3451 = vmatpush1.msra.mxu0 0.0
        %3452 = vmatprep.subr.mxu0 0.0
        %3453 = vmatpush1.msra.mxu0 0.0
        %3454 = vmatprep.subr.mxu0 0.0
        %3455 = vmatpush1.msra.mxu0 0.0
        %3456 = vmatprep.subr.mxu0 0.0
        %3457 = vmatpush1.msra.mxu0 0.0
        %3458 = vmatprep.subr.mxu0 0.0
        %3459 = vmatpush1.msra.mxu0 0.0
        %3460 = vmatprep.subr.mxu0 0.0
        %3461 = vmatpush1.msra.mxu0 0.0
        %3462 = vmatprep.subr.mxu0 0.0
        %3463 = vmatpush1.msra.mxu0 0.0
        %3464 = vmatprep.subr.mxu0 0.0
        %3465 = vmatpush1.msra.mxu0 0.0
        %3466 = vmatprep.subr.mxu0 0.0
        %3467 = vmatpush1.msra.mxu0 0.0
        %3468 = vmatprep.mubr.f32.mxu0 0.0
        %3469 = vmatmul.mubr.f32.gmra.mrb[0].mxu0 %v2314
        %v3470 = vpop.f32.mrb[0].mxu0
        %v3471 = vadd.f32 %v3402, %v3470
        %v3472 = vpop.f32.mrb[0].mxu0
        %3473 = vmatprep.mubr.f32.mxu0 0.0
        %3474 = vmatmul.mubr.f32.gmra.mrb[0].mxu0 %v2317
        %v3475 = vpop.f32.mrb[0].mxu0
        %v3476 = vadd.f32 %v3402, %v3475
        %v3477 = vpop.f32.mrb[0].mxu0
        %3478 = vdwg.mxu0
        %s3479 = scalar_lea.vmem %s41, 64
        %v3480 = vld [vmem:[%s3479] sm:$0xff]
        %v3481 = vld [vmem:[%s3479 + $0x8] sm:$0xff]
        %v3482 = vld [vmem:[%s3479 + $0x10] sm:$0xff]
        %v3483 = vld [vmem:[%s3479 + $0x18] sm:$0xff]
        %s3484 = scalar_lea.vmem %s43, 2
        %v3485 = vld [vmem:[%s3484] sm:$0x1]
        %v3487 = vlaneseq
        %v3488 = vshrl.u32 %v3487, 7
        %v3489 = vsub.s32 0, %v3488
        %v3490 = vrot.slane %v3485, %v3489
        %3492 = vmatprep.subr.mxu0 0.0
        %3493 = vmatpush1.msra.mxu0 %v3480
        %3494 = vmatprep.subr.mxu0 0.0
        %3495 = vmatpush1.msra.mxu0 %v3481
        %3496 = vmatprep.subr.mxu0 0.0
        %3497 = vmatpush1.msra.mxu0 %v3482
        %3498 = vmatprep.subr.mxu0 0.0
        %3499 = vmatpush1.msra.mxu0 %v3483
        %3500 = vmatprep.subr.mxu0 0.0
        %3501 = vmatpush1.msra.mxu0 0.0
        %3502 = vmatprep.subr.mxu0 0.0
        %3503 = vmatpush1.msra.mxu0 0.0
        %3504 = vmatprep.subr.mxu0 0.0
        %3505 = vmatpush1.msra.mxu0 0.0
        %3506 = vmatprep.subr.mxu0 0.0
        %3507 = vmatpush1.msra.mxu0 0.0
        %3508 = vmatprep.subr.mxu0 0.0
        %3509 = vmatpush1.msra.mxu0 0.0
        %3510 = vmatprep.subr.mxu0 0.0
        %3511 = vmatpush1.msra.mxu0 0.0
        %3512 = vmatprep.subr.mxu0 0.0
        %3513 = vmatpush1.msra.mxu0 0.0
        %3514 = vmatprep.subr.mxu0 0.0
        %3515 = vmatpush1.msra.mxu0 0.0
        %3516 = vmatprep.subr.mxu0 0.0
        %3517 = vmatpush1.msra.mxu0 0.0
        %3518 = vmatprep.subr.mxu0 0.0
        %3519 = vmatpush1.msra.mxu0 0.0
        %3520 = vmatprep.subr.mxu0 0.0
        %3521 = vmatpush1.msra.mxu0 0.0
        %3522 = vmatprep.subr.mxu0 0.0
        %3523 = vmatpush1.msra.mxu0 0.0
        %3524 = vmatprep.subr.mxu0 0.0
        %3525 = vmatpush1.msra.mxu0 0.0
        %3526 = vmatprep.subr.mxu0 0.0
        %3527 = vmatpush1.msra.mxu0 0.0
        %3528 = vmatprep.subr.mxu0 0.0
        %3529 = vmatpush1.msra.mxu0 0.0
        %3530 = vmatprep.subr.mxu0 0.0
        %3531 = vmatpush1.msra.mxu0 0.0
        %3532 = vmatprep.subr.mxu0 0.0
        %3533 = vmatpush1.msra.mxu0 0.0
        %3534 = vmatprep.subr.mxu0 0.0
        %3535 = vmatpush1.msra.mxu0 0.0
        %3536 = vmatprep.subr.mxu0 0.0
        %3537 = vmatpush1.msra.mxu0 0.0
        %3538 = vmatprep.subr.mxu0 0.0
        %3539 = vmatpush1.msra.mxu0 0.0
        %3540 = vmatprep.subr.mxu0 0.0
        %3541 = vmatpush1.msra.mxu0 0.0
        %3542 = vmatprep.subr.mxu0 0.0
        %3543 = vmatpush1.msra.mxu0 0.0
        %3544 = vmatprep.subr.mxu0 0.0
        %3545 = vmatpush1.msra.mxu0 0.0
        %3546 = vmatprep.subr.mxu0 0.0
        %3547 = vmatpush1.msra.mxu0 0.0
        %3548 = vmatprep.subr.mxu0 0.0
        %3549 = vmatpush1.msra.mxu0 0.0
        %3550 = vmatprep.subr.mxu0 0.0
        %3551 = vmatpush1.msra.mxu0 0.0
        %3552 = vmatprep.subr.mxu0 0.0
        %3553 = vmatpush1.msra.mxu0 0.0
        %3554 = vmatprep.subr.mxu0 0.0
        %3555 = vmatpush1.msra.mxu0 0.0
        %3556 = vmatprep.mubr.f32.mxu0 0.0
        %3557 = vmatmul.mubr.f32.gmra.mrb[0].mxu0 %v2314
        %v3558 = vpop.f32.mrb[0].mxu0
        %v3559 = vadd.f32 %v3490, %v3558
        %v3560 = vpop.f32.mrb[0].mxu0
        %3561 = vmatprep.mubr.f32.mxu0 0.0
        %3562 = vmatmul.mubr.f32.gmra.mrb[0].mxu0 %v2317
        %v3563 = vpop.f32.mrb[0].mxu0
        %v3564 = vadd.f32 %v3490, %v3563
        %v3565 = vpop.f32.mrb[0].mxu0
        %3566 = vdwg.mxu0
        %s3567 = scalar_lea.vmem %s45, 64
        %v3568 = vld [vmem:[%s3567] sm:$0xff]
        %v3569 = vld [vmem:[%s3567 + $0x8] sm:$0xff]
        %v3570 = vld [vmem:[%s3567 + $0x10] sm:$0xff]
        %v3571 = vld [vmem:[%s3567 + $0x18] sm:$0xff]
        %s3572 = scalar_lea.vmem %s47, 2
        %v3573 = vld [vmem:[%s3572] sm:$0x1]
        %v3575 = vlaneseq
        %v3576 = vshrl.u32 %v3575, 7
        %v3577 = vsub.s32 0, %v3576
        %v3578 = vrot.slane %v3573, %v3577
        %3580 = vmatprep.subr.mxu0 0.0
        %3581 = vmatpush1.msra.mxu0 %v3568
        %3582 = vmatprep.subr.mxu0 0.0
        %3583 = vmatpush1.msra.mxu0 %v3569
        %3584 = vmatprep.subr.mxu0 0.0
        %3585 = vmatpush1.msra.mxu0 %v3570
        %3586 = vmatprep.subr.mxu0 0.0
        %3587 = vmatpush1.msra.mxu0 %v3571
        %3588 = vmatprep.subr.mxu0 0.0
        %3589 = vmatpush1.msra.mxu0 0.0
        %3590 = vmatprep.subr.mxu0 0.0
        %3591 = vmatpush1.msra.mxu0 0.0
        %3592 = vmatprep.subr.mxu0 0.0
        %3593 = vmatpush1.msra.mxu0 0.0
        %3594 = vmatprep.subr.mxu0 0.0
        %3595 = vmatpush1.msra.mxu0 0.0
        %3596 = vmatprep.subr.mxu0 0.0
        %3597 = vmatpush1.msra.mxu0 0.0
        %3598 = vmatprep.subr.mxu0 0.0
        %3599 = vmatpush1.msra.mxu0 0.0
        %3600 = vmatprep.subr.mxu0 0.0
        %3601 = vmatpush1.msra.mxu0 0.0
        %3602 = vmatprep.subr.mxu0 0.0
        %3603 = vmatpush1.msra.mxu0 0.0
        %3604 = vmatprep.subr.mxu0 0.0
        %3605 = vmatpush1.msra.mxu0 0.0
        %3606 = vmatprep.subr.mxu0 0.0
        %3607 = vmatpush1.msra.mxu0 0.0
        %3608 = vmatprep.subr.mxu0 0.0
        %3609 = vmatpush1.msra.mxu0 0.0
        %3610 = vmatprep.subr.mxu0 0.0
        %3611 = vmatpush1.msra.mxu0 0.0
        %3612 = vmatprep.subr.mxu0 0.0
        %3613 = vmatpush1.msra.mxu0 0.0
        %3614 = vmatprep.subr.mxu0 0.0
        %3615 = vmatpush1.msra.mxu0 0.0
        %3616 = vmatprep.subr.mxu0 0.0
        %3617 = vmatpush1.msra.mxu0 0.0
        %3618 = vmatprep.subr.mxu0 0.0
        %3619 = vmatpush1.msra.mxu0 0.0
        %3620 = vmatprep.subr.mxu0 0.0
        %3621 = vmatpush1.msra.mxu0 0.0
        %3622 = vmatprep.subr.mxu0 0.0
        %3623 = vmatpush1.msra.mxu0 0.0
        %3624 = vmatprep.subr.mxu0 0.0
        %3625 = vmatpush1.msra.mxu0 0.0
        %3626 = vmatprep.subr.mxu0 0.0
        %3627 = vmatpush1.msra.mxu0 0.0
        %3628 = vmatprep.subr.mxu0 0.0
        %3629 = vmatpush1.msra.mxu0 0.0
        %3630 = vmatprep.subr.mxu0 0.0
        %3631 = vmatpush1.msra.mxu0 0.0
        %3632 = vmatprep.subr.mxu0 0.0
        %3633 = vmatpush1.msra.mxu0 0.0
        %3634 = vmatprep.subr.mxu0 0.0
        %3635 = vmatpush1.msra.mxu0 0.0
        %3636 = vmatprep.subr.mxu0 0.0
        %3637 = vmatpush1.msra.mxu0 0.0
        %3638 = vmatprep.subr.mxu0 0.0
        %3639 = vmatpush1.msra.mxu0 0.0
        %3640 = vmatprep.subr.mxu0 0.0
        %3641 = vmatpush1.msra.mxu0 0.0
        %3642 = vmatprep.subr.mxu0 0.0
        %3643 = vmatpush1.msra.mxu0 0.0
        %3644 = vmatprep.mubr.f32.mxu0 0.0
        %3645 = vmatmul.mubr.f32.gmra.mrb[0].mxu0 %v2314
        %v3646 = vpop.f32.mrb[0].mxu0
        %v3647 = vadd.f32 %v3578, %v3646
        %v3648 = vpop.f32.mrb[0].mxu0
        %3649 = vmatprep.mubr.f32.mxu0 0.0
        %3650 = vmatmul.mubr.f32.gmra.mrb[0].mxu0 %v2317
        %v3651 = vpop.f32.mrb[0].mxu0
        %v3652 = vadd.f32 %v3578, %v3651
        %v3653 = vpop.f32.mrb[0].mxu0
        %3654 = vdwg.mxu0
        %v3656 = vsel %vm1371, %v3471, 0
        %v3659 = vsel %vm1371, %v3476, 0
        %v3662 = vsel %vm1371, %v3559, 0
        %v3665 = vsel %vm1371, %v3564, 0
        %3667 = vmatprep.subr.mxu0 0.0
        %3668 = vmatpush1.xpose.msra.mxu0 %v3662
        %3669 = vmatprep.subr.mxu0 0.0
        %3670 = vmatpush1.xpose.msra.mxu0 %v3665
        %3671 = vmatprep.subr.mxu0 0.0
        %3672 = vmatpush1.xpose.msra.mxu0 0.0
        %3673 = vmatprep.subr.mxu0 0.0
        %3674 = vmatpush1.xpose.msra.mxu0 0.0
        %3675 = vmatprep.subr.mxu0 0.0
        %3676 = vmatpush1.xpose.msra.mxu0 0.0
        %3677 = vmatprep.subr.mxu0 0.0
        %3678 = vmatpush1.xpose.msra.mxu0 0.0
        %3679 = vmatprep.subr.mxu0 0.0
        %3680 = vmatpush1.xpose.msra.mxu0 0.0
        %3681 = vmatprep.subr.mxu0 0.0
        %3682 = vmatpush1.xpose.msra.mxu0 0.0
        %3683 = vmatprep.subr.mxu0 0.0
        %3684 = vmatpush1.xpose.msra.mxu0 0.0
        %3685 = vmatprep.subr.mxu0 0.0
        %3686 = vmatpush1.xpose.msra.mxu0 0.0
        %3687 = vmatprep.subr.mxu0 0.0
        %3688 = vmatpush1.xpose.msra.mxu0 0.0
        %3689 = vmatprep.subr.mxu0 0.0
        %3690 = vmatpush1.xpose.msra.mxu0 0.0
        %3691 = vmatprep.subr.mxu0 0.0
        %3692 = vmatpush1.xpose.msra.mxu0 0.0
        %3693 = vmatprep.subr.mxu0 0.0
        %3694 = vmatpush1.xpose.msra.mxu0 0.0
        %3695 = vmatprep.subr.mxu0 0.0
        %3696 = vmatpush1.xpose.msra.mxu0 0.0
        %3697 = vmatprep.subr.mxu0 0.0
        %3698 = vmatpush1.xpose.msra.mxu0 0.0
        %3699 = vmatprep.subr.mxu0 0.0
        %3700 = vmatpush1.xpose.msra.mxu0 0.0
        %3701 = vmatprep.subr.mxu0 0.0
        %3702 = vmatpush1.xpose.msra.mxu0 0.0
        %3703 = vmatprep.subr.mxu0 0.0
        %3704 = vmatpush1.xpose.msra.mxu0 0.0
        %3705 = vmatprep.subr.mxu0 0.0
        %3706 = vmatpush1.xpose.msra.mxu0 0.0
        %3707 = vmatprep.subr.mxu0 0.0
        %3708 = vmatpush1.xpose.msra.mxu0 0.0
        %3709 = vmatprep.subr.mxu0 0.0
        %3710 = vmatpush1.xpose.msra.mxu0 0.0
        %3711 = vmatprep.subr.mxu0 0.0
        %3712 = vmatpush1.xpose.msra.mxu0 0.0
        %3713 = vmatprep.subr.mxu0 0.0
        %3714 = vmatpush1.xpose.msra.mxu0 0.0
        %3715 = vmatprep.subr.mxu0 0.0
        %3716 = vmatpush1.xpose.msra.mxu0 0.0
        %3717 = vmatprep.subr.mxu0 0.0
        %3718 = vmatpush1.xpose.msra.mxu0 0.0
        %3719 = vmatprep.subr.mxu0 0.0
        %3720 = vmatpush1.xpose.msra.mxu0 0.0
        %3721 = vmatprep.subr.mxu0 0.0
        %3722 = vmatpush1.xpose.msra.mxu0 0.0
        %3723 = vmatprep.subr.mxu0 0.0
        %3724 = vmatpush1.xpose.msra.mxu0 0.0
        %3725 = vmatprep.subr.mxu0 0.0
        %3726 = vmatpush1.xpose.msra.mxu0 0.0
        %3727 = vmatprep.subr.mxu0 0.0
        %3728 = vmatpush1.xpose.msra.mxu0 0.0
        %3729 = vmatprep.subr.mxu0 0.0
        %3730 = vmatpush1.xpose.msra.mxu0 0.0
        %3731 = vmatprep.mubr.f32.mxu0 0.0
        %3732 = vmatmul.mubr.f32.gmra.mrb[0].mxu0 %v3656
        %v3733 = vpop.f32.mrb[0].mxu0
        %v3734 = vadd.f32 0.0, %v3733
        %v3735 = vpop.f32.mrb[0].mxu0
        %3736 = vmatprep.mubr.f32.mxu0 0.0
        %3737 = vmatmul.mubr.f32.gmra.mrb[0].mxu0 %v3659
        %v3738 = vpop.f32.mrb[0].mxu0
        %v3739 = vadd.f32 0.0, %v3738
        %v3740 = vpop.f32.mrb[0].mxu0
        %3741 = vdwg.mxu0
        %v3742 = vmul.f32 %v3734, 0.35355338
        %v3743 = vmul.f32 %v3739, 0.35355338
        %v3744 = vsel %vm2253, %v3742, -1e+30
        %v3745 = vsel %vm2254, %v3743, -1e+30
        %v3746 = vsel %vm2657, %v3744, -inf
        %3747 = vmax.xlane.f32.xlu0 %v3746
        %v3748 = vpop.xlane.xlu0 %3747
        %v3749 = vsel %vm2661, %v3745, -inf
        %3750 = vmax.xlane.f32.xlu0 %v3749
        %v3751 = vpop.xlane.xlu0 %3750
        %v3752 = vsub.f32 %v3744, %v3748
        %v3753 = vsub.f32 %v3745, %v3751
        %v3754 = vmul.f32 %v3752, 1.442695
        %v3755 = vpow.pop %v3754
        %v3756 = vmul.f32 %v3753, 1.442695
        %v3757 = vpow.pop %v3756
        %v3758 = vsel %vm2657, %v3755, 0.0
        %3759 = vadd.xlane.f32.xlu0 %v3758
        %v3760 = vpop.xlane.xlu0 %3759
        %v3761 = vsel %vm2661, %v3757, 0.0
        %3762 = vadd.xlane.f32.xlu0 %v3761
        %v3763 = vpop.xlane.xlu0 %3762
        %v3764 = vrcp.pop %v3760
        %v3765 = vmul.f32 %v3755, %v3764
        %v3766 = vrcp.pop %v3763
        %v3767 = vmul.f32 %v3757, %v3766
        %v3769 = vsel %vm2657, %v3765, 0
        %v3772 = vsel %vm2657, %v3767, 0
        %v3775 = vsel %vm1993, %v3652, 0
        %3777 = vmatprep.subr.mxu0 0.0
        %3778 = vmatpush1.msra.mxu0 %v3647
        %3779 = vmatprep.subr.mxu0 0.0
        %3780 = vmatpush1.msra.mxu0 %v3775
        %3781 = vmatprep.subr.mxu0 0.0
        %3782 = vmatpush1.msra.mxu0 0.0
        %3783 = vmatprep.subr.mxu0 0.0
        %3784 = vmatpush1.msra.mxu0 0.0
        %3785 = vmatprep.subr.mxu0 0.0
        %3786 = vmatpush1.msra.mxu0 0.0
        %3787 = vmatprep.subr.mxu0 0.0
        %3788 = vmatpush1.msra.mxu0 0.0
        %3789 = vmatprep.subr.mxu0 0.0
        %3790 = vmatpush1.msra.mxu0 0.0
        %3791 = vmatprep.subr.mxu0 0.0
        %3792 = vmatpush1.msra.mxu0 0.0
        %3793 = vmatprep.subr.mxu0 0.0
        %3794 = vmatpush1.msra.mxu0 0.0
        %3795 = vmatprep.subr.mxu0 0.0
        %3796 = vmatpush1.msra.mxu0 0.0
        %3797 = vmatprep.subr.mxu0 0.0
        %3798 = vmatpush1.msra.mxu0 0.0
        %3799 = vmatprep.subr.mxu0 0.0
        %3800 = vmatpush1.msra.mxu0 0.0
        %3801 = vmatprep.subr.mxu0 0.0
        %3802 = vmatpush1.msra.mxu0 0.0
        %3803 = vmatprep.subr.mxu0 0.0
        %3804 = vmatpush1.msra.mxu0 0.0
        %3805 = vmatprep.subr.mxu0 0.0
        %3806 = vmatpush1.msra.mxu0 0.0
        %3807 = vmatprep.subr.mxu0 0.0
        %3808 = vmatpush1.msra.mxu0 0.0
        %3809 = vmatprep.subr.mxu0 0.0
        %3810 = vmatpush1.msra.mxu0 0.0
        %3811 = vmatprep.subr.mxu0 0.0
        %3812 = vmatpush1.msra.mxu0 0.0
        %3813 = vmatprep.subr.mxu0 0.0
        %3814 = vmatpush1.msra.mxu0 0.0
        %3815 = vmatprep.subr.mxu0 0.0
        %3816 = vmatpush1.msra.mxu0 0.0
        %3817 = vmatprep.subr.mxu0 0.0
        %3818 = vmatpush1.msra.mxu0 0.0
        %3819 = vmatprep.subr.mxu0 0.0
        %3820 = vmatpush1.msra.mxu0 0.0
        %3821 = vmatprep.subr.mxu0 0.0
        %3822 = vmatpush1.msra.mxu0 0.0
        %3823 = vmatprep.subr.mxu0 0.0
        %3824 = vmatpush1.msra.mxu0 0.0
        %3825 = vmatprep.subr.mxu0 0.0
        %3826 = vmatpush1.msra.mxu0 0.0
        %3827 = vmatprep.subr.mxu0 0.0
        %3828 = vmatpush1.msra.mxu0 0.0
        %3829 = vmatprep.subr.mxu0 0.0
        %3830 = vmatpush1.msra.mxu0 0.0
        %3831 = vmatprep.subr.mxu0 0.0
        %3832 = vmatpush1.msra.mxu0 0.0
        %3833 = vmatprep.subr.mxu0 0.0
        %3834 = vmatpush1.msra.mxu0 0.0
        %3835 = vmatprep.subr.mxu0 0.0
        %3836 = vmatpush1.msra.mxu0 0.0
        %3837 = vmatprep.subr.mxu0 0.0
        %3838 = vmatpush1.msra.mxu0 0.0
        %3839 = vmatprep.subr.mxu0 0.0
        %3840 = vmatpush1.msra.mxu0 0.0
        %3841 = vmatprep.mubr.f32.mxu0 0.0
        %3842 = vmatmul.mubr.f32.gmra.mrb[0].mxu0 %v3769
        %v3843 = vpop.f32.mrb[0].mxu0
        %v3844 = vadd.f32 0.0, %v3843
        %v3845 = vpop.f32.mrb[0].mxu0
        %3846 = vmatprep.mubr.f32.mxu0 0.0
        %3847 = vmatmul.mubr.f32.gmra.mrb[0].mxu0 %v3772
        %v3848 = vpop.f32.mrb[0].mxu0
        %v3849 = vadd.f32 0.0, %v3848
        %v3850 = vpop.f32.mrb[0].mxu0
        %3851 = vdwg.mxu0
        %s3852 = scalar_lea.vmem [#allocation8], 16
        %v3853 = vld [vmem:[%s3852] sm:$0xff]
        %v3855 = vsel %vm1371, %v3844, 0
        %v3858 = vsel %vm1371, %v3849, 0
        %3860 = vmatprep.subr.mxu0 0.0
        %3861 = vmatpush1.msra.mxu0 %v3853
        %3862 = vmatprep.subr.mxu0 0.0
        %3863 = vmatpush1.msra.mxu0 0.0
        %3864 = vmatprep.subr.mxu0 0.0
        %3865 = vmatpush1.msra.mxu0 0.0
        %3866 = vmatprep.subr.mxu0 0.0
        %3867 = vmatpush1.msra.mxu0 0.0
        %3868 = vmatprep.subr.mxu0 0.0
        %3869 = vmatpush1.msra.mxu0 0.0
        %3870 = vmatprep.subr.mxu0 0.0
        %3871 = vmatpush1.msra.mxu0 0.0
        %3872 = vmatprep.subr.mxu0 0.0
        %3873 = vmatpush1.msra.mxu0 0.0
        %3874 = vmatprep.subr.mxu0 0.0
        %3875 = vmatpush1.msra.mxu0 0.0
        %3876 = vmatprep.subr.mxu0 0.0
        %3877 = vmatpush1.msra.mxu0 0.0
        %3878 = vmatprep.subr.mxu0 0.0
        %3879 = vmatpush1.msra.mxu0 0.0
        %3880 = vmatprep.subr.mxu0 0.0
        %3881 = vmatpush1.msra.mxu0 0.0
        %3882 = vmatprep.subr.mxu0 0.0
        %3883 = vmatpush1.msra.mxu0 0.0
        %3884 = vmatprep.subr.mxu0 0.0
        %3885 = vmatpush1.msra.mxu0 0.0
        %3886 = vmatprep.subr.mxu0 0.0
        %3887 = vmatpush1.msra.mxu0 0.0
        %3888 = vmatprep.subr.mxu0 0.0
        %3889 = vmatpush1.msra.mxu0 0.0
        %3890 = vmatprep.subr.mxu0 0.0
        %3891 = vmatpush1.msra.mxu0 0.0
        %3892 = vmatprep.subr.mxu0 0.0
        %3893 = vmatpush1.msra.mxu0 0.0
        %3894 = vmatprep.subr.mxu0 0.0
        %3895 = vmatpush1.msra.mxu0 0.0
        %3896 = vmatprep.subr.mxu0 0.0
        %3897 = vmatpush1.msra.mxu0 0.0
        %3898 = vmatprep.subr.mxu0 0.0
        %3899 = vmatpush1.msra.mxu0 0.0
        %3900 = vmatprep.subr.mxu0 0.0
        %3901 = vmatpush1.msra.mxu0 0.0
        %3902 = vmatprep.subr.mxu0 0.0
        %3903 = vmatpush1.msra.mxu0 0.0
        %3904 = vmatprep.subr.mxu0 0.0
        %3905 = vmatpush1.msra.mxu0 0.0
        %3906 = vmatprep.subr.mxu0 0.0
        %3907 = vmatpush1.msra.mxu0 0.0
        %3908 = vmatprep.subr.mxu0 0.0
        %3909 = vmatpush1.msra.mxu0 0.0
        %3910 = vmatprep.subr.mxu0 0.0
        %3911 = vmatpush1.msra.mxu0 0.0
        %3912 = vmatprep.subr.mxu0 0.0
        %3913 = vmatpush1.msra.mxu0 0.0
        %3914 = vmatprep.subr.mxu0 0.0
        %3915 = vmatpush1.msra.mxu0 0.0
        %3916 = vmatprep.subr.mxu0 0.0
        %3917 = vmatpush1.msra.mxu0 0.0
        %3918 = vmatprep.subr.mxu0 0.0
        %3919 = vmatpush1.msra.mxu0 0.0
        %3920 = vmatprep.subr.mxu0 0.0
        %3921 = vmatpush1.msra.mxu0 0.0
        %3922 = vmatprep.subr.mxu0 0.0
        %3923 = vmatpush1.msra.mxu0 0.0
        %3924 = vmatprep.mubr.f32.mxu0 0.0
        %3925 = vmatmul.mubr.f32.gmra.mrb[0].mxu0 %v3855
        %v3926 = vpop.f32.mrb[0].mxu0
        %v3927 = vadd.f32 0.0, %v3926
        %v3928 = vpop.f32.mrb[0].mxu0
        %3929 = vmatprep.mubr.f32.mxu0 0.0
        %3930 = vmatmul.mubr.f32.gmra.mrb[0].mxu0 %v3858
        %v3931 = vpop.f32.mrb[0].mxu0
        %v3932 = vadd.f32 0.0, %v3931
        %v3933 = vpop.f32.mrb[0].mxu0
        %3934 = vdwg.mxu0
        %v3935 = vadd.f32 %v3383, %v3927
        %v3936 = vadd.f32 %v3388, %v3932
        %s3937 = scalar_lea.vmem %s37, 96
        %v3938 = vld [vmem:[%s3937] sm:$0xff]
        %v3939 = vld [vmem:[%s3937 + $0x8] sm:$0xff]
        %v3940 = vld [vmem:[%s3937 + $0x10] sm:$0xff]
        %v3941 = vld [vmem:[%s3937 + $0x18] sm:$0xff]
        %s3942 = scalar_lea.vmem %s39, 3
        %v3943 = vld [vmem:[%s3942] sm:$0x1]
        %v3945 = vlaneseq
        %v3946 = vshrl.u32 %v3945, 7
        %v3947 = vsub.s32 0, %v3946
        %v3948 = vrot.slane %v3943, %v3947
        %3950 = vmatprep.subr.mxu0 0.0
        %3951 = vmatpush1.msra.mxu0 %v3938
        %3952 = vmatprep.subr.mxu0 0.0
        %3953 = vmatpush1.msra.mxu0 %v3939
        %3954 = vmatprep.subr.mxu0 0.0
        %3955 = vmatpush1.msra.mxu0 %v3940
        %3956 = vmatprep.subr.mxu0 0.0
        %3957 = vmatpush1.msra.mxu0 %v3941
        %3958 = vmatprep.subr.mxu0 0.0
        %3959 = vmatpush1.msra.mxu0 0.0
        %3960 = vmatprep.subr.mxu0 0.0
        %3961 = vmatpush1.msra.mxu0 0.0
        %3962 = vmatprep.subr.mxu0 0.0
        %3963 = vmatpush1.msra.mxu0 0.0
        %3964 = vmatprep.subr.mxu0 0.0
        %3965 = vmatpush1.msra.mxu0 0.0
        %3966 = vmatprep.subr.mxu0 0.0
        %3967 = vmatpush1.msra.mxu0 0.0
        %3968 = vmatprep.subr.mxu0 0.0
        %3969 = vmatpush1.msra.mxu0 0.0
        %3970 = vmatprep.subr.mxu0 0.0
        %3971 = vmatpush1.msra.mxu0 0.0
        %3972 = vmatprep.subr.mxu0 0.0
        %3973 = vmatpush1.msra.mxu0 0.0
        %3974 = vmatprep.subr.mxu0 0.0
        %3975 = vmatpush1.msra.mxu0 0.0
        %3976 = vmatprep.subr.mxu0 0.0
        %3977 = vmatpush1.msra.mxu0 0.0
        %3978 = vmatprep.subr.mxu0 0.0
        %3979 = vmatpush1.msra.mxu0 0.0
        %3980 = vmatprep.subr.mxu0 0.0
        %3981 = vmatpush1.msra.mxu0 0.0
        %3982 = vmatprep.subr.mxu0 0.0
        %3983 = vmatpush1.msra.mxu0 0.0
        %3984 = vmatprep.subr.mxu0 0.0
        %3985 = vmatpush1.msra.mxu0 0.0
        %3986 = vmatprep.subr.mxu0 0.0
        %3987 = vmatpush1.msra.mxu0 0.0
        %3988 = vmatprep.subr.mxu0 0.0
        %3989 = vmatpush1.msra.mxu0 0.0
        %3990 = vmatprep.subr.mxu0 0.0
        %3991 = vmatpush1.msra.mxu0 0.0
        %3992 = vmatprep.subr.mxu0 0.0
        %3993 = vmatpush1.msra.mxu0 0.0
        %3994 = vmatprep.subr.mxu0 0.0
        %3995 = vmatpush1.msra.mxu0 0.0
        %3996 = vmatprep.subr.mxu0 0.0
        %3997 = vmatpush1.msra.mxu0 0.0
        %3998 = vmatprep.subr.mxu0 0.0
        %3999 = vmatpush1.msra.mxu0 0.0
        %4000 = vmatprep.subr.mxu0 0.0
        %4001 = vmatpush1.msra.mxu0 0.0
        %4002 = vmatprep.subr.mxu0 0.0
        %4003 = vmatpush1.msra.mxu0 0.0
        %4004 = vmatprep.subr.mxu0 0.0
        %4005 = vmatpush1.msra.mxu0 0.0
        %4006 = vmatprep.subr.mxu0 0.0
        %4007 = vmatpush1.msra.mxu0 0.0
        %4008 = vmatprep.subr.mxu0 0.0
        %4009 = vmatpush1.msra.mxu0 0.0
        %4010 = vmatprep.subr.mxu0 0.0
        %4011 = vmatpush1.msra.mxu0 0.0
        %4012 = vmatprep.subr.mxu0 0.0
        %4013 = vmatpush1.msra.mxu0 0.0
        %4014 = vmatprep.mubr.f32.mxu0 0.0
        %4015 = vmatmul.mubr.f32.gmra.mrb[0].mxu0 %v2314
        %v4016 = vpop.f32.mrb[0].mxu0
        %v4017 = vadd.f32 %v3948, %v4016
        %v4018 = vpop.f32.mrb[0].mxu0
        %4019 = vmatprep.mubr.f32.mxu0 0.0
        %4020 = vmatmul.mubr.f32.gmra.mrb[0].mxu0 %v2317
        %v4021 = vpop.f32.mrb[0].mxu0
        %v4022 = vadd.f32 %v3948, %v4021
        %v4023 = vpop.f32.mrb[0].mxu0
        %4024 = vdwg.mxu0
        %s4025 = scalar_lea.vmem %s41, 96
        %v4026 = vld [vmem:[%s4025] sm:$0xff]
        %v4027 = vld [vmem:[%s4025 + $0x8] sm:$0xff]
        %v4028 = vld [vmem:[%s4025 + $0x10] sm:$0xff]
        %v4029 = vld [vmem:[%s4025 + $0x18] sm:$0xff]
        %s4030 = scalar_lea.vmem %s43, 3
        %v4031 = vld [vmem:[%s4030] sm:$0x1]
        %v4033 = vlaneseq
        %v4034 = vshrl.u32 %v4033, 7
        %v4035 = vsub.s32 0, %v4034
        %v4036 = vrot.slane %v4031, %v4035
        %4038 = vmatprep.subr.mxu0 0.0
        %4039 = vmatpush1.msra.mxu0 %v4026
        %4040 = vmatprep.subr.mxu0 0.0
        %4041 = vmatpush1.msra.mxu0 %v4027
        %4042 = vmatprep.subr.mxu0 0.0
        %4043 = vmatpush1.msra.mxu0 %v4028
        %4044 = vmatprep.subr.mxu0 0.0
        %4045 = vmatpush1.msra.mxu0 %v4029
        %4046 = vmatprep.subr.mxu0 0.0
        %4047 = vmatpush1.msra.mxu0 0.0
        %4048 = vmatprep.subr.mxu0 0.0
        %4049 = vmatpush1.msra.mxu0 0.0
        %4050 = vmatprep.subr.mxu0 0.0
        %4051 = vmatpush1.msra.mxu0 0.0
        %4052 = vmatprep.subr.mxu0 0.0
        %4053 = vmatpush1.msra.mxu0 0.0
        %4054 = vmatprep.subr.mxu0 0.0
        %4055 = vmatpush1.msra.mxu0 0.0
        %4056 = vmatprep.subr.mxu0 0.0
        %4057 = vmatpush1.msra.mxu0 0.0
        %4058 = vmatprep.subr.mxu0 0.0
        %4059 = vmatpush1.msra.mxu0 0.0
        %4060 = vmatprep.subr.mxu0 0.0
        %4061 = vmatpush1.msra.mxu0 0.0
        %4062 = vmatprep.subr.mxu0 0.0
        %4063 = vmatpush1.msra.mxu0 0.0
        %4064 = vmatprep.subr.mxu0 0.0
        %4065 = vmatpush1.msra.mxu0 0.0
        %4066 = vmatprep.subr.mxu0 0.0
        %4067 = vmatpush1.msra.mxu0 0.0
        %4068 = vmatprep.subr.mxu0 0.0
        %4069 = vmatpush1.msra.mxu0 0.0
        %4070 = vmatprep.subr.mxu0 0.0
        %4071 = vmatpush1.msra.mxu0 0.0
        %4072 = vmatprep.subr.mxu0 0.0
        %4073 = vmatpush1.msra.mxu0 0.0
        %4074 = vmatprep.subr.mxu0 0.0
        %4075 = vmatpush1.msra.mxu0 0.0
        %4076 = vmatprep.subr.mxu0 0.0
        %4077 = vmatpush1.msra.mxu0 0.0
        %4078 = vmatprep.subr.mxu0 0.0
        %4079 = vmatpush1.msra.mxu0 0.0
        %4080 = vmatprep.subr.mxu0 0.0
        %4081 = vmatpush1.msra.mxu0 0.0
        %4082 = vmatprep.subr.mxu0 0.0
        %4083 = vmatpush1.msra.mxu0 0.0
        %4084 = vmatprep.subr.mxu0 0.0
        %4085 = vmatpush1.msra.mxu0 0.0
        %4086 = vmatprep.subr.mxu0 0.0
        %4087 = vmatpush1.msra.mxu0 0.0
        %4088 = vmatprep.subr.mxu0 0.0
        %4089 = vmatpush1.msra.mxu0 0.0
        %4090 = vmatprep.subr.mxu0 0.0
        %4091 = vmatpush1.msra.mxu0 0.0
        %4092 = vmatprep.subr.mxu0 0.0
        %4093 = vmatpush1.msra.mxu0 0.0
        %4094 = vmatprep.subr.mxu0 0.0
        %4095 = vmatpush1.msra.mxu0 0.0
        %4096 = vmatprep.subr.mxu0 0.0
        %4097 = vmatpush1.msra.mxu0 0.0
        %4098 = vmatprep.subr.mxu0 0.0
        %4099 = vmatpush1.msra.mxu0 0.0
        %4100 = vmatprep.subr.mxu0 0.0
        %4101 = vmatpush1.msra.mxu0 0.0
        %4102 = vmatprep.mubr.f32.mxu0 0.0
        %4103 = vmatmul.mubr.f32.gmra.mrb[0].mxu0 %v2314
        %v4104 = vpop.f32.mrb[0].mxu0
        %v4105 = vadd.f32 %v4036, %v4104
        %v4106 = vpop.f32.mrb[0].mxu0
        %4107 = vmatprep.mubr.f32.mxu0 0.0
        %4108 = vmatmul.mubr.f32.gmra.mrb[0].mxu0 %v2317
        %v4109 = vpop.f32.mrb[0].mxu0
        %v4110 = vadd.f32 %v4036, %v4109
        %v4111 = vpop.f32.mrb[0].mxu0
        %4112 = vdwg.mxu0
        %s4113 = scalar_lea.vmem %s45, 96
        %v4114 = vld [vmem:[%s4113] sm:$0xff]
        %v4115 = vld [vmem:[%s4113 + $0x8] sm:$0xff]
        %v4116 = vld [vmem:[%s4113 + $0x10] sm:$0xff]
        %v4117 = vld [vmem:[%s4113 + $0x18] sm:$0xff]
        %s4118 = scalar_lea.vmem %s47, 3
        %v4119 = vld [vmem:[%s4118] sm:$0x1]
        %v4121 = vlaneseq
        %v4122 = vshrl.u32 %v4121, 7
        %v4123 = vsub.s32 0, %v4122
        %v4124 = vrot.slane %v4119, %v4123
        %4126 = vmatprep.subr.mxu0 0.0
        %4127 = vmatpush1.msra.mxu0 %v4114
        %4128 = vmatprep.subr.mxu0 0.0
        %4129 = vmatpush1.msra.mxu0 %v4115
        %4130 = vmatprep.subr.mxu0 0.0
        %4131 = vmatpush1.msra.mxu0 %v4116
        %4132 = vmatprep.subr.mxu0 0.0
        %4133 = vmatpush1.msra.mxu0 %v4117
        %4134 = vmatprep.subr.mxu0 0.0
        %4135 = vmatpush1.msra.mxu0 0.0
        %4136 = vmatprep.subr.mxu0 0.0
        %4137 = vmatpush1.msra.mxu0 0.0
        %4138 = vmatprep.subr.mxu0 0.0
        %4139 = vmatpush1.msra.mxu0 0.0
        %4140 = vmatprep.subr.mxu0 0.0
        %4141 = vmatpush1.msra.mxu0 0.0
        %4142 = vmatprep.subr.mxu0 0.0
        %4143 = vmatpush1.msra.mxu0 0.0
        %4144 = vmatprep.subr.mxu0 0.0
        %4145 = vmatpush1.msra.mxu0 0.0
        %4146 = vmatprep.subr.mxu0 0.0
        %4147 = vmatpush1.msra.mxu0 0.0
        %4148 = vmatprep.subr.mxu0 0.0
        %4149 = vmatpush1.msra.mxu0 0.0
        %4150 = vmatprep.subr.mxu0 0.0
        %4151 = vmatpush1.msra.mxu0 0.0
        %4152 = vmatprep.subr.mxu0 0.0
        %4153 = vmatpush1.msra.mxu0 0.0
        %4154 = vmatprep.subr.mxu0 0.0
        %4155 = vmatpush1.msra.mxu0 0.0
        %4156 = vmatprep.subr.mxu0 0.0
        %4157 = vmatpush1.msra.mxu0 0.0
        %4158 = vmatprep.subr.mxu0 0.0
        %4159 = vmatpush1.msra.mxu0 0.0
        %4160 = vmatprep.subr.mxu0 0.0
        %4161 = vmatpush1.msra.mxu0 0.0
        %4162 = vmatprep.subr.mxu0 0.0
        %4163 = vmatpush1.msra.mxu0 0.0
        %4164 = vmatprep.subr.mxu0 0.0
        %4165 = vmatpush1.msra.mxu0 0.0
        %4166 = vmatprep.subr.mxu0 0.0
        %4167 = vmatpush1.msra.mxu0 0.0
        %4168 = vmatprep.subr.mxu0 0.0
        %4169 = vmatpush1.msra.mxu0 0.0
        %4170 = vmatprep.subr.mxu0 0.0
        %4171 = vmatpush1.msra.mxu0 0.0
        %4172 = vmatprep.subr.mxu0 0.0
        %4173 = vmatpush1.msra.mxu0 0.0
        %4174 = vmatprep.subr.mxu0 0.0
        %4175 = vmatpush1.msra.mxu0 0.0
        %4176 = vmatprep.subr.mxu0 0.0
        %4177 = vmatpush1.msra.mxu0 0.0
        %4178 = vmatprep.subr.mxu0 0.0
        %4179 = vmatpush1.msra.mxu0 0.0
        %4180 = vmatprep.subr.mxu0 0.0
        %4181 = vmatpush1.msra.mxu0 0.0
        %4182 = vmatprep.subr.mxu0 0.0
        %4183 = vmatpush1.msra.mxu0 0.0
        %4184 = vmatprep.subr.mxu0 0.0
        %4185 = vmatpush1.msra.mxu0 0.0
        %4186 = vmatprep.subr.mxu0 0.0
        %4187 = vmatpush1.msra.mxu0 0.0
        %4188 = vmatprep.subr.mxu0 0.0
        %4189 = vmatpush1.msra.mxu0 0.0
        %4190 = vmatprep.mubr.f32.mxu0 0.0
        %4191 = vmatmul.mubr.f32.gmra.mrb[0].mxu0 %v2314
        %v4192 = vpop.f32.mrb[0].mxu0
        %v4193 = vadd.f32 %v4124, %v4192
        %v4194 = vpop.f32.mrb[0].mxu0
        %4195 = vmatprep.mubr.f32.mxu0 0.0
        %4196 = vmatmul.mubr.f32.gmra.mrb[0].mxu0 %v2317
        %v4197 = vpop.f32.mrb[0].mxu0
        %v4198 = vadd.f32 %v4124, %v4197
        %v4199 = vpop.f32.mrb[0].mxu0
        %4200 = vdwg.mxu0
        %v4202 = vsel %vm1371, %v4017, 0
        %v4205 = vsel %vm1371, %v4022, 0
        %v4208 = vsel %vm1371, %v4105, 0
        %v4211 = vsel %vm1371, %v4110, 0
        %4213 = vmatprep.subr.mxu0 0.0
        %4214 = vmatpush1.xpose.msra.mxu0 %v4208
        %4215 = vmatprep.subr.mxu0 0.0
        %4216 = vmatpush1.xpose.msra.mxu0 %v4211
        %4217 = vmatprep.subr.mxu0 0.0
        %4218 = vmatpush1.xpose.msra.mxu0 0.0
        %4219 = vmatprep.subr.mxu0 0.0
        %4220 = vmatpush1.xpose.msra.mxu0 0.0
        %4221 = vmatprep.subr.mxu0 0.0
        %4222 = vmatpush1.xpose.msra.mxu0 0.0
        %4223 = vmatprep.subr.mxu0 0.0
        %4224 = vmatpush1.xpose.msra.mxu0 0.0
        %4225 = vmatprep.subr.mxu0 0.0
        %4226 = vmatpush1.xpose.msra.mxu0 0.0
        %4227 = vmatprep.subr.mxu0 0.0
        %4228 = vmatpush1.xpose.msra.mxu0 0.0
        %4229 = vmatprep.subr.mxu0 0.0
        %4230 = vmatpush1.xpose.msra.mxu0 0.0
        %4231 = vmatprep.subr.mxu0 0.0
        %4232 = vmatpush1.xpose.msra.mxu0 0.0
        %4233 = vmatprep.subr.mxu0 0.0
        %4234 = vmatpush1.xpose.msra.mxu0 0.0
        %4235 = vmatprep.subr.mxu0 0.0
        %4236 = vmatpush1.xpose.msra.mxu0 0.0
        %4237 = vmatprep.subr.mxu0 0.0
        %4238 = vmatpush1.xpose.msra.mxu0 0.0
        %4239 = vmatprep.subr.mxu0 0.0
        %4240 = vmatpush1.xpose.msra.mxu0 0.0
        %4241 = vmatprep.subr.mxu0 0.0
        %4242 = vmatpush1.xpose.msra.mxu0 0.0
        %4243 = vmatprep.subr.mxu0 0.0
        %4244 = vmatpush1.xpose.msra.mxu0 0.0
        %4245 = vmatprep.subr.mxu0 0.0
        %4246 = vmatpush1.xpose.msra.mxu0 0.0
        %4247 = vmatprep.subr.mxu0 0.0
        %4248 = vmatpush1.xpose.msra.mxu0 0.0
        %4249 = vmatprep.subr.mxu0 0.0
        %4250 = vmatpush1.xpose.msra.mxu0 0.0
        %4251 = vmatprep.subr.mxu0 0.0
        %4252 = vmatpush1.xpose.msra.mxu0 0.0
        %4253 = vmatprep.subr.mxu0 0.0
        %4254 = vmatpush1.xpose.msra.mxu0 0.0
        %4255 = vmatprep.subr.mxu0 0.0
        %4256 = vmatpush1.xpose.msra.mxu0 0.0
        %4257 = vmatprep.subr.mxu0 0.0
        %4258 = vmatpush1.xpose.msra.mxu0 0.0
        %4259 = vmatprep.subr.mxu0 0.0
        %4260 = vmatpush1.xpose.msra.mxu0 0.0
        %4261 = vmatprep.subr.mxu0 0.0
        %4262 = vmatpush1.xpose.msra.mxu0 0.0
        %4263 = vmatprep.subr.mxu0 0.0
        %4264 = vmatpush1.xpose.msra.mxu0 0.0
        %4265 = vmatprep.subr.mxu0 0.0
        %4266 = vmatpush1.xpose.msra.mxu0 0.0
        %4267 = vmatprep.subr.mxu0 0.0
        %4268 = vmatpush1.xpose.msra.mxu0 0.0
        %4269 = vmatprep.subr.mxu0 0.0
        %4270 = vmatpush1.xpose.msra.mxu0 0.0
        %4271 = vmatprep.subr.mxu0 0.0
        %4272 = vmatpush1.xpose.msra.mxu0 0.0
        %4273 = vmatprep.subr.mxu0 0.0
        %4274 = vmatpush1.xpose.msra.mxu0 0.0
        %4275 = vmatprep.subr.mxu0 0.0
        %4276 = vmatpush1.xpose.msra.mxu0 0.0
        %4277 = vmatprep.mubr.f32.mxu0 0.0
        %4278 = vmatmul.mubr.f32.gmra.mrb[0].mxu0 %v4202
        %v4279 = vpop.f32.mrb[0].mxu0
        %v4280 = vadd.f32 0.0, %v4279
        %v4281 = vpop.f32.mrb[0].mxu0
        %4282 = vmatprep.mubr.f32.mxu0 0.0
        %4283 = vmatmul.mubr.f32.gmra.mrb[0].mxu0 %v4205
        %v4284 = vpop.f32.mrb[0].mxu0
        %v4285 = vadd.f32 0.0, %v4284
        %v4286 = vpop.f32.mrb[0].mxu0
        %4287 = vdwg.mxu0
        %v4288 = vmul.f32 %v4280, 0.35355338
        %v4289 = vmul.f32 %v4285, 0.35355338
        %v4290 = vsel %vm2253, %v4288, -1e+30
        %v4291 = vsel %vm2254, %v4289, -1e+30
        %v4292 = vsel %vm2657, %v4290, -inf
        %4293 = vmax.xlane.f32.xlu0 %v4292
        %v4294 = vpop.xlane.xlu0 %4293
        %v4295 = vsel %vm2661, %v4291, -inf
        %4296 = vmax.xlane.f32.xlu0 %v4295
        %v4297 = vpop.xlane.xlu0 %4296
        %v4298 = vsub.f32 %v4290, %v4294
        %v4299 = vsub.f32 %v4291, %v4297
        %v4300 = vmul.f32 %v4298, 1.442695
        %v4301 = vpow.pop %v4300
        %v4302 = vmul.f32 %v4299, 1.442695
        %v4303 = vpow.pop %v4302
        %v4304 = vsel %vm2657, %v4301, 0.0
        %4305 = vadd.xlane.f32.xlu0 %v4304
        %v4306 = vpop.xlane.xlu0 %4305
        %v4307 = vsel %vm2661, %v4303, 0.0
        %4308 = vadd.xlane.f32.xlu0 %v4307
        %v4309 = vpop.xlane.xlu0 %4308
        %v4310 = vrcp.pop %v4306
        %v4311 = vmul.f32 %v4301, %v4310
        %v4312 = vrcp.pop %v4309
        %v4313 = vmul.f32 %v4303, %v4312
        %v4315 = vsel %vm2657, %v4311, 0
        %v4318 = vsel %vm2657, %v4313, 0
        %v4321 = vsel %vm1993, %v4198, 0
        %4323 = vmatprep.subr.mxu0 0.0
        %4324 = vmatpush1.msra.mxu0 %v4193
        %4325 = vmatprep.subr.mxu0 0.0
        %4326 = vmatpush1.msra.mxu0 %v4321
        %4327 = vmatprep.subr.mxu0 0.0
        %4328 = vmatpush1.msra.mxu0 0.0
        %4329 = vmatprep.subr.mxu0 0.0
        %4330 = vmatpush1.msra.mxu0 0.0
        %4331 = vmatprep.subr.mxu0 0.0
        %4332 = vmatpush1.msra.mxu0 0.0
        %4333 = vmatprep.subr.mxu0 0.0
        %4334 = vmatpush1.msra.mxu0 0.0
        %4335 = vmatprep.subr.mxu0 0.0
        %4336 = vmatpush1.msra.mxu0 0.0
        %4337 = vmatprep.subr.mxu0 0.0
        %4338 = vmatpush1.msra.mxu0 0.0
        %4339 = vmatprep.subr.mxu0 0.0
        %4340 = vmatpush1.msra.mxu0 0.0
        %4341 = vmatprep.subr.mxu0 0.0
        %4342 = vmatpush1.msra.mxu0 0.0
        %4343 = vmatprep.subr.mxu0 0.0
        %4344 = vmatpush1.msra.mxu0 0.0
        %4345 = vmatprep.subr.mxu0 0.0
        %4346 = vmatpush1.msra.mxu0 0.0
        %4347 = vmatprep.subr.mxu0 0.0
        %4348 = vmatpush1.msra.mxu0 0.0
        %4349 = vmatprep.subr.mxu0 0.0
        %4350 = vmatpush1.msra.mxu0 0.0
        %4351 = vmatprep.subr.mxu0 0.0
        %4352 = vmatpush1.msra.mxu0 0.0
        %4353 = vmatprep.subr.mxu0 0.0
        %4354 = vmatpush1.msra.mxu0 0.0
        %4355 = vmatprep.subr.mxu0 0.0
        %4356 = vmatpush1.msra.mxu0 0.0
        %4357 = vmatprep.subr.mxu0 0.0
        %4358 = vmatpush1.msra.mxu0 0.0
        %4359 = vmatprep.subr.mxu0 0.0
        %4360 = vmatpush1.msra.mxu0 0.0
        %4361 = vmatprep.subr.mxu0 0.0
        %4362 = vmatpush1.msra.mxu0 0.0
        %4363 = vmatprep.subr.mxu0 0.0
        %4364 = vmatpush1.msra.mxu0 0.0
        %4365 = vmatprep.subr.mxu0 0.0
        %4366 = vmatpush1.msra.mxu0 0.0
        %4367 = vmatprep.subr.mxu0 0.0
        %4368 = vmatpush1.msra.mxu0 0.0
        %4369 = vmatprep.subr.mxu0 0.0
        %4370 = vmatpush1.msra.mxu0 0.0
        %4371 = vmatprep.subr.mxu0 0.0
        %4372 = vmatpush1.msra.mxu0 0.0
        %4373 = vmatprep.subr.mxu0 0.0
        %4374 = vmatpush1.msra.mxu0 0.0
        %4375 = vmatprep.subr.mxu0 0.0
        %4376 = vmatpush1.msra.mxu0 0.0
        %4377 = vmatprep.subr.mxu0 0.0
        %4378 = vmatpush1.msra.mxu0 0.0
        %4379 = vmatprep.subr.mxu0 0.0
        %4380 = vmatpush1.msra.mxu0 0.0
        %4381 = vmatprep.subr.mxu0 0.0
        %4382 = vmatpush1.msra.mxu0 0.0
        %4383 = vmatprep.subr.mxu0 0.0
        %4384 = vmatpush1.msra.mxu0 0.0
        %4385 = vmatprep.subr.mxu0 0.0
        %4386 = vmatpush1.msra.mxu0 0.0
        %4387 = vmatprep.mubr.f32.mxu0 0.0
        %4388 = vmatmul.mubr.f32.gmra.mrb[0].mxu0 %v4315
        %v4389 = vpop.f32.mrb[0].mxu0
        %v4390 = vadd.f32 0.0, %v4389
        %v4391 = vpop.f32.mrb[0].mxu0
        %4392 = vmatprep.mubr.f32.mxu0 0.0
        %4393 = vmatmul.mubr.f32.gmra.mrb[0].mxu0 %v4318
        %v4394 = vpop.f32.mrb[0].mxu0
        %v4395 = vadd.f32 0.0, %v4394
        %v4396 = vpop.f32.mrb[0].mxu0
        %4397 = vdwg.mxu0
        %s4398 = scalar_lea.vmem [#allocation8], 24
        %v4399 = vld [vmem:[%s4398] sm:$0xff]
        %v4401 = vsel %vm1371, %v4390, 0
        %v4404 = vsel %vm1371, %v4395, 0
        %4406 = vmatprep.subr.mxu0 0.0
        %4407 = vmatpush1.msra.mxu0 %v4399
        %4408 = vmatprep.subr.mxu0 0.0
        %4409 = vmatpush1.msra.mxu0 0.0
        %4410 = vmatprep.subr.mxu0 0.0
        %4411 = vmatpush1.msra.mxu0 0.0
        %4412 = vmatprep.subr.mxu0 0.0
        %4413 = vmatpush1.msra.mxu0 0.0
        %4414 = vmatprep.subr.mxu0 0.0
        %4415 = vmatpush1.msra.mxu0 0.0
        %4416 = vmatprep.subr.mxu0 0.0
        %4417 = vmatpush1.msra.mxu0 0.0
        %4418 = vmatprep.subr.mxu0 0.0
        %4419 = vmatpush1.msra.mxu0 0.0
        %4420 = vmatprep.subr.mxu0 0.0
        %4421 = vmatpush1.msra.mxu0 0.0
        %4422 = vmatprep.subr.mxu0 0.0
        %4423 = vmatpush1.msra.mxu0 0.0
        %4424 = vmatprep.subr.mxu0 0.0
        %4425 = vmatpush1.msra.mxu0 0.0
        %4426 = vmatprep.subr.mxu0 0.0
        %4427 = vmatpush1.msra.mxu0 0.0
        %4428 = vmatprep.subr.mxu0 0.0
        %4429 = vmatpush1.msra.mxu0 0.0
        %4430 = vmatprep.subr.mxu0 0.0
        %4431 = vmatpush1.msra.mxu0 0.0
        %4432 = vmatprep.subr.mxu0 0.0
        %4433 = vmatpush1.msra.mxu0 0.0
        %4434 = vmatprep.subr.mxu0 0.0
        %4435 = vmatpush1.msra.mxu0 0.0
        %4436 = vmatprep.subr.mxu0 0.0
        %4437 = vmatpush1.msra.mxu0 0.0
        %4438 = vmatprep.subr.mxu0 0.0
        %4439 = vmatpush1.msra.mxu0 0.0
        %4440 = vmatprep.subr.mxu0 0.0
        %4441 = vmatpush1.msra.mxu0 0.0
        %4442 = vmatprep.subr.mxu0 0.0
        %4443 = vmatpush1.msra.mxu0 0.0
        %4444 = vmatprep.subr.mxu0 0.0
        %4445 = vmatpush1.msra.mxu0 0.0
        %4446 = vmatprep.subr.mxu0 0.0
        %4447 = vmatpush1.msra.mxu0 0.0
        %4448 = vmatprep.subr.mxu0 0.0
        %4449 = vmatpush1.msra.mxu0 0.0
        %4450 = vmatprep.subr.mxu0 0.0
        %4451 = vmatpush1.msra.mxu0 0.0
        %4452 = vmatprep.subr.mxu0 0.0
        %4453 = vmatpush1.msra.mxu0 0.0
        %4454 = vmatprep.subr.mxu0 0.0
        %4455 = vmatpush1.msra.mxu0 0.0
        %4456 = vmatprep.subr.mxu0 0.0
        %4457 = vmatpush1.msra.mxu0 0.0
        %4458 = vmatprep.subr.mxu0 0.0
        %4459 = vmatpush1.msra.mxu0 0.0
        %4460 = vmatprep.subr.mxu0 0.0
        %4461 = vmatpush1.msra.mxu0 0.0
        %4462 = vmatprep.subr.mxu0 0.0
        %4463 = vmatpush1.msra.mxu0 0.0
        %4464 = vmatprep.subr.mxu0 0.0
        %4465 = vmatpush1.msra.mxu0 0.0
        %4466 = vmatprep.subr.mxu0 0.0
        %4467 = vmatpush1.msra.mxu0 0.0
        %4468 = vmatprep.subr.mxu0 0.0
        %4469 = vmatpush1.msra.mxu0 0.0
        %4470 = vmatprep.mubr.f32.mxu0 0.0
        %4471 = vmatmul.mubr.f32.gmra.mrb[0].mxu0 %v4401
        %v4472 = vpop.f32.mrb[0].mxu0
        %v4473 = vadd.f32 0.0, %v4472
        %v4474 = vpop.f32.mrb[0].mxu0
        %4475 = vmatprep.mubr.f32.mxu0 0.0
        %4476 = vmatmul.mubr.f32.gmra.mrb[0].mxu0 %v4404
        %v4477 = vpop.f32.mrb[0].mxu0
        %v4478 = vadd.f32 0.0, %v4477
        %v4479 = vpop.f32.mrb[0].mxu0
        %4480 = vdwg.mxu0
        %v4481 = vadd.f32 %v3935, %v4473
        %v4482 = vadd.f32 %v3936, %v4478
        %v4483 = vadd.f32 %v2251, %v4481
        %v4484 = vadd.f32 %v2252, %v4482
        %v4485 = vld [vmem:[%s51] sm:$0x1]
        %v4487 = vlaneseq
        %v4488 = vshrl.u32 %v4487, 7
        %v4489 = vsub.s32 0, %v4488
        %v4490 = vrot.slane %v4485, %v4489
        %v4492 = vadd.f32 %v4483, %v4490
        %v4493 = vadd.f32 %v4484, %v4490
        %v4494 = vld [vmem:[%s53] sm:$0x1]
        %v4495 = vld [vmem:[%s55] sm:$0x1]
        %v4496 = vsel %vm2257, %v4492, 0.0
        %4497 = vadd.xlane.f32.xlu0 %v4496
        %v4498 = vpop.xlane.xlu0 %4497
        %v4499 = vsel %vm2261, %v4493, 0.0
        %4500 = vadd.xlane.f32.xlu0 %v4499
        %v4501 = vpop.xlane.xlu0 %4500
        %v4502 = vmul.f32 %v4498, %v2265
        %v4503 = vmul.f32 %v4501, %v2265
        %v4504 = vsub.f32 %v4492, %v4502
        %v4505 = vsub.f32 %v4493, %v4503
        %v4506 = vmul.f32 %v4504, %v4504
        %v4507 = vmul.f32 %v4505, %v4505
        %v4508 = vsel %vm2257, %v4506, 0.0
        %4509 = vadd.xlane.f32.xlu0 %v4508
        %v4510 = vpop.xlane.xlu0 %4509
        %v4511 = vsel %vm2261, %v4507, 0.0
        %4512 = vadd.xlane.f32.xlu0 %v4511
        %v4513 = vpop.xlane.xlu0 %4512
        %v4514 = vmul.f32 %v4510, %v2265
        %v4515 = vmul.f32 %v4513, %v2265
        %v4516 = vadd.f32 %v4514, 1e-05
        %v4517 = vadd.f32 %v4515, 1e-05
        %v4518 = vrsqrt.pop %v4516
        %v4519 = vrsqrt.pop %v4517
        %v4520 = vmul.f32 %v4504, %v4518
        %v4521 = vmul.f32 %v4505, %v4519
        %v4523 = vlaneseq
        %v4524 = vshrl.u32 %v4523, 7
        %v4525 = vsub.s32 0, %v4524
        %v4526 = vrot.slane %v4494, %v4525
        %v4528 = vmul.f32 %v4520, %v4526
        %v4529 = vmul.f32 %v4521, %v4526
        %v4531 = vlaneseq
        %v4532 = vshrl.u32 %v4531, 7
        %v4533 = vsub.s32 0, %v4532
        %v4534 = vrot.slane %v4495, %v4533
        %v4536 = vadd.f32 %v4528, %v4534
        %v4537 = vadd.f32 %v4529, %v4534
        %v4538 = vld [vmem:[#allocation10] sm:$0xff]
        %v4539 = vld [vmem:[#allocation10 + $0x8] sm:$0xff]
        %v4540 = vld [vmem:[#allocation10 + $0x10] sm:$0xff]
        %v4541 = vld [vmem:[#allocation10 + $0x18] sm:$0xff]
        %v4542 = vld [vmem:[%s59] sm:$0x1]
        %v4544 = vlaneseq
        %v4545 = vshrl.u32 %v4544, 7
        %v4546 = vsub.s32 0, %v4545
        %v4547 = vrot.slane %v4542, %v4546
        %v4550 = vsel %vm2257, %v4536, 0
        %v4553 = vsel %vm2257, %v4537, 0
        %4555 = vmatprep.subr.mxu0 0.0
        %4556 = vmatpush1.msra.mxu0 %v4538
        %4557 = vmatprep.subr.mxu0 0.0
        %4558 = vmatpush1.msra.mxu0 %v4539
        %4559 = vmatprep.subr.mxu0 0.0
        %4560 = vmatpush1.msra.mxu0 %v4540
        %4561 = vmatprep.subr.mxu0 0.0
        %4562 = vmatpush1.msra.mxu0 %v4541
        %4563 = vmatprep.subr.mxu0 0.0
        %4564 = vmatpush1.msra.mxu0 0.0
        %4565 = vmatprep.subr.mxu0 0.0
        %4566 = vmatpush1.msra.mxu0 0.0
        %4567 = vmatprep.subr.mxu0 0.0
        %4568 = vmatpush1.msra.mxu0 0.0
        %4569 = vmatprep.subr.mxu0 0.0
        %4570 = vmatpush1.msra.mxu0 0.0
        %4571 = vmatprep.subr.mxu0 0.0
        %4572 = vmatpush1.msra.mxu0 0.0
        %4573 = vmatprep.subr.mxu0 0.0
        %4574 = vmatpush1.msra.mxu0 0.0
        %4575 = vmatprep.subr.mxu0 0.0
        %4576 = vmatpush1.msra.mxu0 0.0
        %4577 = vmatprep.subr.mxu0 0.0
        %4578 = vmatpush1.msra.mxu0 0.0
        %4579 = vmatprep.subr.mxu0 0.0
        %4580 = vmatpush1.msra.mxu0 0.0
        %4581 = vmatprep.subr.mxu0 0.0
        %4582 = vmatpush1.msra.mxu0 0.0
        %4583 = vmatprep.subr.mxu0 0.0
        %4584 = vmatpush1.msra.mxu0 0.0
        %4585 = vmatprep.subr.mxu0 0.0
        %4586 = vmatpush1.msra.mxu0 0.0
        %4587 = vmatprep.subr.mxu0 0.0
        %4588 = vmatpush1.msra.mxu0 0.0
        %4589 = vmatprep.subr.mxu0 0.0
        %4590 = vmatpush1.msra.mxu0 0.0
        %4591 = vmatprep.subr.mxu0 0.0
        %4592 = vmatpush1.msra.mxu0 0.0
        %4593 = vmatprep.subr.mxu0 0.0
        %4594 = vmatpush1.msra.mxu0 0.0
        %4595 = vmatprep.subr.mxu0 0.0
        %4596 = vmatpush1.msra.mxu0 0.0
        %4597 = vmatprep.subr.mxu0 0.0
        %4598 = vmatpush1.msra.mxu0 0.0
        %4599 = vmatprep.subr.mxu0 0.0
        %4600 = vmatpush1.msra.mxu0 0.0
        %4601 = vmatprep.subr.mxu0 0.0
        %4602 = vmatpush1.msra.mxu0 0.0
        %4603 = vmatprep.subr.mxu0 0.0
        %4604 = vmatpush1.msra.mxu0 0.0
        %4605 = vmatprep.subr.mxu0 0.0
        %4606 = vmatpush1.msra.mxu0 0.0
        %4607 = vmatprep.subr.mxu0 0.0
        %4608 = vmatpush1.msra.mxu0 0.0
        %4609 = vmatprep.subr.mxu0 0.0
        %4610 = vmatpush1.msra.mxu0 0.0
        %4611 = vmatprep.subr.mxu0 0.0
        %4612 = vmatpush1.msra.mxu0 0.0
        %4613 = vmatprep.subr.mxu0 0.0
        %4614 = vmatpush1.msra.mxu0 0.0
        %4615 = vmatprep.subr.mxu0 0.0
        %4616 = vmatpush1.msra.mxu0 0.0
        %4617 = vmatprep.subr.mxu0 0.0
        %4618 = vmatpush1.msra.mxu0 0.0
        %4619 = vmatprep.mubr.f32.mxu0 0.0
        %4620 = vmatmul.mubr.f32.gmra.mrb[0].mxu0 %v4550
        %v4621 = vpop.f32.mrb[0].mxu0
        %v4622 = vadd.f32 %v4547, %v4621
        %v4623 = vpop.f32.mrb[0].mxu0
        %4624 = vmatprep.mubr.f32.mxu0 0.0
        %4625 = vmatmul.mubr.f32.gmra.mrb[0].mxu0 %v4553
        %v4626 = vpop.f32.mrb[0].mxu0
        %v4627 = vadd.f32 %v4547, %v4626
        %v4628 = vpop.f32.mrb[0].mxu0
        %4629 = vdwg.mxu0
        %v4630 = vmul.f32 %v4622, 0.70710677
        %v4631 = vmul.f32 %v4627, 0.70710677
        %v4632 = vand.u32 2147483647, %v4630
        %v4633 = vand.u32 2147483647, %v4631
        %v4634 = vmul.f32 %v4632, 0.3275911
        %v4635 = vmul.f32 %v4633, 0.3275911
        %v4636 = vadd.f32 %v4634, 1.0
        %v4637 = vadd.f32 %v4635, 1.0
        %v4638 = vrcp.pop %v4636
        %v4639 = vmul.f32 1.0, %v4638
        %v4640 = vrcp.pop %v4637
        %v4641 = vmul.f32 1.0, %v4640
        %v4642 = vmul.f32 %v4639, 1.0614054
        %v4643 = vmul.f32 %v4641, 1.0614054
        %v4644 = vadd.f32 %v4642, -1.4531521
        %v4645 = vadd.f32 %v4643, -1.4531521
        %v4646 = vmul.f32 %v4639, %v4644
        %v4647 = vmul.f32 %v4641, %v4645
        %v4648 = vadd.f32 %v4646, 1.4214138
        %v4649 = vadd.f32 %v4647, 1.4214138
        %v4650 = vmul.f32 %v4639, %v4648
        %v4651 = vmul.f32 %v4641, %v4649
        %v4652 = vadd.f32 %v4650, -0.28449672
        %v4653 = vadd.f32 %v4651, -0.28449672
        %v4654 = vmul.f32 %v4639, %v4652
        %v4655 = vmul.f32 %v4641, %v4653
        %v4656 = vadd.f32 %v4654, 0.2548296
        %v4657 = vadd.f32 %v4655, 0.2548296
        %v4658 = vmul.f32 %v4639, %v4656
        %v4659 = vmul.f32 %v4641, %v4657
        %v4660 = vsub.f32 0.0, %v4632
        %v4661 = vsub.f32 0.0, %v4633
        %v4662 = vmul.f32 %v4660, %v4632
        %v4663 = vmul.f32 %v4661, %v4633
        %v4664 = vmul.f32 %v4662, 1.442695
        %v4665 = vpow.pop %v4664
        %v4666 = vmul.f32 %v4663, 1.442695
        %v4667 = vpow.pop %v4666
        %v4668 = vmul.f32 %v4658, %v4665
        %v4669 = vmul.f32 %v4659, %v4667
        %v4670 = vsub.f32 1.0, %v4668
        %v4671 = vsub.f32 1.0, %v4669
        %vm4672 = vcmp.ge.f32.partialorder %v4630, 0.0
        %vm4673 = vcmp.ge.f32.partialorder %v4631, 0.0
        %v4674 = vsub.f32 0.0, %v4670
        %v4675 = vsub.f32 0.0, %v4671
        %v4676 = vsel %vm4672, %v4670, %v4674
        %v4677 = vsel %vm4673, %v4671, %v4675
        %v4678 = vmul.f32 %v4622, 0.5
        %v4679 = vmul.f32 %v4627, 0.5
        %v4680 = vadd.f32 %v4676, 1.0
        %v4681 = vadd.f32 %v4677, 1.0
        %v4682 = vmul.f32 %v4678, %v4680
        %v4683 = vmul.f32 %v4679, %v4681
        %v4684 = vld [vmem:[%s61] sm:$0xff]
        %v4685 = vld [vmem:[%s61 + $0x8] sm:$0xff]
        %v4686 = vld [vmem:[%s61 + $0x10] sm:$0xff]
        %v4687 = vld [vmem:[%s61 + $0x18] sm:$0xff]
        %v4688 = vld [vmem:[%s61 + $0x20] sm:$0xff]
        %v4689 = vld [vmem:[%s61 + $0x28] sm:$0xff]
        %v4690 = vld [vmem:[%s61 + $0x30] sm:$0xff]
        %v4691 = vld [vmem:[%s61 + $0x38] sm:$0xff]
        %v4692 = vld [vmem:[%s61 + $0x40] sm:$0xff]
        %v4693 = vld [vmem:[%s61 + $0x48] sm:$0xff]
        %v4694 = vld [vmem:[%s61 + $0x50] sm:$0xff]
        %v4695 = vld [vmem:[%s61 + $0x58] sm:$0xff]
        %v4696 = vld [vmem:[%s61 + $0x60] sm:$0xff]
        %v4697 = vld [vmem:[%s61 + $0x68] sm:$0xff]
        %v4698 = vld [vmem:[%s61 + $0x70] sm:$0xff]
        %v4699 = vld [vmem:[%s61 + $0x78] sm:$0xff]
        %v4700 = vld [vmem:[%s63] sm:$0x1]
        %v4702 = vlaneseq
        %v4703 = vshrl.u32 %v4702, 7
        %v4704 = vsub.s32 0, %v4703
        %v4705 = vrot.slane %v4700, %v4704
        %4707 = vmatprep.subr.mxu0 0.0
        %4708 = vmatpush1.msra.mxu0 %v4684
        %4709 = vmatprep.subr.mxu0 0.0
        %4710 = vmatpush1.msra.mxu0 %v4685
        %4711 = vmatprep.subr.mxu0 0.0
        %4712 = vmatpush1.msra.mxu0 %v4686
        %4713 = vmatprep.subr.mxu0 0.0
        %4714 = vmatpush1.msra.mxu0 %v4687
        %4715 = vmatprep.subr.mxu0 0.0
        %4716 = vmatpush1.msra.mxu0 %v4688
        %4717 = vmatprep.subr.mxu0 0.0
        %4718 = vmatpush1.msra.mxu0 %v4689
        %4719 = vmatprep.subr.mxu0 0.0
        %4720 = vmatpush1.msra.mxu0 %v4690
        %4721 = vmatprep.subr.mxu0 0.0
        %4722 = vmatpush1.msra.mxu0 %v4691
        %4723 = vmatprep.subr.mxu0 0.0
        %4724 = vmatpush1.msra.mxu0 %v4692
        %4725 = vmatprep.subr.mxu0 0.0
        %4726 = vmatpush1.msra.mxu0 %v4693
        %4727 = vmatprep.subr.mxu0 0.0
        %4728 = vmatpush1.msra.mxu0 %v4694
        %4729 = vmatprep.subr.mxu0 0.0
        %4730 = vmatpush1.msra.mxu0 %v4695
        %4731 = vmatprep.subr.mxu0 0.0
        %4732 = vmatpush1.msra.mxu0 %v4696
        %4733 = vmatprep.subr.mxu0 0.0
        %4734 = vmatpush1.msra.mxu0 %v4697
        %4735 = vmatprep.subr.mxu0 0.0
        %4736 = vmatpush1.msra.mxu0 %v4698
        %4737 = vmatprep.subr.mxu0 0.0
        %4738 = vmatpush1.msra.mxu0 %v4699
        %4739 = vmatprep.subr.mxu0 0.0
        %4740 = vmatpush1.msra.mxu0 0.0
        %4741 = vmatprep.subr.mxu0 0.0
        %4742 = vmatpush1.msra.mxu0 0.0
        %4743 = vmatprep.subr.mxu0 0.0
        %4744 = vmatpush1.msra.mxu0 0.0
        %4745 = vmatprep.subr.mxu0 0.0
        %4746 = vmatpush1.msra.mxu0 0.0
        %4747 = vmatprep.subr.mxu0 0.0
        %4748 = vmatpush1.msra.mxu0 0.0
        %4749 = vmatprep.subr.mxu0 0.0
        %4750 = vmatpush1.msra.mxu0 0.0
        %4751 = vmatprep.subr.mxu0 0.0
        %4752 = vmatpush1.msra.mxu0 0.0
        %4753 = vmatprep.subr.mxu0 0.0
        %4754 = vmatpush1.msra.mxu0 0.0
        %4755 = vmatprep.subr.mxu0 0.0
        %4756 = vmatpush1.msra.mxu0 0.0
        %4757 = vmatprep.subr.mxu0 0.0
        %4758 = vmatpush1.msra.mxu0 0.0
        %4759 = vmatprep.subr.mxu0 0.0
        %4760 = vmatpush1.msra.mxu0 0.0
        %4761 = vmatprep.subr.mxu0 0.0
        %4762 = vmatpush1.msra.mxu0 0.0
        %4763 = vmatprep.subr.mxu0 0.0
        %4764 = vmatpush1.msra.mxu0 0.0
        %4765 = vmatprep.subr.mxu0 0.0
        %4766 = vmatpush1.msra.mxu0 0.0
        %4767 = vmatprep.subr.mxu0 0.0
        %4768 = vmatpush1.msra.mxu0 0.0
        %4769 = vmatprep.subr.mxu0 0.0
        %4770 = vmatpush1.msra.mxu0 0.0
        %4771 = vmatprep.mubr.f32.mxu0 0.0
        %4772 = vmatmul.mubr.f32.gmra.mrb[0].mxu0 %v4682
        %v4773 = vpop.f32.mrb[0].mxu0
        %v4774 = vadd.f32 %v4705, %v4773
        %v4775 = vpop.f32.mrb[0].mxu0
        %4776 = vmatprep.mubr.f32.mxu0 0.0
        %4777 = vmatmul.mubr.f32.gmra.mrb[0].mxu0 %v4683
        %v4778 = vpop.f32.mrb[0].mxu0
        %v4779 = vadd.f32 %v4705, %v4778
        %v4780 = vpop.f32.mrb[0].mxu0
        %4781 = vdwg.mxu0
        %v4782 = vadd.f32 %v4492, %v4774
        %v4783 = vadd.f32 %v4493, %v4779
        %s4784 = scalar_lea.vmem %s33, 1
        %v4785 = vld [vmem:[%s4784] sm:$0x1]
        %s4786 = scalar_lea.vmem %s35, 1
        %v4787 = vld [vmem:[%s4786] sm:$0x1]
        %v4788 = vsel %vm2257, %v4782, 0.0
        %4789 = vadd.xlane.f32.xlu0 %v4788
        %v4790 = vpop.xlane.xlu0 %4789
        %v4791 = vsel %vm2261, %v4783, 0.0
        %4792 = vadd.xlane.f32.xlu0 %v4791
        %v4793 = vpop.xlane.xlu0 %4792
        %v4794 = vmul.f32 %v4790, %v2265
        %v4795 = vmul.f32 %v4793, %v2265
        %v4796 = vsub.f32 %v4782, %v4794
        %v4797 = vsub.f32 %v4783, %v4795
        %v4798 = vmul.f32 %v4796, %v4796
        %v4799 = vmul.f32 %v4797, %v4797
        %v4800 = vsel %vm2257, %v4798, 0.0
        %4801 = vadd.xlane.f32.xlu0 %v4800
        %v4802 = vpop.xlane.xlu0 %4801
        %v4803 = vsel %vm2261, %v4799, 0.0
        %4804 = vadd.xlane.f32.xlu0 %v4803
        %v4805 = vpop.xlane.xlu0 %4804
        %v4806 = vmul.f32 %v4802, %v2265
        %v4807 = vmul.f32 %v4805, %v2265
        %v4808 = vadd.f32 %v4806, 1e-05
        %v4809 = vadd.f32 %v4807, 1e-05
        %v4810 = vrsqrt.pop %v4808
        %v4811 = vrsqrt.pop %v4809
        %v4812 = vmul.f32 %v4796, %v4810
        %v4813 = vmul.f32 %v4797, %v4811
        %v4815 = vlaneseq
        %v4816 = vshrl.u32 %v4815, 7
        %v4817 = vsub.s32 0, %v4816
        %v4818 = vrot.slane %v4785, %v4817
        %v4820 = vmul.f32 %v4812, %v4818
        %v4821 = vmul.f32 %v4813, %v4818
        %v4823 = vlaneseq
        %v4824 = vshrl.u32 %v4823, 7
        %v4825 = vsub.s32 0, %v4824
        %v4826 = vrot.slane %v4787, %v4825
        %v4828 = vadd.f32 %v4820, %v4826
        %v4829 = vadd.f32 %v4821, %v4826
        %s4830 = scalar_lea.vmem %s37, 128
        %v4831 = vld [vmem:[%s4830] sm:$0xff]
        %v4832 = vld [vmem:[%s4830 + $0x8] sm:$0xff]
        %v4833 = vld [vmem:[%s4830 + $0x10] sm:$0xff]
        %v4834 = vld [vmem:[%s4830 + $0x18] sm:$0xff]
        %s4835 = scalar_lea.vmem %s39, 4
        %v4836 = vld [vmem:[%s4835] sm:$0x1]
        %v4838 = vlaneseq
        %v4839 = vshrl.u32 %v4838, 7
        %v4840 = vsub.s32 0, %v4839
        %v4841 = vrot.slane %v4836, %v4840
        %v4844 = vsel %vm2257, %v4828, 0
        %v4847 = vsel %vm2257, %v4829, 0
        %4849 = vmatprep.subr.mxu0 0.0
        %4850 = vmatpush1.msra.mxu0 %v4831
        %4851 = vmatprep.subr.mxu0 0.0
        %4852 = vmatpush1.msra.mxu0 %v4832
        %4853 = vmatprep.subr.mxu0 0.0
        %4854 = vmatpush1.msra.mxu0 %v4833
        %4855 = vmatprep.subr.mxu0 0.0
        %4856 = vmatpush1.msra.mxu0 %v4834
        %4857 = vmatprep.subr.mxu0 0.0
        %4858 = vmatpush1.msra.mxu0 0.0
        %4859 = vmatprep.subr.mxu0 0.0
        %4860 = vmatpush1.msra.mxu0 0.0
        %4861 = vmatprep.subr.mxu0 0.0
        %4862 = vmatpush1.msra.mxu0 0.0
        %4863 = vmatprep.subr.mxu0 0.0
        %4864 = vmatpush1.msra.mxu0 0.0
        %4865 = vmatprep.subr.mxu0 0.0
        %4866 = vmatpush1.msra.mxu0 0.0
        %4867 = vmatprep.subr.mxu0 0.0
        %4868 = vmatpush1.msra.mxu0 0.0
        %4869 = vmatprep.subr.mxu0 0.0
        %4870 = vmatpush1.msra.mxu0 0.0
        %4871 = vmatprep.subr.mxu0 0.0
        %4872 = vmatpush1.msra.mxu0 0.0
        %4873 = vmatprep.subr.mxu0 0.0
        %4874 = vmatpush1.msra.mxu0 0.0
        %4875 = vmatprep.subr.mxu0 0.0
        %4876 = vmatpush1.msra.mxu0 0.0
        %4877 = vmatprep.subr.mxu0 0.0
        %4878 = vmatpush1.msra.mxu0 0.0
        %4879 = vmatprep.subr.mxu0 0.0
        %4880 = vmatpush1.msra.mxu0 0.0
        %4881 = vmatprep.subr.mxu0 0.0
        %4882 = vmatpush1.msra.mxu0 0.0
        %4883 = vmatprep.subr.mxu0 0.0
        %4884 = vmatpush1.msra.mxu0 0.0
        %4885 = vmatprep.subr.mxu0 0.0
        %4886 = vmatpush1.msra.mxu0 0.0
        %4887 = vmatprep.subr.mxu0 0.0
        %4888 = vmatpush1.msra.mxu0 0.0
        %4889 = vmatprep.subr.mxu0 0.0
        %4890 = vmatpush1.msra.mxu0 0.0
        %4891 = vmatprep.subr.mxu0 0.0
        %4892 = vmatpush1.msra.mxu0 0.0
        %4893 = vmatprep.subr.mxu0 0.0
        %4894 = vmatpush1.msra.mxu0 0.0
        %4895 = vmatprep.subr.mxu0 0.0
        %4896 = vmatpush1.msra.mxu0 0.0
        %4897 = vmatprep.subr.mxu0 0.0
        %4898 = vmatpush1.msra.mxu0 0.0
        %4899 = vmatprep.subr.mxu0 0.0
        %4900 = vmatpush1.msra.mxu0 0.0
        %4901 = vmatprep.subr.mxu0 0.0
        %4902 = vmatpush1.msra.mxu0 0.0
        %4903 = vmatprep.subr.mxu0 0.0
        %4904 = vmatpush1.msra.mxu0 0.0
        %4905 = vmatprep.subr.mxu0 0.0
        %4906 = vmatpush1.msra.mxu0 0.0
        %4907 = vmatprep.subr.mxu0 0.0
        %4908 = vmatpush1.msra.mxu0 0.0
        %4909 = vmatprep.subr.mxu0 0.0
        %4910 = vmatpush1.msra.mxu0 0.0
        %4911 = vmatprep.subr.mxu0 0.0
        %4912 = vmatpush1.msra.mxu0 0.0
        %4913 = vmatprep.mubr.f32.mxu0 0.0
        %4914 = vmatmul.mubr.f32.gmra.mrb[0].mxu0 %v4844
        %v4915 = vpop.f32.mrb[0].mxu0
        %v4916 = vadd.f32 %v4841, %v4915
        %v4917 = vpop.f32.mrb[0].mxu0
        %4918 = vmatprep.mubr.f32.mxu0 0.0
        %4919 = vmatmul.mubr.f32.gmra.mrb[0].mxu0 %v4847
        %v4920 = vpop.f32.mrb[0].mxu0
        %v4921 = vadd.f32 %v4841, %v4920
        %v4922 = vpop.f32.mrb[0].mxu0
        %4923 = vdwg.mxu0
        %s4924 = scalar_lea.vmem %s41, 128
        %v4925 = vld [vmem:[%s4924] sm:$0xff]
        %v4926 = vld [vmem:[%s4924 + $0x8] sm:$0xff]
        %v4927 = vld [vmem:[%s4924 + $0x10] sm:$0xff]
        %v4928 = vld [vmem:[%s4924 + $0x18] sm:$0xff]
        %s4929 = scalar_lea.vmem %s43, 4
        %v4930 = vld [vmem:[%s4929] sm:$0x1]
        %v4932 = vlaneseq
        %v4933 = vshrl.u32 %v4932, 7
        %v4934 = vsub.s32 0, %v4933
        %v4935 = vrot.slane %v4930, %v4934
        %4937 = vmatprep.subr.mxu0 0.0
        %4938 = vmatpush1.msra.mxu0 %v4925
        %4939 = vmatprep.subr.mxu0 0.0
        %4940 = vmatpush1.msra.mxu0 %v4926
        %4941 = vmatprep.subr.mxu0 0.0
        %4942 = vmatpush1.msra.mxu0 %v4927
        %4943 = vmatprep.subr.mxu0 0.0
        %4944 = vmatpush1.msra.mxu0 %v4928
        %4945 = vmatprep.subr.mxu0 0.0
        %4946 = vmatpush1.msra.mxu0 0.0
        %4947 = vmatprep.subr.mxu0 0.0
        %4948 = vmatpush1.msra.mxu0 0.0
        %4949 = vmatprep.subr.mxu0 0.0
        %4950 = vmatpush1.msra.mxu0 0.0
        %4951 = vmatprep.subr.mxu0 0.0
        %4952 = vmatpush1.msra.mxu0 0.0
        %4953 = vmatprep.subr.mxu0 0.0
        %4954 = vmatpush1.msra.mxu0 0.0
        %4955 = vmatprep.subr.mxu0 0.0
        %4956 = vmatpush1.msra.mxu0 0.0
        %4957 = vmatprep.subr.mxu0 0.0
        %4958 = vmatpush1.msra.mxu0 0.0
        %4959 = vmatprep.subr.mxu0 0.0
        %4960 = vmatpush1.msra.mxu0 0.0
        %4961 = vmatprep.subr.mxu0 0.0
        %4962 = vmatpush1.msra.mxu0 0.0
        %4963 = vmatprep.subr.mxu0 0.0
        %4964 = vmatpush1.msra.mxu0 0.0
        %4965 = vmatprep.subr.mxu0 0.0
        %4966 = vmatpush1.msra.mxu0 0.0
        %4967 = vmatprep.subr.mxu0 0.0
        %4968 = vmatpush1.msra.mxu0 0.0
        %4969 = vmatprep.subr.mxu0 0.0
        %4970 = vmatpush1.msra.mxu0 0.0
        %4971 = vmatprep.subr.mxu0 0.0
        %4972 = vmatpush1.msra.mxu0 0.0
        %4973 = vmatprep.subr.mxu0 0.0
        %4974 = vmatpush1.msra.mxu0 0.0
        %4975 = vmatprep.subr.mxu0 0.0
        %4976 = vmatpush1.msra.mxu0 0.0
        %4977 = vmatprep.subr.mxu0 0.0
        %4978 = vmatpush1.msra.mxu0 0.0
        %4979 = vmatprep.subr.mxu0 0.0
        %4980 = vmatpush1.msra.mxu0 0.0
        %4981 = vmatprep.subr.mxu0 0.0
        %4982 = vmatpush1.msra.mxu0 0.0
        %4983 = vmatprep.subr.mxu0 0.0
        %4984 = vmatpush1.msra.mxu0 0.0
        %4985 = vmatprep.subr.mxu0 0.0
        %4986 = vmatpush1.msra.mxu0 0.0
        %4987 = vmatprep.subr.mxu0 0.0
        %4988 = vmatpush1.msra.mxu0 0.0
        %4989 = vmatprep.subr.mxu0 0.0
        %4990 = vmatpush1.msra.mxu0 0.0
        %4991 = vmatprep.subr.mxu0 0.0
        %4992 = vmatpush1.msra.mxu0 0.0
        %4993 = vmatprep.subr.mxu0 0.0
        %4994 = vmatpush1.msra.mxu0 0.0
        %4995 = vmatprep.subr.mxu0 0.0
        %4996 = vmatpush1.msra.mxu0 0.0
        %4997 = vmatprep.subr.mxu0 0.0
        %4998 = vmatpush1.msra.mxu0 0.0
        %4999 = vmatprep.subr.mxu0 0.0
        %5000 = vmatpush1.msra.mxu0 0.0
        %5001 = vmatprep.mubr.f32.mxu0 0.0
        %5002 = vmatmul.mubr.f32.gmra.mrb[0].mxu0 %v4844
        %v5003 = vpop.f32.mrb[0].mxu0
        %v5004 = vadd.f32 %v4935, %v5003
        %v5005 = vpop.f32.mrb[0].mxu0
        %5006 = vmatprep.mubr.f32.mxu0 0.0
        %5007 = vmatmul.mubr.f32.gmra.mrb[0].mxu0 %v4847
        %v5008 = vpop.f32.mrb[0].mxu0
        %v5009 = vadd.f32 %v4935, %v5008
        %v5010 = vpop.f32.mrb[0].mxu0
        %5011 = vdwg.mxu0
        %s5012 = scalar_lea.vmem %s45, 128
        %v5013 = vld [vmem:[%s5012] sm:$0xff]
        %v5014 = vld [vmem:[%s5012 + $0x8] sm:$0xff]
        %v5015 = vld [vmem:[%s5012 + $0x10] sm:$0xff]
        %v5016 = vld [vmem:[%s5012 + $0x18] sm:$0xff]
        %s5017 = scalar_lea.vmem %s47, 4
        %v5018 = vld [vmem:[%s5017] sm:$0x1]
        %v5020 = vlaneseq
        %v5021 = vshrl.u32 %v5020, 7
        %v5022 = vsub.s32 0, %v5021
        %v5023 = vrot.slane %v5018, %v5022
        %5025 = vmatprep.subr.mxu0 0.0
        %5026 = vmatpush1.msra.mxu0 %v5013
        %5027 = vmatprep.subr.mxu0 0.0
        %5028 = vmatpush1.msra.mxu0 %v5014
        %5029 = vmatprep.subr.mxu0 0.0
        %5030 = vmatpush1.msra.mxu0 %v5015
        %5031 = vmatprep.subr.mxu0 0.0
        %5032 = vmatpush1.msra.mxu0 %v5016
        %5033 = vmatprep.subr.mxu0 0.0
        %5034 = vmatpush1.msra.mxu0 0.0
        %5035 = vmatprep.subr.mxu0 0.0
        %5036 = vmatpush1.msra.mxu0 0.0
        %5037 = vmatprep.subr.mxu0 0.0
        %5038 = vmatpush1.msra.mxu0 0.0
        %5039 = vmatprep.subr.mxu0 0.0
        %5040 = vmatpush1.msra.mxu0 0.0
        %5041 = vmatprep.subr.mxu0 0.0
        %5042 = vmatpush1.msra.mxu0 0.0
        %5043 = vmatprep.subr.mxu0 0.0
        %5044 = vmatpush1.msra.mxu0 0.0
        %5045 = vmatprep.subr.mxu0 0.0
        %5046 = vmatpush1.msra.mxu0 0.0
        %5047 = vmatprep.subr.mxu0 0.0
        %5048 = vmatpush1.msra.mxu0 0.0
        %5049 = vmatprep.subr.mxu0 0.0
        %5050 = vmatpush1.msra.mxu0 0.0
        %5051 = vmatprep.subr.mxu0 0.0
        %5052 = vmatpush1.msra.mxu0 0.0
        %5053 = vmatprep.subr.mxu0 0.0
        %5054 = vmatpush1.msra.mxu0 0.0
        %5055 = vmatprep.subr.mxu0 0.0
        %5056 = vmatpush1.msra.mxu0 0.0
        %5057 = vmatprep.subr.mxu0 0.0
        %5058 = vmatpush1.msra.mxu0 0.0
        %5059 = vmatprep.subr.mxu0 0.0
        %5060 = vmatpush1.msra.mxu0 0.0
        %5061 = vmatprep.subr.mxu0 0.0
        %5062 = vmatpush1.msra.mxu0 0.0
        %5063 = vmatprep.subr.mxu0 0.0
        %5064 = vmatpush1.msra.mxu0 0.0
        %5065 = vmatprep.subr.mxu0 0.0
        %5066 = vmatpush1.msra.mxu0 0.0
        %5067 = vmatprep.subr.mxu0 0.0
        %5068 = vmatpush1.msra.mxu0 0.0
        %5069 = vmatprep.subr.mxu0 0.0
        %5070 = vmatpush1.msra.mxu0 0.0
        %5071 = vmatprep.subr.mxu0 0.0
        %5072 = vmatpush1.msra.mxu0 0.0
        %5073 = vmatprep.subr.mxu0 0.0
        %5074 = vmatpush1.msra.mxu0 0.0
        %5075 = vmatprep.subr.mxu0 0.0
        %5076 = vmatpush1.msra.mxu0 0.0
        %5077 = vmatprep.subr.mxu0 0.0
        %5078 = vmatpush1.msra.mxu0 0.0
        %5079 = vmatprep.subr.mxu0 0.0
        %5080 = vmatpush1.msra.mxu0 0.0
        %5081 = vmatprep.subr.mxu0 0.0
        %5082 = vmatpush1.msra.mxu0 0.0
        %5083 = vmatprep.subr.mxu0 0.0
        %5084 = vmatpush1.msra.mxu0 0.0
        %5085 = vmatprep.subr.mxu0 0.0
        %5086 = vmatpush1.msra.mxu0 0.0
        %5087 = vmatprep.subr.mxu0 0.0
        %5088 = vmatpush1.msra.mxu0 0.0
        %5089 = vmatprep.mubr.f32.mxu0 0.0
        %5090 = vmatmul.mubr.f32.gmra.mrb[0].mxu0 %v4844
        %v5091 = vpop.f32.mrb[0].mxu0
        %v5092 = vadd.f32 %v5023, %v5091
        %v5093 = vpop.f32.mrb[0].mxu0
        %5094 = vmatprep.mubr.f32.mxu0 0.0
        %5095 = vmatmul.mubr.f32.gmra.mrb[0].mxu0 %v4847
        %v5096 = vpop.f32.mrb[0].mxu0
        %v5097 = vadd.f32 %v5023, %v5096
        %v5098 = vpop.f32.mrb[0].mxu0
        %5099 = vdwg.mxu0
        %v5101 = vsel %vm1371, %v4916, 0
        %v5104 = vsel %vm1371, %v4921, 0
        %v5107 = vsel %vm1371, %v5004, 0
        %v5110 = vsel %vm1371, %v5009, 0
        %5112 = vmatprep.subr.mxu0 0.0
        %5113 = vmatpush1.xpose.msra.mxu0 %v5107
        %5114 = vmatprep.subr.mxu0 0.0
        %5115 = vmatpush1.xpose.msra.mxu0 %v5110
        %5116 = vmatprep.subr.mxu0 0.0
        %5117 = vmatpush1.xpose.msra.mxu0 0.0
        %5118 = vmatprep.subr.mxu0 0.0
        %5119 = vmatpush1.xpose.msra.mxu0 0.0
        %5120 = vmatprep.subr.mxu0 0.0
        %5121 = vmatpush1.xpose.msra.mxu0 0.0
        %5122 = vmatprep.subr.mxu0 0.0
        %5123 = vmatpush1.xpose.msra.mxu0 0.0
        %5124 = vmatprep.subr.mxu0 0.0
        %5125 = vmatpush1.xpose.msra.mxu0 0.0
        %5126 = vmatprep.subr.mxu0 0.0
        %5127 = vmatpush1.xpose.msra.mxu0 0.0
        %5128 = vmatprep.subr.mxu0 0.0
        %5129 = vmatpush1.xpose.msra.mxu0 0.0
        %5130 = vmatprep.subr.mxu0 0.0
        %5131 = vmatpush1.xpose.msra.mxu0 0.0
        %5132 = vmatprep.subr.mxu0 0.0
        %5133 = vmatpush1.xpose.msra.mxu0 0.0
        %5134 = vmatprep.subr.mxu0 0.0
        %5135 = vmatpush1.xpose.msra.mxu0 0.0
        %5136 = vmatprep.subr.mxu0 0.0
        %5137 = vmatpush1.xpose.msra.mxu0 0.0
        %5138 = vmatprep.subr.mxu0 0.0
        %5139 = vmatpush1.xpose.msra.mxu0 0.0
        %5140 = vmatprep.subr.mxu0 0.0
        %5141 = vmatpush1.xpose.msra.mxu0 0.0
        %5142 = vmatprep.subr.mxu0 0.0
        %5143 = vmatpush1.xpose.msra.mxu0 0.0
        %5144 = vmatprep.subr.mxu0 0.0
        %5145 = vmatpush1.xpose.msra.mxu0 0.0
        %5146 = vmatprep.subr.mxu0 0.0
        %5147 = vmatpush1.xpose.msra.mxu0 0.0
        %5148 = vmatprep.subr.mxu0 0.0
        %5149 = vmatpush1.xpose.msra.mxu0 0.0
        %5150 = vmatprep.subr.mxu0 0.0
        %5151 = vmatpush1.xpose.msra.mxu0 0.0
        %5152 = vmatprep.subr.mxu0 0.0
        %5153 = vmatpush1.xpose.msra.mxu0 0.0
        %5154 = vmatprep.subr.mxu0 0.0
        %5155 = vmatpush1.xpose.msra.mxu0 0.0
        %5156 = vmatprep.subr.mxu0 0.0
        %5157 = vmatpush1.xpose.msra.mxu0 0.0
        %5158 = vmatprep.subr.mxu0 0.0
        %5159 = vmatpush1.xpose.msra.mxu0 0.0
        %5160 = vmatprep.subr.mxu0 0.0
        %5161 = vmatpush1.xpose.msra.mxu0 0.0
        %5162 = vmatprep.subr.mxu0 0.0
        %5163 = vmatpush1.xpose.msra.mxu0 0.0
        %5164 = vmatprep.subr.mxu0 0.0
        %5165 = vmatpush1.xpose.msra.mxu0 0.0
        %5166 = vmatprep.subr.mxu0 0.0
        %5167 = vmatpush1.xpose.msra.mxu0 0.0
        %5168 = vmatprep.subr.mxu0 0.0
        %5169 = vmatpush1.xpose.msra.mxu0 0.0
        %5170 = vmatprep.subr.mxu0 0.0
        %5171 = vmatpush1.xpose.msra.mxu0 0.0
        %5172 = vmatprep.subr.mxu0 0.0
        %5173 = vmatpush1.xpose.msra.mxu0 0.0
        %5174 = vmatprep.subr.mxu0 0.0
        %5175 = vmatpush1.xpose.msra.mxu0 0.0
        %5176 = vmatprep.mubr.f32.mxu0 0.0
        %5177 = vmatmul.mubr.f32.gmra.mrb[0].mxu0 %v5101
        %v5178 = vpop.f32.mrb[0].mxu0
        %v5179 = vadd.f32 0.0, %v5178
        %v5180 = vpop.f32.mrb[0].mxu0
        %5181 = vmatprep.mubr.f32.mxu0 0.0
        %5182 = vmatmul.mubr.f32.gmra.mrb[0].mxu0 %v5104
        %v5183 = vpop.f32.mrb[0].mxu0
        %v5184 = vadd.f32 0.0, %v5183
        %v5185 = vpop.f32.mrb[0].mxu0
        %5186 = vdwg.mxu0
        %v5187 = vmul.f32 %v5179, 0.35355338
        %v5188 = vmul.f32 %v5184, 0.35355338
        %v5189 = vsel %vm2253, %v5187, -1e+30
        %v5190 = vsel %vm2254, %v5188, -1e+30
        %v5191 = vsel %vm2657, %v5189, -inf
        %5192 = vmax.xlane.f32.xlu0 %v5191
        %v5193 = vpop.xlane.xlu0 %5192
        %v5194 = vsel %vm2661, %v5190, -inf
        %5195 = vmax.xlane.f32.xlu0 %v5194
        %v5196 = vpop.xlane.xlu0 %5195
        %v5197 = vsub.f32 %v5189, %v5193
        %v5198 = vsub.f32 %v5190, %v5196
        %v5199 = vmul.f32 %v5197, 1.442695
        %v5200 = vpow.pop %v5199
        %v5201 = vmul.f32 %v5198, 1.442695
        %v5202 = vpow.pop %v5201
        %v5203 = vsel %vm2657, %v5200, 0.0
        %5204 = vadd.xlane.f32.xlu0 %v5203
        %v5205 = vpop.xlane.xlu0 %5204
        %v5206 = vsel %vm2661, %v5202, 0.0
        %5207 = vadd.xlane.f32.xlu0 %v5206
        %v5208 = vpop.xlane.xlu0 %5207
        %v5209 = vrcp.pop %v5205
        %v5210 = vmul.f32 %v5200, %v5209
        %v5211 = vrcp.pop %v5208
        %v5212 = vmul.f32 %v5202, %v5211
        %v5214 = vsel %vm2657, %v5210, 0
        %v5217 = vsel %vm2657, %v5212, 0
        %v5220 = vsel %vm1993, %v5097, 0
        %5222 = vmatprep.subr.mxu0 0.0
        %5223 = vmatpush1.msra.mxu0 %v5092
        %5224 = vmatprep.subr.mxu0 0.0
        %5225 = vmatpush1.msra.mxu0 %v5220
        %5226 = vmatprep.subr.mxu0 0.0
        %5227 = vmatpush1.msra.mxu0 0.0
        %5228 = vmatprep.subr.mxu0 0.0
        %5229 = vmatpush1.msra.mxu0 0.0
        %5230 = vmatprep.subr.mxu0 0.0
        %5231 = vmatpush1.msra.mxu0 0.0
        %5232 = vmatprep.subr.mxu0 0.0
        %5233 = vmatpush1.msra.mxu0 0.0
        %5234 = vmatprep.subr.mxu0 0.0
        %5235 = vmatpush1.msra.mxu0 0.0
        %5236 = vmatprep.subr.mxu0 0.0
        %5237 = vmatpush1.msra.mxu0 0.0
        %5238 = vmatprep.subr.mxu0 0.0
        %5239 = vmatpush1.msra.mxu0 0.0
        %5240 = vmatprep.subr.mxu0 0.0
        %5241 = vmatpush1.msra.mxu0 0.0
        %5242 = vmatprep.subr.mxu0 0.0
        %5243 = vmatpush1.msra.mxu0 0.0
        %5244 = vmatprep.subr.mxu0 0.0
        %5245 = vmatpush1.msra.mxu0 0.0
        %5246 = vmatprep.subr.mxu0 0.0
        %5247 = vmatpush1.msra.mxu0 0.0
        %5248 = vmatprep.subr.mxu0 0.0
        %5249 = vmatpush1.msra.mxu0 0.0
        %5250 = vmatprep.subr.mxu0 0.0
        %5251 = vmatpush1.msra.mxu0 0.0
        %5252 = vmatprep.subr.mxu0 0.0
        %5253 = vmatpush1.msra.mxu0 0.0
        %5254 = vmatprep.subr.mxu0 0.0
        %5255 = vmatpush1.msra.mxu0 0.0
        %5256 = vmatprep.subr.mxu0 0.0
        %5257 = vmatpush1.msra.mxu0 0.0
        %5258 = vmatprep.subr.mxu0 0.0
        %5259 = vmatpush1.msra.mxu0 0.0
        %5260 = vmatprep.subr.mxu0 0.0
        %5261 = vmatpush1.msra.mxu0 0.0
        %5262 = vmatprep.subr.mxu0 0.0
        %5263 = vmatpush1.msra.mxu0 0.0
        %5264 = vmatprep.subr.mxu0 0.0
        %5265 = vmatpush1.msra.mxu0 0.0
        %5266 = vmatprep.subr.mxu0 0.0
        %5267 = vmatpush1.msra.mxu0 0.0
        %5268 = vmatprep.subr.mxu0 0.0
        %5269 = vmatpush1.msra.mxu0 0.0
        %5270 = vmatprep.subr.mxu0 0.0
        %5271 = vmatpush1.msra.mxu0 0.0
        %5272 = vmatprep.subr.mxu0 0.0
        %5273 = vmatpush1.msra.mxu0 0.0
        %5274 = vmatprep.subr.mxu0 0.0
        %5275 = vmatpush1.msra.mxu0 0.0
        %5276 = vmatprep.subr.mxu0 0.0
        %5277 = vmatpush1.msra.mxu0 0.0
        %5278 = vmatprep.subr.mxu0 0.0
        %5279 = vmatpush1.msra.mxu0 0.0
        %5280 = vmatprep.subr.mxu0 0.0
        %5281 = vmatpush1.msra.mxu0 0.0
        %5282 = vmatprep.subr.mxu0 0.0
        %5283 = vmatpush1.msra.mxu0 0.0
        %5284 = vmatprep.subr.mxu0 0.0
        %5285 = vmatpush1.msra.mxu0 0.0
        %5286 = vmatprep.mubr.f32.mxu0 0.0
        %5287 = vmatmul.mubr.f32.gmra.mrb[0].mxu0 %v5214
        %v5288 = vpop.f32.mrb[0].mxu0
        %v5289 = vadd.f32 0.0, %v5288
        %v5290 = vpop.f32.mrb[0].mxu0
        %5291 = vmatprep.mubr.f32.mxu0 0.0
        %5292 = vmatmul.mubr.f32.gmra.mrb[0].mxu0 %v5217
        %v5293 = vpop.f32.mrb[0].mxu0
        %v5294 = vadd.f32 0.0, %v5293
        %v5295 = vpop.f32.mrb[0].mxu0
        %5296 = vdwg.mxu0
        %s5297 = scalar_lea.vmem [#allocation8], 32
        %v5298 = vld [vmem:[%s5297] sm:$0xff]
        %s5299 = scalar_lea.vmem %s37, 160
        %v5300 = vld [vmem:[%s5299] sm:$0xff]
        %v5301 = vld [vmem:[%s5299 + $0x8] sm:$0xff]
        %v5302 = vld [vmem:[%s5299 + $0x10] sm:$0xff]
        %v5303 = vld [vmem:[%s5299 + $0x18] sm:$0xff]
        %s5304 = scalar_lea.vmem %s39, 5
        %v5305 = vld [vmem:[%s5304] sm:$0x1]
        %v5307 = vlaneseq
        %v5308 = vshrl.u32 %v5307, 7
        %v5309 = vsub.s32 0, %v5308
        %v5310 = vrot.slane %v5305, %v5309
        %5312 = vmatprep.subr.mxu0 0.0
        %5313 = vmatpush1.msra.mxu0 %v5300
        %5314 = vmatprep.subr.mxu0 0.0
        %5315 = vmatpush1.msra.mxu0 %v5301
        %5316 = vmatprep.subr.mxu0 0.0
        %5317 = vmatpush1.msra.mxu0 %v5302
        %5318 = vmatprep.subr.mxu0 0.0
        %5319 = vmatpush1.msra.mxu0 %v5303
        %5320 = vmatprep.subr.mxu0 0.0
        %5321 = vmatpush1.msra.mxu0 0.0
        %5322 = vmatprep.subr.mxu0 0.0
        %5323 = vmatpush1.msra.mxu0 0.0
        %5324 = vmatprep.subr.mxu0 0.0
        %5325 = vmatpush1.msra.mxu0 0.0
        %5326 = vmatprep.subr.mxu0 0.0
        %5327 = vmatpush1.msra.mxu0 0.0
        %5328 = vmatprep.subr.mxu0 0.0
        %5329 = vmatpush1.msra.mxu0 0.0
        %5330 = vmatprep.subr.mxu0 0.0
        %5331 = vmatpush1.msra.mxu0 0.0
        %5332 = vmatprep.subr.mxu0 0.0
        %5333 = vmatpush1.msra.mxu0 0.0
        %5334 = vmatprep.subr.mxu0 0.0
        %5335 = vmatpush1.msra.mxu0 0.0
        %5336 = vmatprep.subr.mxu0 0.0
        %5337 = vmatpush1.msra.mxu0 0.0
        %5338 = vmatprep.subr.mxu0 0.0
        %5339 = vmatpush1.msra.mxu0 0.0
        %5340 = vmatprep.subr.mxu0 0.0
        %5341 = vmatpush1.msra.mxu0 0.0
        %5342 = vmatprep.subr.mxu0 0.0
        %5343 = vmatpush1.msra.mxu0 0.0
        %5344 = vmatprep.subr.mxu0 0.0
        %5345 = vmatpush1.msra.mxu0 0.0
        %5346 = vmatprep.subr.mxu0 0.0
        %5347 = vmatpush1.msra.mxu0 0.0
        %5348 = vmatprep.subr.mxu0 0.0
        %5349 = vmatpush1.msra.mxu0 0.0
        %5350 = vmatprep.subr.mxu0 0.0
        %5351 = vmatpush1.msra.mxu0 0.0
        %5352 = vmatprep.subr.mxu0 0.0
        %5353 = vmatpush1.msra.mxu0 0.0
        %5354 = vmatprep.subr.mxu0 0.0
        %5355 = vmatpush1.msra.mxu0 0.0
        %5356 = vmatprep.subr.mxu0 0.0
        %5357 = vmatpush1.msra.mxu0 0.0
        %5358 = vmatprep.subr.mxu0 0.0
        %5359 = vmatpush1.msra.mxu0 0.0
        %5360 = vmatprep.subr.mxu0 0.0
        %5361 = vmatpush1.msra.mxu0 0.0
        %5362 = vmatprep.subr.mxu0 0.0
        %5363 = vmatpush1.msra.mxu0 0.0
        %5364 = vmatprep.subr.mxu0 0.0
        %5365 = vmatpush1.msra.mxu0 0.0
        %5366 = vmatprep.subr.mxu0 0.0
        %5367 = vmatpush1.msra.mxu0 0.0
        %5368 = vmatprep.subr.mxu0 0.0
        %5369 = vmatpush1.msra.mxu0 0.0
        %5370 = vmatprep.subr.mxu0 0.0
        %5371 = vmatpush1.msra.mxu0 0.0
        %5372 = vmatprep.subr.mxu0 0.0
        %5373 = vmatpush1.msra.mxu0 0.0
        %5374 = vmatprep.subr.mxu0 0.0
        %5375 = vmatpush1.msra.mxu0 0.0
        %5376 = vmatprep.mubr.f32.mxu0 0.0
        %5377 = vmatmul.mubr.f32.gmra.mrb[0].mxu0 %v4844
        %v5378 = vpop.f32.mrb[0].mxu0
        %v5379 = vadd.f32 %v5310, %v5378
        %v5380 = vpop.f32.mrb[0].mxu0
        %5381 = vmatprep.mubr.f32.mxu0 0.0
        %5382 = vmatmul.mubr.f32.gmra.mrb[0].mxu0 %v4847
        %v5383 = vpop.f32.mrb[0].mxu0
        %v5384 = vadd.f32 %v5310, %v5383
        %v5385 = vpop.f32.mrb[0].mxu0
        %5386 = vdwg.mxu0
        %s5387 = scalar_lea.vmem %s41, 160
        %v5388 = vld [vmem:[%s5387] sm:$0xff]
        %v5389 = vld [vmem:[%s5387 + $0x8] sm:$0xff]
        %v5390 = vld [vmem:[%s5387 + $0x10] sm:$0xff]
        %v5391 = vld [vmem:[%s5387 + $0x18] sm:$0xff]
        %s5392 = scalar_lea.vmem %s43, 5
        %v5393 = vld [vmem:[%s5392] sm:$0x1]
        %v5395 = vlaneseq
        %v5396 = vshrl.u32 %v5395, 7
        %v5397 = vsub.s32 0, %v5396
        %v5398 = vrot.slane %v5393, %v5397
        %5400 = vmatprep.subr.mxu0 0.0
        %5401 = vmatpush1.msra.mxu0 %v5388
        %5402 = vmatprep.subr.mxu0 0.0
        %5403 = vmatpush1.msra.mxu0 %v5389
        %5404 = vmatprep.subr.mxu0 0.0
        %5405 = vmatpush1.msra.mxu0 %v5390
        %5406 = vmatprep.subr.mxu0 0.0
        %5407 = vmatpush1.msra.mxu0 %v5391
        %5408 = vmatprep.subr.mxu0 0.0
        %5409 = vmatpush1.msra.mxu0 0.0
        %5410 = vmatprep.subr.mxu0 0.0
        %5411 = vmatpush1.msra.mxu0 0.0
        %5412 = vmatprep.subr.mxu0 0.0
        %5413 = vmatpush1.msra.mxu0 0.0
        %5414 = vmatprep.subr.mxu0 0.0
        %5415 = vmatpush1.msra.mxu0 0.0
        %5416 = vmatprep.subr.mxu0 0.0
        %5417 = vmatpush1.msra.mxu0 0.0
        %5418 = vmatprep.subr.mxu0 0.0
        %5419 = vmatpush1.msra.mxu0 0.0
        %5420 = vmatprep.subr.mxu0 0.0
        %5421 = vmatpush1.msra.mxu0 0.0
        %5422 = vmatprep.subr.mxu0 0.0
        %5423 = vmatpush1.msra.mxu0 0.0
        %5424 = vmatprep.subr.mxu0 0.0
        %5425 = vmatpush1.msra.mxu0 0.0
        %5426 = vmatprep.subr.mxu0 0.0
        %5427 = vmatpush1.msra.mxu0 0.0
        %5428 = vmatprep.subr.mxu0 0.0
        %5429 = vmatpush1.msra.mxu0 0.0
        %5430 = vmatprep.subr.mxu0 0.0
        %5431 = vmatpush1.msra.mxu0 0.0
        %5432 = vmatprep.subr.mxu0 0.0
        %5433 = vmatpush1.msra.mxu0 0.0
        %5434 = vmatprep.subr.mxu0 0.0
        %5435 = vmatpush1.msra.mxu0 0.0
        %5436 = vmatprep.subr.mxu0 0.0
        %5437 = vmatpush1.msra.mxu0 0.0
        %5438 = vmatprep.subr.mxu0 0.0
        %5439 = vmatpush1.msra.mxu0 0.0
        %5440 = vmatprep.subr.mxu0 0.0
        %5441 = vmatpush1.msra.mxu0 0.0
        %5442 = vmatprep.subr.mxu0 0.0
        %5443 = vmatpush1.msra.mxu0 0.0
        %5444 = vmatprep.subr.mxu0 0.0
        %5445 = vmatpush1.msra.mxu0 0.0
        %5446 = vmatprep.subr.mxu0 0.0
        %5447 = vmatpush1.msra.mxu0 0.0
        %5448 = vmatprep.subr.mxu0 0.0
        %5449 = vmatpush1.msra.mxu0 0.0
        %5450 = vmatprep.subr.mxu0 0.0
        %5451 = vmatpush1.msra.mxu0 0.0
        %5452 = vmatprep.subr.mxu0 0.0
        %5453 = vmatpush1.msra.mxu0 0.0
        %5454 = vmatprep.subr.mxu0 0.0
        %5455 = vmatpush1.msra.mxu0 0.0
        %5456 = vmatprep.subr.mxu0 0.0
        %5457 = vmatpush1.msra.mxu0 0.0
        %5458 = vmatprep.subr.mxu0 0.0
        %5459 = vmatpush1.msra.mxu0 0.0
        %5460 = vmatprep.subr.mxu0 0.0
        %5461 = vmatpush1.msra.mxu0 0.0
        %5462 = vmatprep.subr.mxu0 0.0
        %5463 = vmatpush1.msra.mxu0 0.0
        %5464 = vmatprep.mubr.f32.mxu0 0.0
        %5465 = vmatmul.mubr.f32.gmra.mrb[0].mxu0 %v4844
        %v5466 = vpop.f32.mrb[0].mxu0
        %v5467 = vadd.f32 %v5398, %v5466
        %v5468 = vpop.f32.mrb[0].mxu0
        %5469 = vmatprep.mubr.f32.mxu0 0.0
        %5470 = vmatmul.mubr.f32.gmra.mrb[0].mxu0 %v4847
        %v5471 = vpop.f32.mrb[0].mxu0
        %v5472 = vadd.f32 %v5398, %v5471
        %v5473 = vpop.f32.mrb[0].mxu0
        %5474 = vdwg.mxu0
        %s5475 = scalar_lea.vmem %s45, 160
        %v5476 = vld [vmem:[%s5475] sm:$0xff]
        %v5477 = vld [vmem:[%s5475 + $0x8] sm:$0xff]
        %v5478 = vld [vmem:[%s5475 + $0x10] sm:$0xff]
        %v5479 = vld [vmem:[%s5475 + $0x18] sm:$0xff]
        %s5480 = scalar_lea.vmem %s47, 5
        %v5481 = vld [vmem:[%s5480] sm:$0x1]
        %v5483 = vlaneseq
        %v5484 = vshrl.u32 %v5483, 7
        %v5485 = vsub.s32 0, %v5484
        %v5486 = vrot.slane %v5481, %v5485
        %5488 = vmatprep.subr.mxu0 0.0
        %5489 = vmatpush1.msra.mxu0 %v5476
        %5490 = vmatprep.subr.mxu0 0.0
        %5491 = vmatpush1.msra.mxu0 %v5477
        %5492 = vmatprep.subr.mxu0 0.0
        %5493 = vmatpush1.msra.mxu0 %v5478
        %5494 = vmatprep.subr.mxu0 0.0
        %5495 = vmatpush1.msra.mxu0 %v5479
        %5496 = vmatprep.subr.mxu0 0.0
        %5497 = vmatpush1.msra.mxu0 0.0
        %5498 = vmatprep.subr.mxu0 0.0
        %5499 = vmatpush1.msra.mxu0 0.0
        %5500 = vmatprep.subr.mxu0 0.0
        %5501 = vmatpush1.msra.mxu0 0.0
        %5502 = vmatprep.subr.mxu0 0.0
        %5503 = vmatpush1.msra.mxu0 0.0
        %5504 = vmatprep.subr.mxu0 0.0
        %5505 = vmatpush1.msra.mxu0 0.0
        %5506 = vmatprep.subr.mxu0 0.0
        %5507 = vmatpush1.msra.mxu0 0.0
        %5508 = vmatprep.subr.mxu0 0.0
        %5509 = vmatpush1.msra.mxu0 0.0
        %5510 = vmatprep.subr.mxu0 0.0
        %5511 = vmatpush1.msra.mxu0 0.0
        %5512 = vmatprep.subr.mxu0 0.0
        %5513 = vmatpush1.msra.mxu0 0.0
        %5514 = vmatprep.subr.mxu0 0.0
        %5515 = vmatpush1.msra.mxu0 0.0
        %5516 = vmatprep.subr.mxu0 0.0
        %5517 = vmatpush1.msra.mxu0 0.0
        %5518 = vmatprep.subr.mxu0 0.0
        %5519 = vmatpush1.msra.mxu0 0.0
        %5520 = vmatprep.subr.mxu0 0.0
        %5521 = vmatpush1.msra.mxu0 0.0
        %5522 = vmatprep.subr.mxu0 0.0
        %5523 = vmatpush1.msra.mxu0 0.0
        %5524 = vmatprep.subr.mxu0 0.0
        %5525 = vmatpush1.msra.mxu0 0.0
        %5526 = vmatprep.subr.mxu0 0.0
        %5527 = vmatpush1.msra.mxu0 0.0
        %5528 = vmatprep.subr.mxu0 0.0
        %5529 = vmatpush1.msra.mxu0 0.0
        %5530 = vmatprep.subr.mxu0 0.0
        %5531 = vmatpush1.msra.mxu0 0.0
        %5532 = vmatprep.subr.mxu0 0.0
        %5533 = vmatpush1.msra.mxu0 0.0
        %5534 = vmatprep.subr.mxu0 0.0
        %5535 = vmatpush1.msra.mxu0 0.0
        %5536 = vmatprep.subr.mxu0 0.0
        %5537 = vmatpush1.msra.mxu0 0.0
        %5538 = vmatprep.subr.mxu0 0.0
        %5539 = vmatpush1.msra.mxu0 0.0
        %5540 = vmatprep.subr.mxu0 0.0
        %5541 = vmatpush1.msra.mxu0 0.0
        %5542 = vmatprep.subr.mxu0 0.0
        %5543 = vmatpush1.msra.mxu0 0.0
        %5544 = vmatprep.subr.mxu0 0.0
        %5545 = vmatpush1.msra.mxu0 0.0
        %5546 = vmatprep.subr.mxu0 0.0
        %5547 = vmatpush1.msra.mxu0 0.0
        %5548 = vmatprep.subr.mxu0 0.0
        %5549 = vmatpush1.msra.mxu0 0.0
        %5550 = vmatprep.subr.mxu0 0.0
        %5551 = vmatpush1.msra.mxu0 0.0
        %5552 = vmatprep.mubr.f32.mxu0 0.0
        %5553 = vmatmul.mubr.f32.gmra.mrb[0].mxu0 %v4844
        %v5554 = vpop.f32.mrb[0].mxu0
        %v5555 = vadd.f32 %v5486, %v5554
        %v5556 = vpop.f32.mrb[0].mxu0
        %5557 = vmatprep.mubr.f32.mxu0 0.0
        %5558 = vmatmul.mubr.f32.gmra.mrb[0].mxu0 %v4847
        %v5559 = vpop.f32.mrb[0].mxu0
        %v5560 = vadd.f32 %v5486, %v5559
        %v5561 = vpop.f32.mrb[0].mxu0
        %5562 = vdwg.mxu0
        %v5564 = vsel %vm1371, %v5379, 0
        %v5567 = vsel %vm1371, %v5384, 0
        %v5570 = vsel %vm1371, %v5467, 0
        %v5573 = vsel %vm1371, %v5472, 0
        %5575 = vmatprep.subr.mxu0 0.0
        %5576 = vmatpush1.xpose.msra.mxu0 %v5570
        %5577 = vmatprep.subr.mxu0 0.0
        %5578 = vmatpush1.xpose.msra.mxu0 %v5573
        %5579 = vmatprep.subr.mxu0 0.0
        %5580 = vmatpush1.xpose.msra.mxu0 0.0
        %5581 = vmatprep.subr.mxu0 0.0
        %5582 = vmatpush1.xpose.msra.mxu0 0.0
        %5583 = vmatprep.subr.mxu0 0.0
        %5584 = vmatpush1.xpose.msra.mxu0 0.0
        %5585 = vmatprep.subr.mxu0 0.0
        %5586 = vmatpush1.xpose.msra.mxu0 0.0
        %5587 = vmatprep.subr.mxu0 0.0
        %5588 = vmatpush1.xpose.msra.mxu0 0.0
        %5589 = vmatprep.subr.mxu0 0.0
        %5590 = vmatpush1.xpose.msra.mxu0 0.0
        %5591 = vmatprep.subr.mxu0 0.0
        %5592 = vmatpush1.xpose.msra.mxu0 0.0
        %5593 = vmatprep.subr.mxu0 0.0
        %5594 = vmatpush1.xpose.msra.mxu0 0.0
        %5595 = vmatprep.subr.mxu0 0.0
        %5596 = vmatpush1.xpose.msra.mxu0 0.0
        %5597 = vmatprep.subr.mxu0 0.0
        %5598 = vmatpush1.xpose.msra.mxu0 0.0
        %5599 = vmatprep.subr.mxu0 0.0
        %5600 = vmatpush1.xpose.msra.mxu0 0.0
        %5601 = vmatprep.subr.mxu0 0.0
        %5602 = vmatpush1.xpose.msra.mxu0 0.0
        %5603 = vmatprep.subr.mxu0 0.0
        %5604 = vmatpush1.xpose.msra.mxu0 0.0
        %5605 = vmatprep.subr.mxu0 0.0
        %5606 = vmatpush1.xpose.msra.mxu0 0.0
        %5607 = vmatprep.subr.mxu0 0.0
        %5608 = vmatpush1.xpose.msra.mxu0 0.0
        %5609 = vmatprep.subr.mxu0 0.0
        %5610 = vmatpush1.xpose.msra.mxu0 0.0
        %5611 = vmatprep.subr.mxu0 0.0
        %5612 = vmatpush1.xpose.msra.mxu0 0.0
        %5613 = vmatprep.subr.mxu0 0.0
        %5614 = vmatpush1.xpose.msra.mxu0 0.0
        %5615 = vmatprep.subr.mxu0 0.0
        %5616 = vmatpush1.xpose.msra.mxu0 0.0
        %5617 = vmatprep.subr.mxu0 0.0
        %5618 = vmatpush1.xpose.msra.mxu0 0.0
        %5619 = vmatprep.subr.mxu0 0.0
        %5620 = vmatpush1.xpose.msra.mxu0 0.0
        %5621 = vmatprep.subr.mxu0 0.0
        %5622 = vmatpush1.xpose.msra.mxu0 0.0
        %5623 = vmatprep.subr.mxu0 0.0
        %5624 = vmatpush1.xpose.msra.mxu0 0.0
        %5625 = vmatprep.subr.mxu0 0.0
        %5626 = vmatpush1.xpose.msra.mxu0 0.0
        %5627 = vmatprep.subr.mxu0 0.0
        %5628 = vmatpush1.xpose.msra.mxu0 0.0
        %5629 = vmatprep.subr.mxu0 0.0
        %5630 = vmatpush1.xpose.msra.mxu0 0.0
        %5631 = vmatprep.subr.mxu0 0.0
        %5632 = vmatpush1.xpose.msra.mxu0 0.0
        %5633 = vmatprep.subr.mxu0 0.0
        %5634 = vmatpush1.xpose.msra.mxu0 0.0
        %5635 = vmatprep.subr.mxu0 0.0
        %5636 = vmatpush1.xpose.msra.mxu0 0.0
        %5637 = vmatprep.subr.mxu0 0.0
        %5638 = vmatpush1.xpose.msra.mxu0 0.0
        %5639 = vmatprep.mubr.f32.mxu0 0.0
        %5640 = vmatmul.mubr.f32.gmra.mrb[0].mxu0 %v5564
        %v5641 = vpop.f32.mrb[0].mxu0
        %v5642 = vadd.f32 0.0, %v5641
        %v5643 = vpop.f32.mrb[0].mxu0
        %5644 = vmatprep.mubr.f32.mxu0 0.0
        %5645 = vmatmul.mubr.f32.gmra.mrb[0].mxu0 %v5567
        %v5646 = vpop.f32.mrb[0].mxu0
        %v5647 = vadd.f32 0.0, %v5646
        %v5648 = vpop.f32.mrb[0].mxu0
        %5649 = vdwg.mxu0
        %v5650 = vmul.f32 %v5642, 0.35355338
        %v5651 = vmul.f32 %v5647, 0.35355338
        %v5652 = vsel %vm2253, %v5650, -1e+30
        %v5653 = vsel %vm2254, %v5651, -1e+30
        %v5654 = vsel %vm2657, %v5652, -inf
        %5655 = vmax.xlane.f32.xlu0 %v5654
        %v5656 = vpop.xlane.xlu0 %5655
        %v5657 = vsel %vm2661, %v5653, -inf
        %5658 = vmax.xlane.f32.xlu0 %v5657
        %v5659 = vpop.xlane.xlu0 %5658
        %v5660 = vsub.f32 %v5652, %v5656
        %v5661 = vsub.f32 %v5653, %v5659
        %v5662 = vmul.f32 %v5660, 1.442695
        %v5663 = vpow.pop %v5662
        %v5664 = vmul.f32 %v5661, 1.442695
        %v5665 = vpow.pop %v5664
        %v5666 = vsel %vm2657, %v5663, 0.0
        %5667 = vadd.xlane.f32.xlu0 %v5666
        %v5668 = vpop.xlane.xlu0 %5667
        %v5669 = vsel %vm2661, %v5665, 0.0
        %5670 = vadd.xlane.f32.xlu0 %v5669
        %v5671 = vpop.xlane.xlu0 %5670
        %v5672 = vrcp.pop %v5668
        %v5673 = vmul.f32 %v5663, %v5672
        %v5674 = vrcp.pop %v5671
        %v5675 = vmul.f32 %v5665, %v5674
        %v5677 = vsel %vm2657, %v5673, 0
        %v5680 = vsel %vm2657, %v5675, 0
        %v5683 = vsel %vm1993, %v5560, 0
        %5685 = vmatprep.subr.mxu0 0.0
        %5686 = vmatpush1.msra.mxu0 %v5555
        %5687 = vmatprep.subr.mxu0 0.0
        %5688 = vmatpush1.msra.mxu0 %v5683
        %5689 = vmatprep.subr.mxu0 0.0
        %5690 = vmatpush1.msra.mxu0 0.0
        %5691 = vmatprep.subr.mxu0 0.0
        %5692 = vmatpush1.msra.mxu0 0.0
        %5693 = vmatprep.subr.mxu0 0.0
        %5694 = vmatpush1.msra.mxu0 0.0
        %5695 = vmatprep.subr.mxu0 0.0
        %5696 = vmatpush1.msra.mxu0 0.0
        %5697 = vmatprep.subr.mxu0 0.0
        %5698 = vmatpush1.msra.mxu0 0.0
        %5699 = vmatprep.subr.mxu0 0.0
        %5700 = vmatpush1.msra.mxu0 0.0
        %5701 = vmatprep.subr.mxu0 0.0
        %5702 = vmatpush1.msra.mxu0 0.0
        %5703 = vmatprep.subr.mxu0 0.0
        %5704 = vmatpush1.msra.mxu0 0.0
        %5705 = vmatprep.subr.mxu0 0.0
        %5706 = vmatpush1.msra.mxu0 0.0
        %5707 = vmatprep.subr.mxu0 0.0
        %5708 = vmatpush1.msra.mxu0 0.0
        %5709 = vmatprep.subr.mxu0 0.0
        %5710 = vmatpush1.msra.mxu0 0.0
        %5711 = vmatprep.subr.mxu0 0.0
        %5712 = vmatpush1.msra.mxu0 0.0
        %5713 = vmatprep.subr.mxu0 0.0
        %5714 = vmatpush1.msra.mxu0 0.0
        %5715 = vmatprep.subr.mxu0 0.0
        %5716 = vmatpush1.msra.mxu0 0.0
        %5717 = vmatprep.subr.mxu0 0.0
        %5718 = vmatpush1.msra.mxu0 0.0
        %5719 = vmatprep.subr.mxu0 0.0
        %5720 = vmatpush1.msra.mxu0 0.0
        %5721 = vmatprep.subr.mxu0 0.0
        %5722 = vmatpush1.msra.mxu0 0.0
        %5723 = vmatprep.subr.mxu0 0.0
        %5724 = vmatpush1.msra.mxu0 0.0
        %5725 = vmatprep.subr.mxu0 0.0
        %5726 = vmatpush1.msra.mxu0 0.0
        %5727 = vmatprep.subr.mxu0 0.0
        %5728 = vmatpush1.msra.mxu0 0.0
        %5729 = vmatprep.subr.mxu0 0.0
        %5730 = vmatpush1.msra.mxu0 0.0
        %5731 = vmatprep.subr.mxu0 0.0
        %5732 = vmatpush1.msra.mxu0 0.0
        %5733 = vmatprep.subr.mxu0 0.0
        %5734 = vmatpush1.msra.mxu0 0.0
        %5735 = vmatprep.subr.mxu0 0.0
        %5736 = vmatpush1.msra.mxu0 0.0
        %5737 = vmatprep.subr.mxu0 0.0
        %5738 = vmatpush1.msra.mxu0 0.0
        %5739 = vmatprep.subr.mxu0 0.0
        %5740 = vmatpush1.msra.mxu0 0.0
        %5741 = vmatprep.subr.mxu0 0.0
        %5742 = vmatpush1.msra.mxu0 0.0
        %5743 = vmatprep.subr.mxu0 0.0
        %5744 = vmatpush1.msra.mxu0 0.0
        %5745 = vmatprep.subr.mxu0 0.0
        %5746 = vmatpush1.msra.mxu0 0.0
        %5747 = vmatprep.subr.mxu0 0.0
        %5748 = vmatpush1.msra.mxu0 0.0
        %5749 = vmatprep.mubr.f32.mxu0 0.0
        %5750 = vmatmul.mubr.f32.gmra.mrb[0].mxu0 %v5677
        %v5751 = vpop.f32.mrb[0].mxu0
        %v5752 = vadd.f32 0.0, %v5751
        %v5753 = vpop.f32.mrb[0].mxu0
        %5754 = vmatprep.mubr.f32.mxu0 0.0
        %5755 = vmatmul.mubr.f32.gmra.mrb[0].mxu0 %v5680
        %v5756 = vpop.f32.mrb[0].mxu0
        %v5757 = vadd.f32 0.0, %v5756
        %v5758 = vpop.f32.mrb[0].mxu0
        %5759 = vdwg.mxu0
        %s5760 = scalar_lea.vmem [#allocation8], 40
        %v5761 = vld [vmem:[%s5760] sm:$0xff]
        %v5763 = vsel %vm1371, %v5752, 0
        %v5766 = vsel %vm1371, %v5757, 0
        %5768 = vmatprep.subr.mxu0 0.0
        %5769 = vmatpush1.msra.mxu0 %v5761
        %5770 = vmatprep.subr.mxu0 0.0
        %5771 = vmatpush1.msra.mxu0 0.0
        %5772 = vmatprep.subr.mxu0 0.0
        %5773 = vmatpush1.msra.mxu0 0.0
        %5774 = vmatprep.subr.mxu0 0.0
        %5775 = vmatpush1.msra.mxu0 0.0
        %5776 = vmatprep.subr.mxu0 0.0
        %5777 = vmatpush1.msra.mxu0 0.0
        %5778 = vmatprep.subr.mxu0 0.0
        %5779 = vmatpush1.msra.mxu0 0.0
        %5780 = vmatprep.subr.mxu0 0.0
        %5781 = vmatpush1.msra.mxu0 0.0
        %5782 = vmatprep.subr.mxu0 0.0
        %5783 = vmatpush1.msra.mxu0 0.0
        %5784 = vmatprep.subr.mxu0 0.0
        %5785 = vmatpush1.msra.mxu0 0.0
        %5786 = vmatprep.subr.mxu0 0.0
        %5787 = vmatpush1.msra.mxu0 0.0
        %5788 = vmatprep.subr.mxu0 0.0
        %5789 = vmatpush1.msra.mxu0 0.0
        %5790 = vmatprep.subr.mxu0 0.0
        %5791 = vmatpush1.msra.mxu0 0.0
        %5792 = vmatprep.subr.mxu0 0.0
        %5793 = vmatpush1.msra.mxu0 0.0
        %5794 = vmatprep.subr.mxu0 0.0
        %5795 = vmatpush1.msra.mxu0 0.0
        %5796 = vmatprep.subr.mxu0 0.0
        %5797 = vmatpush1.msra.mxu0 0.0
        %5798 = vmatprep.subr.mxu0 0.0
        %5799 = vmatpush1.msra.mxu0 0.0
        %5800 = vmatprep.subr.mxu0 0.0
        %5801 = vmatpush1.msra.mxu0 0.0
        %5802 = vmatprep.subr.mxu0 0.0
        %5803 = vmatpush1.msra.mxu0 0.0
        %5804 = vmatprep.subr.mxu0 0.0
        %5805 = vmatpush1.msra.mxu0 0.0
        %5806 = vmatprep.subr.mxu0 0.0
        %5807 = vmatpush1.msra.mxu0 0.0
        %5808 = vmatprep.subr.mxu0 0.0
        %5809 = vmatpush1.msra.mxu0 0.0
        %5810 = vmatprep.subr.mxu0 0.0
        %5811 = vmatpush1.msra.mxu0 0.0
        %5812 = vmatprep.subr.mxu0 0.0
        %5813 = vmatpush1.msra.mxu0 0.0
        %5814 = vmatprep.subr.mxu0 0.0
        %5815 = vmatpush1.msra.mxu0 0.0
        %5816 = vmatprep.subr.mxu0 0.0
        %5817 = vmatpush1.msra.mxu0 0.0
        %5818 = vmatprep.subr.mxu0 0.0
        %5819 = vmatpush1.msra.mxu0 0.0
        %5820 = vmatprep.subr.mxu0 0.0
        %5821 = vmatpush1.msra.mxu0 0.0
        %5822 = vmatprep.subr.mxu0 0.0
        %5823 = vmatpush1.msra.mxu0 0.0
        %5824 = vmatprep.subr.mxu0 0.0
        %5825 = vmatpush1.msra.mxu0 0.0
        %5826 = vmatprep.subr.mxu0 0.0
        %5827 = vmatpush1.msra.mxu0 0.0
        %5828 = vmatprep.subr.mxu0 0.0
        %5829 = vmatpush1.msra.mxu0 0.0
        %5830 = vmatprep.subr.mxu0 0.0
        %5831 = vmatpush1.msra.mxu0 0.0
        %5832 = vmatprep.mubr.f32.mxu0 0.0
        %5833 = vmatmul.mubr.f32.gmra.mrb[0].mxu0 %v5763
        %v5834 = vpop.f32.mrb[0].mxu0
        %v5835 = vadd.f32 0.0, %v5834
        %v5836 = vpop.f32.mrb[0].mxu0
        %5837 = vmatprep.mubr.f32.mxu0 0.0
        %5838 = vmatmul.mubr.f32.gmra.mrb[0].mxu0 %v5766
        %v5839 = vpop.f32.mrb[0].mxu0
        %v5840 = vadd.f32 0.0, %v5839
        %v5841 = vpop.f32.mrb[0].mxu0
        %5842 = vdwg.mxu0
        %v5844 = vsel %vm1371, %v5289, 0
        %v5847 = vsel %vm1371, %v5294, 0
        %5849 = vmatprep.subr.mxu0 0.0
        %5850 = vmatpush1.msra.mxu0 %v5298
        %5851 = vmatprep.subr.mxu0 0.0
        %5852 = vmatpush1.msra.mxu0 0.0
        %5853 = vmatprep.subr.mxu0 0.0
        %5854 = vmatpush1.msra.mxu0 0.0
        %5855 = vmatprep.subr.mxu0 0.0
        %5856 = vmatpush1.msra.mxu0 0.0
        %5857 = vmatprep.subr.mxu0 0.0
        %5858 = vmatpush1.msra.mxu0 0.0
        %5859 = vmatprep.subr.mxu0 0.0
        %5860 = vmatpush1.msra.mxu0 0.0
        %5861 = vmatprep.subr.mxu0 0.0
        %5862 = vmatpush1.msra.mxu0 0.0
        %5863 = vmatprep.subr.mxu0 0.0
        %5864 = vmatpush1.msra.mxu0 0.0
        %5865 = vmatprep.subr.mxu0 0.0
        %5866 = vmatpush1.msra.mxu0 0.0
        %5867 = vmatprep.subr.mxu0 0.0
        %5868 = vmatpush1.msra.mxu0 0.0
        %5869 = vmatprep.subr.mxu0 0.0
        %5870 = vmatpush1.msra.mxu0 0.0
        %5871 = vmatprep.subr.mxu0 0.0
        %5872 = vmatpush1.msra.mxu0 0.0
        %5873 = vmatprep.subr.mxu0 0.0
        %5874 = vmatpush1.msra.mxu0 0.0
        %5875 = vmatprep.subr.mxu0 0.0
        %5876 = vmatpush1.msra.mxu0 0.0
        %5877 = vmatprep.subr.mxu0 0.0
        %5878 = vmatpush1.msra.mxu0 0.0
        %5879 = vmatprep.subr.mxu0 0.0
        %5880 = vmatpush1.msra.mxu0 0.0
        %5881 = vmatprep.subr.mxu0 0.0
        %5882 = vmatpush1.msra.mxu0 0.0
        %5883 = vmatprep.subr.mxu0 0.0
        %5884 = vmatpush1.msra.mxu0 0.0
        %5885 = vmatprep.subr.mxu0 0.0
        %5886 = vmatpush1.msra.mxu0 0.0
        %5887 = vmatprep.subr.mxu0 0.0
        %5888 = vmatpush1.msra.mxu0 0.0
        %5889 = vmatprep.subr.mxu0 0.0
        %5890 = vmatpush1.msra.mxu0 0.0
        %5891 = vmatprep.subr.mxu0 0.0
        %5892 = vmatpush1.msra.mxu0 0.0
        %5893 = vmatprep.subr.mxu0 0.0
        %5894 = vmatpush1.msra.mxu0 0.0
        %5895 = vmatprep.subr.mxu0 0.0
        %5896 = vmatpush1.msra.mxu0 0.0
        %5897 = vmatprep.subr.mxu0 0.0
        %5898 = vmatpush1.msra.mxu0 0.0
        %5899 = vmatprep.subr.mxu0 0.0
        %5900 = vmatpush1.msra.mxu0 0.0
        %5901 = vmatprep.subr.mxu0 0.0
        %5902 = vmatpush1.msra.mxu0 0.0
        %5903 = vmatprep.subr.mxu0 0.0
        %5904 = vmatpush1.msra.mxu0 0.0
        %5905 = vmatprep.subr.mxu0 0.0
        %5906 = vmatpush1.msra.mxu0 0.0
        %5907 = vmatprep.subr.mxu0 0.0
        %5908 = vmatpush1.msra.mxu0 0.0
        %5909 = vmatprep.subr.mxu0 0.0
        %5910 = vmatpush1.msra.mxu0 0.0
        %5911 = vmatprep.subr.mxu0 0.0
        %5912 = vmatpush1.msra.mxu0 0.0
        %5913 = vmatprep.mubr.f32.mxu0 0.0
        %5914 = vmatmul.mubr.f32.gmra.mrb[0].mxu0 %v5844
        %v5915 = vpop.f32.mrb[0].mxu0
        %v5916 = vadd.f32 %v5835, %v5915
        %v5917 = vpop.f32.mrb[0].mxu0
        %5918 = vmatprep.mubr.f32.mxu0 0.0
        %5919 = vmatmul.mubr.f32.gmra.mrb[0].mxu0 %v5847
        %v5920 = vpop.f32.mrb[0].mxu0
        %v5921 = vadd.f32 %v5840, %v5920
        %v5922 = vpop.f32.mrb[0].mxu0
        %5923 = vdwg.mxu0
        %s5924 = scalar_lea.vmem %s37, 192
        %v5925 = vld [vmem:[%s5924] sm:$0xff]
        %v5926 = vld [vmem:[%s5924 + $0x8] sm:$0xff]
        %v5927 = vld [vmem:[%s5924 + $0x10] sm:$0xff]
        %v5928 = vld [vmem:[%s5924 + $0x18] sm:$0xff]
        %s5929 = scalar_lea.vmem %s39, 6
        %v5930 = vld [vmem:[%s5929] sm:$0x1]
        %v5932 = vlaneseq
        %v5933 = vshrl.u32 %v5932, 7
        %v5934 = vsub.s32 0, %v5933
        %v5935 = vrot.slane %v5930, %v5934
        %5937 = vmatprep.subr.mxu0 0.0
        %5938 = vmatpush1.msra.mxu0 %v5925
        %5939 = vmatprep.subr.mxu0 0.0
        %5940 = vmatpush1.msra.mxu0 %v5926
        %5941 = vmatprep.subr.mxu0 0.0
        %5942 = vmatpush1.msra.mxu0 %v5927
        %5943 = vmatprep.subr.mxu0 0.0
        %5944 = vmatpush1.msra.mxu0 %v5928
        %5945 = vmatprep.subr.mxu0 0.0
        %5946 = vmatpush1.msra.mxu0 0.0
        %5947 = vmatprep.subr.mxu0 0.0
        %5948 = vmatpush1.msra.mxu0 0.0
        %5949 = vmatprep.subr.mxu0 0.0
        %5950 = vmatpush1.msra.mxu0 0.0
        %5951 = vmatprep.subr.mxu0 0.0
        %5952 = vmatpush1.msra.mxu0 0.0
        %5953 = vmatprep.subr.mxu0 0.0
        %5954 = vmatpush1.msra.mxu0 0.0
        %5955 = vmatprep.subr.mxu0 0.0
        %5956 = vmatpush1.msra.mxu0 0.0
        %5957 = vmatprep.subr.mxu0 0.0
        %5958 = vmatpush1.msra.mxu0 0.0
        %5959 = vmatprep.subr.mxu0 0.0
        %5960 = vmatpush1.msra.mxu0 0.0
        %5961 = vmatprep.subr.mxu0 0.0
        %5962 = vmatpush1.msra.mxu0 0.0
        %5963 = vmatprep.subr.mxu0 0.0
        %5964 = vmatpush1.msra.mxu0 0.0
        %5965 = vmatprep.subr.mxu0 0.0
        %5966 = vmatpush1.msra.mxu0 0.0
        %5967 = vmatprep.subr.mxu0 0.0
        %5968 = vmatpush1.msra.mxu0 0.0
        %5969 = vmatprep.subr.mxu0 0.0
        %5970 = vmatpush1.msra.mxu0 0.0
        %5971 = vmatprep.subr.mxu0 0.0
        %5972 = vmatpush1.msra.mxu0 0.0
        %5973 = vmatprep.subr.mxu0 0.0
        %5974 = vmatpush1.msra.mxu0 0.0
        %5975 = vmatprep.subr.mxu0 0.0
        %5976 = vmatpush1.msra.mxu0 0.0
        %5977 = vmatprep.subr.mxu0 0.0
        %5978 = vmatpush1.msra.mxu0 0.0
        %5979 = vmatprep.subr.mxu0 0.0
        %5980 = vmatpush1.msra.mxu0 0.0
        %5981 = vmatprep.subr.mxu0 0.0
        %5982 = vmatpush1.msra.mxu0 0.0
        %5983 = vmatprep.subr.mxu0 0.0
        %5984 = vmatpush1.msra.mxu0 0.0
        %5985 = vmatprep.subr.mxu0 0.0
        %5986 = vmatpush1.msra.mxu0 0.0
        %5987 = vmatprep.subr.mxu0 0.0
        %5988 = vmatpush1.msra.mxu0 0.0
        %5989 = vmatprep.subr.mxu0 0.0
        %5990 = vmatpush1.msra.mxu0 0.0
        %5991 = vmatprep.subr.mxu0 0.0
        %5992 = vmatpush1.msra.mxu0 0.0
        %5993 = vmatprep.subr.mxu0 0.0
        %5994 = vmatpush1.msra.mxu0 0.0
        %5995 = vmatprep.subr.mxu0 0.0
        %5996 = vmatpush1.msra.mxu0 0.0
        %5997 = vmatprep.subr.mxu0 0.0
        %5998 = vmatpush1.msra.mxu0 0.0
        %5999 = vmatprep.subr.mxu0 0.0
        %6000 = vmatpush1.msra.mxu0 0.0
        %6001 = vmatprep.mubr.f32.mxu0 0.0
        %6002 = vmatmul.mubr.f32.gmra.mrb[0].mxu0 %v4844
        %v6003 = vpop.f32.mrb[0].mxu0
        %v6004 = vadd.f32 %v5935, %v6003
        %v6005 = vpop.f32.mrb[0].mxu0
        %6006 = vmatprep.mubr.f32.mxu0 0.0
        %6007 = vmatmul.mubr.f32.gmra.mrb[0].mxu0 %v4847
        %v6008 = vpop.f32.mrb[0].mxu0
        %v6009 = vadd.f32 %v5935, %v6008
        %v6010 = vpop.f32.mrb[0].mxu0
        %6011 = vdwg.mxu0
        %s6012 = scalar_lea.vmem %s41, 192
        %v6013 = vld [vmem:[%s6012] sm:$0xff]
        %v6014 = vld [vmem:[%s6012 + $0x8] sm:$0xff]
        %v6015 = vld [vmem:[%s6012 + $0x10] sm:$0xff]
        %v6016 = vld [vmem:[%s6012 + $0x18] sm:$0xff]
        %s6017 = scalar_lea.vmem %s43, 6
        %v6018 = vld [vmem:[%s6017] sm:$0x1]
        %v6020 = vlaneseq
        %v6021 = vshrl.u32 %v6020, 7
        %v6022 = vsub.s32 0, %v6021
        %v6023 = vrot.slane %v6018, %v6022
        %6025 = vmatprep.subr.mxu0 0.0
        %6026 = vmatpush1.msra.mxu0 %v6013
        %6027 = vmatprep.subr.mxu0 0.0
        %6028 = vmatpush1.msra.mxu0 %v6014
        %6029 = vmatprep.subr.mxu0 0.0
        %6030 = vmatpush1.msra.mxu0 %v6015
        %6031 = vmatprep.subr.mxu0 0.0
        %6032 = vmatpush1.msra.mxu0 %v6016
        %6033 = vmatprep.subr.mxu0 0.0
        %6034 = vmatpush1.msra.mxu0 0.0
        %6035 = vmatprep.subr.mxu0 0.0
        %6036 = vmatpush1.msra.mxu0 0.0
        %6037 = vmatprep.subr.mxu0 0.0
        %6038 = vmatpush1.msra.mxu0 0.0
        %6039 = vmatprep.subr.mxu0 0.0
        %6040 = vmatpush1.msra.mxu0 0.0
        %6041 = vmatprep.subr.mxu0 0.0
        %6042 = vmatpush1.msra.mxu0 0.0
        %6043 = vmatprep.subr.mxu0 0.0
        %6044 = vmatpush1.msra.mxu0 0.0
        %6045 = vmatprep.subr.mxu0 0.0
        %6046 = vmatpush1.msra.mxu0 0.0
        %6047 = vmatprep.subr.mxu0 0.0
        %6048 = vmatpush1.msra.mxu0 0.0
        %6049 = vmatprep.subr.mxu0 0.0
        %6050 = vmatpush1.msra.mxu0 0.0
        %6051 = vmatprep.subr.mxu0 0.0
        %6052 = vmatpush1.msra.mxu0 0.0
        %6053 = vmatprep.subr.mxu0 0.0
        %6054 = vmatpush1.msra.mxu0 0.0
        %6055 = vmatprep.subr.mxu0 0.0
        %6056 = vmatpush1.msra.mxu0 0.0
        %6057 = vmatprep.subr.mxu0 0.0
        %6058 = vmatpush1.msra.mxu0 0.0
        %6059 = vmatprep.subr.mxu0 0.0
        %6060 = vmatpush1.msra.mxu0 0.0
        %6061 = vmatprep.subr.mxu0 0.0
        %6062 = vmatpush1.msra.mxu0 0.0
        %6063 = vmatprep.subr.mxu0 0.0
        %6064 = vmatpush1.msra.mxu0 0.0
        %6065 = vmatprep.subr.mxu0 0.0
        %6066 = vmatpush1.msra.mxu0 0.0
        %6067 = vmatprep.subr.mxu0 0.0
        %6068 = vmatpush1.msra.mxu0 0.0
        %6069 = vmatprep.subr.mxu0 0.0
        %6070 = vmatpush1.msra.mxu0 0.0
        %6071 = vmatprep.subr.mxu0 0.0
        %6072 = vmatpush1.msra.mxu0 0.0
        %6073 = vmatprep.subr.mxu0 0.0
        %6074 = vmatpush1.msra.mxu0 0.0
        %6075 = vmatprep.subr.mxu0 0.0
        %6076 = vmatpush1.msra.mxu0 0.0
        %6077 = vmatprep.subr.mxu0 0.0
        %6078 = vmatpush1.msra.mxu0 0.0
        %6079 = vmatprep.subr.mxu0 0.0
        %6080 = vmatpush1.msra.mxu0 0.0
        %6081 = vmatprep.subr.mxu0 0.0
        %6082 = vmatpush1.msra.mxu0 0.0
        %6083 = vmatprep.subr.mxu0 0.0
        %6084 = vmatpush1.msra.mxu0 0.0
        %6085 = vmatprep.subr.mxu0 0.0
        %6086 = vmatpush1.msra.mxu0 0.0
        %6087 = vmatprep.subr.mxu0 0.0
        %6088 = vmatpush1.msra.mxu0 0.0
        %6089 = vmatprep.mubr.f32.mxu0 0.0
        %6090 = vmatmul.mubr.f32.gmra.mrb[0].mxu0 %v4844
        %v6091 = vpop.f32.mrb[0].mxu0
        %v6092 = vadd.f32 %v6023, %v6091
        %v6093 = vpop.f32.mrb[0].mxu0
        %6094 = vmatprep.mubr.f32.mxu0 0.0
        %6095 = vmatmul.mubr.f32.gmra.mrb[0].mxu0 %v4847
        %v6096 = vpop.f32.mrb[0].mxu0
        %v6097 = vadd.f32 %v6023, %v6096
        %v6098 = vpop.f32.mrb[0].mxu0
        %6099 = vdwg.mxu0
        %s6100 = scalar_lea.vmem %s45, 192
        %v6101 = vld [vmem:[%s6100] sm:$0xff]
        %v6102 = vld [vmem:[%s6100 + $0x8] sm:$0xff]
        %v6103 = vld [vmem:[%s6100 + $0x10] sm:$0xff]
        %v6104 = vld [vmem:[%s6100 + $0x18] sm:$0xff]
        %s6105 = scalar_lea.vmem %s47, 6
        %v6106 = vld [vmem:[%s6105] sm:$0x1]
        %v6108 = vlaneseq
        %v6109 = vshrl.u32 %v6108, 7
        %v6110 = vsub.s32 0, %v6109
        %v6111 = vrot.slane %v6106, %v6110
        %6113 = vmatprep.subr.mxu0 0.0
        %6114 = vmatpush1.msra.mxu0 %v6101
        %6115 = vmatprep.subr.mxu0 0.0
        %6116 = vmatpush1.msra.mxu0 %v6102
        %6117 = vmatprep.subr.mxu0 0.0
        %6118 = vmatpush1.msra.mxu0 %v6103
        %6119 = vmatprep.subr.mxu0 0.0
        %6120 = vmatpush1.msra.mxu0 %v6104
        %6121 = vmatprep.subr.mxu0 0.0
        %6122 = vmatpush1.msra.mxu0 0.0
        %6123 = vmatprep.subr.mxu0 0.0
        %6124 = vmatpush1.msra.mxu0 0.0
        %6125 = vmatprep.subr.mxu0 0.0
        %6126 = vmatpush1.msra.mxu0 0.0
        %6127 = vmatprep.subr.mxu0 0.0
        %6128 = vmatpush1.msra.mxu0 0.0
        %6129 = vmatprep.subr.mxu0 0.0
        %6130 = vmatpush1.msra.mxu0 0.0
        %6131 = vmatprep.subr.mxu0 0.0
        %6132 = vmatpush1.msra.mxu0 0.0
        %6133 = vmatprep.subr.mxu0 0.0
        %6134 = vmatpush1.msra.mxu0 0.0
        %6135 = vmatprep.subr.mxu0 0.0
        %6136 = vmatpush1.msra.mxu0 0.0
        %6137 = vmatprep.subr.mxu0 0.0
        %6138 = vmatpush1.msra.mxu0 0.0
        %6139 = vmatprep.subr.mxu0 0.0
        %6140 = vmatpush1.msra.mxu0 0.0
        %6141 = vmatprep.subr.mxu0 0.0
        %6142 = vmatpush1.msra.mxu0 0.0
        %6143 = vmatprep.subr.mxu0 0.0
        %6144 = vmatpush1.msra.mxu0 0.0
        %6145 = vmatprep.subr.mxu0 0.0
        %6146 = vmatpush1.msra.mxu0 0.0
        %6147 = vmatprep.subr.mxu0 0.0
        %6148 = vmatpush1.msra.mxu0 0.0
        %6149 = vmatprep.subr.mxu0 0.0
        %6150 = vmatpush1.msra.mxu0 0.0
        %6151 = vmatprep.subr.mxu0 0.0
        %6152 = vmatpush1.msra.mxu0 0.0
        %6153 = vmatprep.subr.mxu0 0.0
        %6154 = vmatpush1.msra.mxu0 0.0
        %6155 = vmatprep.subr.mxu0 0.0
        %6156 = vmatpush1.msra.mxu0 0.0
        %6157 = vmatprep.subr.mxu0 0.0
        %6158 = vmatpush1.msra.mxu0 0.0
        %6159 = vmatprep.subr.mxu0 0.0
        %6160 = vmatpush1.msra.mxu0 0.0
        %6161 = vmatprep.subr.mxu0 0.0
        %6162 = vmatpush1.msra.mxu0 0.0
        %6163 = vmatprep.subr.mxu0 0.0
        %6164 = vmatpush1.msra.mxu0 0.0
        %6165 = vmatprep.subr.mxu0 0.0
        %6166 = vmatpush1.msra.mxu0 0.0
        %6167 = vmatprep.subr.mxu0 0.0
        %6168 = vmatpush1.msra.mxu0 0.0
        %6169 = vmatprep.subr.mxu0 0.0
        %6170 = vmatpush1.msra.mxu0 0.0
        %6171 = vmatprep.subr.mxu0 0.0
        %6172 = vmatpush1.msra.mxu0 0.0
        %6173 = vmatprep.subr.mxu0 0.0
        %6174 = vmatpush1.msra.mxu0 0.0
        %6175 = vmatprep.subr.mxu0 0.0
        %6176 = vmatpush1.msra.mxu0 0.0
        %6177 = vmatprep.mubr.f32.mxu0 0.0
        %6178 = vmatmul.mubr.f32.gmra.mrb[0].mxu0 %v4844
        %v6179 = vpop.f32.mrb[0].mxu0
        %v6180 = vadd.f32 %v6111, %v6179
        %v6181 = vpop.f32.mrb[0].mxu0
        %6182 = vmatprep.mubr.f32.mxu0 0.0
        %6183 = vmatmul.mubr.f32.gmra.mrb[0].mxu0 %v4847
        %v6184 = vpop.f32.mrb[0].mxu0
        %v6185 = vadd.f32 %v6111, %v6184
        %v6186 = vpop.f32.mrb[0].mxu0
        %6187 = vdwg.mxu0
        %v6189 = vsel %vm1371, %v6004, 0
        %v6192 = vsel %vm1371, %v6009, 0
        %v6195 = vsel %vm1371, %v6092, 0
        %v6198 = vsel %vm1371, %v6097, 0
        %6200 = vmatprep.subr.mxu0 0.0
        %6201 = vmatpush1.xpose.msra.mxu0 %v6195
        %6202 = vmatprep.subr.mxu0 0.0
        %6203 = vmatpush1.xpose.msra.mxu0 %v6198
        %6204 = vmatprep.subr.mxu0 0.0
        %6205 = vmatpush1.xpose.msra.mxu0 0.0
        %6206 = vmatprep.subr.mxu0 0.0
        %6207 = vmatpush1.xpose.msra.mxu0 0.0
        %6208 = vmatprep.subr.mxu0 0.0
        %6209 = vmatpush1.xpose.msra.mxu0 0.0
        %6210 = vmatprep.subr.mxu0 0.0
        %6211 = vmatpush1.xpose.msra.mxu0 0.0
        %6212 = vmatprep.subr.mxu0 0.0
        %6213 = vmatpush1.xpose.msra.mxu0 0.0
        %6214 = vmatprep.subr.mxu0 0.0
        %6215 = vmatpush1.xpose.msra.mxu0 0.0
        %6216 = vmatprep.subr.mxu0 0.0
        %6217 = vmatpush1.xpose.msra.mxu0 0.0
        %6218 = vmatprep.subr.mxu0 0.0
        %6219 = vmatpush1.xpose.msra.mxu0 0.0
        %6220 = vmatprep.subr.mxu0 0.0
        %6221 = vmatpush1.xpose.msra.mxu0 0.0
        %6222 = vmatprep.subr.mxu0 0.0
        %6223 = vmatpush1.xpose.msra.mxu0 0.0
        %6224 = vmatprep.subr.mxu0 0.0
        %6225 = vmatpush1.xpose.msra.mxu0 0.0
        %6226 = vmatprep.subr.mxu0 0.0
        %6227 = vmatpush1.xpose.msra.mxu0 0.0
        %6228 = vmatprep.subr.mxu0 0.0
        %6229 = vmatpush1.xpose.msra.mxu0 0.0
        %6230 = vmatprep.subr.mxu0 0.0
        %6231 = vmatpush1.xpose.msra.mxu0 0.0
        %6232 = vmatprep.subr.mxu0 0.0
        %6233 = vmatpush1.xpose.msra.mxu0 0.0
        %6234 = vmatprep.subr.mxu0 0.0
        %6235 = vmatpush1.xpose.msra.mxu0 0.0
        %6236 = vmatprep.subr.mxu0 0.0
        %6237 = vmatpush1.xpose.msra.mxu0 0.0
        %6238 = vmatprep.subr.mxu0 0.0
        %6239 = vmatpush1.xpose.msra.mxu0 0.0
        %6240 = vmatprep.subr.mxu0 0.0
        %6241 = vmatpush1.xpose.msra.mxu0 0.0
        %6242 = vmatprep.subr.mxu0 0.0
        %6243 = vmatpush1.xpose.msra.mxu0 0.0
        %6244 = vmatprep.subr.mxu0 0.0
        %6245 = vmatpush1.xpose.msra.mxu0 0.0
        %6246 = vmatprep.subr.mxu0 0.0
        %6247 = vmatpush1.xpose.msra.mxu0 0.0
        %6248 = vmatprep.subr.mxu0 0.0
        %6249 = vmatpush1.xpose.msra.mxu0 0.0
        %6250 = vmatprep.subr.mxu0 0.0
        %6251 = vmatpush1.xpose.msra.mxu0 0.0
        %6252 = vmatprep.subr.mxu0 0.0
        %6253 = vmatpush1.xpose.msra.mxu0 0.0
        %6254 = vmatprep.subr.mxu0 0.0
        %6255 = vmatpush1.xpose.msra.mxu0 0.0
        %6256 = vmatprep.subr.mxu0 0.0
        %6257 = vmatpush1.xpose.msra.mxu0 0.0
        %6258 = vmatprep.subr.mxu0 0.0
        %6259 = vmatpush1.xpose.msra.mxu0 0.0
        %6260 = vmatprep.subr.mxu0 0.0
        %6261 = vmatpush1.xpose.msra.mxu0 0.0
        %6262 = vmatprep.subr.mxu0 0.0
        %6263 = vmatpush1.xpose.msra.mxu0 0.0
        %6264 = vmatprep.mubr.f32.mxu0 0.0
        %6265 = vmatmul.mubr.f32.gmra.mrb[0].mxu0 %v6189
        %v6266 = vpop.f32.mrb[0].mxu0
        %v6267 = vadd.f32 0.0, %v6266
        %v6268 = vpop.f32.mrb[0].mxu0
        %6269 = vmatprep.mubr.f32.mxu0 0.0
        %6270 = vmatmul.mubr.f32.gmra.mrb[0].mxu0 %v6192
        %v6271 = vpop.f32.mrb[0].mxu0
        %v6272 = vadd.f32 0.0, %v6271
        %v6273 = vpop.f32.mrb[0].mxu0
        %6274 = vdwg.mxu0
        %v6275 = vmul.f32 %v6267, 0.35355338
        %v6276 = vmul.f32 %v6272, 0.35355338
        %v6277 = vsel %vm2253, %v6275, -1e+30
        %v6278 = vsel %vm2254, %v6276, -1e+30
        %v6279 = vsel %vm2657, %v6277, -inf
        %6280 = vmax.xlane.f32.xlu0 %v6279
        %v6281 = vpop.xlane.xlu0 %6280
        %v6282 = vsel %vm2661, %v6278, -inf
        %6283 = vmax.xlane.f32.xlu0 %v6282
        %v6284 = vpop.xlane.xlu0 %6283
        %v6285 = vsub.f32 %v6277, %v6281
        %v6286 = vsub.f32 %v6278, %v6284
        %v6287 = vmul.f32 %v6285, 1.442695
        %v6288 = vpow.pop %v6287
        %v6289 = vmul.f32 %v6286, 1.442695
        %v6290 = vpow.pop %v6289
        %v6291 = vsel %vm2657, %v6288, 0.0
        %6292 = vadd.xlane.f32.xlu0 %v6291
        %v6293 = vpop.xlane.xlu0 %6292
        %v6294 = vsel %vm2661, %v6290, 0.0
        %6295 = vadd.xlane.f32.xlu0 %v6294
        %v6296 = vpop.xlane.xlu0 %6295
        %v6297 = vrcp.pop %v6293
        %v6298 = vmul.f32 %v6288, %v6297
        %v6299 = vrcp.pop %v6296
        %v6300 = vmul.f32 %v6290, %v6299
        %v6302 = vsel %vm2657, %v6298, 0
        %v6305 = vsel %vm2657, %v6300, 0
        %v6308 = vsel %vm1993, %v6185, 0
        %6310 = vmatprep.subr.mxu0 0.0
        %6311 = vmatpush1.msra.mxu0 %v6180
        %6312 = vmatprep.subr.mxu0 0.0
        %6313 = vmatpush1.msra.mxu0 %v6308
        %6314 = vmatprep.subr.mxu0 0.0
        %6315 = vmatpush1.msra.mxu0 0.0
        %6316 = vmatprep.subr.mxu0 0.0
        %6317 = vmatpush1.msra.mxu0 0.0
        %6318 = vmatprep.subr.mxu0 0.0
        %6319 = vmatpush1.msra.mxu0 0.0
        %6320 = vmatprep.subr.mxu0 0.0
        %6321 = vmatpush1.msra.mxu0 0.0
        %6322 = vmatprep.subr.mxu0 0.0
        %6323 = vmatpush1.msra.mxu0 0.0
        %6324 = vmatprep.subr.mxu0 0.0
        %6325 = vmatpush1.msra.mxu0 0.0
        %6326 = vmatprep.subr.mxu0 0.0
        %6327 = vmatpush1.msra.mxu0 0.0
        %6328 = vmatprep.subr.mxu0 0.0
        %6329 = vmatpush1.msra.mxu0 0.0
        %6330 = vmatprep.subr.mxu0 0.0
        %6331 = vmatpush1.msra.mxu0 0.0
        %6332 = vmatprep.subr.mxu0 0.0
        %6333 = vmatpush1.msra.mxu0 0.0
        %6334 = vmatprep.subr.mxu0 0.0
        %6335 = vmatpush1.msra.mxu0 0.0
        %6336 = vmatprep.subr.mxu0 0.0
        %6337 = vmatpush1.msra.mxu0 0.0
        %6338 = vmatprep.subr.mxu0 0.0
        %6339 = vmatpush1.msra.mxu0 0.0
        %6340 = vmatprep.subr.mxu0 0.0
        %6341 = vmatpush1.msra.mxu0 0.0
        %6342 = vmatprep.subr.mxu0 0.0
        %6343 = vmatpush1.msra.mxu0 0.0
        %6344 = vmatprep.subr.mxu0 0.0
        %6345 = vmatpush1.msra.mxu0 0.0
        %6346 = vmatprep.subr.mxu0 0.0
        %6347 = vmatpush1.msra.mxu0 0.0
        %6348 = vmatprep.subr.mxu0 0.0
        %6349 = vmatpush1.msra.mxu0 0.0
        %6350 = vmatprep.subr.mxu0 0.0
        %6351 = vmatpush1.msra.mxu0 0.0
        %6352 = vmatprep.subr.mxu0 0.0
        %6353 = vmatpush1.msra.mxu0 0.0
        %6354 = vmatprep.subr.mxu0 0.0
        %6355 = vmatpush1.msra.mxu0 0.0
        %6356 = vmatprep.subr.mxu0 0.0
        %6357 = vmatpush1.msra.mxu0 0.0
        %6358 = vmatprep.subr.mxu0 0.0
        %6359 = vmatpush1.msra.mxu0 0.0
        %6360 = vmatprep.subr.mxu0 0.0
        %6361 = vmatpush1.msra.mxu0 0.0
        %6362 = vmatprep.subr.mxu0 0.0
        %6363 = vmatpush1.msra.mxu0 0.0
        %6364 = vmatprep.subr.mxu0 0.0
        %6365 = vmatpush1.msra.mxu0 0.0
        %6366 = vmatprep.subr.mxu0 0.0
        %6367 = vmatpush1.msra.mxu0 0.0
        %6368 = vmatprep.subr.mxu0 0.0
        %6369 = vmatpush1.msra.mxu0 0.0
        %6370 = vmatprep.subr.mxu0 0.0
        %6371 = vmatpush1.msra.mxu0 0.0
        %6372 = vmatprep.subr.mxu0 0.0
        %6373 = vmatpush1.msra.mxu0 0.0
        %6374 = vmatprep.mubr.f32.mxu0 0.0
        %6375 = vmatmul.mubr.f32.gmra.mrb[0].mxu0 %v6302
        %v6376 = vpop.f32.mrb[0].mxu0
        %v6377 = vadd.f32 0.0, %v6376
        %v6378 = vpop.f32.mrb[0].mxu0
        %6379 = vmatprep.mubr.f32.mxu0 0.0
        %6380 = vmatmul.mubr.f32.gmra.mrb[0].mxu0 %v6305
        %v6381 = vpop.f32.mrb[0].mxu0
        %v6382 = vadd.f32 0.0, %v6381
        %v6383 = vpop.f32.mrb[0].mxu0
        %6384 = vdwg.mxu0
        %s6385 = scalar_lea.vmem [#allocation8], 48
        %v6386 = vld [vmem:[%s6385] sm:$0xff]
        %v6388 = vsel %vm1371, %v6377, 0
        %v6391 = vsel %vm1371, %v6382, 0
        %6393 = vmatprep.subr.mxu0 0.0
        %6394 = vmatpush1.msra.mxu0 %v6386
        %6395 = vmatprep.subr.mxu0 0.0
        %6396 = vmatpush1.msra.mxu0 0.0
        %6397 = vmatprep.subr.mxu0 0.0
        %6398 = vmatpush1.msra.mxu0 0.0
        %6399 = vmatprep.subr.mxu0 0.0
        %6400 = vmatpush1.msra.mxu0 0.0
        %6401 = vmatprep.subr.mxu0 0.0
        %6402 = vmatpush1.msra.mxu0 0.0
        %6403 = vmatprep.subr.mxu0 0.0
        %6404 = vmatpush1.msra.mxu0 0.0
        %6405 = vmatprep.subr.mxu0 0.0
        %6406 = vmatpush1.msra.mxu0 0.0
        %6407 = vmatprep.subr.mxu0 0.0
        %6408 = vmatpush1.msra.mxu0 0.0
        %6409 = vmatprep.subr.mxu0 0.0
        %6410 = vmatpush1.msra.mxu0 0.0
        %6411 = vmatprep.subr.mxu0 0.0
        %6412 = vmatpush1.msra.mxu0 0.0
        %6413 = vmatprep.subr.mxu0 0.0
        %6414 = vmatpush1.msra.mxu0 0.0
        %6415 = vmatprep.subr.mxu0 0.0
        %6416 = vmatpush1.msra.mxu0 0.0
        %6417 = vmatprep.subr.mxu0 0.0
        %6418 = vmatpush1.msra.mxu0 0.0
        %6419 = vmatprep.subr.mxu0 0.0
        %6420 = vmatpush1.msra.mxu0 0.0
        %6421 = vmatprep.subr.mxu0 0.0
        %6422 = vmatpush1.msra.mxu0 0.0
        %6423 = vmatprep.subr.mxu0 0.0
        %6424 = vmatpush1.msra.mxu0 0.0
        %6425 = vmatprep.subr.mxu0 0.0
        %6426 = vmatpush1.msra.mxu0 0.0
        %6427 = vmatprep.subr.mxu0 0.0
        %6428 = vmatpush1.msra.mxu0 0.0
        %6429 = vmatprep.subr.mxu0 0.0
        %6430 = vmatpush1.msra.mxu0 0.0
        %6431 = vmatprep.subr.mxu0 0.0
        %6432 = vmatpush1.msra.mxu0 0.0
        %6433 = vmatprep.subr.mxu0 0.0
        %6434 = vmatpush1.msra.mxu0 0.0
        %6435 = vmatprep.subr.mxu0 0.0
        %6436 = vmatpush1.msra.mxu0 0.0
        %6437 = vmatprep.subr.mxu0 0.0
        %6438 = vmatpush1.msra.mxu0 0.0
        %6439 = vmatprep.subr.mxu0 0.0
        %6440 = vmatpush1.msra.mxu0 0.0
        %6441 = vmatprep.subr.mxu0 0.0
        %6442 = vmatpush1.msra.mxu0 0.0
        %6443 = vmatprep.subr.mxu0 0.0
        %6444 = vmatpush1.msra.mxu0 0.0
        %6445 = vmatprep.subr.mxu0 0.0
        %6446 = vmatpush1.msra.mxu0 0.0
        %6447 = vmatprep.subr.mxu0 0.0
        %6448 = vmatpush1.msra.mxu0 0.0
        %6449 = vmatprep.subr.mxu0 0.0
        %6450 = vmatpush1.msra.mxu0 0.0
        %6451 = vmatprep.subr.mxu0 0.0
        %6452 = vmatpush1.msra.mxu0 0.0
        %6453 = vmatprep.subr.mxu0 0.0
        %6454 = vmatpush1.msra.mxu0 0.0
        %6455 = vmatprep.subr.mxu0 0.0
        %6456 = vmatpush1.msra.mxu0 0.0
        %6457 = vmatprep.mubr.f32.mxu0 0.0
        %6458 = vmatmul.mubr.f32.gmra.mrb[0].mxu0 %v6388
        %v6459 = vpop.f32.mrb[0].mxu0
        %v6460 = vadd.f32 0.0, %v6459
        %v6461 = vpop.f32.mrb[0].mxu0
        %6462 = vmatprep.mubr.f32.mxu0 0.0
        %6463 = vmatmul.mubr.f32.gmra.mrb[0].mxu0 %v6391
        %v6464 = vpop.f32.mrb[0].mxu0
        %v6465 = vadd.f32 0.0, %v6464
        %v6466 = vpop.f32.mrb[0].mxu0
        %6467 = vdwg.mxu0
        %v6468 = vadd.f32 %v5916, %v6460
        %v6469 = vadd.f32 %v5921, %v6465
        %s6470 = scalar_lea.vmem %s37, 224
        %v6471 = vld [vmem:[%s6470] sm:$0xff]
        %v6472 = vld [vmem:[%s6470 + $0x8] sm:$0xff]
        %v6473 = vld [vmem:[%s6470 + $0x10] sm:$0xff]
        %v6474 = vld [vmem:[%s6470 + $0x18] sm:$0xff]
        %s6475 = scalar_lea.vmem %s39, 7
        %v6476 = vld [vmem:[%s6475] sm:$0x1]
        %v6478 = vlaneseq
        %v6479 = vshrl.u32 %v6478, 7
        %v6480 = vsub.s32 0, %v6479
        %v6481 = vrot.slane %v6476, %v6480
        %6483 = vmatprep.subr.mxu0 0.0
        %6484 = vmatpush1.msra.mxu0 %v6471
        %6485 = vmatprep.subr.mxu0 0.0
        %6486 = vmatpush1.msra.mxu0 %v6472
        %6487 = vmatprep.subr.mxu0 0.0
        %6488 = vmatpush1.msra.mxu0 %v6473
        %6489 = vmatprep.subr.mxu0 0.0
        %6490 = vmatpush1.msra.mxu0 %v6474
        %6491 = vmatprep.subr.mxu0 0.0
        %6492 = vmatpush1.msra.mxu0 0.0
        %6493 = vmatprep.subr.mxu0 0.0
        %6494 = vmatpush1.msra.mxu0 0.0
        %6495 = vmatprep.subr.mxu0 0.0
        %6496 = vmatpush1.msra.mxu0 0.0
        %6497 = vmatprep.subr.mxu0 0.0
        %6498 = vmatpush1.msra.mxu0 0.0
        %6499 = vmatprep.subr.mxu0 0.0
        %6500 = vmatpush1.msra.mxu0 0.0
        %6501 = vmatprep.subr.mxu0 0.0
        %6502 = vmatpush1.msra.mxu0 0.0
        %6503 = vmatprep.subr.mxu0 0.0
        %6504 = vmatpush1.msra.mxu0 0.0
        %6505 = vmatprep.subr.mxu0 0.0
        %6506 = vmatpush1.msra.mxu0 0.0
        %6507 = vmatprep.subr.mxu0 0.0
        %6508 = vmatpush1.msra.mxu0 0.0
        %6509 = vmatprep.subr.mxu0 0.0
        %6510 = vmatpush1.msra.mxu0 0.0
        %6511 = vmatprep.subr.mxu0 0.0
        %6512 = vmatpush1.msra.mxu0 0.0
        %6513 = vmatprep.subr.mxu0 0.0
        %6514 = vmatpush1.msra.mxu0 0.0
        %6515 = vmatprep.subr.mxu0 0.0
        %6516 = vmatpush1.msra.mxu0 0.0
        %6517 = vmatprep.subr.mxu0 0.0
        %6518 = vmatpush1.msra.mxu0 0.0
        %6519 = vmatprep.subr.mxu0 0.0
        %6520 = vmatpush1.msra.mxu0 0.0
        %6521 = vmatprep.subr.mxu0 0.0
        %6522 = vmatpush1.msra.mxu0 0.0
        %6523 = vmatprep.subr.mxu0 0.0
        %6524 = vmatpush1.msra.mxu0 0.0
        %6525 = vmatprep.subr.mxu0 0.0
        %6526 = vmatpush1.msra.mxu0 0.0
        %6527 = vmatprep.subr.mxu0 0.0
        %6528 = vmatpush1.msra.mxu0 0.0
        %6529 = vmatprep.subr.mxu0 0.0
        %6530 = vmatpush1.msra.mxu0 0.0
        %6531 = vmatprep.subr.mxu0 0.0
        %6532 = vmatpush1.msra.mxu0 0.0
        %6533 = vmatprep.subr.mxu0 0.0
        %6534 = vmatpush1.msra.mxu0 0.0
        %6535 = vmatprep.subr.mxu0 0.0
        %6536 = vmatpush1.msra.mxu0 0.0
        %6537 = vmatprep.subr.mxu0 0.0
        %6538 = vmatpush1.msra.mxu0 0.0
        %6539 = vmatprep.subr.mxu0 0.0
        %6540 = vmatpush1.msra.mxu0 0.0
        %6541 = vmatprep.subr.mxu0 0.0
        %6542 = vmatpush1.msra.mxu0 0.0
        %6543 = vmatprep.subr.mxu0 0.0
        %6544 = vmatpush1.msra.mxu0 0.0
        %6545 = vmatprep.subr.mxu0 0.0
        %6546 = vmatpush1.msra.mxu0 0.0
        %6547 = vmatprep.mubr.f32.mxu0 0.0
        %6548 = vmatmul.mubr.f32.gmra.mrb[0].mxu0 %v4844
        %v6549 = vpop.f32.mrb[0].mxu0
        %v6550 = vadd.f32 %v6481, %v6549
        %v6551 = vpop.f32.mrb[0].mxu0
        %6552 = vmatprep.mubr.f32.mxu0 0.0
        %6553 = vmatmul.mubr.f32.gmra.mrb[0].mxu0 %v4847
        %v6554 = vpop.f32.mrb[0].mxu0
        %v6555 = vadd.f32 %v6481, %v6554
        %v6556 = vpop.f32.mrb[0].mxu0
        %6557 = vdwg.mxu0
        %s6558 = scalar_lea.vmem %s41, 224
        %v6559 = vld [vmem:[%s6558] sm:$0xff]
        %v6560 = vld [vmem:[%s6558 + $0x8] sm:$0xff]
        %v6561 = vld [vmem:[%s6558 + $0x10] sm:$0xff]
        %v6562 = vld [vmem:[%s6558 + $0x18] sm:$0xff]
        %s6563 = scalar_lea.vmem %s43, 7
        %v6564 = vld [vmem:[%s6563] sm:$0x1]
        %v6566 = vlaneseq
        %v6567 = vshrl.u32 %v6566, 7
        %v6568 = vsub.s32 0, %v6567
        %v6569 = vrot.slane %v6564, %v6568
        %6571 = vmatprep.subr.mxu0 0.0
        %6572 = vmatpush1.msra.mxu0 %v6559
        %6573 = vmatprep.subr.mxu0 0.0
        %6574 = vmatpush1.msra.mxu0 %v6560
        %6575 = vmatprep.subr.mxu0 0.0
        %6576 = vmatpush1.msra.mxu0 %v6561
        %6577 = vmatprep.subr.mxu0 0.0
        %6578 = vmatpush1.msra.mxu0 %v6562
        %6579 = vmatprep.subr.mxu0 0.0
        %6580 = vmatpush1.msra.mxu0 0.0
        %6581 = vmatprep.subr.mxu0 0.0
        %6582 = vmatpush1.msra.mxu0 0.0
        %6583 = vmatprep.subr.mxu0 0.0
        %6584 = vmatpush1.msra.mxu0 0.0
        %6585 = vmatprep.subr.mxu0 0.0
        %6586 = vmatpush1.msra.mxu0 0.0
        %6587 = vmatprep.subr.mxu0 0.0
        %6588 = vmatpush1.msra.mxu0 0.0
        %6589 = vmatprep.subr.mxu0 0.0
        %6590 = vmatpush1.msra.mxu0 0.0
        %6591 = vmatprep.subr.mxu0 0.0
        %6592 = vmatpush1.msra.mxu0 0.0
        %6593 = vmatprep.subr.mxu0 0.0
        %6594 = vmatpush1.msra.mxu0 0.0
        %6595 = vmatprep.subr.mxu0 0.0
        %6596 = vmatpush1.msra.mxu0 0.0
        %6597 = vmatprep.subr.mxu0 0.0
        %6598 = vmatpush1.msra.mxu0 0.0
        %6599 = vmatprep.subr.mxu0 0.0
        %6600 = vmatpush1.msra.mxu0 0.0
        %6601 = vmatprep.subr.mxu0 0.0
        %6602 = vmatpush1.msra.mxu0 0.0
        %6603 = vmatprep.subr.mxu0 0.0
        %6604 = vmatpush1.msra.mxu0 0.0
        %6605 = vmatprep.subr.mxu0 0.0
        %6606 = vmatpush1.msra.mxu0 0.0
        %6607 = vmatprep.subr.mxu0 0.0
        %6608 = vmatpush1.msra.mxu0 0.0
        %6609 = vmatprep.subr.mxu0 0.0
        %6610 = vmatpush1.msra.mxu0 0.0
        %6611 = vmatprep.subr.mxu0 0.0
        %6612 = vmatpush1.msra.mxu0 0.0
        %6613 = vmatprep.subr.mxu0 0.0
        %6614 = vmatpush1.msra.mxu0 0.0
        %6615 = vmatprep.subr.mxu0 0.0
        %6616 = vmatpush1.msra.mxu0 0.0
        %6617 = vmatprep.subr.mxu0 0.0
        %6618 = vmatpush1.msra.mxu0 0.0
        %6619 = vmatprep.subr.mxu0 0.0
        %6620 = vmatpush1.msra.mxu0 0.0
        %6621 = vmatprep.subr.mxu0 0.0
        %6622 = vmatpush1.msra.mxu0 0.0
        %6623 = vmatprep.subr.mxu0 0.0
        %6624 = vmatpush1.msra.mxu0 0.0
        %6625 = vmatprep.subr.mxu0 0.0
        %6626 = vmatpush1.msra.mxu0 0.0
        %6627 = vmatprep.subr.mxu0 0.0
        %6628 = vmatpush1.msra.mxu0 0.0
        %6629 = vmatprep.subr.mxu0 0.0
        %6630 = vmatpush1.msra.mxu0 0.0
        %6631 = vmatprep.subr.mxu0 0.0
        %6632 = vmatpush1.msra.mxu0 0.0
        %6633 = vmatprep.subr.mxu0 0.0
        %6634 = vmatpush1.msra.mxu0 0.0
        %6635 = vmatprep.mubr.f32.mxu0 0.0
        %6636 = vmatmul.mubr.f32.gmra.mrb[0].mxu0 %v4844
        %v6637 = vpop.f32.mrb[0].mxu0
        %v6638 = vadd.f32 %v6569, %v6637
        %v6639 = vpop.f32.mrb[0].mxu0
        %6640 = vmatprep.mubr.f32.mxu0 0.0
        %6641 = vmatmul.mubr.f32.gmra.mrb[0].mxu0 %v4847
        %v6642 = vpop.f32.mrb[0].mxu0
        %v6643 = vadd.f32 %v6569, %v6642
        %v6644 = vpop.f32.mrb[0].mxu0
        %6645 = vdwg.mxu0
        %s6646 = scalar_lea.vmem %s45, 224
        %v6647 = vld [vmem:[%s6646] sm:$0xff]
        %v6648 = vld [vmem:[%s6646 + $0x8] sm:$0xff]
        %v6649 = vld [vmem:[%s6646 + $0x10] sm:$0xff]
        %v6650 = vld [vmem:[%s6646 + $0x18] sm:$0xff]
        %s6651 = scalar_lea.vmem %s47, 7
        %v6652 = vld [vmem:[%s6651] sm:$0x1]
        %v6654 = vlaneseq
        %v6655 = vshrl.u32 %v6654, 7
        %v6656 = vsub.s32 0, %v6655
        %v6657 = vrot.slane %v6652, %v6656
        %6659 = vmatprep.subr.mxu0 0.0
        %6660 = vmatpush1.msra.mxu0 %v6647
        %6661 = vmatprep.subr.mxu0 0.0
        %6662 = vmatpush1.msra.mxu0 %v6648
        %6663 = vmatprep.subr.mxu0 0.0
        %6664 = vmatpush1.msra.mxu0 %v6649
        %6665 = vmatprep.subr.mxu0 0.0
        %6666 = vmatpush1.msra.mxu0 %v6650
        %6667 = vmatprep.subr.mxu0 0.0
        %6668 = vmatpush1.msra.mxu0 0.0
        %6669 = vmatprep.subr.mxu0 0.0
        %6670 = vmatpush1.msra.mxu0 0.0
        %6671 = vmatprep.subr.mxu0 0.0
        %6672 = vmatpush1.msra.mxu0 0.0
        %6673 = vmatprep.subr.mxu0 0.0
        %6674 = vmatpush1.msra.mxu0 0.0
        %6675 = vmatprep.subr.mxu0 0.0
        %6676 = vmatpush1.msra.mxu0 0.0
        %6677 = vmatprep.subr.mxu0 0.0
        %6678 = vmatpush1.msra.mxu0 0.0
        %6679 = vmatprep.subr.mxu0 0.0
        %6680 = vmatpush1.msra.mxu0 0.0
        %6681 = vmatprep.subr.mxu0 0.0
        %6682 = vmatpush1.msra.mxu0 0.0
        %6683 = vmatprep.subr.mxu0 0.0
        %6684 = vmatpush1.msra.mxu0 0.0
        %6685 = vmatprep.subr.mxu0 0.0
        %6686 = vmatpush1.msra.mxu0 0.0
        %6687 = vmatprep.subr.mxu0 0.0
        %6688 = vmatpush1.msra.mxu0 0.0
        %6689 = vmatprep.subr.mxu0 0.0
        %6690 = vmatpush1.msra.mxu0 0.0
        %6691 = vmatprep.subr.mxu0 0.0
        %6692 = vmatpush1.msra.mxu0 0.0
        %6693 = vmatprep.subr.mxu0 0.0
        %6694 = vmatpush1.msra.mxu0 0.0
        %6695 = vmatprep.subr.mxu0 0.0
        %6696 = vmatpush1.msra.mxu0 0.0
        %6697 = vmatprep.subr.mxu0 0.0
        %6698 = vmatpush1.msra.mxu0 0.0
        %6699 = vmatprep.subr.mxu0 0.0
        %6700 = vmatpush1.msra.mxu0 0.0
        %6701 = vmatprep.subr.mxu0 0.0
        %6702 = vmatpush1.msra.mxu0 0.0
        %6703 = vmatprep.subr.mxu0 0.0
        %6704 = vmatpush1.msra.mxu0 0.0
        %6705 = vmatprep.subr.mxu0 0.0
        %6706 = vmatpush1.msra.mxu0 0.0
        %6707 = vmatprep.subr.mxu0 0.0
        %6708 = vmatpush1.msra.mxu0 0.0
        %6709 = vmatprep.subr.mxu0 0.0
        %6710 = vmatpush1.msra.mxu0 0.0
        %6711 = vmatprep.subr.mxu0 0.0
        %6712 = vmatpush1.msra.mxu0 0.0
        %6713 = vmatprep.subr.mxu0 0.0
        %6714 = vmatpush1.msra.mxu0 0.0
        %6715 = vmatprep.subr.mxu0 0.0
        %6716 = vmatpush1.msra.mxu0 0.0
        %6717 = vmatprep.subr.mxu0 0.0
        %6718 = vmatpush1.msra.mxu0 0.0
        %6719 = vmatprep.subr.mxu0 0.0
        %6720 = vmatpush1.msra.mxu0 0.0
        %6721 = vmatprep.subr.mxu0 0.0
        %6722 = vmatpush1.msra.mxu0 0.0
        %6723 = vmatprep.mubr.f32.mxu0 0.0
        %6724 = vmatmul.mubr.f32.gmra.mrb[0].mxu0 %v4844
        %v6725 = vpop.f32.mrb[0].mxu0
        %v6726 = vadd.f32 %v6657, %v6725
        %v6727 = vpop.f32.mrb[0].mxu0
        %6728 = vmatprep.mubr.f32.mxu0 0.0
        %6729 = vmatmul.mubr.f32.gmra.mrb[0].mxu0 %v4847
        %v6730 = vpop.f32.mrb[0].mxu0
        %v6731 = vadd.f32 %v6657, %v6730
        %v6732 = vpop.f32.mrb[0].mxu0
        %6733 = vdwg.mxu0
        %v6735 = vsel %vm1371, %v6550, 0
        %v6738 = vsel %vm1371, %v6555, 0
        %v6741 = vsel %vm1371, %v6638, 0
        %v6744 = vsel %vm1371, %v6643, 0
        %6746 = vmatprep.subr.mxu0 0.0
        %6747 = vmatpush1.xpose.msra.mxu0 %v6741
        %6748 = vmatprep.subr.mxu0 0.0
        %6749 = vmatpush1.xpose.msra.mxu0 %v6744
        %6750 = vmatprep.subr.mxu0 0.0
        %6751 = vmatpush1.xpose.msra.mxu0 0.0
        %6752 = vmatprep.subr.mxu0 0.0
        %6753 = vmatpush1.xpose.msra.mxu0 0.0
        %6754 = vmatprep.subr.mxu0 0.0
        %6755 = vmatpush1.xpose.msra.mxu0 0.0
        %6756 = vmatprep.subr.mxu0 0.0
        %6757 = vmatpush1.xpose.msra.mxu0 0.0
        %6758 = vmatprep.subr.mxu0 0.0
        %6759 = vmatpush1.xpose.msra.mxu0 0.0
        %6760 = vmatprep.subr.mxu0 0.0
        %6761 = vmatpush1.xpose.msra.mxu0 0.0
        %6762 = vmatprep.subr.mxu0 0.0
        %6763 = vmatpush1.xpose.msra.mxu0 0.0
        %6764 = vmatprep.subr.mxu0 0.0
        %6765 = vmatpush1.xpose.msra.mxu0 0.0
        %6766 = vmatprep.subr.mxu0 0.0
        %6767 = vmatpush1.xpose.msra.mxu0 0.0
        %6768 = vmatprep.subr.mxu0 0.0
        %6769 = vmatpush1.xpose.msra.mxu0 0.0
        %6770 = vmatprep.subr.mxu0 0.0
        %6771 = vmatpush1.xpose.msra.mxu0 0.0
        %6772 = vmatprep.subr.mxu0 0.0
        %6773 = vmatpush1.xpose.msra.mxu0 0.0
        %6774 = vmatprep.subr.mxu0 0.0
        %6775 = vmatpush1.xpose.msra.mxu0 0.0
        %6776 = vmatprep.subr.mxu0 0.0
        %6777 = vmatpush1.xpose.msra.mxu0 0.0
        %6778 = vmatprep.subr.mxu0 0.0
        %6779 = vmatpush1.xpose.msra.mxu0 0.0
        %6780 = vmatprep.subr.mxu0 0.0
        %6781 = vmatpush1.xpose.msra.mxu0 0.0
        %6782 = vmatprep.subr.mxu0 0.0
        %6783 = vmatpush1.xpose.msra.mxu0 0.0
        %6784 = vmatprep.subr.mxu0 0.0
        %6785 = vmatpush1.xpose.msra.mxu0 0.0
        %6786 = vmatprep.subr.mxu0 0.0
        %6787 = vmatpush1.xpose.msra.mxu0 0.0
        %6788 = vmatprep.subr.mxu0 0.0
        %6789 = vmatpush1.xpose.msra.mxu0 0.0
        %6790 = vmatprep.subr.mxu0 0.0
        %6791 = vmatpush1.xpose.msra.mxu0 0.0
        %6792 = vmatprep.subr.mxu0 0.0
        %6793 = vmatpush1.xpose.msra.mxu0 0.0
        %6794 = vmatprep.subr.mxu0 0.0
        %6795 = vmatpush1.xpose.msra.mxu0 0.0
        %6796 = vmatprep.subr.mxu0 0.0
        %6797 = vmatpush1.xpose.msra.mxu0 0.0
        %6798 = vmatprep.subr.mxu0 0.0
        %6799 = vmatpush1.xpose.msra.mxu0 0.0
        %6800 = vmatprep.subr.mxu0 0.0
        %6801 = vmatpush1.xpose.msra.mxu0 0.0
        %6802 = vmatprep.subr.mxu0 0.0
        %6803 = vmatpush1.xpose.msra.mxu0 0.0
        %6804 = vmatprep.subr.mxu0 0.0
        %6805 = vmatpush1.xpose.msra.mxu0 0.0
        %6806 = vmatprep.subr.mxu0 0.0
        %6807 = vmatpush1.xpose.msra.mxu0 0.0
        %6808 = vmatprep.subr.mxu0 0.0
        %6809 = vmatpush1.xpose.msra.mxu0 0.0
        %6810 = vmatprep.mubr.f32.mxu0 0.0
        %6811 = vmatmul.mubr.f32.gmra.mrb[0].mxu0 %v6735
        %v6812 = vpop.f32.mrb[0].mxu0
        %v6813 = vadd.f32 0.0, %v6812
        %v6814 = vpop.f32.mrb[0].mxu0
        %6815 = vmatprep.mubr.f32.mxu0 0.0
        %6816 = vmatmul.mubr.f32.gmra.mrb[0].mxu0 %v6738
        %v6817 = vpop.f32.mrb[0].mxu0
        %v6818 = vadd.f32 0.0, %v6817
        %v6819 = vpop.f32.mrb[0].mxu0
        %6820 = vdwg.mxu0
        %v6821 = vmul.f32 %v6813, 0.35355338
        %v6822 = vmul.f32 %v6818, 0.35355338
        %v6823 = vsel %vm2253, %v6821, -1e+30
        %v6824 = vsel %vm2254, %v6822, -1e+30
        %v6825 = vsel %vm2657, %v6823, -inf
        %6826 = vmax.xlane.f32.xlu0 %v6825
        %v6827 = vpop.xlane.xlu0 %6826
        %v6828 = vsel %vm2661, %v6824, -inf
        %6829 = vmax.xlane.f32.xlu0 %v6828
        %v6830 = vpop.xlane.xlu0 %6829
        %v6831 = vsub.f32 %v6823, %v6827
        %v6832 = vsub.f32 %v6824, %v6830
        %v6833 = vmul.f32 %v6831, 1.442695
        %v6834 = vpow.pop %v6833
        %v6835 = vmul.f32 %v6832, 1.442695
        %v6836 = vpow.pop %v6835
        %v6837 = vsel %vm2657, %v6834, 0.0
        %6838 = vadd.xlane.f32.xlu0 %v6837
        %v6839 = vpop.xlane.xlu0 %6838
        %v6840 = vsel %vm2661, %v6836, 0.0
        %6841 = vadd.xlane.f32.xlu0 %v6840
        %v6842 = vpop.xlane.xlu0 %6841
        %v6843 = vrcp.pop %v6839
        %v6844 = vmul.f32 %v6834, %v6843
        %v6845 = vrcp.pop %v6842
        %v6846 = vmul.f32 %v6836, %v6845
        %v6848 = vsel %vm2657, %v6844, 0
        %v6851 = vsel %vm2657, %v6846, 0
        %v6854 = vsel %vm1993, %v6731, 0
        %6856 = vmatprep.subr.mxu0 0.0
        %6857 = vmatpush1.msra.mxu0 %v6726
        %6858 = vmatprep.subr.mxu0 0.0
        %6859 = vmatpush1.msra.mxu0 %v6854
        %6860 = vmatprep.subr.mxu0 0.0
        %6861 = vmatpush1.msra.mxu0 0.0
        %6862 = vmatprep.subr.mxu0 0.0
        %6863 = vmatpush1.msra.mxu0 0.0
        %6864 = vmatprep.subr.mxu0 0.0
        %6865 = vmatpush1.msra.mxu0 0.0
        %6866 = vmatprep.subr.mxu0 0.0
        %6867 = vmatpush1.msra.mxu0 0.0
        %6868 = vmatprep.subr.mxu0 0.0
        %6869 = vmatpush1.msra.mxu0 0.0
        %6870 = vmatprep.subr.mxu0 0.0
        %6871 = vmatpush1.msra.mxu0 0.0
        %6872 = vmatprep.subr.mxu0 0.0
        %6873 = vmatpush1.msra.mxu0 0.0
        %6874 = vmatprep.subr.mxu0 0.0
        %6875 = vmatpush1.msra.mxu0 0.0
        %6876 = vmatprep.subr.mxu0 0.0
        %6877 = vmatpush1.msra.mxu0 0.0
        %6878 = vmatprep.subr.mxu0 0.0
        %6879 = vmatpush1.msra.mxu0 0.0
        %6880 = vmatprep.subr.mxu0 0.0
        %6881 = vmatpush1.msra.mxu0 0.0
        %6882 = vmatprep.subr.mxu0 0.0
        %6883 = vmatpush1.msra.mxu0 0.0
        %6884 = vmatprep.subr.mxu0 0.0
        %6885 = vmatpush1.msra.mxu0 0.0
        %6886 = vmatprep.subr.mxu0 0.0
        %6887 = vmatpush1.msra.mxu0 0.0
        %6888 = vmatprep.subr.mxu0 0.0
        %6889 = vmatpush1.msra.mxu0 0.0
        %6890 = vmatprep.subr.mxu0 0.0
        %6891 = vmatpush1.msra.mxu0 0.0
        %6892 = vmatprep.subr.mxu0 0.0
        %6893 = vmatpush1.msra.mxu0 0.0
        %6894 = vmatprep.subr.mxu0 0.0
        %6895 = vmatpush1.msra.mxu0 0.0
        %6896 = vmatprep.subr.mxu0 0.0
        %6897 = vmatpush1.msra.mxu0 0.0
        %6898 = vmatprep.subr.mxu0 0.0
        %6899 = vmatpush1.msra.mxu0 0.0
        %6900 = vmatprep.subr.mxu0 0.0
        %6901 = vmatpush1.msra.mxu0 0.0
        %6902 = vmatprep.subr.mxu0 0.0
        %6903 = vmatpush1.msra.mxu0 0.0
        %6904 = vmatprep.subr.mxu0 0.0
        %6905 = vmatpush1.msra.mxu0 0.0
        %6906 = vmatprep.subr.mxu0 0.0
        %6907 = vmatpush1.msra.mxu0 0.0
        %6908 = vmatprep.subr.mxu0 0.0
        %6909 = vmatpush1.msra.mxu0 0.0
        %6910 = vmatprep.subr.mxu0 0.0
        %6911 = vmatpush1.msra.mxu0 0.0
        %6912 = vmatprep.subr.mxu0 0.0
        %6913 = vmatpush1.msra.mxu0 0.0
        %6914 = vmatprep.subr.mxu0 0.0
        %6915 = vmatpush1.msra.mxu0 0.0
        %6916 = vmatprep.subr.mxu0 0.0
        %6917 = vmatpush1.msra.mxu0 0.0
        %6918 = vmatprep.subr.mxu0 0.0
        %6919 = vmatpush1.msra.mxu0 0.0
        %6920 = vmatprep.mubr.f32.mxu0 0.0
        %6921 = vmatmul.mubr.f32.gmra.mrb[0].mxu0 %v6848
        %v6922 = vpop.f32.mrb[0].mxu0
        %v6923 = vadd.f32 0.0, %v6922
        %v6924 = vpop.f32.mrb[0].mxu0
        %6925 = vmatprep.mubr.f32.mxu0 0.0
        %6926 = vmatmul.mubr.f32.gmra.mrb[0].mxu0 %v6851
        %v6927 = vpop.f32.mrb[0].mxu0
        %v6928 = vadd.f32 0.0, %v6927
        %v6929 = vpop.f32.mrb[0].mxu0
        %6930 = vdwg.mxu0
        %s6931 = scalar_lea.vmem [#allocation8], 56
        %v6932 = vld [vmem:[%s6931] sm:$0xff]
        %v6934 = vsel %vm1371, %v6923, 0
        %v6937 = vsel %vm1371, %v6928, 0
        %6939 = vmatprep.subr.mxu0 0.0
        %6940 = vmatpush1.msra.mxu0 %v6932
        %6941 = vmatprep.subr.mxu0 0.0
        %6942 = vmatpush1.msra.mxu0 0.0
        %6943 = vmatprep.subr.mxu0 0.0
        %6944 = vmatpush1.msra.mxu0 0.0
        %6945 = vmatprep.subr.mxu0 0.0
        %6946 = vmatpush1.msra.mxu0 0.0
        %6947 = vmatprep.subr.mxu0 0.0
        %6948 = vmatpush1.msra.mxu0 0.0
        %6949 = vmatprep.subr.mxu0 0.0
        %6950 = vmatpush1.msra.mxu0 0.0
        %6951 = vmatprep.subr.mxu0 0.0
        %6952 = vmatpush1.msra.mxu0 0.0
        %6953 = vmatprep.subr.mxu0 0.0
        %6954 = vmatpush1.msra.mxu0 0.0
        %6955 = vmatprep.subr.mxu0 0.0
        %6956 = vmatpush1.msra.mxu0 0.0
        %6957 = vmatprep.subr.mxu0 0.0
        %6958 = vmatpush1.msra.mxu0 0.0
        %6959 = vmatprep.subr.mxu0 0.0
        %6960 = vmatpush1.msra.mxu0 0.0
        %6961 = vmatprep.subr.mxu0 0.0
        %6962 = vmatpush1.msra.mxu0 0.0
        %6963 = vmatprep.subr.mxu0 0.0
        %6964 = vmatpush1.msra.mxu0 0.0
        %6965 = vmatprep.subr.mxu0 0.0
        %6966 = vmatpush1.msra.mxu0 0.0
        %6967 = vmatprep.subr.mxu0 0.0
        %6968 = vmatpush1.msra.mxu0 0.0
        %6969 = vmatprep.subr.mxu0 0.0
        %6970 = vmatpush1.msra.mxu0 0.0
        %6971 = vmatprep.subr.mxu0 0.0
        %6972 = vmatpush1.msra.mxu0 0.0
        %6973 = vmatprep.subr.mxu0 0.0
        %6974 = vmatpush1.msra.mxu0 0.0
        %6975 = vmatprep.subr.mxu0 0.0
        %6976 = vmatpush1.msra.mxu0 0.0
        %6977 = vmatprep.subr.mxu0 0.0
        %6978 = vmatpush1.msra.mxu0 0.0
        %6979 = vmatprep.subr.mxu0 0.0
        %6980 = vmatpush1.msra.mxu0 0.0
        %6981 = vmatprep.subr.mxu0 0.0
        %6982 = vmatpush1.msra.mxu0 0.0
        %6983 = vmatprep.subr.mxu0 0.0
        %6984 = vmatpush1.msra.mxu0 0.0
        %6985 = vmatprep.subr.mxu0 0.0
        %6986 = vmatpush1.msra.mxu0 0.0
        %6987 = vmatprep.subr.mxu0 0.0
        %6988 = vmatpush1.msra.mxu0 0.0
        %6989 = vmatprep.subr.mxu0 0.0
        %6990 = vmatpush1.msra.mxu0 0.0
        %6991 = vmatprep.subr.mxu0 0.0
        %6992 = vmatpush1.msra.mxu0 0.0
        %6993 = vmatprep.subr.mxu0 0.0
        %6994 = vmatpush1.msra.mxu0 0.0
        %6995 = vmatprep.subr.mxu0 0.0
        %6996 = vmatpush1.msra.mxu0 0.0
        %6997 = vmatprep.subr.mxu0 0.0
        %6998 = vmatpush1.msra.mxu0 0.0
        %6999 = vmatprep.subr.mxu0 0.0
        %7000 = vmatpush1.msra.mxu0 0.0
        %7001 = vmatprep.subr.mxu0 0.0
        %7002 = vmatpush1.msra.mxu0 0.0
        %7003 = vmatprep.mubr.f32.mxu0 0.0
        %7004 = vmatmul.mubr.f32.gmra.mrb[0].mxu0 %v6934
        %v7005 = vpop.f32.mrb[0].mxu0
        %v7006 = vadd.f32 0.0, %v7005
        %v7007 = vpop.f32.mrb[0].mxu0
        %7008 = vmatprep.mubr.f32.mxu0 0.0
        %7009 = vmatmul.mubr.f32.gmra.mrb[0].mxu0 %v6937
        %v7010 = vpop.f32.mrb[0].mxu0
        %v7011 = vadd.f32 0.0, %v7010
        %v7012 = vpop.f32.mrb[0].mxu0
        %7013 = vdwg.mxu0
        %v7014 = vadd.f32 %v6468, %v7006
        %v7015 = vadd.f32 %v6469, %v7011
        %v7016 = vadd.f32 %v4782, %v7014
        %v7017 = vadd.f32 %v4783, %v7015
        %s7018 = scalar_lea.vmem %s51, 1
        %v7019 = vld [vmem:[%s7018] sm:$0x1]
        %v7021 = vlaneseq
        %v7022 = vshrl.u32 %v7021, 7
        %v7023 = vsub.s32 0, %v7022
        %v7024 = vrot.slane %v7019, %v7023
        %v7026 = vadd.f32 %v7016, %v7024
        %v7027 = vadd.f32 %v7017, %v7024
        %s7028 = scalar_lea.vmem %s53, 1
        %v7029 = vld [vmem:[%s7028] sm:$0x1]
        %s7030 = scalar_lea.vmem %s55, 1
        %v7031 = vld [vmem:[%s7030] sm:$0x1]
        %v7032 = vsel %vm2257, %v7026, 0.0
        %7033 = vadd.xlane.f32.xlu0 %v7032
        %v7034 = vpop.xlane.xlu0 %7033
        %v7035 = vsel %vm2261, %v7027, 0.0
        %7036 = vadd.xlane.f32.xlu0 %v7035
        %v7037 = vpop.xlane.xlu0 %7036
        %v7038 = vmul.f32 %v7034, %v2265
        %v7039 = vmul.f32 %v7037, %v2265
        %v7040 = vsub.f32 %v7026, %v7038
        %v7041 = vsub.f32 %v7027, %v7039
        %v7042 = vmul.f32 %v7040, %v7040
        %v7043 = vmul.f32 %v7041, %v7041
        %v7044 = vsel %vm2257, %v7042, 0.0
        %7045 = vadd.xlane.f32.xlu0 %v7044
        %v7046 = vpop.xlane.xlu0 %7045
        %v7047 = vsel %vm2261, %v7043, 0.0
        %7048 = vadd.xlane.f32.xlu0 %v7047
        %v7049 = vpop.xlane.xlu0 %7048
        %v7050 = vmul.f32 %v7046, %v2265
        %v7051 = vmul.f32 %v7049, %v2265
        %v7052 = vadd.f32 %v7050, 1e-05
        %v7053 = vadd.f32 %v7051, 1e-05
        %v7054 = vrsqrt.pop %v7052
        %v7055 = vrsqrt.pop %v7053
        %v7056 = vmul.f32 %v7040, %v7054
        %v7057 = vmul.f32 %v7041, %v7055
        %v7059 = vlaneseq
        %v7060 = vshrl.u32 %v7059, 7
        %v7061 = vsub.s32 0, %v7060
        %v7062 = vrot.slane %v7029, %v7061
        %v7064 = vmul.f32 %v7056, %v7062
        %v7065 = vmul.f32 %v7057, %v7062
        %v7067 = vlaneseq
        %v7068 = vshrl.u32 %v7067, 7
        %v7069 = vsub.s32 0, %v7068
        %v7070 = vrot.slane %v7031, %v7069
        %v7072 = vadd.f32 %v7064, %v7070
        %v7073 = vadd.f32 %v7065, %v7070
        %s7074 = scalar_lea.vmem [#allocation10], 32
        %v7075 = vld [vmem:[%s7074] sm:$0xff]
        %v7076 = vld [vmem:[%s7074 + $0x8] sm:$0xff]
        %v7077 = vld [vmem:[%s7074 + $0x10] sm:$0xff]
        %v7078 = vld [vmem:[%s7074 + $0x18] sm:$0xff]
        %s7079 = scalar_lea.vmem %s59, 1
        %v7080 = vld [vmem:[%s7079] sm:$0x1]
        %v7082 = vlaneseq
        %v7083 = vshrl.u32 %v7082, 7
        %v7084 = vsub.s32 0, %v7083
        %v7085 = vrot.slane %v7080, %v7084
        %v7088 = vsel %vm2257, %v7072, 0
        %v7091 = vsel %vm2257, %v7073, 0
        %7093 = vmatprep.subr.mxu0 0.0
        %7094 = vmatpush1.msra.mxu0 %v7075
        %7095 = vmatprep.subr.mxu0 0.0
        %7096 = vmatpush1.msra.mxu0 %v7076
        %7097 = vmatprep.subr.mxu0 0.0
        %7098 = vmatpush1.msra.mxu0 %v7077
        %7099 = vmatprep.subr.mxu0 0.0
        %7100 = vmatpush1.msra.mxu0 %v7078
        %7101 = vmatprep.subr.mxu0 0.0
        %7102 = vmatpush1.msra.mxu0 0.0
        %7103 = vmatprep.subr.mxu0 0.0
        %7104 = vmatpush1.msra.mxu0 0.0
        %7105 = vmatprep.subr.mxu0 0.0
        %7106 = vmatpush1.msra.mxu0 0.0
        %7107 = vmatprep.subr.mxu0 0.0
        %7108 = vmatpush1.msra.mxu0 0.0
        %7109 = vmatprep.subr.mxu0 0.0
        %7110 = vmatpush1.msra.mxu0 0.0
        %7111 = vmatprep.subr.mxu0 0.0
        %7112 = vmatpush1.msra.mxu0 0.0
        %7113 = vmatprep.subr.mxu0 0.0
        %7114 = vmatpush1.msra.mxu0 0.0
        %7115 = vmatprep.subr.mxu0 0.0
        %7116 = vmatpush1.msra.mxu0 0.0
        %7117 = vmatprep.subr.mxu0 0.0
        %7118 = vmatpush1.msra.mxu0 0.0
        %7119 = vmatprep.subr.mxu0 0.0
        %7120 = vmatpush1.msra.mxu0 0.0
        %7121 = vmatprep.subr.mxu0 0.0
        %7122 = vmatpush1.msra.mxu0 0.0
        %7123 = vmatprep.subr.mxu0 0.0
        %7124 = vmatpush1.msra.mxu0 0.0
        %7125 = vmatprep.subr.mxu0 0.0
        %7126 = vmatpush1.msra.mxu0 0.0
        %7127 = vmatprep.subr.mxu0 0.0
        %7128 = vmatpush1.msra.mxu0 0.0
        %7129 = vmatprep.subr.mxu0 0.0
        %7130 = vmatpush1.msra.mxu0 0.0
        %7131 = vmatprep.subr.mxu0 0.0
        %7132 = vmatpush1.msra.mxu0 0.0
        %7133 = vmatprep.subr.mxu0 0.0
        %7134 = vmatpush1.msra.mxu0 0.0
        %7135 = vmatprep.subr.mxu0 0.0
        %7136 = vmatpush1.msra.mxu0 0.0
        %7137 = vmatprep.subr.mxu0 0.0
        %7138 = vmatpush1.msra.mxu0 0.0
        %7139 = vmatprep.subr.mxu0 0.0
        %7140 = vmatpush1.msra.mxu0 0.0
        %7141 = vmatprep.subr.mxu0 0.0
        %7142 = vmatpush1.msra.mxu0 0.0
        %7143 = vmatprep.subr.mxu0 0.0
        %7144 = vmatpush1.msra.mxu0 0.0
        %7145 = vmatprep.subr.mxu0 0.0
        %7146 = vmatpush1.msra.mxu0 0.0
        %7147 = vmatprep.subr.mxu0 0.0
        %7148 = vmatpush1.msra.mxu0 0.0
        %7149 = vmatprep.subr.mxu0 0.0
        %7150 = vmatpush1.msra.mxu0 0.0
        %7151 = vmatprep.subr.mxu0 0.0
        %7152 = vmatpush1.msra.mxu0 0.0
        %7153 = vmatprep.subr.mxu0 0.0
        %7154 = vmatpush1.msra.mxu0 0.0
        %7155 = vmatprep.subr.mxu0 0.0
        %7156 = vmatpush1.msra.mxu0 0.0
        %7157 = vmatprep.mubr.f32.mxu0 0.0
        %7158 = vmatmul.mubr.f32.gmra.mrb[0].mxu0 %v7088
        %v7159 = vpop.f32.mrb[0].mxu0
        %v7160 = vadd.f32 %v7085, %v7159
        %v7161 = vpop.f32.mrb[0].mxu0
        %7162 = vmatprep.mubr.f32.mxu0 0.0
        %7163 = vmatmul.mubr.f32.gmra.mrb[0].mxu0 %v7091
        %v7164 = vpop.f32.mrb[0].mxu0
        %v7165 = vadd.f32 %v7085, %v7164
        %v7166 = vpop.f32.mrb[0].mxu0
        %7167 = vdwg.mxu0
        %v7168 = vmul.f32 %v7160, 0.70710677
        %v7169 = vmul.f32 %v7165, 0.70710677
        %v7170 = vand.u32 2147483647, %v7168
        %v7171 = vand.u32 2147483647, %v7169
        %v7172 = vmul.f32 %v7170, 0.3275911
        %v7173 = vmul.f32 %v7171, 0.3275911
        %v7174 = vadd.f32 %v7172, 1.0
        %v7175 = vadd.f32 %v7173, 1.0
        %v7176 = vrcp.pop %v7174
        %v7177 = vmul.f32 1.0, %v7176
        %v7178 = vrcp.pop %v7175
        %v7179 = vmul.f32 1.0, %v7178
        %v7180 = vmul.f32 %v7177, 1.0614054
        %v7181 = vmul.f32 %v7179, 1.0614054
        %v7182 = vadd.f32 %v7180, -1.4531521
        %v7183 = vadd.f32 %v7181, -1.4531521
        %v7184 = vmul.f32 %v7177, %v7182
        %v7185 = vmul.f32 %v7179, %v7183
        %v7186 = vadd.f32 %v7184, 1.4214138
        %v7187 = vadd.f32 %v7185, 1.4214138
        %v7188 = vmul.f32 %v7177, %v7186
        %v7189 = vmul.f32 %v7179, %v7187
        %v7190 = vadd.f32 %v7188, -0.28449672
        %v7191 = vadd.f32 %v7189, -0.28449672
        %v7192 = vmul.f32 %v7177, %v7190
        %v7193 = vmul.f32 %v7179, %v7191
        %v7194 = vadd.f32 %v7192, 0.2548296
        %v7195 = vadd.f32 %v7193, 0.2548296
        %v7196 = vmul.f32 %v7177, %v7194
        %v7197 = vmul.f32 %v7179, %v7195
        %v7198 = vsub.f32 0.0, %v7170
        %v7199 = vsub.f32 0.0, %v7171
        %v7200 = vmul.f32 %v7198, %v7170
        %v7201 = vmul.f32 %v7199, %v7171
        %v7202 = vmul.f32 %v7200, 1.442695
        %v7203 = vpow.pop %v7202
        %v7204 = vmul.f32 %v7201, 1.442695
        %v7205 = vpow.pop %v7204
        %v7206 = vmul.f32 %v7196, %v7203
        %v7207 = vmul.f32 %v7197, %v7205
        %v7208 = vsub.f32 1.0, %v7206
        %v7209 = vsub.f32 1.0, %v7207
        %vm7210 = vcmp.ge.f32.partialorder %v7168, 0.0
        %vm7211 = vcmp.ge.f32.partialorder %v7169, 0.0
        %v7212 = vsub.f32 0.0, %v7208
        %v7213 = vsub.f32 0.0, %v7209
        %v7214 = vsel %vm7210, %v7208, %v7212
        %v7215 = vsel %vm7211, %v7209, %v7213
        %v7216 = vmul.f32 %v7160, 0.5
        %v7217 = vmul.f32 %v7165, 0.5
        %v7218 = vadd.f32 %v7214, 1.0
        %v7219 = vadd.f32 %v7215, 1.0
        %v7220 = vmul.f32 %v7216, %v7218
        %v7221 = vmul.f32 %v7217, %v7219
        %s7222 = scalar_lea.vmem %s61, 128
        %v7223 = vld [vmem:[%s7222] sm:$0xff]
        %v7224 = vld [vmem:[%s7222 + $0x8] sm:$0xff]
        %v7225 = vld [vmem:[%s7222 + $0x10] sm:$0xff]
        %v7226 = vld [vmem:[%s7222 + $0x18] sm:$0xff]
        %v7227 = vld [vmem:[%s7222 + $0x20] sm:$0xff]
        %v7228 = vld [vmem:[%s7222 + $0x28] sm:$0xff]
        %v7229 = vld [vmem:[%s7222 + $0x30] sm:$0xff]
        %v7230 = vld [vmem:[%s7222 + $0x38] sm:$0xff]
        %v7231 = vld [vmem:[%s7222 + $0x40] sm:$0xff]
        %v7232 = vld [vmem:[%s7222 + $0x48] sm:$0xff]
        %v7233 = vld [vmem:[%s7222 + $0x50] sm:$0xff]
        %v7234 = vld [vmem:[%s7222 + $0x58] sm:$0xff]
        %v7235 = vld [vmem:[%s7222 + $0x60] sm:$0xff]
        %v7236 = vld [vmem:[%s7222 + $0x68] sm:$0xff]
        %v7237 = vld [vmem:[%s7222 + $0x70] sm:$0xff]
        %v7238 = vld [vmem:[%s7222 + $0x78] sm:$0xff]
        %s7239 = scalar_lea.vmem %s63, 1
        %v7240 = vld [vmem:[%s7239] sm:$0x1]
        %v7242 = vlaneseq
        %v7243 = vshrl.u32 %v7242, 7
        %v7244 = vsub.s32 0, %v7243
        %v7245 = vrot.slane %v7240, %v7244
        %7247 = vmatprep.subr.mxu0 0.0
        %7248 = vmatpush1.msra.mxu0 %v7223
        %7249 = vmatprep.subr.mxu0 0.0
        %7250 = vmatpush1.msra.mxu0 %v7224
        %7251 = vmatprep.subr.mxu0 0.0
        %7252 = vmatpush1.msra.mxu0 %v7225
        %7253 = vmatprep.subr.mxu0 0.0
        %7254 = vmatpush1.msra.mxu0 %v7226
        %7255 = vmatprep.subr.mxu0 0.0
        %7256 = vmatpush1.msra.mxu0 %v7227
        %7257 = vmatprep.subr.mxu0 0.0
        %7258 = vmatpush1.msra.mxu0 %v7228
        %7259 = vmatprep.subr.mxu0 0.0
        %7260 = vmatpush1.msra.mxu0 %v7229
        %7261 = vmatprep.subr.mxu0 0.0
        %7262 = vmatpush1.msra.mxu0 %v7230
        %7263 = vmatprep.subr.mxu0 0.0
        %7264 = vmatpush1.msra.mxu0 %v7231
        %7265 = vmatprep.subr.mxu0 0.0
        %7266 = vmatpush1.msra.mxu0 %v7232
        %7267 = vmatprep.subr.mxu0 0.0
        %7268 = vmatpush1.msra.mxu0 %v7233
        %7269 = vmatprep.subr.mxu0 0.0
        %7270 = vmatpush1.msra.mxu0 %v7234
        %7271 = vmatprep.subr.mxu0 0.0
        %7272 = vmatpush1.msra.mxu0 %v7235
        %7273 = vmatprep.subr.mxu0 0.0
        %7274 = vmatpush1.msra.mxu0 %v7236
        %7275 = vmatprep.subr.mxu0 0.0
        %7276 = vmatpush1.msra.mxu0 %v7237
        %7277 = vmatprep.subr.mxu0 0.0
        %7278 = vmatpush1.msra.mxu0 %v7238
        %7279 = vmatprep.subr.mxu0 0.0
        %7280 = vmatpush1.msra.mxu0 0.0
        %7281 = vmatprep.subr.mxu0 0.0
        %7282 = vmatpush1.msra.mxu0 0.0
        %7283 = vmatprep.subr.mxu0 0.0
        %7284 = vmatpush1.msra.mxu0 0.0
        %7285 = vmatprep.subr.mxu0 0.0
        %7286 = vmatpush1.msra.mxu0 0.0
        %7287 = vmatprep.subr.mxu0 0.0
        %7288 = vmatpush1.msra.mxu0 0.0
        %7289 = vmatprep.subr.mxu0 0.0
        %7290 = vmatpush1.msra.mxu0 0.0
        %7291 = vmatprep.subr.mxu0 0.0
        %7292 = vmatpush1.msra.mxu0 0.0
        %7293 = vmatprep.subr.mxu0 0.0
        %7294 = vmatpush1.msra.mxu0 0.0
        %7295 = vmatprep.subr.mxu0 0.0
        %7296 = vmatpush1.msra.mxu0 0.0
        %7297 = vmatprep.subr.mxu0 0.0
        %7298 = vmatpush1.msra.mxu0 0.0
        %7299 = vmatprep.subr.mxu0 0.0
        %7300 = vmatpush1.msra.mxu0 0.0
        %7301 = vmatprep.subr.mxu0 0.0
        %7302 = vmatpush1.msra.mxu0 0.0
        %7303 = vmatprep.subr.mxu0 0.0
        %7304 = vmatpush1.msra.mxu0 0.0
        %7305 = vmatprep.subr.mxu0 0.0
        %7306 = vmatpush1.msra.mxu0 0.0
        %7307 = vmatprep.subr.mxu0 0.0
        %7308 = vmatpush1.msra.mxu0 0.0
        %7309 = vmatprep.subr.mxu0 0.0
        %7310 = vmatpush1.msra.mxu0 0.0
        %7311 = vmatprep.mubr.f32.mxu0 0.0
        %7312 = vmatmul.mubr.f32.gmra.mrb[0].mxu0 %v7220
        %v7313 = vpop.f32.mrb[0].mxu0
        %v7314 = vadd.f32 %v7245, %v7313
        %v7315 = vpop.f32.mrb[0].mxu0
        %7316 = vmatprep.mubr.f32.mxu0 0.0
        %7317 = vmatmul.mubr.f32.gmra.mrb[0].mxu0 %v7221
        %v7318 = vpop.f32.mrb[0].mxu0
        %v7319 = vadd.f32 %v7245, %v7318
        %v7320 = vpop.f32.mrb[0].mxu0
        %7321 = vdwg.mxu0
        %v7322 = vadd.f32 %v7026, %v7314
        %v7323 = vadd.f32 %v7027, %v7319
        %v7324 = vld [vmem:[%s65] sm:$0x1]
        %v7325 = vld [vmem:[%s67] sm:$0x1]
        %v7326 = vsel %vm2257, %v7322, 0.0
        %7327 = vadd.xlane.f32.xlu0 %v7326
        %v7328 = vpop.xlane.xlu0 %7327
        %v7329 = vsel %vm2261, %v7323, 0.0
        %7330 = vadd.xlane.f32.xlu0 %v7329
        %v7331 = vpop.xlane.xlu0 %7330
        %v7332 = vmul.f32 %v7328, %v2265
        %v7333 = vmul.f32 %v7331, %v2265
        %v7334 = vsub.f32 %v7322, %v7332
        %v7335 = vsub.f32 %v7323, %v7333
        %v7336 = vmul.f32 %v7334, %v7334
        %v7337 = vmul.f32 %v7335, %v7335
        %v7338 = vsel %vm2257, %v7336, 0.0
        %7339 = vadd.xlane.f32.xlu0 %v7338
        %v7340 = vpop.xlane.xlu0 %7339
        %v7341 = vsel %vm2261, %v7337, 0.0
        %7342 = vadd.xlane.f32.xlu0 %v7341
        %v7343 = vpop.xlane.xlu0 %7342
        %v7344 = vmul.f32 %v7340, %v2265
        %v7345 = vmul.f32 %v7343, %v2265
        %v7346 = vadd.f32 %v7344, 1e-05
        %v7347 = vadd.f32 %v7345, 1e-05
        %v7348 = vrsqrt.pop %v7346
        %v7349 = vrsqrt.pop %v7347
        %v7350 = vmul.f32 %v7334, %v7348
        %v7351 = vmul.f32 %v7335, %v7349
        %v7353 = vlaneseq
        %v7354 = vshrl.u32 %v7353, 7
        %v7355 = vsub.s32 0, %v7354
        %v7356 = vrot.slane %v7324, %v7355
        %v7358 = vmul.f32 %v7350, %v7356
        %v7359 = vmul.f32 %v7351, %v7356
        %v7361 = vlaneseq
        %v7362 = vshrl.u32 %v7361, 7
        %v7363 = vsub.s32 0, %v7362
        %v7364 = vrot.slane %v7325, %v7363
        %v7366 = vadd.f32 %v7358, %v7364
        %v7367 = vadd.f32 %v7359, %v7364
        %v7368 = vmul.u32 %v1966, 3
        %v7369 = vadd.s32 %v7368, 1
        %vm7370 = vcmp.eq.s32.totalorder %v1971, %v7369
        %v7371 = vsel %vm7370, 1, 0
        %v7372 = vcvt.s32.f32 %v7371
        %v7374 = vsel %vm2657, %v7372, 0
        %v7377 = vsel %vm1993, %v7367, 0
        %7379 = vmatprep.subr.mxu0 0.0
        %7380 = vmatpush1.msra.mxu0 %v7366
        %7381 = vmatprep.subr.mxu0 0.0
        %7382 = vmatpush1.msra.mxu0 %v7377
        %7383 = vmatprep.subr.mxu0 0.0
        %7384 = vmatpush1.msra.mxu0 0.0
        %7385 = vmatprep.subr.mxu0 0.0
        %7386 = vmatpush1.msra.mxu0 0.0
        %7387 = vmatprep.subr.mxu0 0.0
        %7388 = vmatpush1.msra.mxu0 0.0
        %7389 = vmatprep.subr.mxu0 0.0
        %7390 = vmatpush1.msra.mxu0 0.0
        %7391 = vmatprep.subr.mxu0 0.0
        %7392 = vmatpush1.msra.mxu0 0.0
        %7393 = vmatprep.subr.mxu0 0.0
        %7394 = vmatpush1.msra.mxu0 0.0
        %7395 = vmatprep.subr.mxu0 0.0
        %7396 = vmatpush1.msra.mxu0 0.0
        %7397 = vmatprep.subr.mxu0 0.0
        %7398 = vmatpush1.msra.mxu0 0.0
        %7399 = vmatprep.subr.mxu0 0.0
        %7400 = vmatpush1.msra.mxu0 0.0
        %7401 = vmatprep.subr.mxu0 0.0
        %7402 = vmatpush1.msra.mxu0 0.0
        %7403 = vmatprep.subr.mxu0 0.0
        %7404 = vmatpush1.msra.mxu0 0.0
        %7405 = vmatprep.subr.mxu0 0.0
        %7406 = vmatpush1.msra.mxu0 0.0
        %7407 = vmatprep.subr.mxu0 0.0
        %7408 = vmatpush1.msra.mxu0 0.0
        %7409 = vmatprep.subr.mxu0 0.0
        %7410 = vmatpush1.msra.mxu0 0.0
        %7411 = vmatprep.subr.mxu0 0.0
        %7412 = vmatpush1.msra.mxu0 0.0
        %7413 = vmatprep.subr.mxu0 0.0
        %7414 = vmatpush1.msra.mxu0 0.0
        %7415 = vmatprep.subr.mxu0 0.0
        %7416 = vmatpush1.msra.mxu0 0.0
        %7417 = vmatprep.subr.mxu0 0.0
        %7418 = vmatpush1.msra.mxu0 0.0
        %7419 = vmatprep.subr.mxu0 0.0
        %7420 = vmatpush1.msra.mxu0 0.0
        %7421 = vmatprep.subr.mxu0 0.0
        %7422 = vmatpush1.msra.mxu0 0.0
        %7423 = vmatprep.subr.mxu0 0.0
        %7424 = vmatpush1.msra.mxu0 0.0
        %7425 = vmatprep.subr.mxu0 0.0
        %7426 = vmatpush1.msra.mxu0 0.0
        %7427 = vmatprep.subr.mxu0 0.0
        %7428 = vmatpush1.msra.mxu0 0.0
        %7429 = vmatprep.subr.mxu0 0.0
        %7430 = vmatpush1.msra.mxu0 0.0
        %7431 = vmatprep.subr.mxu0 0.0
        %7432 = vmatpush1.msra.mxu0 0.0
        %7433 = vmatprep.subr.mxu0 0.0
        %7434 = vmatpush1.msra.mxu0 0.0
        %7435 = vmatprep.subr.mxu0 0.0
        %7436 = vmatpush1.msra.mxu0 0.0
        %7437 = vmatprep.subr.mxu0 0.0
        %7438 = vmatpush1.msra.mxu0 0.0
        %7439 = vmatprep.subr.mxu0 0.0
        %7440 = vmatpush1.msra.mxu0 0.0
        %7441 = vmatprep.subr.mxu0 0.0
        %7442 = vmatpush1.msra.mxu0 0.0
        %7443 = vmatprep.mubr.f32.mxu0 0.0
        %7444 = vmatmul.mubr.f32.gmra.mrb[0].mxu0 %v7374
        %v7445 = vpop.f32.mrb[0].mxu0
        %v7446 = vadd.f32 0.0, %v7445
        %v7447 = vpop.f32.mrb[0].mxu0
        %7448 = vdwg.mxu0
        %v7449 = vld [vmem:[#allocation11] sm:$0xff]
        %v7450 = vld [vmem:[#allocation11 + $0x8] sm:$0xff]
        %v7451 = vld [vmem:[#allocation11 + $0x10] sm:$0xff]
        %v7452 = vld [vmem:[#allocation11 + $0x18] sm:$0xff]
        %v7453 = vld [vmem:[#allocation11 + $0x20] sm:$0xff]
        %v7454 = vld [vmem:[#allocation11 + $0x28] sm:$0xff]
        %v7455 = vld [vmem:[#allocation11 + $0x30] sm:$0xff]
        %v7456 = vld [vmem:[#allocation11 + $0x38] sm:$0xff]
        %v7457 = vld [vmem:[%s71] sm:$0x3]
        %v7459 = vlaneseq
        %v7460 = vshrl.u32 %v7459, 7
        %v7461 = vsub.s32 0, %v7460
        %v7462 = vrot.slane %v7457, %v7461
        %v7463 = vlaneseq
        %v7464 = vshrl.u32 %v7463, 7
        %v7465 = vsub.s32 1, %v7464
        %v7466 = vrot.slane %v7457, %v7465
        %v7470 = vsel %vm2257, %v7446, 0
        %7472 = vmatprep.subr.mxu0 %v7450
        %7473 = vmatpush1.msra.mxu0 %v7449
        %7474 = vmatprep.subr.mxu0 %v7452
        %7475 = vmatpush1.msra.mxu0 %v7451
        %7476 = vmatprep.subr.mxu0 %v7454
        %7477 = vmatpush1.msra.mxu0 %v7453
        %7478 = vmatprep.subr.mxu0 %v7456
        %7479 = vmatpush1.msra.mxu0 %v7455
        %7480 = vmatprep.subr.mxu0 0.0
        %7481 = vmatpush1.msra.mxu0 0.0
        %7482 = vmatprep.subr.mxu0 0.0
        %7483 = vmatpush1.msra.mxu0 0.0
        %7484 = vmatprep.subr.mxu0 0.0
        %7485 = vmatpush1.msra.mxu0 0.0
        %7486 = vmatprep.subr.mxu0 0.0
        %7487 = vmatpush1.msra.mxu0 0.0
        %7488 = vmatprep.subr.mxu0 0.0
        %7489 = vmatpush1.msra.mxu0 0.0
        %7490 = vmatprep.subr.mxu0 0.0
        %7491 = vmatpush1.msra.mxu0 0.0
        %7492 = vmatprep.subr.mxu0 0.0
        %7493 = vmatpush1.msra.mxu0 0.0
        %7494 = vmatprep.subr.mxu0 0.0
        %7495 = vmatpush1.msra.mxu0 0.0
        %7496 = vmatprep.subr.mxu0 0.0
        %7497 = vmatpush1.msra.mxu0 0.0
        %7498 = vmatprep.subr.mxu0 0.0
        %7499 = vmatpush1.msra.mxu0 0.0
        %7500 = vmatprep.subr.mxu0 0.0
        %7501 = vmatpush1.msra.mxu0 0.0
        %7502 = vmatprep.subr.mxu0 0.0
        %7503 = vmatpush1.msra.mxu0 0.0
        %7504 = vmatprep.subr.mxu0 0.0
        %7505 = vmatpush1.msra.mxu0 0.0
        %7506 = vmatprep.subr.mxu0 0.0
        %7507 = vmatpush1.msra.mxu0 0.0
        %7508 = vmatprep.subr.mxu0 0.0
        %7509 = vmatpush1.msra.mxu0 0.0
        %7510 = vmatprep.subr.mxu0 0.0
        %7511 = vmatpush1.msra.mxu0 0.0
        %7512 = vmatprep.subr.mxu0 0.0
        %7513 = vmatpush1.msra.mxu0 0.0
        %7514 = vmatprep.subr.mxu0 0.0
        %7515 = vmatpush1.msra.mxu0 0.0
        %7516 = vmatprep.subr.mxu0 0.0
        %7517 = vmatpush1.msra.mxu0 0.0
        %7518 = vmatprep.subr.mxu0 0.0
        %7519 = vmatpush1.msra.mxu0 0.0
        %7520 = vmatprep.subr.mxu0 0.0
        %7521 = vmatpush1.msra.mxu0 0.0
        %7522 = vmatprep.subr.mxu0 0.0
        %7523 = vmatpush1.msra.mxu0 0.0
        %7524 = vmatprep.subr.mxu0 0.0
        %7525 = vmatpush1.msra.mxu0 0.0
        %7526 = vmatprep.subr.mxu0 0.0
        %7527 = vmatpush1.msra.mxu0 0.0
        %7528 = vmatprep.subr.mxu0 0.0
        %7529 = vmatpush1.msra.mxu0 0.0
        %7530 = vmatprep.subr.mxu0 0.0
        %7531 = vmatpush1.msra.mxu0 0.0
        %7532 = vmatprep.subr.mxu0 0.0
        %7533 = vmatpush1.msra.mxu0 0.0
        %7534 = vmatprep.subr.mxu0 0.0
        %7535 = vmatpush1.msra.mxu0 0.0
        %7536 = vmatprep.mubr.f32.mxu0 0.0
        %7537 = vmatmul.mubr.f32.gmra.mrb[0].mxu0 %v7470
        %v7538 = vpop.f32.mrb[0].mxu0
        %v7539 = vadd.f32 %v7462, %v7538
        %v7540 = vpop.f32.mrb[0].mxu0
        %v7541 = vadd.f32 %v7466, %v7540
        %7542 = vdwg.mxu0
        %v7543 = vmax.f32 %v7539, 0.0
        %v7544 = vmax.f32 %v7541, 0.0
        %v7545 = vld [vmem:[%s73] sm:$0xff]
        %v7546 = vld [vmem:[%s73 + $0x8] sm:$0xff]
        %v7547 = vld [vmem:[%s73 + $0x10] sm:$0xff]
        %v7548 = vld [vmem:[%s73 + $0x18] sm:$0xff]
        %v7549 = vld [vmem:[%s73 + $0x20] sm:$0xff]
        %v7550 = vld [vmem:[%s73 + $0x28] sm:$0xff]
        %v7551 = vld [vmem:[%s73 + $0x30] sm:$0xff]
        %v7552 = vld [vmem:[%s73 + $0x38] sm:$0xff]
        %v7553 = vld [vmem:[%s73 + $0x40] sm:$0xff]
        %v7554 = vld [vmem:[%s73 + $0x48] sm:$0xff]
        %v7555 = vld [vmem:[%s73 + $0x50] sm:$0xff]
        %v7556 = vld [vmem:[%s73 + $0x58] sm:$0xff]
        %v7557 = vld [vmem:[%s73 + $0x60] sm:$0xff]
        %v7558 = vld [vmem:[%s73 + $0x68] sm:$0xff]
        %v7559 = vld [vmem:[%s73 + $0x70] sm:$0xff]
        %v7560 = vld [vmem:[%s73 + $0x78] sm:$0xff]
        %v7561 = vld [vmem:[%s73 + $0x80] sm:$0xff]
        %v7562 = vld [vmem:[%s73 + $0x88] sm:$0xff]
        %v7563 = vld [vmem:[%s73 + $0x90] sm:$0xff]
        %v7564 = vld [vmem:[%s73 + $0x98] sm:$0xff]
        %v7565 = vld [vmem:[%s73 + $0xa0] sm:$0xff]
        %v7566 = vld [vmem:[%s73 + $0xa8] sm:$0xff]
        %v7567 = vld [vmem:[%s73 + $0xb0] sm:$0xff]
        %v7568 = vld [vmem:[%s73 + $0xb8] sm:$0xff]
        %v7569 = vld [vmem:[%s73 + $0xc0] sm:$0xff]
        %v7570 = vld [vmem:[%s73 + $0xc8] sm:$0xff]
        %v7571 = vld [vmem:[%s73 + $0xd0] sm:$0xff]
        %v7572 = vld [vmem:[%s73 + $0xd8] sm:$0xff]
        %v7573 = vld [vmem:[%s73 + $0xe0] sm:$0xff]
        %v7574 = vld [vmem:[%s73 + $0xe8] sm:$0xff]
        %v7575 = vld [vmem:[%s73 + $0xf0] sm:$0xff]
        %v7576 = vld [vmem:[%s73 + $0xf8] sm:$0xff]
        %v7577 = vld [vmem:[%s73 + $0x100] sm:$0xff]
        %v7578 = vld [vmem:[%s73 + $0x108] sm:$0xff]
        %v7579 = vld [vmem:[%s73 + $0x110] sm:$0xff]
        %v7580 = vld [vmem:[%s73 + $0x118] sm:$0xff]
        %v7581 = vld [vmem:[%s73 + $0x120] sm:$0xff]
        %v7582 = vld [vmem:[%s73 + $0x128] sm:$0xff]
        %v7583 = vld [vmem:[%s73 + $0x130] sm:$0xff]
        %v7584 = vld [vmem:[%s73 + $0x138] sm:$0xff]
        %v7585 = vld [vmem:[%s73 + $0x140] sm:$0xff]
        %v7586 = vld [vmem:[%s73 + $0x148] sm:$0xff]
        %v7587 = vld [vmem:[%s73 + $0x150] sm:$0xff]
        %v7588 = vld [vmem:[%s73 + $0x158] sm:$0xff]
        %v7589 = vld [vmem:[%s73 + $0x160] sm:$0xff]
        %v7590 = vld [vmem:[%s73 + $0x168] sm:$0xff]
        %v7591 = vld [vmem:[%s73 + $0x170] sm:$0xff]
        %v7592 = vld [vmem:[%s73 + $0x178] sm:$0xff]
        %v7593 = vld [vmem:[%s73 + $0x180] sm:$0xff]
        %v7594 = vld [vmem:[%s73 + $0x188] sm:$0xff]
        %v7595 = vld [vmem:[%s73 + $0x190] sm:$0xff]
        %v7596 = vld [vmem:[%s73 + $0x198] sm:$0xff]
        %v7597 = vld [vmem:[%s73 + $0x1a0] sm:$0xff]
        %v7598 = vld [vmem:[%s73 + $0x1a8] sm:$0xff]
        %v7599 = vld [vmem:[%s73 + $0x1b0] sm:$0xff]
        %v7600 = vld [vmem:[%s73 + $0x1b8] sm:$0xff]
        %v7601 = vld [vmem:[%s73 + $0x1c0] sm:$0xff]
        %v7602 = vld [vmem:[%s73 + $0x1c8] sm:$0xff]
        %v7603 = vld [vmem:[%s73 + $0x1d0] sm:$0xff]
        %v7604 = vld [vmem:[%s73 + $0x1d8] sm:$0xff]
        %v7605 = vld [vmem:[%s73 + $0x1e0] sm:$0xff]
        %v7606 = vld [vmem:[%s73 + $0x1e8] sm:$0xff]
        %v7607 = vld [vmem:[%s73 + $0x1f0] sm:$0xff]
        %v7608 = vld [vmem:[%s73 + $0x1f8] sm:$0xff]
        %v7609 = vld [vmem:[%s75] sm:$0x3]
        %v7611 = vlaneseq
        %v7612 = vshrl.u32 %v7611, 7
        %v7613 = vsub.s32 0, %v7612
        %v7614 = vrot.slane %v7609, %v7613
        %v7615 = vlaneseq
        %v7616 = vshrl.u32 %v7615, 7
        %v7617 = vsub.s32 1, %v7616
        %v7618 = vrot.slane %v7609, %v7617
        %7621 = vmatprep.subr.mxu0 %v7546
        %7622 = vmatpush1.msra.mxu0 %v7545
        %7623 = vmatprep.subr.mxu0 %v7548
        %7624 = vmatpush1.msra.mxu0 %v7547
        %7625 = vmatprep.subr.mxu0 %v7550
        %7626 = vmatpush1.msra.mxu0 %v7549
        %7627 = vmatprep.subr.mxu0 %v7552
        %7628 = vmatpush1.msra.mxu0 %v7551
        %7629 = vmatprep.subr.mxu0 %v7554
        %7630 = vmatpush1.msra.mxu0 %v7553
        %7631 = vmatprep.subr.mxu0 %v7556
        %7632 = vmatpush1.msra.mxu0 %v7555
        %7633 = vmatprep.subr.mxu0 %v7558
        %7634 = vmatpush1.msra.mxu0 %v7557
        %7635 = vmatprep.subr.mxu0 %v7560
        %7636 = vmatpush1.msra.mxu0 %v7559
        %7637 = vmatprep.subr.mxu0 %v7562
        %7638 = vmatpush1.msra.mxu0 %v7561
        %7639 = vmatprep.subr.mxu0 %v7564
        %7640 = vmatpush1.msra.mxu0 %v7563
        %7641 = vmatprep.subr.mxu0 %v7566
        %7642 = vmatpush1.msra.mxu0 %v7565
        %7643 = vmatprep.subr.mxu0 %v7568
        %7644 = vmatpush1.msra.mxu0 %v7567
        %7645 = vmatprep.subr.mxu0 %v7570
        %7646 = vmatpush1.msra.mxu0 %v7569
        %7647 = vmatprep.subr.mxu0 %v7572
        %7648 = vmatpush1.msra.mxu0 %v7571
        %7649 = vmatprep.subr.mxu0 %v7574
        %7650 = vmatpush1.msra.mxu0 %v7573
        %7651 = vmatprep.subr.mxu0 %v7576
        %7652 = vmatpush1.msra.mxu0 %v7575
        %7653 = vmatprep.subr.mxu0 %v7578
        %7654 = vmatpush1.msra.mxu0 %v7577
        %7655 = vmatprep.subr.mxu0 %v7580
        %7656 = vmatpush1.msra.mxu0 %v7579
        %7657 = vmatprep.subr.mxu0 %v7582
        %7658 = vmatpush1.msra.mxu0 %v7581
        %7659 = vmatprep.subr.mxu0 %v7584
        %7660 = vmatpush1.msra.mxu0 %v7583
        %7661 = vmatprep.subr.mxu0 %v7586
        %7662 = vmatpush1.msra.mxu0 %v7585
        %7663 = vmatprep.subr.mxu0 %v7588
        %7664 = vmatpush1.msra.mxu0 %v7587
        %7665 = vmatprep.subr.mxu0 %v7590
        %7666 = vmatpush1.msra.mxu0 %v7589
        %7667 = vmatprep.subr.mxu0 %v7592
        %7668 = vmatpush1.msra.mxu0 %v7591
        %7669 = vmatprep.subr.mxu0 %v7594
        %7670 = vmatpush1.msra.mxu0 %v7593
        %7671 = vmatprep.subr.mxu0 %v7596
        %7672 = vmatpush1.msra.mxu0 %v7595
        %7673 = vmatprep.subr.mxu0 %v7598
        %7674 = vmatpush1.msra.mxu0 %v7597
        %7675 = vmatprep.subr.mxu0 %v7600
        %7676 = vmatpush1.msra.mxu0 %v7599
        %7677 = vmatprep.subr.mxu0 %v7602
        %7678 = vmatpush1.msra.mxu0 %v7601
        %7679 = vmatprep.subr.mxu0 %v7604
        %7680 = vmatpush1.msra.mxu0 %v7603
        %7681 = vmatprep.subr.mxu0 %v7606
        %7682 = vmatpush1.msra.mxu0 %v7605
        %7683 = vmatprep.subr.mxu0 %v7608
        %7684 = vmatpush1.msra.mxu0 %v7607
        %7685 = vmatprep.mubr.f32.mxu0 %v7544
        %7686 = vmatmul.mubr.f32.gmra.mrb[0].mxu0 %v7543
        %v7687 = vpop.f32.mrb[0].mxu0
        %v7688 = vadd.f32 %v7614, %v7687
        %v7689 = vpop.f32.mrb[0].mxu0
        %v7690 = vadd.f32 %v7618, %v7689
        %7691 = vdwg.mxu0
        %v7692 = vmax.f32 %v7688, 0.0
        %v7693 = vmax.f32 %v7690, 0.0
        %v7694 = vld [vmem:[%s77] sm:$0xff]
        %v7695 = vld [vmem:[%s77 + $0x8] sm:$0xff]
        %v7696 = vld [vmem:[%s77 + $0x10] sm:$0xff]
        %v7697 = vld [vmem:[%s77 + $0x18] sm:$0xff]
        %v7698 = vld [vmem:[%s77 + $0x20] sm:$0xff]
        %v7699 = vld [vmem:[%s77 + $0x28] sm:$0xff]
        %v7700 = vld [vmem:[%s77 + $0x30] sm:$0xff]
        %v7701 = vld [vmem:[%s77 + $0x38] sm:$0xff]
        %v7702 = vld [vmem:[%s77 + $0x40] sm:$0xff]
        %v7703 = vld [vmem:[%s77 + $0x48] sm:$0xff]
        %v7704 = vld [vmem:[%s77 + $0x50] sm:$0xff]
        %v7705 = vld [vmem:[%s77 + $0x58] sm:$0xff]
        %v7706 = vld [vmem:[%s77 + $0x60] sm:$0xff]
        %v7707 = vld [vmem:[%s77 + $0x68] sm:$0xff]
        %v7708 = vld [vmem:[%s77 + $0x70] sm:$0xff]
        %v7709 = vld [vmem:[%s77 + $0x78] sm:$0xff]
        %v7710 = vld [vmem:[%s77 + $0x80] sm:$0xff]
        %v7711 = vld [vmem:[%s77 + $0x88] sm:$0xff]
        %v7712 = vld [vmem:[%s77 + $0x90] sm:$0xff]
        %v7713 = vld [vmem:[%s77 + $0x98] sm:$0xff]
        %v7714 = vld [vmem:[%s77 + $0xa0] sm:$0xff]
        %v7715 = vld [vmem:[%s77 + $0xa8] sm:$0xff]
        %v7716 = vld [vmem:[%s77 + $0xb0] sm:$0xff]
        %v7717 = vld [vmem:[%s77 + $0xb8] sm:$0xff]
        %v7718 = vld [vmem:[%s77 + $0xc0] sm:$0xff]
        %v7719 = vld [vmem:[%s77 + $0xc8] sm:$0xff]
        %v7720 = vld [vmem:[%s77 + $0xd0] sm:$0xff]
        %v7721 = vld [vmem:[%s77 + $0xd8] sm:$0xff]
        %v7722 = vld [vmem:[%s77 + $0xe0] sm:$0xff]
        %v7723 = vld [vmem:[%s77 + $0xe8] sm:$0xff]
        %v7724 = vld [vmem:[%s77 + $0xf0] sm:$0xff]
        %v7725 = vld [vmem:[%s77 + $0xf8] sm:$0xff]
        %v7726 = vld [vmem:[%s79] sm:$0x1]
        %v7728 = vlaneseq
        %v7729 = vshrl.u32 %v7728, 7
        %v7730 = vsub.s32 0, %v7729
        %v7731 = vrot.slane %v7726, %v7730
        %7733 = vmatprep.subr.mxu0 0.0
        %7734 = vmatpush1.msra.mxu0 %v7694
        %7735 = vmatprep.subr.mxu0 0.0
        %7736 = vmatpush1.msra.mxu0 %v7695
        %7737 = vmatprep.subr.mxu0 0.0
        %7738 = vmatpush1.msra.mxu0 %v7696
        %7739 = vmatprep.subr.mxu0 0.0
        %7740 = vmatpush1.msra.mxu0 %v7697
        %7741 = vmatprep.subr.mxu0 0.0
        %7742 = vmatpush1.msra.mxu0 %v7698
        %7743 = vmatprep.subr.mxu0 0.0
        %7744 = vmatpush1.msra.mxu0 %v7699
        %7745 = vmatprep.subr.mxu0 0.0
        %7746 = vmatpush1.msra.mxu0 %v7700
        %7747 = vmatprep.subr.mxu0 0.0
        %7748 = vmatpush1.msra.mxu0 %v7701
        %7749 = vmatprep.subr.mxu0 0.0
        %7750 = vmatpush1.msra.mxu0 %v7702
        %7751 = vmatprep.subr.mxu0 0.0
        %7752 = vmatpush1.msra.mxu0 %v7703
        %7753 = vmatprep.subr.mxu0 0.0
        %7754 = vmatpush1.msra.mxu0 %v7704
        %7755 = vmatprep.subr.mxu0 0.0
        %7756 = vmatpush1.msra.mxu0 %v7705
        %7757 = vmatprep.subr.mxu0 0.0
        %7758 = vmatpush1.msra.mxu0 %v7706
        %7759 = vmatprep.subr.mxu0 0.0
        %7760 = vmatpush1.msra.mxu0 %v7707
        %7761 = vmatprep.subr.mxu0 0.0
        %7762 = vmatpush1.msra.mxu0 %v7708
        %7763 = vmatprep.subr.mxu0 0.0
        %7764 = vmatpush1.msra.mxu0 %v7709
        %7765 = vmatprep.subr.mxu0 0.0
        %7766 = vmatpush1.msra.mxu0 %v7710
        %7767 = vmatprep.subr.mxu0 0.0
        %7768 = vmatpush1.msra.mxu0 %v7711
        %7769 = vmatprep.subr.mxu0 0.0
        %7770 = vmatpush1.msra.mxu0 %v7712
        %7771 = vmatprep.subr.mxu0 0.0
        %7772 = vmatpush1.msra.mxu0 %v7713
        %7773 = vmatprep.subr.mxu0 0.0
        %7774 = vmatpush1.msra.mxu0 %v7714
        %7775 = vmatprep.subr.mxu0 0.0
        %7776 = vmatpush1.msra.mxu0 %v7715
        %7777 = vmatprep.subr.mxu0 0.0
        %7778 = vmatpush1.msra.mxu0 %v7716
        %7779 = vmatprep.subr.mxu0 0.0
        %7780 = vmatpush1.msra.mxu0 %v7717
        %7781 = vmatprep.subr.mxu0 0.0
        %7782 = vmatpush1.msra.mxu0 %v7718
        %7783 = vmatprep.subr.mxu0 0.0
        %7784 = vmatpush1.msra.mxu0 %v7719
        %7785 = vmatprep.subr.mxu0 0.0
        %7786 = vmatpush1.msra.mxu0 %v7720
        %7787 = vmatprep.subr.mxu0 0.0
        %7788 = vmatpush1.msra.mxu0 %v7721
        %7789 = vmatprep.subr.mxu0 0.0
        %7790 = vmatpush1.msra.mxu0 %v7722
        %7791 = vmatprep.subr.mxu0 0.0
        %7792 = vmatpush1.msra.mxu0 %v7723
        %7793 = vmatprep.subr.mxu0 0.0
        %7794 = vmatpush1.msra.mxu0 %v7724
        %7795 = vmatprep.subr.mxu0 0.0
        %7796 = vmatpush1.msra.mxu0 %v7725
        %7797 = vmatprep.mubr.f32.mxu0 %v7693
        %7798 = vmatmul.mubr.f32.gmra.mrb[0].mxu0 %v7692
        %v7799 = vpop.f32.mrb[0].mxu0
        %v7800 = vadd.f32 %v7731, %v7799
        %v7801 = vpop.f32.mrb[0].mxu0
        %7802 = vdwg.mxu0
        %vm7803 = vcmask 44032
        %7804 = vst.msk [vmem:[%s1346] sm:$0xf] %vm7803, %v7800
        %s7805 = sand.u32 %s971, 1
        %s7806 = scalar_lea.sflag [#allocation4], %s7805
        %s7807 = sand.u32 %s971, 1
        %s7808 = smul.addr %s7807, 4
        %s7809 = scalar_lea.vmem [#allocation13], %s7808
        // Predicated region
        $region205: #{explicit_sahn_gpt_forward.1} parent=179 // pred_check
          %p7810 = pneg %p981
        $region206: #{explicit_sahn_gpt_forward.1} parent=179 // pred_check_branch
          %7812 = sbr.rel (%p7810) target = $region208
        $region207: #{explicit_sahn_gpt_forward.1} parent=179 // pred_region
          %s7814 = ssub.s32 64, 64
          %7815 = vsyncadd %s7806, %s7814
          %s7816 = smul.addr %s103, 64
          %s7817 = scalar_lea.hbm %s81, %s7816
          %s7819 = sshll.u32 %s7809, 4
          %s7820 = int_to_ptr.vmem [resolvable:$true] %s7819
          %7822 = dma.vmem_to_hbm [thread:$0]  %s7820, 64, %s7817, %s7806
        $region208: #{explicit_sahn_gpt_forward.1} parent=179 // pred_fallthru
          _
      $region180: #{explicit_sahn_gpt_forward.1} parent=5 // pred_fallthru
        _
      %p7823 = scmp.le.s32.totalorder 2, %s98
      // Predicated region
      $region209: #{explicit_sahn_gpt_forward.1} parent=5 // pred_check
        %p7824 = pneg %p7823
      $region210: #{explicit_sahn_gpt_forward.1} parent=5 // pred_check_branch
        %7826 = sbr.rel (%p7824) target = $region212
      $region211: #{explicit_sahn_gpt_forward.1} parent=5 // pred_region
        %s7827 = ssub.s32 %s98, 2
        // Predicated region
        $region213: #{explicit_sahn_gpt_forward.1} parent=211 // pred_check
          %p7828 = pneg %p987
        $region214: #{explicit_sahn_gpt_forward.1} parent=211 // pred_check_branch
          %7830 = sbr.rel (%p7828) target = $region216
        $region215: #{explicit_sahn_gpt_forward.1} parent=211 // pred_region
          %s7831 = sand.u32 %s972, 1
          %s7832 = scalar_lea.sflag [#allocation4], %s7831
          %s7833 = sand.u32 %s972, 1
          %s7834 = smul.addr %s7833, 4
          %s7835 = scalar_lea.vmem [#allocation13], %s7834
          %7836 = dma.done %s7832, 64
        $region216: #{explicit_sahn_gpt_forward.1} parent=211 // pred_fallthru
          _
      $region212: #{explicit_sahn_gpt_forward.1} parent=5 // pred_fallthru
        _
    $region6: #{explicit_sahn_gpt_forward.1} parent=1 // loop_footer
      %s102 = sadd.s32 1, %s98
    $region7: #{explicit_sahn_gpt_forward.1} parent=1 // loop_footer_branch
      %97 = sbr.rel target = $region3
    $region8: #{explicit_sahn_gpt_forward.1} parent=1 // loop_exit
      _
    %7837 = vsyncpa [#allocation3], 1
    %s7838 = scalar_lea.sflag [#allocation3], 1
    %7839 = vsyncpa %s7838, 1
    %7840 = vsyncpa [#allocation6], 1
    %s7841 = scalar_lea.sflag [#allocation6], 1
    %7842 = vsyncpa %s7841, 1
    %7843 = vsyncpa [#allocation9], 1
    %7844 = vsyncpa [#allocation12], 1
    %7845 = vsyncpa [#allocation4], 1
    %s7846 = scalar_lea.sflag [#allocation4], 1
    %7847 = vsyncpa %s7846, 1

</llo_original>
